<compile_context>
chip_gen: v7x
topology: tpu7x:2x2x1
jax: 0.10.0
libtpu: 0.0.40
codegen_flags: <defaults>
</compile_context>

<pallas_src>
import functools

import jax
import jax.numpy as jnp
from jax.experimental import pallas as pl
from jax.experimental.pallas import tpu as pltpu

N_POWER_SERIES = 3  # n_exact_terms=2 + geometric(p=0.5) draw fixed to 1


# ----------------------------------------------------------------------------
# Fused Pallas kernel: all blocks x layers + power-series log-det.
# ----------------------------------------------------------------------------
def _silu_parts(v):
    # sigmoid via EUP exp + EUP approximate reciprocal (VALU-free).
    sig = pl.reciprocal(1.0 + jnp.exp(-v), approx=True)
    silu = v * sig
    dsilu = sig * (1.0 + v * (1.0 - sig))
    return silu, dsilu


def _rescoorflow_kernel(xT_ref, vT_ref, ri_ref, rj_ref, st_ref,
                        w1a_ref, w1b_ref, w1c_ref, b1_ref,
                        w2_ref, b2_ref,
                        w3a_ref, w3b_ref, b3_ref,
                        w4_ref, b4_ref,
                        yT_ref, ld_ref,
                        *, block_size, gnn_size, n_terms):
    dot = lambda a, b: jnp.dot(a, b, preferred_element_type=jnp.float32)

    ri = ri_ref[...]          # (BN, E)  edge -> i-endpoint selector
    rj = rj_ref[...]          # (BN, E)  edge -> j-endpoint selector
    st = st_ref[...]          # (E, BN)  per-node message sum (= RI^T)

    xT = xT_ref[...]          # (D, BN)  coordinates, nodes on lanes
    ld = jnp.zeros(ld_ref.shape, jnp.float32)   # (1, BN) per-node logdet partials

    for blk in range(block_size):
        # ------------------ forward pass of this block's EGNN_ net ------------------
        feats = xT
        saved = []
        for li in range(gnn_size):
            l = blk * gnn_size + li
            w1a = w1a_ref[l]; w1b = w1b_ref[l]; w1c = w1c_ref[l]   # (e_hid,D),(e_hid,D),(e_hid,1)
            w2 = w2_ref[l]                                         # (m_dim, e_hid)
            w3a = w3a_ref[l]; w3b = w3b_ref[l]                     # (n_hid,D),(n_hid,m_dim)
            w4 = w4_ref[l]                                         # (D, n_hid)

            xi = dot(feats, ri)                                    # (D, E) edge i-endpoint
            xj = dot(feats, rj)                                    # (D, E) edge j-endpoint
            diff = xi - xj
            dist = jnp.sum(diff * diff, axis=0, keepdims=True)     # (1, E) squared distance

            # edge MLP: Linear(2D+1 -> 2(2D+1)), SiLU, Linear(-> m_dim), SiLU
            pre1 = dot(w1a, xi) + dot(w1b, xj) + w1c * dist + b1_ref[l]   # (e_hid, E)
            h, ds1 = _silu_parts(pre1)
            pre2 = dot(w2, h) + b2_ref[l]                                  # (m_dim, E)
            m, ds2 = _silu_parts(pre2)

            m_i = dot(m, st)                                               # (m_dim, BN)

            # node MLP: Linear(D+m_dim -> 2D), SiLU, Linear(-> D), + residual
            pre3 = dot(w3a, feats) + dot(w3b, m_i) + b3_ref[l]             # (n_hid, BN)
            h2, ds3 = _silu_parts(pre3)
            feats = dot(w4, h2) + b4_ref[l] + feats                        # (D, BN)

            saved.append((w1a, w1b, w1c, w2, w3a, w3b, w4, diff, ds1, ds2, ds3))

        g = feats                                                          # net(x) for this block

        # --------- truncated power series of log|det(I + J_net)| via JVPs ----------
        v = vT_ref[blk]                                                    # (D, BN)
        w = v
        for k in range(1, n_terms + 1):
            t = w
            for li in range(gnn_size):
                w1a, w1b, w1c, w2, w3a, w3b, w4, diff, ds1, ds2, ds3 = saved[li]
                dxi = dot(t, ri)
                dxj = dot(t, rj)
                ddist = 2.0 * jnp.sum(diff * (dxi - dxj), axis=0, keepdims=True)
                dh = ds1 * (dot(w1a, dxi) + dot(w1b, dxj) + w1c * ddist)
                dm = ds2 * dot(w2, dh)
                dm_i = dot(dm, st)
                dh2 = ds3 * (dot(w3a, t) + dot(w3b, dm_i))
                t = dot(w4, dh2) + t
            w = t                                                           # w <- J_net^k v
            per_node = jnp.sum(w * v, axis=0, keepdims=True)                # (1, BN)
            ld = ld + (((-1.0) ** (k + 1)) / k) * per_node

        xT = xT + g                                                         # y = x + net(x)

    yT_ref[...] = xT
    ld_ref[...] = ld


# ----------------------------------------------------------------------------
# Wrapper: layout plumbing + single pallas_call.
# ----------------------------------------------------------------------------
def _full_spec(a):
    nd = a.ndim
    return pl.BlockSpec(a.shape, lambda i, _nd=nd: (0,) * _nd)


def _edge_matrices(B, N):
    BN, E = B * N, B * N * N
    e = jnp.arange(E)
    b = e // (N * N)
    i = (e % (N * N)) // N
    j = e % N
    node = jnp.arange(BN)
    ri = (node[:, None] == (b * N + i)[None, :]).astype(jnp.float32)   # (BN, E)
    rj = (node[:, None] == (b * N + j)[None, :]).astype(jnp.float32)   # (BN, E)
    st = jnp.transpose(ri)                                             # (E, BN)
    return ri, rj, st


@jax.jit
def rescoorflow_forward(x, params, hutch_vs):
    B, N, D = x.shape
    block_size = hutch_vs.shape[0]
    n_layers = params["w1a"].shape[0]
    gnn_size = n_layers // block_size

    ri, rj, st = _edge_matrices(B, N)
    xT = jnp.transpose(x.reshape(B * N, D))                                 # (D, BN)
    vT = jnp.transpose(hutch_vs.reshape(block_size, B * N, D), (0, 2, 1))   # (blk, D, BN)

    kernel = functools.partial(_rescoorflow_kernel, block_size=block_size,
                               gnn_size=gnn_size, n_terms=N_POWER_SERIES)

    inputs = (xT, vT, ri, rj, st,
              params["w1a"], params["w1b"], params["w1c"], params["b1"],
              params["w2"], params["b2"],
              params["w3a"], params["w3b"], params["b3"],
              params["w4"], params["b4"])

    yT, ld = pl.pallas_call(
        kernel,
        out_shape=(jax.ShapeDtypeStruct((D, B * N), jnp.float32),
                   jax.ShapeDtypeStruct((1, B * N), jnp.float32)),
        grid=(1,),
        in_specs=[_full_spec(a) for a in inputs],
        out_specs=(pl.BlockSpec((D, B * N), lambda i: (0, 0)),
                   pl.BlockSpec((1, B * N), lambda i: (0, 0))),
        compiler_params=pltpu.CompilerParams(dimension_semantics=("arbitrary",)),
    )(*inputs)

    y = jnp.transpose(yT).reshape(B, N, D)
    log_prob = jnp.sum(ld[0].reshape(B, N), axis=1)
    return y, log_prob


# ----------------------------------------------------------------------------
# Pure-JAX mirror (test oracle): same math, jax.linearize-based log-det.
# ----------------------------------------------------------------------------
def _silu_ref(v):
    return v * jax.nn.sigmoid(v)


def _egnn_layer_ref(x, p, l):
    B, N, D = x.shape
    xi = jnp.broadcast_to(x[:, :, None, :], (B, N, N, D))
    xj = jnp.broadcast_to(x[:, None, :, :], (B, N, N, D))
    dist = jnp.sum((xi - xj) ** 2, axis=-1, keepdims=True)
    pre1 = (jnp.einsum("bijd,hd->bijh", xi, p["w1a"][l])
            + jnp.einsum("bijd,hd->bijh", xj, p["w1b"][l])
            + dist * p["w1c"][l][:, 0] + p["b1"][l][:, 0])
    h = _silu_ref(pre1)
    m = _silu_ref(jnp.einsum("bijh,mh->bijm", h, p["w2"][l]) + p["b2"][l][:, 0])
    m_i = jnp.sum(m, axis=2)
    pre3 = (jnp.einsum("bnd,hd->bnh", x, p["w3a"][l])
            + jnp.einsum("bnm,hm->bnh", m_i, p["w3b"][l])
            + p["b3"][l][:, 0])
    h2 = _silu_ref(pre3)
    return jnp.einsum("bnh,dh->bnd", h2, p["w4"][l]) + p["b4"][l][:, 0] + x


def net_ref(x, p, blk, gnn_size):
    feats = x
    for li in range(gnn_size):
        feats = _egnn_layer_ref(feats, p, blk * gnn_size + li)
    return feats


def rescoorflow_ref(x, p, hutch_vs, gnn_size, n_terms=N_POWER_SERIES):
    B = x.shape[0]
    log_prob = jnp.zeros((B,), jnp.float32)
    for blk in range(hutch_vs.shape[0]):
        f = functools.partial(net_ref, p=p, blk=blk, gnn_size=gnn_size)
        g, jvp_fn = jax.linearize(f, x)
        v = hutch_vs[blk]
        w = v
        ld = jnp.zeros((B,), jnp.float32)
        for k in range(1, n_terms + 1):
            w = jvp_fn(w)
            tr = jnp.sum((w * v).reshape(B, -1), axis=1)
            ld = ld + ((-1.0) ** (k + 1)) / k * tr
        x = x + g
        log_prob = log_prob + ld
    return x, log_prob


# ----------------------------------------------------------------------------
# Deterministic synthetic parameters (shapes of the PyTorch module, transposed
# and stacked over all BLOCK_SIZE * GNN_SIZE layers).
# ----------------------------------------------------------------------------
def init_params(key, n_layers, dim, m_dim, std=0.05):
    e_hid = 2 * (2 * dim + 1)    # edge MLP hidden (14 for dim=3)
    n_hid = 2 * dim              # node MLP hidden (6)
    shapes = dict(
        w1a=(e_hid, dim), w1b=(e_hid, dim), w1c=(e_hid, 1), b1=(e_hid, 1),
        w2=(m_dim, e_hid), b2=(m_dim, 1),
        w3a=(n_hid, dim), w3b=(n_hid, m_dim), b3=(n_hid, 1),
        w4=(dim, n_hid), b4=(dim, 1))
    params = {}
    for name, shp in shapes.items():
        key, k = jax.random.split(key)
        params[name] = std * jax.random.normal(k, (n_layers,) + shp, jnp.float32)
    return params


if __name__ == "__main__":
    B, N, D = 2, 8, 3        # batch, nodes (<= max_nodes), xyz  ->  B*N*N = 128 edges
    HIDDEN = 32              # m_dim (hidden_dim)
    GNN_SIZE = 1             # EGNN layers per residual block (module default)
    BLOCK_SIZE = 3           # residual blocks (small for the demo)

    key = jax.random.PRNGKey(0)
    kx, kp, kv = jax.random.split(key, 3)

    x = jax.random.normal(kx, (B, N, D), jnp.float32)
    params = init_params(kp, BLOCK_SIZE * GNN_SIZE, D, HIDDEN)
    hutch_vs = jax.random.normal(kv, (BLOCK_SIZE, B, N, D), jnp.float32)

    y, log_prob = rescoorflow_forward(x, params, hutch_vs)
    jax.block_until_ready((y, log_prob))

    assert y.shape == (B, N, D) and log_prob.shape == (B,)
    assert bool(jnp.all(jnp.isfinite(y))) and bool(jnp.all(jnp.isfinite(log_prob)))

    # sanity check vs. pure-JAX mirror (tolerance covers the in-kernel EUP
    # approximate-reciprocal sigmoid and MXU f32 matmul rounding).
    y_ref, lp_ref = rescoorflow_ref(x, params, hutch_vs, GNN_SIZE)
    assert jnp.allclose(y, y_ref, atol=2e-2, rtol=2e-2), "y mismatch vs reference"
    assert jnp.allclose(log_prob, lp_ref, atol=2e-1, rtol=2e-2), "log_prob mismatch vs reference"

    print("KERNEL_OK")
</pallas_src>

<mosaic_0001>
module attributes {stable_mosaic.version = 11 : i64} {
  func.func @_rescoorflow_kernel(%arg0: i32, %arg1: memref<3x16xf32, #tpu.memory_space<vmem>>, %arg2: memref<3x3x16xf32, #tpu.memory_space<vmem>>, %arg3: memref<16x128xf32, #tpu.memory_space<vmem>>, %arg4: memref<16x128xf32, #tpu.memory_space<vmem>>, %arg5: memref<128x16xf32, #tpu.memory_space<vmem>>, %arg6: memref<3x14x3xf32, #tpu.memory_space<vmem>>, %arg7: memref<3x14x3xf32, #tpu.memory_space<vmem>>, %arg8: memref<3x14x1xf32, #tpu.memory_space<vmem>>, %arg9: memref<3x14x1xf32, #tpu.memory_space<vmem>>, %arg10: memref<3x32x14xf32, #tpu.memory_space<vmem>>, %arg11: memref<3x32x1xf32, #tpu.memory_space<vmem>>, %arg12: memref<3x6x3xf32, #tpu.memory_space<vmem>>, %arg13: memref<3x6x32xf32, #tpu.memory_space<vmem>>, %arg14: memref<3x6x1xf32, #tpu.memory_space<vmem>>, %arg15: memref<3x3x6xf32, #tpu.memory_space<vmem>>, %arg16: memref<3x3x1xf32, #tpu.memory_space<vmem>>, %arg17: memref<3x16xf32, #tpu.memory_space<vmem>>, %arg18: memref<1x16xf32, #tpu.memory_space<vmem>>) attributes {dimension_semantics = [#tpu.dimension_semantics<arbitrary>], iteration_bounds = array<i64: 1>, scalar_prefetch = 0 : i64, scratch_operands = 0 : i64, tpu.core_type = #tpu.core_type<tc>, window_params = [{pipeline_mode = #tpu.pipeline_mode<synchronous>, transform_indices = @transform_0, window_bounds = array<i64: 3, 16>}, {pipeline_mode = #tpu.pipeline_mode<synchronous>, transform_indices = @transform_1, window_bounds = array<i64: 3, 3, 16>}, {pipeline_mode = #tpu.pipeline_mode<synchronous>, transform_indices = @transform_2, window_bounds = array<i64: 16, 128>}, {pipeline_mode = #tpu.pipeline_mode<synchronous>, transform_indices = @transform_3, window_bounds = array<i64: 16, 128>}, {pipeline_mode = #tpu.pipeline_mode<synchronous>, transform_indices = @transform_4, window_bounds = array<i64: 128, 16>}, {pipeline_mode = #tpu.pipeline_mode<synchronous>, transform_indices = @transform_5, window_bounds = array<i64: 3, 14, 3>}, {pipeline_mode = #tpu.pipeline_mode<synchronous>, transform_indices = @transform_6, window_bounds = array<i64: 3, 14, 3>}, {pipeline_mode = #tpu.pipeline_mode<synchronous>, transform_indices = @transform_7, window_bounds = array<i64: 3, 14, 1>}, {pipeline_mode = #tpu.pipeline_mode<synchronous>, transform_indices = @transform_8, window_bounds = array<i64: 3, 14, 1>}, {pipeline_mode = #tpu.pipeline_mode<synchronous>, transform_indices = @transform_9, window_bounds = array<i64: 3, 32, 14>}, {pipeline_mode = #tpu.pipeline_mode<synchronous>, transform_indices = @transform_10, window_bounds = array<i64: 3, 32, 1>}, {pipeline_mode = #tpu.pipeline_mode<synchronous>, transform_indices = @transform_11, window_bounds = array<i64: 3, 6, 3>}, {pipeline_mode = #tpu.pipeline_mode<synchronous>, transform_indices = @transform_12, window_bounds = array<i64: 3, 6, 32>}, {pipeline_mode = #tpu.pipeline_mode<synchronous>, transform_indices = @transform_13, window_bounds = array<i64: 3, 6, 1>}, {pipeline_mode = #tpu.pipeline_mode<synchronous>, transform_indices = @transform_14, window_bounds = array<i64: 3, 3, 6>}, {pipeline_mode = #tpu.pipeline_mode<synchronous>, transform_indices = @transform_15, window_bounds = array<i64: 3, 3, 1>}, {pipeline_mode = #tpu.pipeline_mode<synchronous>, transform_indices = @transform_16, window_bounds = array<i64: 3, 16>}, {pipeline_mode = #tpu.pipeline_mode<synchronous>, transform_indices = @transform_17, window_bounds = array<i64: 1, 16>}]} {
    %c0 = arith.constant 0 : index
    %c0_0 = arith.constant 0 : index
    %0 = vector.load %arg3[%c0, %c0_0] : memref<16x128xf32, #tpu.memory_space<vmem>>, vector<16x128xf32>
    %c0_1 = arith.constant 0 : index
    %c0_2 = arith.constant 0 : index
    %1 = vector.load %arg4[%c0_1, %c0_2] : memref<16x128xf32, #tpu.memory_space<vmem>>, vector<16x128xf32>
    %c0_3 = arith.constant 0 : index
    %c0_4 = arith.constant 0 : index
    %2 = vector.load %arg5[%c0_3, %c0_4] : memref<128x16xf32, #tpu.memory_space<vmem>>, vector<128x16xf32>
    %c0_5 = arith.constant 0 : index
    %c0_6 = arith.constant 0 : index
    %3 = vector.load %arg1[%c0_5, %c0_6] : memref<3x16xf32, #tpu.memory_space<vmem>>, vector<3x16xf32>
    %cst = arith.constant 0.000000e+00 : f32
    %4 = vector.broadcast %cst : f32 to vector<1x16xf32>
    %c0_7 = arith.constant 0 : index
    %c0_8 = arith.constant 0 : index
    %c0_9 = arith.constant 0 : index
    %5 = vector.load %arg6[%c0_7, %c0_8, %c0_9] : memref<3x14x3xf32, #tpu.memory_space<vmem>>, vector<1x14x3xf32>
    %6 = vector.shape_cast %5 : vector<1x14x3xf32> to vector<14x3xf32>
    %c0_10 = arith.constant 0 : index
    %c0_11 = arith.constant 0 : index
    %c0_12 = arith.constant 0 : index
    %7 = vector.load %arg7[%c0_10, %c0_11, %c0_12] : memref<3x14x3xf32, #tpu.memory_space<vmem>>, vector<1x14x3xf32>
    %8 = vector.shape_cast %7 : vector<1x14x3xf32> to vector<14x3xf32>
    %c0_13 = arith.constant 0 : index
    %c0_14 = arith.constant 0 : index
    %c0_15 = arith.constant 0 : index
    %9 = vector.load %arg8[%c0_13, %c0_14, %c0_15] : memref<3x14x1xf32, #tpu.memory_space<vmem>>, vector<1x14x1xf32>
    %10 = vector.shape_cast %9 : vector<1x14x1xf32> to vector<14x1xf32>
    %c0_16 = arith.constant 0 : index
    %c0_17 = arith.constant 0 : index
    %c0_18 = arith.constant 0 : index
    %11 = vector.load %arg10[%c0_16, %c0_17, %c0_18] : memref<3x32x14xf32, #tpu.memory_space<vmem>>, vector<1x32x14xf32>
    %12 = vector.shape_cast %11 : vector<1x32x14xf32> to vector<32x14xf32>
    %c0_19 = arith.constant 0 : index
    %c0_20 = arith.constant 0 : index
    %c0_21 = arith.constant 0 : index
    %13 = vector.load %arg12[%c0_19, %c0_20, %c0_21] : memref<3x6x3xf32, #tpu.memory_space<vmem>>, vector<1x6x3xf32>
    %14 = vector.shape_cast %13 : vector<1x6x3xf32> to vector<6x3xf32>
    %c0_22 = arith.constant 0 : index
    %c0_23 = arith.constant 0 : index
    %c0_24 = arith.constant 0 : index
    %15 = vector.load %arg13[%c0_22, %c0_23, %c0_24] : memref<3x6x32xf32, #tpu.memory_space<vmem>>, vector<1x6x32xf32>
    %16 = vector.shape_cast %15 : vector<1x6x32xf32> to vector<6x32xf32>
    %c0_25 = arith.constant 0 : index
    %c0_26 = arith.constant 0 : index
    %c0_27 = arith.constant 0 : index
    %17 = vector.load %arg15[%c0_25, %c0_26, %c0_27] : memref<3x3x6xf32, #tpu.memory_space<vmem>>, vector<1x3x6xf32>
    %18 = vector.shape_cast %17 : vector<1x3x6xf32> to vector<3x6xf32>
    %cst_28 = arith.constant dense<0.000000e+00> : vector<3x128xf32>
    %19 = tpu.matmul %3, %0, %cst_28 {dimension_numbers = #tpu.dot_dimension_numbers<[1], [0], [0], [1], [0, 0, 1, 1], [], []>} : vector<3x16xf32>, vector<16x128xf32>, vector<3x128xf32> -> vector<3x128xf32>
    %cst_29 = arith.constant dense<0.000000e+00> : vector<3x128xf32>
    %20 = tpu.matmul %3, %1, %cst_29 {dimension_numbers = #tpu.dot_dimension_numbers<[1], [0], [0], [1], [0, 0, 1, 1], [], []>} : vector<3x16xf32>, vector<16x128xf32>, vector<3x128xf32> -> vector<3x128xf32>
    %21 = arith.subf %19, %20 : vector<3x128xf32>
    %22 = arith.mulf %21, %21 : vector<3x128xf32>
    %cst_30 = arith.constant dense<0.000000e+00> : vector<128xf32>
    %23 = vector.multi_reduction <add>, %22, %cst_30 [0] : vector<3x128xf32> to vector<128xf32>
    %24 = vector.shape_cast %23 : vector<128xf32> to vector<1x128xf32>
    %cst_31 = arith.constant dense<0.000000e+00> : vector<14x128xf32>
    %25 = tpu.matmul %6, %19, %cst_31 {dimension_numbers = #tpu.dot_dimension_numbers<[1], [0], [0], [1], [0, 0, 1, 1], [], []>} : vector<14x3xf32>, vector<3x128xf32>, vector<14x128xf32> -> vector<14x128xf32>
    %cst_32 = arith.constant dense<0.000000e+00> : vector<14x128xf32>
    %26 = tpu.matmul %8, %20, %cst_32 {dimension_numbers = #tpu.dot_dimension_numbers<[1], [0], [0], [1], [0, 0, 1, 1], [], []>} : vector<14x3xf32>, vector<3x128xf32>, vector<14x128xf32> -> vector<14x128xf32>
    %27 = arith.addf %25, %26 : vector<14x128xf32>
    %28 = vector.broadcast %10 : vector<14x1xf32> to vector<14x128xf32>
    %29 = vector.broadcast %24 : vector<1x128xf32> to vector<14x128xf32>
    %30 = arith.mulf %28, %29 : vector<14x128xf32>
    %31 = arith.addf %27, %30 : vector<14x128xf32>
    %c0_33 = arith.constant 0 : index
    %c0_34 = arith.constant 0 : index
    %c0_35 = arith.constant 0 : index
    %32 = vector.load %arg9[%c0_33, %c0_34, %c0_35] : memref<3x14x1xf32, #tpu.memory_space<vmem>>, vector<1x14x1xf32>
    %33 = vector.shape_cast %32 : vector<1x14x1xf32> to vector<14x1xf32>
    %34 = vector.broadcast %33 : vector<14x1xf32> to vector<14x128xf32>
    %35 = arith.addf %31, %34 : vector<14x128xf32>
    %cst_36 = arith.constant 0.000000e+00 : f32
    %36 = vector.broadcast %cst_36 : f32 to vector<14x128xf32>
    %37 = arith.subf %36, %35 : vector<14x128xf32>
    %38 = math.exp %37 : vector<14x128xf32>
    %cst_37 = arith.constant 1.000000e+00 : f32
    %39 = vector.broadcast %cst_37 : f32 to vector<14x128xf32>
    %40 = arith.addf %39, %38 : vector<14x128xf32>
    %41 = tpu.reciprocal %40 {approx = true} : vector<14x128xf32> -> vector<14x128xf32>
    %42 = arith.mulf %35, %41 : vector<14x128xf32>
    %cst_38 = arith.constant 1.000000e+00 : f32
    %43 = vector.broadcast %cst_38 : f32 to vector<14x128xf32>
    %44 = arith.subf %43, %41 : vector<14x128xf32>
    %45 = arith.mulf %35, %44 : vector<14x128xf32>
    %cst_39 = arith.constant 1.000000e+00 : f32
    %46 = vector.broadcast %cst_39 : f32 to vector<14x128xf32>
    %47 = arith.addf %46, %45 : vector<14x128xf32>
    %48 = arith.mulf %41, %47 : vector<14x128xf32>
    %cst_40 = arith.constant dense<0.000000e+00> : vector<32x128xf32>
    %49 = tpu.matmul %12, %42, %cst_40 {dimension_numbers = #tpu.dot_dimension_numbers<[1], [0], [0], [1], [0, 0, 1, 1], [], []>} : vector<32x14xf32>, vector<14x128xf32>, vector<32x128xf32> -> vector<32x128xf32>
    %c0_41 = arith.constant 0 : index
    %c0_42 = arith.constant 0 : index
    %c0_43 = arith.constant 0 : index
    %50 = vector.load %arg11[%c0_41, %c0_42, %c0_43] : memref<3x32x1xf32, #tpu.memory_space<vmem>>, vector<1x32x1xf32>
    %51 = vector.shape_cast %50 : vector<1x32x1xf32> to vector<32x1xf32>
    %52 = vector.broadcast %51 : vector<32x1xf32> to vector<32x128xf32>
    %53 = arith.addf %49, %52 : vector<32x128xf32>
    %cst_44 = arith.constant 0.000000e+00 : f32
    %54 = vector.broadcast %cst_44 : f32 to vector<32x128xf32>
    %55 = arith.subf %54, %53 : vector<32x128xf32>
    %56 = math.exp %55 : vector<32x128xf32>
    %cst_45 = arith.constant 1.000000e+00 : f32
    %57 = vector.broadcast %cst_45 : f32 to vector<32x128xf32>
    %58 = arith.addf %57, %56 : vector<32x128xf32>
    %59 = tpu.reciprocal %58 {approx = true} : vector<32x128xf32> -> vector<32x128xf32>
    %60 = arith.mulf %53, %59 : vector<32x128xf32>
    %cst_46 = arith.constant 1.000000e+00 : f32
    %61 = vector.broadcast %cst_46 : f32 to vector<32x128xf32>
    %62 = arith.subf %61, %59 : vector<32x128xf32>
    %63 = arith.mulf %53, %62 : vector<32x128xf32>
    %cst_47 = arith.constant 1.000000e+00 : f32
    %64 = vector.broadcast %cst_47 : f32 to vector<32x128xf32>
    %65 = arith.addf %64, %63 : vector<32x128xf32>
    %66 = arith.mulf %59, %65 : vector<32x128xf32>
    %cst_48 = arith.constant dense<0.000000e+00> : vector<32x16xf32>
    %67 = tpu.matmul %60, %2, %cst_48 {dimension_numbers = #tpu.dot_dimension_numbers<[1], [0], [0], [1], [0, 0, 1, 1], [], []>} : vector<32x128xf32>, vector<128x16xf32>, vector<32x16xf32> -> vector<32x16xf32>
    %cst_49 = arith.constant dense<0.000000e+00> : vector<6x16xf32>
    %68 = tpu.matmul %14, %3, %cst_49 {dimension_numbers = #tpu.dot_dimension_numbers<[1], [0], [0], [1], [0, 0, 1, 1], [], []>} : vector<6x3xf32>, vector<3x16xf32>, vector<6x16xf32> -> vector<6x16xf32>
    %cst_50 = arith.constant dense<0.000000e+00> : vector<6x16xf32>
    %69 = tpu.matmul %16, %67, %cst_50 {dimension_numbers = #tpu.dot_dimension_numbers<[1], [0], [0], [1], [0, 0, 1, 1], [], []>} : vector<6x32xf32>, vector<32x16xf32>, vector<6x16xf32> -> vector<6x16xf32>
    %70 = arith.addf %68, %69 : vector<6x16xf32>
    %c0_51 = arith.constant 0 : index
    %c0_52 = arith.constant 0 : index
    %c0_53 = arith.constant 0 : index
    %71 = vector.load %arg14[%c0_51, %c0_52, %c0_53] : memref<3x6x1xf32, #tpu.memory_space<vmem>>, vector<1x6x1xf32>
    %72 = vector.shape_cast %71 : vector<1x6x1xf32> to vector<6x1xf32>
    %73 = vector.broadcast %72 : vector<6x1xf32> to vector<6x16xf32>
    %74 = arith.addf %70, %73 : vector<6x16xf32>
    %cst_54 = arith.constant 0.000000e+00 : f32
    %75 = vector.broadcast %cst_54 : f32 to vector<6x16xf32>
    %76 = arith.subf %75, %74 : vector<6x16xf32>
    %77 = math.exp %76 : vector<6x16xf32>
    %cst_55 = arith.constant 1.000000e+00 : f32
    %78 = vector.broadcast %cst_55 : f32 to vector<6x16xf32>
    %79 = arith.addf %78, %77 : vector<6x16xf32>
    %80 = tpu.reciprocal %79 {approx = true} : vector<6x16xf32> -> vector<6x16xf32>
    %81 = arith.mulf %74, %80 : vector<6x16xf32>
    %cst_56 = arith.constant 1.000000e+00 : f32
    %82 = vector.broadcast %cst_56 : f32 to vector<6x16xf32>
    %83 = arith.subf %82, %80 : vector<6x16xf32>
    %84 = arith.mulf %74, %83 : vector<6x16xf32>
    %cst_57 = arith.constant 1.000000e+00 : f32
    %85 = vector.broadcast %cst_57 : f32 to vector<6x16xf32>
    %86 = arith.addf %85, %84 : vector<6x16xf32>
    %87 = arith.mulf %80, %86 : vector<6x16xf32>
    %cst_58 = arith.constant dense<0.000000e+00> : vector<3x16xf32>
    %88 = tpu.matmul %18, %81, %cst_58 {dimension_numbers = #tpu.dot_dimension_numbers<[1], [0], [0], [1], [0, 0, 1, 1], [], []>} : vector<3x6xf32>, vector<6x16xf32>, vector<3x16xf32> -> vector<3x16xf32>
    %c0_59 = arith.constant 0 : index
    %c0_60 = arith.constant 0 : index
    %c0_61 = arith.constant 0 : index
    %89 = vector.load %arg16[%c0_59, %c0_60, %c0_61] : memref<3x3x1xf32, #tpu.memory_space<vmem>>, vector<1x3x1xf32>
    %90 = vector.shape_cast %89 : vector<1x3x1xf32> to vector<3x1xf32>
    %91 = vector.broadcast %90 : vector<3x1xf32> to vector<3x16xf32>
    %92 = arith.addf %88, %91 : vector<3x16xf32>
    %93 = arith.addf %92, %3 : vector<3x16xf32>
    %c0_62 = arith.constant 0 : index
    %c0_63 = arith.constant 0 : index
    %c0_64 = arith.constant 0 : index
    %94 = vector.load %arg2[%c0_62, %c0_63, %c0_64] : memref<3x3x16xf32, #tpu.memory_space<vmem>>, vector<1x3x16xf32>
    %95 = vector.shape_cast %94 : vector<1x3x16xf32> to vector<3x16xf32>
    %cst_65 = arith.constant dense<0.000000e+00> : vector<3x128xf32>
    %96 = tpu.matmul %95, %0, %cst_65 {dimension_numbers = #tpu.dot_dimension_numbers<[1], [0], [0], [1], [0, 0, 1, 1], [], []>} : vector<3x16xf32>, vector<16x128xf32>, vector<3x128xf32> -> vector<3x128xf32>
    %cst_66 = arith.constant dense<0.000000e+00> : vector<3x128xf32>
    %97 = tpu.matmul %95, %1, %cst_66 {dimension_numbers = #tpu.dot_dimension_numbers<[1], [0], [0], [1], [0, 0, 1, 1], [], []>} : vector<3x16xf32>, vector<16x128xf32>, vector<3x128xf32> -> vector<3x128xf32>
    %98 = arith.subf %96, %97 : vector<3x128xf32>
    %99 = arith.mulf %21, %98 : vector<3x128xf32>
    %cst_67 = arith.constant dense<0.000000e+00> : vector<128xf32>
    %100 = vector.multi_reduction <add>, %99, %cst_67 [0] : vector<3x128xf32> to vector<128xf32>
    %101 = vector.shape_cast %100 : vector<128xf32> to vector<1x128xf32>
    %cst_68 = arith.constant 2.000000e+00 : f32
    %102 = vector.broadcast %cst_68 : f32 to vector<1x128xf32>
    %103 = arith.mulf %102, %101 : vector<1x128xf32>
    %cst_69 = arith.constant dense<0.000000e+00> : vector<14x128xf32>
    %104 = tpu.matmul %6, %96, %cst_69 {dimension_numbers = #tpu.dot_dimension_numbers<[1], [0], [0], [1], [0, 0, 1, 1], [], []>} : vector<14x3xf32>, vector<3x128xf32>, vector<14x128xf32> -> vector<14x128xf32>
    %cst_70 = arith.constant dense<0.000000e+00> : vector<14x128xf32>
    %105 = tpu.matmul %8, %97, %cst_70 {dimension_numbers = #tpu.dot_dimension_numbers<[1], [0], [0], [1], [0, 0, 1, 1], [], []>} : vector<14x3xf32>, vector<3x128xf32>, vector<14x128xf32> -> vector<14x128xf32>
    %106 = arith.addf %104, %105 : vector<14x128xf32>
    %107 = vector.broadcast %10 : vector<14x1xf32> to vector<14x128xf32>
    %108 = vector.broadcast %103 : vector<1x128xf32> to vector<14x128xf32>
    %109 = arith.mulf %107, %108 : vector<14x128xf32>
    %110 = arith.addf %106, %109 : vector<14x128xf32>
    %111 = arith.mulf %48, %110 : vector<14x128xf32>
    %cst_71 = arith.constant dense<0.000000e+00> : vector<32x128xf32>
    %112 = tpu.matmul %12, %111, %cst_71 {dimension_numbers = #tpu.dot_dimension_numbers<[1], [0], [0], [1], [0, 0, 1, 1], [], []>} : vector<32x14xf32>, vector<14x128xf32>, vector<32x128xf32> -> vector<32x128xf32>
    %113 = arith.mulf %66, %112 : vector<32x128xf32>
    %cst_72 = arith.constant dense<0.000000e+00> : vector<32x16xf32>
    %114 = tpu.matmul %113, %2, %cst_72 {dimension_numbers = #tpu.dot_dimension_numbers<[1], [0], [0], [1], [0, 0, 1, 1], [], []>} : vector<32x128xf32>, vector<128x16xf32>, vector<32x16xf32> -> vector<32x16xf32>
    %cst_73 = arith.constant dense<0.000000e+00> : vector<6x16xf32>
    %115 = tpu.matmul %14, %95, %cst_73 {dimension_numbers = #tpu.dot_dimension_numbers<[1], [0], [0], [1], [0, 0, 1, 1], [], []>} : vector<6x3xf32>, vector<3x16xf32>, vector<6x16xf32> -> vector<6x16xf32>
    %cst_74 = arith.constant dense<0.000000e+00> : vector<6x16xf32>
    %116 = tpu.matmul %16, %114, %cst_74 {dimension_numbers = #tpu.dot_dimension_numbers<[1], [0], [0], [1], [0, 0, 1, 1], [], []>} : vector<6x32xf32>, vector<32x16xf32>, vector<6x16xf32> -> vector<6x16xf32>
    %117 = arith.addf %115, %116 : vector<6x16xf32>
    %118 = arith.mulf %87, %117 : vector<6x16xf32>
    %cst_75 = arith.constant dense<0.000000e+00> : vector<3x16xf32>
    %119 = tpu.matmul %18, %118, %cst_75 {dimension_numbers = #tpu.dot_dimension_numbers<[1], [0], [0], [1], [0, 0, 1, 1], [], []>} : vector<3x6xf32>, vector<6x16xf32>, vector<3x16xf32> -> vector<3x16xf32>
    %120 = arith.addf %119, %95 : vector<3x16xf32>
    %121 = arith.mulf %120, %95 : vector<3x16xf32>
    %cst_76 = arith.constant dense<0.000000e+00> : vector<16xf32>
    %122 = vector.multi_reduction <add>, %121, %cst_76 [0] : vector<3x16xf32> to vector<16xf32>
    %123 = vector.shape_cast %122 : vector<16xf32> to vector<1x16xf32>
    %cst_77 = arith.constant 1.000000e+00 : f32
    %124 = vector.broadcast %cst_77 : f32 to vector<1x16xf32>
    %125 = arith.mulf %124, %123 : vector<1x16xf32>
    %126 = arith.addf %4, %125 : vector<1x16xf32>
    %cst_78 = arith.constant dense<0.000000e+00> : vector<3x128xf32>
    %127 = tpu.matmul %120, %0, %cst_78 {dimension_numbers = #tpu.dot_dimension_numbers<[1], [0], [0], [1], [0, 0, 1, 1], [], []>} : vector<3x16xf32>, vector<16x128xf32>, vector<3x128xf32> -> vector<3x128xf32>
    %cst_79 = arith.constant dense<0.000000e+00> : vector<3x128xf32>
    %128 = tpu.matmul %120, %1, %cst_79 {dimension_numbers = #tpu.dot_dimension_numbers<[1], [0], [0], [1], [0, 0, 1, 1], [], []>} : vector<3x16xf32>, vector<16x128xf32>, vector<3x128xf32> -> vector<3x128xf32>
    %129 = arith.subf %127, %128 : vector<3x128xf32>
    %130 = arith.mulf %21, %129 : vector<3x128xf32>
    %cst_80 = arith.constant dense<0.000000e+00> : vector<128xf32>
    %131 = vector.multi_reduction <add>, %130, %cst_80 [0] : vector<3x128xf32> to vector<128xf32>
    %132 = vector.shape_cast %131 : vector<128xf32> to vector<1x128xf32>
    %cst_81 = arith.constant 2.000000e+00 : f32
    %133 = vector.broadcast %cst_81 : f32 to vector<1x128xf32>
    %134 = arith.mulf %133, %132 : vector<1x128xf32>
    %cst_82 = arith.constant dense<0.000000e+00> : vector<14x128xf32>
    %135 = tpu.matmul %6, %127, %cst_82 {dimension_numbers = #tpu.dot_dimension_numbers<[1], [0], [0], [1], [0, 0, 1, 1], [], []>} : vector<14x3xf32>, vector<3x128xf32>, vector<14x128xf32> -> vector<14x128xf32>
    %cst_83 = arith.constant dense<0.000000e+00> : vector<14x128xf32>
    %136 = tpu.matmul %8, %128, %cst_83 {dimension_numbers = #tpu.dot_dimension_numbers<[1], [0], [0], [1], [0, 0, 1, 1], [], []>} : vector<14x3xf32>, vector<3x128xf32>, vector<14x128xf32> -> vector<14x128xf32>
    %137 = arith.addf %135, %136 : vector<14x128xf32>
    %138 = vector.broadcast %10 : vector<14x1xf32> to vector<14x128xf32>
    %139 = vector.broadcast %134 : vector<1x128xf32> to vector<14x128xf32>
    %140 = arith.mulf %138, %139 : vector<14x128xf32>
    %141 = arith.addf %137, %140 : vector<14x128xf32>
    %142 = arith.mulf %48, %141 : vector<14x128xf32>
    %cst_84 = arith.constant dense<0.000000e+00> : vector<32x128xf32>
    %143 = tpu.matmul %12, %142, %cst_84 {dimension_numbers = #tpu.dot_dimension_numbers<[1], [0], [0], [1], [0, 0, 1, 1], [], []>} : vector<32x14xf32>, vector<14x128xf32>, vector<32x128xf32> -> vector<32x128xf32>
    %144 = arith.mulf %66, %143 : vector<32x128xf32>
    %cst_85 = arith.constant dense<0.000000e+00> : vector<32x16xf32>
    %145 = tpu.matmul %144, %2, %cst_85 {dimension_numbers = #tpu.dot_dimension_numbers<[1], [0], [0], [1], [0, 0, 1, 1], [], []>} : vector<32x128xf32>, vector<128x16xf32>, vector<32x16xf32> -> vector<32x16xf32>
    %cst_86 = arith.constant dense<0.000000e+00> : vector<6x16xf32>
    %146 = tpu.matmul %14, %120, %cst_86 {dimension_numbers = #tpu.dot_dimension_numbers<[1], [0], [0], [1], [0, 0, 1, 1], [], []>} : vector<6x3xf32>, vector<3x16xf32>, vector<6x16xf32> -> vector<6x16xf32>
    %cst_87 = arith.constant dense<0.000000e+00> : vector<6x16xf32>
    %147 = tpu.matmul %16, %145, %cst_87 {dimension_numbers = #tpu.dot_dimension_numbers<[1], [0], [0], [1], [0, 0, 1, 1], [], []>} : vector<6x32xf32>, vector<32x16xf32>, vector<6x16xf32> -> vector<6x16xf32>
    %148 = arith.addf %146, %147 : vector<6x16xf32>
    %149 = arith.mulf %87, %148 : vector<6x16xf32>
    %cst_88 = arith.constant dense<0.000000e+00> : vector<3x16xf32>
    %150 = tpu.matmul %18, %149, %cst_88 {dimension_numbers = #tpu.dot_dimension_numbers<[1], [0], [0], [1], [0, 0, 1, 1], [], []>} : vector<3x6xf32>, vector<6x16xf32>, vector<3x16xf32> -> vector<3x16xf32>
    %151 = arith.addf %150, %120 : vector<3x16xf32>
    %152 = arith.mulf %151, %95 : vector<3x16xf32>
    %cst_89 = arith.constant dense<0.000000e+00> : vector<16xf32>
    %153 = vector.multi_reduction <add>, %152, %cst_89 [0] : vector<3x16xf32> to vector<16xf32>
    %154 = vector.shape_cast %153 : vector<16xf32> to vector<1x16xf32>
    %cst_90 = arith.constant -5.000000e-01 : f32
    %155 = vector.broadcast %cst_90 : f32 to vector<1x16xf32>
    %156 = arith.mulf %155, %154 : vector<1x16xf32>
    %157 = arith.addf %126, %156 : vector<1x16xf32>
    %cst_91 = arith.constant dense<0.000000e+00> : vector<3x128xf32>
    %158 = tpu.matmul %151, %0, %cst_91 {dimension_numbers = #tpu.dot_dimension_numbers<[1], [0], [0], [1], [0, 0, 1, 1], [], []>} : vector<3x16xf32>, vector<16x128xf32>, vector<3x128xf32> -> vector<3x128xf32>
    %cst_92 = arith.constant dense<0.000000e+00> : vector<3x128xf32>
    %159 = tpu.matmul %151, %1, %cst_92 {dimension_numbers = #tpu.dot_dimension_numbers<[1], [0], [0], [1], [0, 0, 1, 1], [], []>} : vector<3x16xf32>, vector<16x128xf32>, vector<3x128xf32> -> vector<3x128xf32>
    %160 = arith.subf %158, %159 : vector<3x128xf32>
    %161 = arith.mulf %21, %160 : vector<3x128xf32>
    %cst_93 = arith.constant dense<0.000000e+00> : vector<128xf32>
    %162 = vector.multi_reduction <add>, %161, %cst_93 [0] : vector<3x128xf32> to vector<128xf32>
    %163 = vector.shape_cast %162 : vector<128xf32> to vector<1x128xf32>
    %cst_94 = arith.constant 2.000000e+00 : f32
    %164 = vector.broadcast %cst_94 : f32 to vector<1x128xf32>
    %165 = arith.mulf %164, %163 : vector<1x128xf32>
    %cst_95 = arith.constant dense<0.000000e+00> : vector<14x128xf32>
    %166 = tpu.matmul %6, %158, %cst_95 {dimension_numbers = #tpu.dot_dimension_numbers<[1], [0], [0], [1], [0, 0, 1, 1], [], []>} : vector<14x3xf32>, vector<3x128xf32>, vector<14x128xf32> -> vector<14x128xf32>
    %cst_96 = arith.constant dense<0.000000e+00> : vector<14x128xf32>
    %167 = tpu.matmul %8, %159, %cst_96 {dimension_numbers = #tpu.dot_dimension_numbers<[1], [0], [0], [1], [0, 0, 1, 1], [], []>} : vector<14x3xf32>, vector<3x128xf32>, vector<14x128xf32> -> vector<14x128xf32>
    %168 = arith.addf %166, %167 : vector<14x128xf32>
    %169 = vector.broadcast %10 : vector<14x1xf32> to vector<14x128xf32>
    %170 = vector.broadcast %165 : vector<1x128xf32> to vector<14x128xf32>
    %171 = arith.mulf %169, %170 : vector<14x128xf32>
    %172 = arith.addf %168, %171 : vector<14x128xf32>
    %173 = arith.mulf %48, %172 : vector<14x128xf32>
    %cst_97 = arith.constant dense<0.000000e+00> : vector<32x128xf32>
    %174 = tpu.matmul %12, %173, %cst_97 {dimension_numbers = #tpu.dot_dimension_numbers<[1], [0], [0], [1], [0, 0, 1, 1], [], []>} : vector<32x14xf32>, vector<14x128xf32>, vector<32x128xf32> -> vector<32x128xf32>
    %175 = arith.mulf %66, %174 : vector<32x128xf32>
    %cst_98 = arith.constant dense<0.000000e+00> : vector<32x16xf32>
    %176 = tpu.matmul %175, %2, %cst_98 {dimension_numbers = #tpu.dot_dimension_numbers<[1], [0], [0], [1], [0, 0, 1, 1], [], []>} : vector<32x128xf32>, vector<128x16xf32>, vector<32x16xf32> -> vector<32x16xf32>
    %cst_99 = arith.constant dense<0.000000e+00> : vector<6x16xf32>
    %177 = tpu.matmul %14, %151, %cst_99 {dimension_numbers = #tpu.dot_dimension_numbers<[1], [0], [0], [1], [0, 0, 1, 1], [], []>} : vector<6x3xf32>, vector<3x16xf32>, vector<6x16xf32> -> vector<6x16xf32>
    %cst_100 = arith.constant dense<0.000000e+00> : vector<6x16xf32>
    %178 = tpu.matmul %16, %176, %cst_100 {dimension_numbers = #tpu.dot_dimension_numbers<[1], [0], [0], [1], [0, 0, 1, 1], [], []>} : vector<6x32xf32>, vector<32x16xf32>, vector<6x16xf32> -> vector<6x16xf32>
    %179 = arith.addf %177, %178 : vector<6x16xf32>
    %180 = arith.mulf %87, %179 : vector<6x16xf32>
    %cst_101 = arith.constant dense<0.000000e+00> : vector<3x16xf32>
    %181 = tpu.matmul %18, %180, %cst_101 {dimension_numbers = #tpu.dot_dimension_numbers<[1], [0], [0], [1], [0, 0, 1, 1], [], []>} : vector<3x6xf32>, vector<6x16xf32>, vector<3x16xf32> -> vector<3x16xf32>
    %182 = arith.addf %181, %151 : vector<3x16xf32>
    %183 = arith.mulf %182, %95 : vector<3x16xf32>
    %cst_102 = arith.constant dense<0.000000e+00> : vector<16xf32>
    %184 = vector.multi_reduction <add>, %183, %cst_102 [0] : vector<3x16xf32> to vector<16xf32>
    %185 = vector.shape_cast %184 : vector<16xf32> to vector<1x16xf32>
    %cst_103 = arith.constant 0.333333343 : f32
    %186 = vector.broadcast %cst_103 : f32 to vector<1x16xf32>
    %187 = arith.mulf %186, %185 : vector<1x16xf32>
    %188 = arith.addf %157, %187 : vector<1x16xf32>
    %189 = arith.addf %3, %93 : vector<3x16xf32>
    %c1 = arith.constant 1 : index
    %c0_104 = arith.constant 0 : index
    %c0_105 = arith.constant 0 : index
    %190 = vector.load %arg6[%c1, %c0_104, %c0_105] : memref<3x14x3xf32, #tpu.memory_space<vmem>>, vector<1x14x3xf32>
    %191 = vector.shape_cast %190 : vector<1x14x3xf32> to vector<14x3xf32>
    %c1_106 = arith.constant 1 : index
    %c0_107 = arith.constant 0 : index
    %c0_108 = arith.constant 0 : index
    %192 = vector.load %arg7[%c1_106, %c0_107, %c0_108] : memref<3x14x3xf32, #tpu.memory_space<vmem>>, vector<1x14x3xf32>
    %193 = vector.shape_cast %192 : vector<1x14x3xf32> to vector<14x3xf32>
    %c1_109 = arith.constant 1 : index
    %c0_110 = arith.constant 0 : index
    %c0_111 = arith.constant 0 : index
    %194 = vector.load %arg8[%c1_109, %c0_110, %c0_111] : memref<3x14x1xf32, #tpu.memory_space<vmem>>, vector<1x14x1xf32>
    %195 = vector.shape_cast %194 : vector<1x14x1xf32> to vector<14x1xf32>
    %c1_112 = arith.constant 1 : index
    %c0_113 = arith.constant 0 : index
    %c0_114 = arith.constant 0 : index
    %196 = vector.load %arg10[%c1_112, %c0_113, %c0_114] : memref<3x32x14xf32, #tpu.memory_space<vmem>>, vector<1x32x14xf32>
    %197 = vector.shape_cast %196 : vector<1x32x14xf32> to vector<32x14xf32>
    %c1_115 = arith.constant 1 : index
    %c0_116 = arith.constant 0 : index
    %c0_117 = arith.constant 0 : index
    %198 = vector.load %arg12[%c1_115, %c0_116, %c0_117] : memref<3x6x3xf32, #tpu.memory_space<vmem>>, vector<1x6x3xf32>
    %199 = vector.shape_cast %198 : vector<1x6x3xf32> to vector<6x3xf32>
    %c1_118 = arith.constant 1 : index
    %c0_119 = arith.constant 0 : index
    %c0_120 = arith.constant 0 : index
    %200 = vector.load %arg13[%c1_118, %c0_119, %c0_120] : memref<3x6x32xf32, #tpu.memory_space<vmem>>, vector<1x6x32xf32>
    %201 = vector.shape_cast %200 : vector<1x6x32xf32> to vector<6x32xf32>
    %c1_121 = arith.constant 1 : index
    %c0_122 = arith.constant 0 : index
    %c0_123 = arith.constant 0 : index
    %202 = vector.load %arg15[%c1_121, %c0_122, %c0_123] : memref<3x3x6xf32, #tpu.memory_space<vmem>>, vector<1x3x6xf32>
    %203 = vector.shape_cast %202 : vector<1x3x6xf32> to vector<3x6xf32>
    %cst_124 = arith.constant dense<0.000000e+00> : vector<3x128xf32>
    %204 = tpu.matmul %189, %0, %cst_124 {dimension_numbers = #tpu.dot_dimension_numbers<[1], [0], [0], [1], [0, 0, 1, 1], [], []>} : vector<3x16xf32>, vector<16x128xf32>, vector<3x128xf32> -> vector<3x128xf32>
    %cst_125 = arith.constant dense<0.000000e+00> : vector<3x128xf32>
    %205 = tpu.matmul %189, %1, %cst_125 {dimension_numbers = #tpu.dot_dimension_numbers<[1], [0], [0], [1], [0, 0, 1, 1], [], []>} : vector<3x16xf32>, vector<16x128xf32>, vector<3x128xf32> -> vector<3x128xf32>
    %206 = arith.subf %204, %205 : vector<3x128xf32>
    %207 = arith.mulf %206, %206 : vector<3x128xf32>
    %cst_126 = arith.constant dense<0.000000e+00> : vector<128xf32>
    %208 = vector.multi_reduction <add>, %207, %cst_126 [0] : vector<3x128xf32> to vector<128xf32>
    %209 = vector.shape_cast %208 : vector<128xf32> to vector<1x128xf32>
    %cst_127 = arith.constant dense<0.000000e+00> : vector<14x128xf32>
    %210 = tpu.matmul %191, %204, %cst_127 {dimension_numbers = #tpu.dot_dimension_numbers<[1], [0], [0], [1], [0, 0, 1, 1], [], []>} : vector<14x3xf32>, vector<3x128xf32>, vector<14x128xf32> -> vector<14x128xf32>
    %cst_128 = arith.constant dense<0.000000e+00> : vector<14x128xf32>
    %211 = tpu.matmul %193, %205, %cst_128 {dimension_numbers = #tpu.dot_dimension_numbers<[1], [0], [0], [1], [0, 0, 1, 1], [], []>} : vector<14x3xf32>, vector<3x128xf32>, vector<14x128xf32> -> vector<14x128xf32>
    %212 = arith.addf %210, %211 : vector<14x128xf32>
    %213 = vector.broadcast %195 : vector<14x1xf32> to vector<14x128xf32>
    %214 = vector.broadcast %209 : vector<1x128xf32> to vector<14x128xf32>
    %215 = arith.mulf %213, %214 : vector<14x128xf32>
    %216 = arith.addf %212, %215 : vector<14x128xf32>
    %c1_129 = arith.constant 1 : index
    %c0_130 = arith.constant 0 : index
    %c0_131 = arith.constant 0 : index
    %217 = vector.load %arg9[%c1_129, %c0_130, %c0_131] : memref<3x14x1xf32, #tpu.memory_space<vmem>>, vector<1x14x1xf32>
    %218 = vector.shape_cast %217 : vector<1x14x1xf32> to vector<14x1xf32>
    %219 = vector.broadcast %218 : vector<14x1xf32> to vector<14x128xf32>
    %220 = arith.addf %216, %219 : vector<14x128xf32>
    %cst_132 = arith.constant 0.000000e+00 : f32
    %221 = vector.broadcast %cst_132 : f32 to vector<14x128xf32>
    %222 = arith.subf %221, %220 : vector<14x128xf32>
    %223 = math.exp %222 : vector<14x128xf32>
    %cst_133 = arith.constant 1.000000e+00 : f32
    %224 = vector.broadcast %cst_133 : f32 to vector<14x128xf32>
    %225 = arith.addf %224, %223 : vector<14x128xf32>
    %226 = tpu.reciprocal %225 {approx = true} : vector<14x128xf32> -> vector<14x128xf32>
    %227 = arith.mulf %220, %226 : vector<14x128xf32>
    %cst_134 = arith.constant 1.000000e+00 : f32
    %228 = vector.broadcast %cst_134 : f32 to vector<14x128xf32>
    %229 = arith.subf %228, %226 : vector<14x128xf32>
    %230 = arith.mulf %220, %229 : vector<14x128xf32>
    %cst_135 = arith.constant 1.000000e+00 : f32
    %231 = vector.broadcast %cst_135 : f32 to vector<14x128xf32>
    %232 = arith.addf %231, %230 : vector<14x128xf32>
    %233 = arith.mulf %226, %232 : vector<14x128xf32>
    %cst_136 = arith.constant dense<0.000000e+00> : vector<32x128xf32>
    %234 = tpu.matmul %197, %227, %cst_136 {dimension_numbers = #tpu.dot_dimension_numbers<[1], [0], [0], [1], [0, 0, 1, 1], [], []>} : vector<32x14xf32>, vector<14x128xf32>, vector<32x128xf32> -> vector<32x128xf32>
    %c1_137 = arith.constant 1 : index
    %c0_138 = arith.constant 0 : index
    %c0_139 = arith.constant 0 : index
    %235 = vector.load %arg11[%c1_137, %c0_138, %c0_139] : memref<3x32x1xf32, #tpu.memory_space<vmem>>, vector<1x32x1xf32>
    %236 = vector.shape_cast %235 : vector<1x32x1xf32> to vector<32x1xf32>
    %237 = vector.broadcast %236 : vector<32x1xf32> to vector<32x128xf32>
    %238 = arith.addf %234, %237 : vector<32x128xf32>
    %cst_140 = arith.constant 0.000000e+00 : f32
    %239 = vector.broadcast %cst_140 : f32 to vector<32x128xf32>
    %240 = arith.subf %239, %238 : vector<32x128xf32>
    %241 = math.exp %240 : vector<32x128xf32>
    %cst_141 = arith.constant 1.000000e+00 : f32
    %242 = vector.broadcast %cst_141 : f32 to vector<32x128xf32>
    %243 = arith.addf %242, %241 : vector<32x128xf32>
    %244 = tpu.reciprocal %243 {approx = true} : vector<32x128xf32> -> vector<32x128xf32>
    %245 = arith.mulf %238, %244 : vector<32x128xf32>
    %cst_142 = arith.constant 1.000000e+00 : f32
    %246 = vector.broadcast %cst_142 : f32 to vector<32x128xf32>
    %247 = arith.subf %246, %244 : vector<32x128xf32>
    %248 = arith.mulf %238, %247 : vector<32x128xf32>
    %cst_143 = arith.constant 1.000000e+00 : f32
    %249 = vector.broadcast %cst_143 : f32 to vector<32x128xf32>
    %250 = arith.addf %249, %248 : vector<32x128xf32>
    %251 = arith.mulf %244, %250 : vector<32x128xf32>
    %cst_144 = arith.constant dense<0.000000e+00> : vector<32x16xf32>
    %252 = tpu.matmul %245, %2, %cst_144 {dimension_numbers = #tpu.dot_dimension_numbers<[1], [0], [0], [1], [0, 0, 1, 1], [], []>} : vector<32x128xf32>, vector<128x16xf32>, vector<32x16xf32> -> vector<32x16xf32>
    %cst_145 = arith.constant dense<0.000000e+00> : vector<6x16xf32>
    %253 = tpu.matmul %199, %189, %cst_145 {dimension_numbers = #tpu.dot_dimension_numbers<[1], [0], [0], [1], [0, 0, 1, 1], [], []>} : vector<6x3xf32>, vector<3x16xf32>, vector<6x16xf32> -> vector<6x16xf32>
    %cst_146 = arith.constant dense<0.000000e+00> : vector<6x16xf32>
    %254 = tpu.matmul %201, %252, %cst_146 {dimension_numbers = #tpu.dot_dimension_numbers<[1], [0], [0], [1], [0, 0, 1, 1], [], []>} : vector<6x32xf32>, vector<32x16xf32>, vector<6x16xf32> -> vector<6x16xf32>
    %255 = arith.addf %253, %254 : vector<6x16xf32>
    %c1_147 = arith.constant 1 : index
    %c0_148 = arith.constant 0 : index
    %c0_149 = arith.constant 0 : index
    %256 = vector.load %arg14[%c1_147, %c0_148, %c0_149] : memref<3x6x1xf32, #tpu.memory_space<vmem>>, vector<1x6x1xf32>
    %257 = vector.shape_cast %256 : vector<1x6x1xf32> to vector<6x1xf32>
    %258 = vector.broadcast %257 : vector<6x1xf32> to vector<6x16xf32>
    %259 = arith.addf %255, %258 : vector<6x16xf32>
    %cst_150 = arith.constant 0.000000e+00 : f32
    %260 = vector.broadcast %cst_150 : f32 to vector<6x16xf32>
    %261 = arith.subf %260, %259 : vector<6x16xf32>
    %262 = math.exp %261 : vector<6x16xf32>
    %cst_151 = arith.constant 1.000000e+00 : f32
    %263 = vector.broadcast %cst_151 : f32 to vector<6x16xf32>
    %264 = arith.addf %263, %262 : vector<6x16xf32>
    %265 = tpu.reciprocal %264 {approx = true} : vector<6x16xf32> -> vector<6x16xf32>
    %266 = arith.mulf %259, %265 : vector<6x16xf32>
    %cst_152 = arith.constant 1.000000e+00 : f32
    %267 = vector.broadcast %cst_152 : f32 to vector<6x16xf32>
    %268 = arith.subf %267, %265 : vector<6x16xf32>
    %269 = arith.mulf %259, %268 : vector<6x16xf32>
    %cst_153 = arith.constant 1.000000e+00 : f32
    %270 = vector.broadcast %cst_153 : f32 to vector<6x16xf32>
    %271 = arith.addf %270, %269 : vector<6x16xf32>
    %272 = arith.mulf %265, %271 : vector<6x16xf32>
    %cst_154 = arith.constant dense<0.000000e+00> : vector<3x16xf32>
    %273 = tpu.matmul %203, %266, %cst_154 {dimension_numbers = #tpu.dot_dimension_numbers<[1], [0], [0], [1], [0, 0, 1, 1], [], []>} : vector<3x6xf32>, vector<6x16xf32>, vector<3x16xf32> -> vector<3x16xf32>
    %c1_155 = arith.constant 1 : index
    %c0_156 = arith.constant 0 : index
    %c0_157 = arith.constant 0 : index
    %274 = vector.load %arg16[%c1_155, %c0_156, %c0_157] : memref<3x3x1xf32, #tpu.memory_space<vmem>>, vector<1x3x1xf32>
    %275 = vector.shape_cast %274 : vector<1x3x1xf32> to vector<3x1xf32>
    %276 = vector.broadcast %275 : vector<3x1xf32> to vector<3x16xf32>
    %277 = arith.addf %273, %276 : vector<3x16xf32>
    %278 = arith.addf %277, %189 : vector<3x16xf32>
    %c1_158 = arith.constant 1 : index
    %c0_159 = arith.constant 0 : index
    %c0_160 = arith.constant 0 : index
    %279 = vector.load %arg2[%c1_158, %c0_159, %c0_160] : memref<3x3x16xf32, #tpu.memory_space<vmem>>, vector<1x3x16xf32>
    %280 = vector.shape_cast %279 : vector<1x3x16xf32> to vector<3x16xf32>
    %cst_161 = arith.constant dense<0.000000e+00> : vector<3x128xf32>
    %281 = tpu.matmul %280, %0, %cst_161 {dimension_numbers = #tpu.dot_dimension_numbers<[1], [0], [0], [1], [0, 0, 1, 1], [], []>} : vector<3x16xf32>, vector<16x128xf32>, vector<3x128xf32> -> vector<3x128xf32>
    %cst_162 = arith.constant dense<0.000000e+00> : vector<3x128xf32>
    %282 = tpu.matmul %280, %1, %cst_162 {dimension_numbers = #tpu.dot_dimension_numbers<[1], [0], [0], [1], [0, 0, 1, 1], [], []>} : vector<3x16xf32>, vector<16x128xf32>, vector<3x128xf32> -> vector<3x128xf32>
    %283 = arith.subf %281, %282 : vector<3x128xf32>
    %284 = arith.mulf %206, %283 : vector<3x128xf32>
    %cst_163 = arith.constant dense<0.000000e+00> : vector<128xf32>
    %285 = vector.multi_reduction <add>, %284, %cst_163 [0] : vector<3x128xf32> to vector<128xf32>
    %286 = vector.shape_cast %285 : vector<128xf32> to vector<1x128xf32>
    %cst_164 = arith.constant 2.000000e+00 : f32
    %287 = vector.broadcast %cst_164 : f32 to vector<1x128xf32>
    %288 = arith.mulf %287, %286 : vector<1x128xf32>
    %cst_165 = arith.constant dense<0.000000e+00> : vector<14x128xf32>
    %289 = tpu.matmul %191, %281, %cst_165 {dimension_numbers = #tpu.dot_dimension_numbers<[1], [0], [0], [1], [0, 0, 1, 1], [], []>} : vector<14x3xf32>, vector<3x128xf32>, vector<14x128xf32> -> vector<14x128xf32>
    %cst_166 = arith.constant dense<0.000000e+00> : vector<14x128xf32>
    %290 = tpu.matmul %193, %282, %cst_166 {dimension_numbers = #tpu.dot_dimension_numbers<[1], [0], [0], [1], [0, 0, 1, 1], [], []>} : vector<14x3xf32>, vector<3x128xf32>, vector<14x128xf32> -> vector<14x128xf32>
    %291 = arith.addf %289, %290 : vector<14x128xf32>
    %292 = vector.broadcast %195 : vector<14x1xf32> to vector<14x128xf32>
    %293 = vector.broadcast %288 : vector<1x128xf32> to vector<14x128xf32>
    %294 = arith.mulf %292, %293 : vector<14x128xf32>
    %295 = arith.addf %291, %294 : vector<14x128xf32>
    %296 = arith.mulf %233, %295 : vector<14x128xf32>
    %cst_167 = arith.constant dense<0.000000e+00> : vector<32x128xf32>
    %297 = tpu.matmul %197, %296, %cst_167 {dimension_numbers = #tpu.dot_dimension_numbers<[1], [0], [0], [1], [0, 0, 1, 1], [], []>} : vector<32x14xf32>, vector<14x128xf32>, vector<32x128xf32> -> vector<32x128xf32>
    %298 = arith.mulf %251, %297 : vector<32x128xf32>
    %cst_168 = arith.constant dense<0.000000e+00> : vector<32x16xf32>
    %299 = tpu.matmul %298, %2, %cst_168 {dimension_numbers = #tpu.dot_dimension_numbers<[1], [0], [0], [1], [0, 0, 1, 1], [], []>} : vector<32x128xf32>, vector<128x16xf32>, vector<32x16xf32> -> vector<32x16xf32>
    %cst_169 = arith.constant dense<0.000000e+00> : vector<6x16xf32>
    %300 = tpu.matmul %199, %280, %cst_169 {dimension_numbers = #tpu.dot_dimension_numbers<[1], [0], [0], [1], [0, 0, 1, 1], [], []>} : vector<6x3xf32>, vector<3x16xf32>, vector<6x16xf32> -> vector<6x16xf32>
    %cst_170 = arith.constant dense<0.000000e+00> : vector<6x16xf32>
    %301 = tpu.matmul %201, %299, %cst_170 {dimension_numbers = #tpu.dot_dimension_numbers<[1], [0], [0], [1], [0, 0, 1, 1], [], []>} : vector<6x32xf32>, vector<32x16xf32>, vector<6x16xf32> -> vector<6x16xf32>
    %302 = arith.addf %300, %301 : vector<6x16xf32>
    %303 = arith.mulf %272, %302 : vector<6x16xf32>
    %cst_171 = arith.constant dense<0.000000e+00> : vector<3x16xf32>
    %304 = tpu.matmul %203, %303, %cst_171 {dimension_numbers = #tpu.dot_dimension_numbers<[1], [0], [0], [1], [0, 0, 1, 1], [], []>} : vector<3x6xf32>, vector<6x16xf32>, vector<3x16xf32> -> vector<3x16xf32>
    %305 = arith.addf %304, %280 : vector<3x16xf32>
    %306 = arith.mulf %305, %280 : vector<3x16xf32>
    %cst_172 = arith.constant dense<0.000000e+00> : vector<16xf32>
    %307 = vector.multi_reduction <add>, %306, %cst_172 [0] : vector<3x16xf32> to vector<16xf32>
    %308 = vector.shape_cast %307 : vector<16xf32> to vector<1x16xf32>
    %cst_173 = arith.constant 1.000000e+00 : f32
    %309 = vector.broadcast %cst_173 : f32 to vector<1x16xf32>
    %310 = arith.mulf %309, %308 : vector<1x16xf32>
    %311 = arith.addf %188, %310 : vector<1x16xf32>
    %cst_174 = arith.constant dense<0.000000e+00> : vector<3x128xf32>
    %312 = tpu.matmul %305, %0, %cst_174 {dimension_numbers = #tpu.dot_dimension_numbers<[1], [0], [0], [1], [0, 0, 1, 1], [], []>} : vector<3x16xf32>, vector<16x128xf32>, vector<3x128xf32> -> vector<3x128xf32>
    %cst_175 = arith.constant dense<0.000000e+00> : vector<3x128xf32>
    %313 = tpu.matmul %305, %1, %cst_175 {dimension_numbers = #tpu.dot_dimension_numbers<[1], [0], [0], [1], [0, 0, 1, 1], [], []>} : vector<3x16xf32>, vector<16x128xf32>, vector<3x128xf32> -> vector<3x128xf32>
    %314 = arith.subf %312, %313 : vector<3x128xf32>
    %315 = arith.mulf %206, %314 : vector<3x128xf32>
    %cst_176 = arith.constant dense<0.000000e+00> : vector<128xf32>
    %316 = vector.multi_reduction <add>, %315, %cst_176 [0] : vector<3x128xf32> to vector<128xf32>
    %317 = vector.shape_cast %316 : vector<128xf32> to vector<1x128xf32>
    %cst_177 = arith.constant 2.000000e+00 : f32
    %318 = vector.broadcast %cst_177 : f32 to vector<1x128xf32>
    %319 = arith.mulf %318, %317 : vector<1x128xf32>
    %cst_178 = arith.constant dense<0.000000e+00> : vector<14x128xf32>
    %320 = tpu.matmul %191, %312, %cst_178 {dimension_numbers = #tpu.dot_dimension_numbers<[1], [0], [0], [1], [0, 0, 1, 1], [], []>} : vector<14x3xf32>, vector<3x128xf32>, vector<14x128xf32> -> vector<14x128xf32>
    %cst_179 = arith.constant dense<0.000000e+00> : vector<14x128xf32>
    %321 = tpu.matmul %193, %313, %cst_179 {dimension_numbers = #tpu.dot_dimension_numbers<[1], [0], [0], [1], [0, 0, 1, 1], [], []>} : vector<14x3xf32>, vector<3x128xf32>, vector<14x128xf32> -> vector<14x128xf32>
    %322 = arith.addf %320, %321 : vector<14x128xf32>
    %323 = vector.broadcast %195 : vector<14x1xf32> to vector<14x128xf32>
    %324 = vector.broadcast %319 : vector<1x128xf32> to vector<14x128xf32>
    %325 = arith.mulf %323, %324 : vector<14x128xf32>
    %326 = arith.addf %322, %325 : vector<14x128xf32>
    %327 = arith.mulf %233, %326 : vector<14x128xf32>
    %cst_180 = arith.constant dense<0.000000e+00> : vector<32x128xf32>
    %328 = tpu.matmul %197, %327, %cst_180 {dimension_numbers = #tpu.dot_dimension_numbers<[1], [0], [0], [1], [0, 0, 1, 1], [], []>} : vector<32x14xf32>, vector<14x128xf32>, vector<32x128xf32> -> vector<32x128xf32>
    %329 = arith.mulf %251, %328 : vector<32x128xf32>
    %cst_181 = arith.constant dense<0.000000e+00> : vector<32x16xf32>
    %330 = tpu.matmul %329, %2, %cst_181 {dimension_numbers = #tpu.dot_dimension_numbers<[1], [0], [0], [1], [0, 0, 1, 1], [], []>} : vector<32x128xf32>, vector<128x16xf32>, vector<32x16xf32> -> vector<32x16xf32>
    %cst_182 = arith.constant dense<0.000000e+00> : vector<6x16xf32>
    %331 = tpu.matmul %199, %305, %cst_182 {dimension_numbers = #tpu.dot_dimension_numbers<[1], [0], [0], [1], [0, 0, 1, 1], [], []>} : vector<6x3xf32>, vector<3x16xf32>, vector<6x16xf32> -> vector<6x16xf32>
    %cst_183 = arith.constant dense<0.000000e+00> : vector<6x16xf32>
    %332 = tpu.matmul %201, %330, %cst_183 {dimension_numbers = #tpu.dot_dimension_numbers<[1], [0], [0], [1], [0, 0, 1, 1], [], []>} : vector<6x32xf32>, vector<32x16xf32>, vector<6x16xf32> -> vector<6x16xf32>
    %333 = arith.addf %331, %332 : vector<6x16xf32>
    %334 = arith.mulf %272, %333 : vector<6x16xf32>
    %cst_184 = arith.constant dense<0.000000e+00> : vector<3x16xf32>
    %335 = tpu.matmul %203, %334, %cst_184 {dimension_numbers = #tpu.dot_dimension_numbers<[1], [0], [0], [1], [0, 0, 1, 1], [], []>} : vector<3x6xf32>, vector<6x16xf32>, vector<3x16xf32> -> vector<3x16xf32>
    %336 = arith.addf %335, %305 : vector<3x16xf32>
    %337 = arith.mulf %336, %280 : vector<3x16xf32>
    %cst_185 = arith.constant dense<0.000000e+00> : vector<16xf32>
    %338 = vector.multi_reduction <add>, %337, %cst_185 [0] : vector<3x16xf32> to vector<16xf32>
    %339 = vector.shape_cast %338 : vector<16xf32> to vector<1x16xf32>
    %cst_186 = arith.constant -5.000000e-01 : f32
    %340 = vector.broadcast %cst_186 : f32 to vector<1x16xf32>
    %341 = arith.mulf %340, %339 : vector<1x16xf32>
    %342 = arith.addf %311, %341 : vector<1x16xf32>
    %cst_187 = arith.constant dense<0.000000e+00> : vector<3x128xf32>
    %343 = tpu.matmul %336, %0, %cst_187 {dimension_numbers = #tpu.dot_dimension_numbers<[1], [0], [0], [1], [0, 0, 1, 1], [], []>} : vector<3x16xf32>, vector<16x128xf32>, vector<3x128xf32> -> vector<3x128xf32>
    %cst_188 = arith.constant dense<0.000000e+00> : vector<3x128xf32>
    %344 = tpu.matmul %336, %1, %cst_188 {dimension_numbers = #tpu.dot_dimension_numbers<[1], [0], [0], [1], [0, 0, 1, 1], [], []>} : vector<3x16xf32>, vector<16x128xf32>, vector<3x128xf32> -> vector<3x128xf32>
    %345 = arith.subf %343, %344 : vector<3x128xf32>
    %346 = arith.mulf %206, %345 : vector<3x128xf32>
    %cst_189 = arith.constant dense<0.000000e+00> : vector<128xf32>
    %347 = vector.multi_reduction <add>, %346, %cst_189 [0] : vector<3x128xf32> to vector<128xf32>
    %348 = vector.shape_cast %347 : vector<128xf32> to vector<1x128xf32>
    %cst_190 = arith.constant 2.000000e+00 : f32
    %349 = vector.broadcast %cst_190 : f32 to vector<1x128xf32>
    %350 = arith.mulf %349, %348 : vector<1x128xf32>
    %cst_191 = arith.constant dense<0.000000e+00> : vector<14x128xf32>
    %351 = tpu.matmul %191, %343, %cst_191 {dimension_numbers = #tpu.dot_dimension_numbers<[1], [0], [0], [1], [0, 0, 1, 1], [], []>} : vector<14x3xf32>, vector<3x128xf32>, vector<14x128xf32> -> vector<14x128xf32>
    %cst_192 = arith.constant dense<0.000000e+00> : vector<14x128xf32>
    %352 = tpu.matmul %193, %344, %cst_192 {dimension_numbers = #tpu.dot_dimension_numbers<[1], [0], [0], [1], [0, 0, 1, 1], [], []>} : vector<14x3xf32>, vector<3x128xf32>, vector<14x128xf32> -> vector<14x128xf32>
    %353 = arith.addf %351, %352 : vector<14x128xf32>
    %354 = vector.broadcast %195 : vector<14x1xf32> to vector<14x128xf32>
    %355 = vector.broadcast %350 : vector<1x128xf32> to vector<14x128xf32>
    %356 = arith.mulf %354, %355 : vector<14x128xf32>
    %357 = arith.addf %353, %356 : vector<14x128xf32>
    %358 = arith.mulf %233, %357 : vector<14x128xf32>
    %cst_193 = arith.constant dense<0.000000e+00> : vector<32x128xf32>
    %359 = tpu.matmul %197, %358, %cst_193 {dimension_numbers = #tpu.dot_dimension_numbers<[1], [0], [0], [1], [0, 0, 1, 1], [], []>} : vector<32x14xf32>, vector<14x128xf32>, vector<32x128xf32> -> vector<32x128xf32>
    %360 = arith.mulf %251, %359 : vector<32x128xf32>
    %cst_194 = arith.constant dense<0.000000e+00> : vector<32x16xf32>
    %361 = tpu.matmul %360, %2, %cst_194 {dimension_numbers = #tpu.dot_dimension_numbers<[1], [0], [0], [1], [0, 0, 1, 1], [], []>} : vector<32x128xf32>, vector<128x16xf32>, vector<32x16xf32> -> vector<32x16xf32>
    %cst_195 = arith.constant dense<0.000000e+00> : vector<6x16xf32>
    %362 = tpu.matmul %199, %336, %cst_195 {dimension_numbers = #tpu.dot_dimension_numbers<[1], [0], [0], [1], [0, 0, 1, 1], [], []>} : vector<6x3xf32>, vector<3x16xf32>, vector<6x16xf32> -> vector<6x16xf32>
    %cst_196 = arith.constant dense<0.000000e+00> : vector<6x16xf32>
    %363 = tpu.matmul %201, %361, %cst_196 {dimension_numbers = #tpu.dot_dimension_numbers<[1], [0], [0], [1], [0, 0, 1, 1], [], []>} : vector<6x32xf32>, vector<32x16xf32>, vector<6x16xf32> -> vector<6x16xf32>
    %364 = arith.addf %362, %363 : vector<6x16xf32>
    %365 = arith.mulf %272, %364 : vector<6x16xf32>
    %cst_197 = arith.constant dense<0.000000e+00> : vector<3x16xf32>
    %366 = tpu.matmul %203, %365, %cst_197 {dimension_numbers = #tpu.dot_dimension_numbers<[1], [0], [0], [1], [0, 0, 1, 1], [], []>} : vector<3x6xf32>, vector<6x16xf32>, vector<3x16xf32> -> vector<3x16xf32>
    %367 = arith.addf %366, %336 : vector<3x16xf32>
    %368 = arith.mulf %367, %280 : vector<3x16xf32>
    %cst_198 = arith.constant dense<0.000000e+00> : vector<16xf32>
    %369 = vector.multi_reduction <add>, %368, %cst_198 [0] : vector<3x16xf32> to vector<16xf32>
    %370 = vector.shape_cast %369 : vector<16xf32> to vector<1x16xf32>
    %cst_199 = arith.constant 0.333333343 : f32
    %371 = vector.broadcast %cst_199 : f32 to vector<1x16xf32>
    %372 = arith.mulf %371, %370 : vector<1x16xf32>
    %373 = arith.addf %342, %372 : vector<1x16xf32>
    %374 = arith.addf %189, %278 : vector<3x16xf32>
    %c2 = arith.constant 2 : index
    %c0_200 = arith.constant 0 : index
    %c0_201 = arith.constant 0 : index
    %375 = vector.load %arg6[%c2, %c0_200, %c0_201] : memref<3x14x3xf32, #tpu.memory_space<vmem>>, vector<1x14x3xf32>
    %376 = vector.shape_cast %375 : vector<1x14x3xf32> to vector<14x3xf32>
    %c2_202 = arith.constant 2 : index
    %c0_203 = arith.constant 0 : index
    %c0_204 = arith.constant 0 : index
    %377 = vector.load %arg7[%c2_202, %c0_203, %c0_204] : memref<3x14x3xf32, #tpu.memory_space<vmem>>, vector<1x14x3xf32>
    %378 = vector.shape_cast %377 : vector<1x14x3xf32> to vector<14x3xf32>
    %c2_205 = arith.constant 2 : index
    %c0_206 = arith.constant 0 : index
    %c0_207 = arith.constant 0 : index
    %379 = vector.load %arg8[%c2_205, %c0_206, %c0_207] : memref<3x14x1xf32, #tpu.memory_space<vmem>>, vector<1x14x1xf32>
    %380 = vector.shape_cast %379 : vector<1x14x1xf32> to vector<14x1xf32>
    %c2_208 = arith.constant 2 : index
    %c0_209 = arith.constant 0 : index
    %c0_210 = arith.constant 0 : index
    %381 = vector.load %arg10[%c2_208, %c0_209, %c0_210] : memref<3x32x14xf32, #tpu.memory_space<vmem>>, vector<1x32x14xf32>
    %382 = vector.shape_cast %381 : vector<1x32x14xf32> to vector<32x14xf32>
    %c2_211 = arith.constant 2 : index
    %c0_212 = arith.constant 0 : index
    %c0_213 = arith.constant 0 : index
    %383 = vector.load %arg12[%c2_211, %c0_212, %c0_213] : memref<3x6x3xf32, #tpu.memory_space<vmem>>, vector<1x6x3xf32>
    %384 = vector.shape_cast %383 : vector<1x6x3xf32> to vector<6x3xf32>
    %c2_214 = arith.constant 2 : index
    %c0_215 = arith.constant 0 : index
    %c0_216 = arith.constant 0 : index
    %385 = vector.load %arg13[%c2_214, %c0_215, %c0_216] : memref<3x6x32xf32, #tpu.memory_space<vmem>>, vector<1x6x32xf32>
    %386 = vector.shape_cast %385 : vector<1x6x32xf32> to vector<6x32xf32>
    %c2_217 = arith.constant 2 : index
    %c0_218 = arith.constant 0 : index
    %c0_219 = arith.constant 0 : index
    %387 = vector.load %arg15[%c2_217, %c0_218, %c0_219] : memref<3x3x6xf32, #tpu.memory_space<vmem>>, vector<1x3x6xf32>
    %388 = vector.shape_cast %387 : vector<1x3x6xf32> to vector<3x6xf32>
    %cst_220 = arith.constant dense<0.000000e+00> : vector<3x128xf32>
    %389 = tpu.matmul %374, %0, %cst_220 {dimension_numbers = #tpu.dot_dimension_numbers<[1], [0], [0], [1], [0, 0, 1, 1], [], []>} : vector<3x16xf32>, vector<16x128xf32>, vector<3x128xf32> -> vector<3x128xf32>
    %cst_221 = arith.constant dense<0.000000e+00> : vector<3x128xf32>
    %390 = tpu.matmul %374, %1, %cst_221 {dimension_numbers = #tpu.dot_dimension_numbers<[1], [0], [0], [1], [0, 0, 1, 1], [], []>} : vector<3x16xf32>, vector<16x128xf32>, vector<3x128xf32> -> vector<3x128xf32>
    %391 = arith.subf %389, %390 : vector<3x128xf32>
    %392 = arith.mulf %391, %391 : vector<3x128xf32>
    %cst_222 = arith.constant dense<0.000000e+00> : vector<128xf32>
    %393 = vector.multi_reduction <add>, %392, %cst_222 [0] : vector<3x128xf32> to vector<128xf32>
    %394 = vector.shape_cast %393 : vector<128xf32> to vector<1x128xf32>
    %cst_223 = arith.constant dense<0.000000e+00> : vector<14x128xf32>
    %395 = tpu.matmul %376, %389, %cst_223 {dimension_numbers = #tpu.dot_dimension_numbers<[1], [0], [0], [1], [0, 0, 1, 1], [], []>} : vector<14x3xf32>, vector<3x128xf32>, vector<14x128xf32> -> vector<14x128xf32>
    %cst_224 = arith.constant dense<0.000000e+00> : vector<14x128xf32>
    %396 = tpu.matmul %378, %390, %cst_224 {dimension_numbers = #tpu.dot_dimension_numbers<[1], [0], [0], [1], [0, 0, 1, 1], [], []>} : vector<14x3xf32>, vector<3x128xf32>, vector<14x128xf32> -> vector<14x128xf32>
    %397 = arith.addf %395, %396 : vector<14x128xf32>
    %398 = vector.broadcast %380 : vector<14x1xf32> to vector<14x128xf32>
    %399 = vector.broadcast %394 : vector<1x128xf32> to vector<14x128xf32>
    %400 = arith.mulf %398, %399 : vector<14x128xf32>
    %401 = arith.addf %397, %400 : vector<14x128xf32>
    %c2_225 = arith.constant 2 : index
    %c0_226 = arith.constant 0 : index
    %c0_227 = arith.constant 0 : index
    %402 = vector.load %arg9[%c2_225, %c0_226, %c0_227] : memref<3x14x1xf32, #tpu.memory_space<vmem>>, vector<1x14x1xf32>
    %403 = vector.shape_cast %402 : vector<1x14x1xf32> to vector<14x1xf32>
    %404 = vector.broadcast %403 : vector<14x1xf32> to vector<14x128xf32>
    %405 = arith.addf %401, %404 : vector<14x128xf32>
    %cst_228 = arith.constant 0.000000e+00 : f32
    %406 = vector.broadcast %cst_228 : f32 to vector<14x128xf32>
    %407 = arith.subf %406, %405 : vector<14x128xf32>
    %408 = math.exp %407 : vector<14x128xf32>
    %cst_229 = arith.constant 1.000000e+00 : f32
    %409 = vector.broadcast %cst_229 : f32 to vector<14x128xf32>
    %410 = arith.addf %409, %408 : vector<14x128xf32>
    %411 = tpu.reciprocal %410 {approx = true} : vector<14x128xf32> -> vector<14x128xf32>
    %412 = arith.mulf %405, %411 : vector<14x128xf32>
    %cst_230 = arith.constant 1.000000e+00 : f32
    %413 = vector.broadcast %cst_230 : f32 to vector<14x128xf32>
    %414 = arith.subf %413, %411 : vector<14x128xf32>
    %415 = arith.mulf %405, %414 : vector<14x128xf32>
    %cst_231 = arith.constant 1.000000e+00 : f32
    %416 = vector.broadcast %cst_231 : f32 to vector<14x128xf32>
    %417 = arith.addf %416, %415 : vector<14x128xf32>
    %418 = arith.mulf %411, %417 : vector<14x128xf32>
    %cst_232 = arith.constant dense<0.000000e+00> : vector<32x128xf32>
    %419 = tpu.matmul %382, %412, %cst_232 {dimension_numbers = #tpu.dot_dimension_numbers<[1], [0], [0], [1], [0, 0, 1, 1], [], []>} : vector<32x14xf32>, vector<14x128xf32>, vector<32x128xf32> -> vector<32x128xf32>
    %c2_233 = arith.constant 2 : index
    %c0_234 = arith.constant 0 : index
    %c0_235 = arith.constant 0 : index
    %420 = vector.load %arg11[%c2_233, %c0_234, %c0_235] : memref<3x32x1xf32, #tpu.memory_space<vmem>>, vector<1x32x1xf32>
    %421 = vector.shape_cast %420 : vector<1x32x1xf32> to vector<32x1xf32>
    %422 = vector.broadcast %421 : vector<32x1xf32> to vector<32x128xf32>
    %423 = arith.addf %419, %422 : vector<32x128xf32>
    %cst_236 = arith.constant 0.000000e+00 : f32
    %424 = vector.broadcast %cst_236 : f32 to vector<32x128xf32>
    %425 = arith.subf %424, %423 : vector<32x128xf32>
    %426 = math.exp %425 : vector<32x128xf32>
    %cst_237 = arith.constant 1.000000e+00 : f32
    %427 = vector.broadcast %cst_237 : f32 to vector<32x128xf32>
    %428 = arith.addf %427, %426 : vector<32x128xf32>
    %429 = tpu.reciprocal %428 {approx = true} : vector<32x128xf32> -> vector<32x128xf32>
    %430 = arith.mulf %423, %429 : vector<32x128xf32>
    %cst_238 = arith.constant 1.000000e+00 : f32
    %431 = vector.broadcast %cst_238 : f32 to vector<32x128xf32>
    %432 = arith.subf %431, %429 : vector<32x128xf32>
    %433 = arith.mulf %423, %432 : vector<32x128xf32>
    %cst_239 = arith.constant 1.000000e+00 : f32
    %434 = vector.broadcast %cst_239 : f32 to vector<32x128xf32>
    %435 = arith.addf %434, %433 : vector<32x128xf32>
    %436 = arith.mulf %429, %435 : vector<32x128xf32>
    %cst_240 = arith.constant dense<0.000000e+00> : vector<32x16xf32>
    %437 = tpu.matmul %430, %2, %cst_240 {dimension_numbers = #tpu.dot_dimension_numbers<[1], [0], [0], [1], [0, 0, 1, 1], [], []>} : vector<32x128xf32>, vector<128x16xf32>, vector<32x16xf32> -> vector<32x16xf32>
    %cst_241 = arith.constant dense<0.000000e+00> : vector<6x16xf32>
    %438 = tpu.matmul %384, %374, %cst_241 {dimension_numbers = #tpu.dot_dimension_numbers<[1], [0], [0], [1], [0, 0, 1, 1], [], []>} : vector<6x3xf32>, vector<3x16xf32>, vector<6x16xf32> -> vector<6x16xf32>
    %cst_242 = arith.constant dense<0.000000e+00> : vector<6x16xf32>
    %439 = tpu.matmul %386, %437, %cst_242 {dimension_numbers = #tpu.dot_dimension_numbers<[1], [0], [0], [1], [0, 0, 1, 1], [], []>} : vector<6x32xf32>, vector<32x16xf32>, vector<6x16xf32> -> vector<6x16xf32>
    %440 = arith.addf %438, %439 : vector<6x16xf32>
    %c2_243 = arith.constant 2 : index
    %c0_244 = arith.constant 0 : index
    %c0_245 = arith.constant 0 : index
    %441 = vector.load %arg14[%c2_243, %c0_244, %c0_245] : memref<3x6x1xf32, #tpu.memory_space<vmem>>, vector<1x6x1xf32>
    %442 = vector.shape_cast %441 : vector<1x6x1xf32> to vector<6x1xf32>
    %443 = vector.broadcast %442 : vector<6x1xf32> to vector<6x16xf32>
    %444 = arith.addf %440, %443 : vector<6x16xf32>
    %cst_246 = arith.constant 0.000000e+00 : f32
    %445 = vector.broadcast %cst_246 : f32 to vector<6x16xf32>
    %446 = arith.subf %445, %444 : vector<6x16xf32>
    %447 = math.exp %446 : vector<6x16xf32>
    %cst_247 = arith.constant 1.000000e+00 : f32
    %448 = vector.broadcast %cst_247 : f32 to vector<6x16xf32>
    %449 = arith.addf %448, %447 : vector<6x16xf32>
    %450 = tpu.reciprocal %449 {approx = true} : vector<6x16xf32> -> vector<6x16xf32>
    %451 = arith.mulf %444, %450 : vector<6x16xf32>
    %cst_248 = arith.constant 1.000000e+00 : f32
    %452 = vector.broadcast %cst_248 : f32 to vector<6x16xf32>
    %453 = arith.subf %452, %450 : vector<6x16xf32>
    %454 = arith.mulf %444, %453 : vector<6x16xf32>
    %cst_249 = arith.constant 1.000000e+00 : f32
    %455 = vector.broadcast %cst_249 : f32 to vector<6x16xf32>
    %456 = arith.addf %455, %454 : vector<6x16xf32>
    %457 = arith.mulf %450, %456 : vector<6x16xf32>
    %cst_250 = arith.constant dense<0.000000e+00> : vector<3x16xf32>
    %458 = tpu.matmul %388, %451, %cst_250 {dimension_numbers = #tpu.dot_dimension_numbers<[1], [0], [0], [1], [0, 0, 1, 1], [], []>} : vector<3x6xf32>, vector<6x16xf32>, vector<3x16xf32> -> vector<3x16xf32>
    %c2_251 = arith.constant 2 : index
    %c0_252 = arith.constant 0 : index
    %c0_253 = arith.constant 0 : index
    %459 = vector.load %arg16[%c2_251, %c0_252, %c0_253] : memref<3x3x1xf32, #tpu.memory_space<vmem>>, vector<1x3x1xf32>
    %460 = vector.shape_cast %459 : vector<1x3x1xf32> to vector<3x1xf32>
    %461 = vector.broadcast %460 : vector<3x1xf32> to vector<3x16xf32>
    %462 = arith.addf %458, %461 : vector<3x16xf32>
    %463 = arith.addf %462, %374 : vector<3x16xf32>
    %c2_254 = arith.constant 2 : index
    %c0_255 = arith.constant 0 : index
    %c0_256 = arith.constant 0 : index
    %464 = vector.load %arg2[%c2_254, %c0_255, %c0_256] : memref<3x3x16xf32, #tpu.memory_space<vmem>>, vector<1x3x16xf32>
    %465 = vector.shape_cast %464 : vector<1x3x16xf32> to vector<3x16xf32>
    %cst_257 = arith.constant dense<0.000000e+00> : vector<3x128xf32>
    %466 = tpu.matmul %465, %0, %cst_257 {dimension_numbers = #tpu.dot_dimension_numbers<[1], [0], [0], [1], [0, 0, 1, 1], [], []>} : vector<3x16xf32>, vector<16x128xf32>, vector<3x128xf32> -> vector<3x128xf32>
    %cst_258 = arith.constant dense<0.000000e+00> : vector<3x128xf32>
    %467 = tpu.matmul %465, %1, %cst_258 {dimension_numbers = #tpu.dot_dimension_numbers<[1], [0], [0], [1], [0, 0, 1, 1], [], []>} : vector<3x16xf32>, vector<16x128xf32>, vector<3x128xf32> -> vector<3x128xf32>
    %468 = arith.subf %466, %467 : vector<3x128xf32>
    %469 = arith.mulf %391, %468 : vector<3x128xf32>
    %cst_259 = arith.constant dense<0.000000e+00> : vector<128xf32>
    %470 = vector.multi_reduction <add>, %469, %cst_259 [0] : vector<3x128xf32> to vector<128xf32>
    %471 = vector.shape_cast %470 : vector<128xf32> to vector<1x128xf32>
    %cst_260 = arith.constant 2.000000e+00 : f32
    %472 = vector.broadcast %cst_260 : f32 to vector<1x128xf32>
    %473 = arith.mulf %472, %471 : vector<1x128xf32>
    %cst_261 = arith.constant dense<0.000000e+00> : vector<14x128xf32>
    %474 = tpu.matmul %376, %466, %cst_261 {dimension_numbers = #tpu.dot_dimension_numbers<[1], [0], [0], [1], [0, 0, 1, 1], [], []>} : vector<14x3xf32>, vector<3x128xf32>, vector<14x128xf32> -> vector<14x128xf32>
    %cst_262 = arith.constant dense<0.000000e+00> : vector<14x128xf32>
    %475 = tpu.matmul %378, %467, %cst_262 {dimension_numbers = #tpu.dot_dimension_numbers<[1], [0], [0], [1], [0, 0, 1, 1], [], []>} : vector<14x3xf32>, vector<3x128xf32>, vector<14x128xf32> -> vector<14x128xf32>
    %476 = arith.addf %474, %475 : vector<14x128xf32>
    %477 = vector.broadcast %380 : vector<14x1xf32> to vector<14x128xf32>
    %478 = vector.broadcast %473 : vector<1x128xf32> to vector<14x128xf32>
    %479 = arith.mulf %477, %478 : vector<14x128xf32>
    %480 = arith.addf %476, %479 : vector<14x128xf32>
    %481 = arith.mulf %418, %480 : vector<14x128xf32>
    %cst_263 = arith.constant dense<0.000000e+00> : vector<32x128xf32>
    %482 = tpu.matmul %382, %481, %cst_263 {dimension_numbers = #tpu.dot_dimension_numbers<[1], [0], [0], [1], [0, 0, 1, 1], [], []>} : vector<32x14xf32>, vector<14x128xf32>, vector<32x128xf32> -> vector<32x128xf32>
    %483 = arith.mulf %436, %482 : vector<32x128xf32>
    %cst_264 = arith.constant dense<0.000000e+00> : vector<32x16xf32>
    %484 = tpu.matmul %483, %2, %cst_264 {dimension_numbers = #tpu.dot_dimension_numbers<[1], [0], [0], [1], [0, 0, 1, 1], [], []>} : vector<32x128xf32>, vector<128x16xf32>, vector<32x16xf32> -> vector<32x16xf32>
    %cst_265 = arith.constant dense<0.000000e+00> : vector<6x16xf32>
    %485 = tpu.matmul %384, %465, %cst_265 {dimension_numbers = #tpu.dot_dimension_numbers<[1], [0], [0], [1], [0, 0, 1, 1], [], []>} : vector<6x3xf32>, vector<3x16xf32>, vector<6x16xf32> -> vector<6x16xf32>
    %cst_266 = arith.constant dense<0.000000e+00> : vector<6x16xf32>
    %486 = tpu.matmul %386, %484, %cst_266 {dimension_numbers = #tpu.dot_dimension_numbers<[1], [0], [0], [1], [0, 0, 1, 1], [], []>} : vector<6x32xf32>, vector<32x16xf32>, vector<6x16xf32> -> vector<6x16xf32>
    %487 = arith.addf %485, %486 : vector<6x16xf32>
    %488 = arith.mulf %457, %487 : vector<6x16xf32>
    %cst_267 = arith.constant dense<0.000000e+00> : vector<3x16xf32>
    %489 = tpu.matmul %388, %488, %cst_267 {dimension_numbers = #tpu.dot_dimension_numbers<[1], [0], [0], [1], [0, 0, 1, 1], [], []>} : vector<3x6xf32>, vector<6x16xf32>, vector<3x16xf32> -> vector<3x16xf32>
    %490 = arith.addf %489, %465 : vector<3x16xf32>
    %491 = arith.mulf %490, %465 : vector<3x16xf32>
    %cst_268 = arith.constant dense<0.000000e+00> : vector<16xf32>
    %492 = vector.multi_reduction <add>, %491, %cst_268 [0] : vector<3x16xf32> to vector<16xf32>
    %493 = vector.shape_cast %492 : vector<16xf32> to vector<1x16xf32>
    %cst_269 = arith.constant 1.000000e+00 : f32
    %494 = vector.broadcast %cst_269 : f32 to vector<1x16xf32>
    %495 = arith.mulf %494, %493 : vector<1x16xf32>
    %496 = arith.addf %373, %495 : vector<1x16xf32>
    %cst_270 = arith.constant dense<0.000000e+00> : vector<3x128xf32>
    %497 = tpu.matmul %490, %0, %cst_270 {dimension_numbers = #tpu.dot_dimension_numbers<[1], [0], [0], [1], [0, 0, 1, 1], [], []>} : vector<3x16xf32>, vector<16x128xf32>, vector<3x128xf32> -> vector<3x128xf32>
    %cst_271 = arith.constant dense<0.000000e+00> : vector<3x128xf32>
    %498 = tpu.matmul %490, %1, %cst_271 {dimension_numbers = #tpu.dot_dimension_numbers<[1], [0], [0], [1], [0, 0, 1, 1], [], []>} : vector<3x16xf32>, vector<16x128xf32>, vector<3x128xf32> -> vector<3x128xf32>
    %499 = arith.subf %497, %498 : vector<3x128xf32>
    %500 = arith.mulf %391, %499 : vector<3x128xf32>
    %cst_272 = arith.constant dense<0.000000e+00> : vector<128xf32>
    %501 = vector.multi_reduction <add>, %500, %cst_272 [0] : vector<3x128xf32> to vector<128xf32>
    %502 = vector.shape_cast %501 : vector<128xf32> to vector<1x128xf32>
    %cst_273 = arith.constant 2.000000e+00 : f32
    %503 = vector.broadcast %cst_273 : f32 to vector<1x128xf32>
    %504 = arith.mulf %503, %502 : vector<1x128xf32>
    %cst_274 = arith.constant dense<0.000000e+00> : vector<14x128xf32>
    %505 = tpu.matmul %376, %497, %cst_274 {dimension_numbers = #tpu.dot_dimension_numbers<[1], [0], [0], [1], [0, 0, 1, 1], [], []>} : vector<14x3xf32>, vector<3x128xf32>, vector<14x128xf32> -> vector<14x128xf32>
    %cst_275 = arith.constant dense<0.000000e+00> : vector<14x128xf32>
    %506 = tpu.matmul %378, %498, %cst_275 {dimension_numbers = #tpu.dot_dimension_numbers<[1], [0], [0], [1], [0, 0, 1, 1], [], []>} : vector<14x3xf32>, vector<3x128xf32>, vector<14x128xf32> -> vector<14x128xf32>
    %507 = arith.addf %505, %506 : vector<14x128xf32>
    %508 = vector.broadcast %380 : vector<14x1xf32> to vector<14x128xf32>
    %509 = vector.broadcast %504 : vector<1x128xf32> to vector<14x128xf32>
    %510 = arith.mulf %508, %509 : vector<14x128xf32>
    %511 = arith.addf %507, %510 : vector<14x128xf32>
    %512 = arith.mulf %418, %511 : vector<14x128xf32>
    %cst_276 = arith.constant dense<0.000000e+00> : vector<32x128xf32>
    %513 = tpu.matmul %382, %512, %cst_276 {dimension_numbers = #tpu.dot_dimension_numbers<[1], [0], [0], [1], [0, 0, 1, 1], [], []>} : vector<32x14xf32>, vector<14x128xf32>, vector<32x128xf32> -> vector<32x128xf32>
    %514 = arith.mulf %436, %513 : vector<32x128xf32>
    %cst_277 = arith.constant dense<0.000000e+00> : vector<32x16xf32>
    %515 = tpu.matmul %514, %2, %cst_277 {dimension_numbers = #tpu.dot_dimension_numbers<[1], [0], [0], [1], [0, 0, 1, 1], [], []>} : vector<32x128xf32>, vector<128x16xf32>, vector<32x16xf32> -> vector<32x16xf32>
    %cst_278 = arith.constant dense<0.000000e+00> : vector<6x16xf32>
    %516 = tpu.matmul %384, %490, %cst_278 {dimension_numbers = #tpu.dot_dimension_numbers<[1], [0], [0], [1], [0, 0, 1, 1], [], []>} : vector<6x3xf32>, vector<3x16xf32>, vector<6x16xf32> -> vector<6x16xf32>
    %cst_279 = arith.constant dense<0.000000e+00> : vector<6x16xf32>
    %517 = tpu.matmul %386, %515, %cst_279 {dimension_numbers = #tpu.dot_dimension_numbers<[1], [0], [0], [1], [0, 0, 1, 1], [], []>} : vector<6x32xf32>, vector<32x16xf32>, vector<6x16xf32> -> vector<6x16xf32>
    %518 = arith.addf %516, %517 : vector<6x16xf32>
    %519 = arith.mulf %457, %518 : vector<6x16xf32>
    %cst_280 = arith.constant dense<0.000000e+00> : vector<3x16xf32>
    %520 = tpu.matmul %388, %519, %cst_280 {dimension_numbers = #tpu.dot_dimension_numbers<[1], [0], [0], [1], [0, 0, 1, 1], [], []>} : vector<3x6xf32>, vector<6x16xf32>, vector<3x16xf32> -> vector<3x16xf32>
    %521 = arith.addf %520, %490 : vector<3x16xf32>
    %522 = arith.mulf %521, %465 : vector<3x16xf32>
    %cst_281 = arith.constant dense<0.000000e+00> : vector<16xf32>
    %523 = vector.multi_reduction <add>, %522, %cst_281 [0] : vector<3x16xf32> to vector<16xf32>
    %524 = vector.shape_cast %523 : vector<16xf32> to vector<1x16xf32>
    %cst_282 = arith.constant -5.000000e-01 : f32
    %525 = vector.broadcast %cst_282 : f32 to vector<1x16xf32>
    %526 = arith.mulf %525, %524 : vector<1x16xf32>
    %527 = arith.addf %496, %526 : vector<1x16xf32>
    %cst_283 = arith.constant dense<0.000000e+00> : vector<3x128xf32>
    %528 = tpu.matmul %521, %0, %cst_283 {dimension_numbers = #tpu.dot_dimension_numbers<[1], [0], [0], [1], [0, 0, 1, 1], [], []>} : vector<3x16xf32>, vector<16x128xf32>, vector<3x128xf32> -> vector<3x128xf32>
    %cst_284 = arith.constant dense<0.000000e+00> : vector<3x128xf32>
    %529 = tpu.matmul %521, %1, %cst_284 {dimension_numbers = #tpu.dot_dimension_numbers<[1], [0], [0], [1], [0, 0, 1, 1], [], []>} : vector<3x16xf32>, vector<16x128xf32>, vector<3x128xf32> -> vector<3x128xf32>
    %530 = arith.subf %528, %529 : vector<3x128xf32>
    %531 = arith.mulf %391, %530 : vector<3x128xf32>
    %cst_285 = arith.constant dense<0.000000e+00> : vector<128xf32>
    %532 = vector.multi_reduction <add>, %531, %cst_285 [0] : vector<3x128xf32> to vector<128xf32>
    %533 = vector.shape_cast %532 : vector<128xf32> to vector<1x128xf32>
    %cst_286 = arith.constant 2.000000e+00 : f32
    %534 = vector.broadcast %cst_286 : f32 to vector<1x128xf32>
    %535 = arith.mulf %534, %533 : vector<1x128xf32>
    %cst_287 = arith.constant dense<0.000000e+00> : vector<14x128xf32>
    %536 = tpu.matmul %376, %528, %cst_287 {dimension_numbers = #tpu.dot_dimension_numbers<[1], [0], [0], [1], [0, 0, 1, 1], [], []>} : vector<14x3xf32>, vector<3x128xf32>, vector<14x128xf32> -> vector<14x128xf32>
    %cst_288 = arith.constant dense<0.000000e+00> : vector<14x128xf32>
    %537 = tpu.matmul %378, %529, %cst_288 {dimension_numbers = #tpu.dot_dimension_numbers<[1], [0], [0], [1], [0, 0, 1, 1], [], []>} : vector<14x3xf32>, vector<3x128xf32>, vector<14x128xf32> -> vector<14x128xf32>
    %538 = arith.addf %536, %537 : vector<14x128xf32>
    %539 = vector.broadcast %380 : vector<14x1xf32> to vector<14x128xf32>
    %540 = vector.broadcast %535 : vector<1x128xf32> to vector<14x128xf32>
    %541 = arith.mulf %539, %540 : vector<14x128xf32>
    %542 = arith.addf %538, %541 : vector<14x128xf32>
    %543 = arith.mulf %418, %542 : vector<14x128xf32>
    %cst_289 = arith.constant dense<0.000000e+00> : vector<32x128xf32>
    %544 = tpu.matmul %382, %543, %cst_289 {dimension_numbers = #tpu.dot_dimension_numbers<[1], [0], [0], [1], [0, 0, 1, 1], [], []>} : vector<32x14xf32>, vector<14x128xf32>, vector<32x128xf32> -> vector<32x128xf32>
    %545 = arith.mulf %436, %544 : vector<32x128xf32>
    %cst_290 = arith.constant dense<0.000000e+00> : vector<32x16xf32>
    %546 = tpu.matmul %545, %2, %cst_290 {dimension_numbers = #tpu.dot_dimension_numbers<[1], [0], [0], [1], [0, 0, 1, 1], [], []>} : vector<32x128xf32>, vector<128x16xf32>, vector<32x16xf32> -> vector<32x16xf32>
    %cst_291 = arith.constant dense<0.000000e+00> : vector<6x16xf32>
    %547 = tpu.matmul %384, %521, %cst_291 {dimension_numbers = #tpu.dot_dimension_numbers<[1], [0], [0], [1], [0, 0, 1, 1], [], []>} : vector<6x3xf32>, vector<3x16xf32>, vector<6x16xf32> -> vector<6x16xf32>
    %cst_292 = arith.constant dense<0.000000e+00> : vector<6x16xf32>
    %548 = tpu.matmul %386, %546, %cst_292 {dimension_numbers = #tpu.dot_dimension_numbers<[1], [0], [0], [1], [0, 0, 1, 1], [], []>} : vector<6x32xf32>, vector<32x16xf32>, vector<6x16xf32> -> vector<6x16xf32>
    %549 = arith.addf %547, %548 : vector<6x16xf32>
    %550 = arith.mulf %457, %549 : vector<6x16xf32>
    %cst_293 = arith.constant dense<0.000000e+00> : vector<3x16xf32>
    %551 = tpu.matmul %388, %550, %cst_293 {dimension_numbers = #tpu.dot_dimension_numbers<[1], [0], [0], [1], [0, 0, 1, 1], [], []>} : vector<3x6xf32>, vector<6x16xf32>, vector<3x16xf32> -> vector<3x16xf32>
    %552 = arith.addf %551, %521 : vector<3x16xf32>
    %553 = arith.mulf %552, %465 : vector<3x16xf32>
    %cst_294 = arith.constant dense<0.000000e+00> : vector<16xf32>
    %554 = vector.multi_reduction <add>, %553, %cst_294 [0] : vector<3x16xf32> to vector<16xf32>
    %555 = vector.shape_cast %554 : vector<16xf32> to vector<1x16xf32>
    %cst_295 = arith.constant 0.333333343 : f32
    %556 = vector.broadcast %cst_295 : f32 to vector<1x16xf32>
    %557 = arith.mulf %556, %555 : vector<1x16xf32>
    %558 = arith.addf %527, %557 : vector<1x16xf32>
    %559 = arith.addf %374, %463 : vector<3x16xf32>
    %c0_296 = arith.constant 0 : index
    %c0_297 = arith.constant 0 : index
    %560 = vector.load %arg17[%c0_296, %c0_297] : memref<3x16xf32, #tpu.memory_space<vmem>>, vector<3x16xf32>
    tpu.vector_store %arg17[%c0_296, %c0_297], %559 {strides = array<i32>} : memref<3x16xf32, #tpu.memory_space<vmem>>, vector<3x16xf32>,
    %c0_298 = arith.constant 0 : index
    %c0_299 = arith.constant 0 : index
    %561 = vector.load %arg18[%c0_298, %c0_299] : memref<1x16xf32, #tpu.memory_space<vmem>>, vector<1x16xf32>
    tpu.vector_store %arg18[%c0_298, %c0_299], %558 {strides = array<i32>} : memref<1x16xf32, #tpu.memory_space<vmem>>, vector<1x16xf32>,
    return
  }
  func.func @transform_0(%arg0: i32) -> (i32, i32) {
    %c0_i32 = arith.constant 0 : i32
    %c0_i32_0 = arith.constant 0 : i32
    %c0_i32_1 = arith.constant 0 : i32
    return %c0_i32, %c0_i32_0 : i32, i32
  }
  func.func @transform_1(%arg0: i32) -> (i32, i32, i32) {
    %c0_i32 = arith.constant 0 : i32
    %c0_i32_0 = arith.constant 0 : i32
    %c0_i32_1 = arith.constant 0 : i32
    %c0_i32_2 = arith.constant 0 : i32
    return %c0_i32, %c0_i32_0, %c0_i32_1 : i32, i32, i32
  }
  func.func @transform_2(%arg0: i32) -> (i32, i32) {
    %c0_i32 = arith.constant 0 : i32
    %c0_i32_0 = arith.constant 0 : i32
    %c0_i32_1 = arith.constant 0 : i32
    return %c0_i32, %c0_i32_0 : i32, i32
  }
  func.func @transform_3(%arg0: i32) -> (i32, i32) {
    %c0_i32 = arith.constant 0 : i32
    %c0_i32_0 = arith.constant 0 : i32
    %c0_i32_1 = arith.constant 0 : i32
    return %c0_i32, %c0_i32_0 : i32, i32
  }
  func.func @transform_4(%arg0: i32) -> (i32, i32) {
    %c0_i32 = arith.constant 0 : i32
    %c0_i32_0 = arith.constant 0 : i32
    %c0_i32_1 = arith.constant 0 : i32
    return %c0_i32, %c0_i32_0 : i32, i32
  }
  func.func @transform_5(%arg0: i32) -> (i32, i32, i32) {
    %c0_i32 = arith.constant 0 : i32
    %c0_i32_0 = arith.constant 0 : i32
    %c0_i32_1 = arith.constant 0 : i32
    %c0_i32_2 = arith.constant 0 : i32
    return %c0_i32, %c0_i32_0, %c0_i32_1 : i32, i32, i32
  }
  func.func @transform_6(%arg0: i32) -> (i32, i32, i32) {
    %c0_i32 = arith.constant 0 : i32
    %c0_i32_0 = arith.constant 0 : i32
    %c0_i32_1 = arith.constant 0 : i32
    %c0_i32_2 = arith.constant 0 : i32
    return %c0_i32, %c0_i32_0, %c0_i32_1 : i32, i32, i32
  }
  func.func @transform_7(%arg0: i32) -> (i32, i32, i32) {
    %c0_i32 = arith.constant 0 : i32
    %c0_i32_0 = arith.constant 0 : i32
    %c0_i32_1 = arith.constant 0 : i32
    %c0_i32_2 = arith.constant 0 : i32
    return %c0_i32, %c0_i32_0, %c0_i32_1 : i32, i32, i32
  }
  func.func @transform_8(%arg0: i32) -> (i32, i32, i32) {
    %c0_i32 = arith.constant 0 : i32
    %c0_i32_0 = arith.constant 0 : i32
    %c0_i32_1 = arith.constant 0 : i32
    %c0_i32_2 = arith.constant 0 : i32
    return %c0_i32, %c0_i32_0, %c0_i32_1 : i32, i32, i32
  }
  func.func @transform_9(%arg0: i32) -> (i32, i32, i32) {
    %c0_i32 = arith.constant 0 : i32
    %c0_i32_0 = arith.constant 0 : i32
    %c0_i32_1 = arith.constant 0 : i32
    %c0_i32_2 = arith.constant 0 : i32
    return %c0_i32, %c0_i32_0, %c0_i32_1 : i32, i32, i32
  }
  func.func @transform_10(%arg0: i32) -> (i32, i32, i32) {
    %c0_i32 = arith.constant 0 : i32
    %c0_i32_0 = arith.constant 0 : i32
    %c0_i32_1 = arith.constant 0 : i32
    %c0_i32_2 = arith.constant 0 : i32
    return %c0_i32, %c0_i32_0, %c0_i32_1 : i32, i32, i32
  }
  func.func @transform_11(%arg0: i32) -> (i32, i32, i32) {
    %c0_i32 = arith.constant 0 : i32
    %c0_i32_0 = arith.constant 0 : i32
    %c0_i32_1 = arith.constant 0 : i32
    %c0_i32_2 = arith.constant 0 : i32
    return %c0_i32, %c0_i32_0, %c0_i32_1 : i32, i32, i32
  }
  func.func @transform_12(%arg0: i32) -> (i32, i32, i32) {
    %c0_i32 = arith.constant 0 : i32
    %c0_i32_0 = arith.constant 0 : i32
    %c0_i32_1 = arith.constant 0 : i32
    %c0_i32_2 = arith.constant 0 : i32
    return %c0_i32, %c0_i32_0, %c0_i32_1 : i32, i32, i32
  }
  func.func @transform_13(%arg0: i32) -> (i32, i32, i32) {
    %c0_i32 = arith.constant 0 : i32
    %c0_i32_0 = arith.constant 0 : i32
    %c0_i32_1 = arith.constant 0 : i32
    %c0_i32_2 = arith.constant 0 : i32
    return %c0_i32, %c0_i32_0, %c0_i32_1 : i32, i32, i32
  }
  func.func @transform_14(%arg0: i32) -> (i32, i32, i32) {
    %c0_i32 = arith.constant 0 : i32
    %c0_i32_0 = arith.constant 0 : i32
    %c0_i32_1 = arith.constant 0 : i32
    %c0_i32_2 = arith.constant 0 : i32
    return %c0_i32, %c0_i32_0, %c0_i32_1 : i32, i32, i32
  }
  func.func @transform_15(%arg0: i32) -> (i32, i32, i32) {
    %c0_i32 = arith.constant 0 : i32
    %c0_i32_0 = arith.constant 0 : i32
    %c0_i32_1 = arith.constant 0 : i32
    %c0_i32_2 = arith.constant 0 : i32
    return %c0_i32, %c0_i32_0, %c0_i32_1 : i32, i32, i32
  }
  func.func @transform_16(%arg0: i32) -> (i32, i32) {
    %c0_i32 = arith.constant 0 : i32
    %c0_i32_0 = arith.constant 0 : i32
    %c0_i32_1 = arith.constant 0 : i32
    return %c0_i32, %c0_i32_0 : i32, i32
  }
  func.func @transform_17(%arg0: i32) -> (i32, i32) {
    %c0_i32 = arith.constant 0 : i32
    %c0_i32_0 = arith.constant 0 : i32
    %c0_i32_1 = arith.constant 0 : i32
    return %c0_i32, %c0_i32_0 : i32, i32
  }
}

</mosaic_0001>

<llo_original>
// kernel: squeeze.1
$region0: #{squeeze.1}
  %s0 = inlined_call_operand.vmem [shape: f32[16], index: 0, kind: input, shape index: {}]
  %s1 = inlined_call_operand.vmem [shape: f32[2,8], index: 1, kind: output, shape index: {}]
  $region1: #{squeeze.1} parent=0
    #allocation0 [shape = 'u8[4096]{0}', space=vmem, size = 0x1000, scoped, tag = 'scoped mem for output reshape']
    #allocation1 [shape = 'u8[4096]{0}', space=vmem, size = 0x1000, scoped, tag = 'scoped mem for input reshape']
    %s3 = sshllo.u32 0, 1
    %v4 = vld [vmem:[%s0] sm:%s3]
    %5 = vst [vmem:[#allocation1] sm:%s3] %v4
    %v6 = vld [vmem:[#allocation1] sm:$0x1]
    %vm7 = vcmask 64512
    %8 = vst.msk [vmem:[#allocation0] sm:$0x1] %vm7, %v6
    %v9 = vld [vmem:[#allocation1] sm:$0x1]
    %10 = vrot.lane.b32.xlu0 %v9, 120
    %v11 = vpop.permute.xlu0 %10
    %vm12 = vcmask 64512
    %s13 = scalar_lea.vmem [#allocation0], 1
    %14 = vst.msk [vmem:[%s13] sm:$0x1] %vm12, %v11
    %s16 = sshllo.u32 0, 2
    %v18 = vld [vmem:[#allocation0] sm:%s16]
    %s19 = sshllo.u32 0, 2
    %20 = vst [vmem:[%s1] sm:%s19] %v18

// kernel: rescoorflow_forward.1
$region0: #{rescoorflow_forward.1}
  #allocation0 [shape = 'u32[]', space=smem, size = 0x4, offset = 0x4, fixed_abs, tag = 'smem constant byte address 0x4 - core index']
  #allocation1 [shape = 'u32[144,128]{1,0:T(1,128)}', space=vmem, size = 0x12000, scoped, tag = 'internal scratch']
  %s0 = inlined_call_operand.vmem [shape: f32[3,16], index: 0, kind: input, shape index: {}]
  %s1 = inlined_call_operand.vmem [shape: f32[3,3,16], index: 1, kind: input, shape index: {}]
  %s2 = inlined_call_operand.vmem [shape: f32[16,128], index: 2, kind: input, shape index: {}]
  %s3 = inlined_call_operand.vmem [shape: f32[16,128], index: 3, kind: input, shape index: {}]
  %s4 = inlined_call_operand.vmem [shape: f32[128,16], index: 4, kind: input, shape index: {}]
  %s5 = inlined_call_operand.vmem [shape: f32[3,14,3], index: 5, kind: input, shape index: {}]
  %s6 = inlined_call_operand.vmem [shape: f32[3,14,3], index: 6, kind: input, shape index: {}]
  %s7 = inlined_call_operand.vmem [shape: f32[3,14,1], index: 7, kind: input, shape index: {}]
  %s8 = inlined_call_operand.vmem [shape: f32[3,14,1], index: 8, kind: input, shape index: {}]
  %s9 = inlined_call_operand.vmem [shape: f32[3,32,14], index: 9, kind: input, shape index: {}]
  %s10 = inlined_call_operand.vmem [shape: f32[3,32,1], index: 10, kind: input, shape index: {}]
  %s11 = inlined_call_operand.vmem [shape: f32[3,6,3], index: 11, kind: input, shape index: {}]
  %s12 = inlined_call_operand.vmem [shape: f32[3,6,32], index: 12, kind: input, shape index: {}]
  %s13 = inlined_call_operand.vmem [shape: f32[3,6,1], index: 13, kind: input, shape index: {}]
  %s14 = inlined_call_operand.vmem [shape: f32[3,3,6], index: 14, kind: input, shape index: {}]
  %s15 = inlined_call_operand.vmem [shape: f32[3,3,1], index: 15, kind: input, shape index: {}]
  %s16 = inlined_call_operand.vmem [shape: f32[3,16], index: 16, kind: output, shape index: {0}]
  %s17 = inlined_call_operand.vmem [shape: f32[1,16], index: 17, kind: output, shape index: {1}]
  %18 = xla_tuple %s16, %s17
  %s19 = sld [smem:[#allocation0]]
  $region82: #{rescoorflow_forward.1} parent=0
    _
  %s21 = ssub.s32 1, %s19
  %s22 = scalar_select 0, %s21, %s19
  // Predicated region
  $region2: #{rescoorflow_forward.1} parent=0 // pred_check
    _
  $region3: #{rescoorflow_forward.1} parent=0 // pred_check_branch
    %24 = sbr.rel (0) target = $region5
  $region4: #{rescoorflow_forward.1} parent=0 // pred_region
    _
  $region5: #{rescoorflow_forward.1} parent=0 // pred_fallthru
    _
  // Predicated region
  $region6: #{rescoorflow_forward.1} parent=0 // pred_check
    _
  $region7: #{rescoorflow_forward.1} parent=0 // pred_check_branch
    %26 = sbr.rel (0) target = $region9
  $region8: #{rescoorflow_forward.1} parent=0 // pred_region
    _
  $region9: #{rescoorflow_forward.1} parent=0 // pred_fallthru
    _
  // Predicated region
  $region10: #{rescoorflow_forward.1} parent=0 // pred_check
    _
  $region11: #{rescoorflow_forward.1} parent=0 // pred_check_branch
    %28 = sbr.rel (0) target = $region13
  $region12: #{rescoorflow_forward.1} parent=0 // pred_region
    _
  $region13: #{rescoorflow_forward.1} parent=0 // pred_fallthru
    _
  // Predicated region
  $region14: #{rescoorflow_forward.1} parent=0 // pred_check
    _
  $region15: #{rescoorflow_forward.1} parent=0 // pred_check_branch
    %30 = sbr.rel (0) target = $region17
  $region16: #{rescoorflow_forward.1} parent=0 // pred_region
    _
  $region17: #{rescoorflow_forward.1} parent=0 // pred_fallthru
    _
  // Predicated region
  $region18: #{rescoorflow_forward.1} parent=0 // pred_check
    _
  $region19: #{rescoorflow_forward.1} parent=0 // pred_check_branch
    %32 = sbr.rel (0) target = $region21
  $region20: #{rescoorflow_forward.1} parent=0 // pred_region
    _
  $region21: #{rescoorflow_forward.1} parent=0 // pred_fallthru
    _
  // Predicated region
  $region22: #{rescoorflow_forward.1} parent=0 // pred_check
    _
  $region23: #{rescoorflow_forward.1} parent=0 // pred_check_branch
    %34 = sbr.rel (0) target = $region25
  $region24: #{rescoorflow_forward.1} parent=0 // pred_region
    _
  $region25: #{rescoorflow_forward.1} parent=0 // pred_fallthru
    _
  // Predicated region
  $region26: #{rescoorflow_forward.1} parent=0 // pred_check
    _
  $region27: #{rescoorflow_forward.1} parent=0 // pred_check_branch
    %36 = sbr.rel (0) target = $region29
  $region28: #{rescoorflow_forward.1} parent=0 // pred_region
    _
  $region29: #{rescoorflow_forward.1} parent=0 // pred_fallthru
    _
  // Predicated region
  $region30: #{rescoorflow_forward.1} parent=0 // pred_check
    _
  $region31: #{rescoorflow_forward.1} parent=0 // pred_check_branch
    %38 = sbr.rel (0) target = $region33
  $region32: #{rescoorflow_forward.1} parent=0 // pred_region
    _
  $region33: #{rescoorflow_forward.1} parent=0 // pred_fallthru
    _
  // Predicated region
  $region34: #{rescoorflow_forward.1} parent=0 // pred_check
    _
  $region35: #{rescoorflow_forward.1} parent=0 // pred_check_branch
    %40 = sbr.rel (0) target = $region37
  $region36: #{rescoorflow_forward.1} parent=0 // pred_region
    _
  $region37: #{rescoorflow_forward.1} parent=0 // pred_fallthru
    _
  // Predicated region
  $region38: #{rescoorflow_forward.1} parent=0 // pred_check
    _
  $region39: #{rescoorflow_forward.1} parent=0 // pred_check_branch
    %42 = sbr.rel (0) target = $region41
  $region40: #{rescoorflow_forward.1} parent=0 // pred_region
    _
  $region41: #{rescoorflow_forward.1} parent=0 // pred_fallthru
    _
  // Predicated region
  $region42: #{rescoorflow_forward.1} parent=0 // pred_check
    _
  $region43: #{rescoorflow_forward.1} parent=0 // pred_check_branch
    %44 = sbr.rel (0) target = $region45
  $region44: #{rescoorflow_forward.1} parent=0 // pred_region
    _
  $region45: #{rescoorflow_forward.1} parent=0 // pred_fallthru
    _
  // Predicated region
  $region46: #{rescoorflow_forward.1} parent=0 // pred_check
    _
  $region47: #{rescoorflow_forward.1} parent=0 // pred_check_branch
    %46 = sbr.rel (0) target = $region49
  $region48: #{rescoorflow_forward.1} parent=0 // pred_region
    _
  $region49: #{rescoorflow_forward.1} parent=0 // pred_fallthru
    _
  // Predicated region
  $region50: #{rescoorflow_forward.1} parent=0 // pred_check
    _
  $region51: #{rescoorflow_forward.1} parent=0 // pred_check_branch
    %48 = sbr.rel (0) target = $region53
  $region52: #{rescoorflow_forward.1} parent=0 // pred_region
    _
  $region53: #{rescoorflow_forward.1} parent=0 // pred_fallthru
    _
  // Predicated region
  $region54: #{rescoorflow_forward.1} parent=0 // pred_check
    _
  $region55: #{rescoorflow_forward.1} parent=0 // pred_check_branch
    %50 = sbr.rel (0) target = $region57
  $region56: #{rescoorflow_forward.1} parent=0 // pred_region
    _
  $region57: #{rescoorflow_forward.1} parent=0 // pred_fallthru
    _
  // Predicated region
  $region58: #{rescoorflow_forward.1} parent=0 // pred_check
    _
  $region59: #{rescoorflow_forward.1} parent=0 // pred_check_branch
    %52 = sbr.rel (0) target = $region61
  $region60: #{rescoorflow_forward.1} parent=0 // pred_region
    _
  $region61: #{rescoorflow_forward.1} parent=0 // pred_fallthru
    _
  // Predicated region
  $region62: #{rescoorflow_forward.1} parent=0 // pred_check
    _
  $region63: #{rescoorflow_forward.1} parent=0 // pred_check_branch
    %54 = sbr.rel (0) target = $region65
  $region64: #{rescoorflow_forward.1} parent=0 // pred_region
    _
  $region65: #{rescoorflow_forward.1} parent=0 // pred_fallthru
    _
  %v55 = vld [vmem:[%s2] sm:$0xff]
  %v56 = vld [vmem:[%s2 + $0x8] sm:$0xff]
  %v57 = vld [vmem:[%s3] sm:$0xff]
  %v58 = vld [vmem:[%s3 + $0x8] sm:$0xff]
  %v59 = vld [vmem:[%s4] sm:$0xff]
  %v60 = vld [vmem:[%s4 + $0x8] sm:$0xff]
  %v61 = vld [vmem:[%s4 + $0x10] sm:$0xff]
  %v62 = vld [vmem:[%s4 + $0x18] sm:$0xff]
  %v63 = vld [vmem:[%s4 + $0x20] sm:$0xff]
  %v64 = vld [vmem:[%s4 + $0x28] sm:$0xff]
  %v65 = vld [vmem:[%s4 + $0x30] sm:$0xff]
  %v66 = vld [vmem:[%s4 + $0x38] sm:$0xff]
  %v67 = vld [vmem:[%s4 + $0x40] sm:$0xff]
  %v68 = vld [vmem:[%s4 + $0x48] sm:$0xff]
  %v69 = vld [vmem:[%s4 + $0x50] sm:$0xff]
  %v70 = vld [vmem:[%s4 + $0x58] sm:$0xff]
  %v71 = vld [vmem:[%s4 + $0x60] sm:$0xff]
  %v72 = vld [vmem:[%s4 + $0x68] sm:$0xff]
  %v73 = vld [vmem:[%s4 + $0x70] sm:$0xff]
  %v74 = vld [vmem:[%s4 + $0x78] sm:$0xff]
  %v75 = vld [vmem:[%s0] sm:$0x7]
  %v76 = vld [vmem:[%s5] sm:$0xff]
  %v77 = vld [vmem:[%s5 + $0x8] sm:$0x3f]
  %v78 = vld [vmem:[%s6] sm:$0xff]
  %v79 = vld [vmem:[%s6 + $0x8] sm:$0x3f]
  %v80 = vld [vmem:[%s7] sm:$0xff]
  %v81 = vld [vmem:[%s7 + $0x8] sm:$0x3f]
  %v82 = vld [vmem:[%s9] sm:$0xff]
  %v83 = vld [vmem:[%s9 + $0x8] sm:$0xff]
  %v84 = vld [vmem:[%s9 + $0x10] sm:$0xff]
  %v85 = vld [vmem:[%s9 + $0x18] sm:$0xff]
  %v86 = vld [vmem:[%s11] sm:$0x3f]
  %v87 = vld [vmem:[%s12] sm:$0x3f]
  %v88 = vld [vmem:[%s14] sm:$0x7]
  %vm89 = vcmask 130048
  %v91 = vsel %vm89, %v75, 0
  %93 = vmatprep.subr.mxu0 0.0
  %94 = vmatpush1.msra.mxu0 %v55
  %95 = vmatprep.subr.mxu0 0.0
  %96 = vmatpush1.msra.mxu0 %v56
  %97 = vmatprep.subr.mxu0 0.0
  %98 = vmatpush1.msra.mxu0 0.0
  %99 = vmatprep.subr.mxu0 0.0
  %100 = vmatpush1.msra.mxu0 0.0
  %101 = vmatprep.subr.mxu0 0.0
  %102 = vmatpush1.msra.mxu0 0.0
  %103 = vmatprep.subr.mxu0 0.0
  %104 = vmatpush1.msra.mxu0 0.0
  %105 = vmatprep.subr.mxu0 0.0
  %106 = vmatpush1.msra.mxu0 0.0
  %107 = vmatprep.subr.mxu0 0.0
  %108 = vmatpush1.msra.mxu0 0.0
  %109 = vmatprep.subr.mxu0 0.0
  %110 = vmatpush1.msra.mxu0 0.0
  %111 = vmatprep.subr.mxu0 0.0
  %112 = vmatpush1.msra.mxu0 0.0
  %113 = vmatprep.subr.mxu0 0.0
  %114 = vmatpush1.msra.mxu0 0.0
  %115 = vmatprep.subr.mxu0 0.0
  %116 = vmatpush1.msra.mxu0 0.0
  %117 = vmatprep.subr.mxu0 0.0
  %118 = vmatpush1.msra.mxu0 0.0
  %119 = vmatprep.subr.mxu0 0.0
  %120 = vmatpush1.msra.mxu0 0.0
  %121 = vmatprep.subr.mxu0 0.0
  %122 = vmatpush1.msra.mxu0 0.0
  %123 = vmatprep.subr.mxu0 0.0
  %124 = vmatpush1.msra.mxu0 0.0
  %125 = vmatprep.subr.mxu0 0.0
  %126 = vmatpush1.msra.mxu0 0.0
  %127 = vmatprep.subr.mxu0 0.0
  %128 = vmatpush1.msra.mxu0 0.0
  %129 = vmatprep.subr.mxu0 0.0
  %130 = vmatpush1.msra.mxu0 0.0
  %131 = vmatprep.subr.mxu0 0.0
  %132 = vmatpush1.msra.mxu0 0.0
  %133 = vmatprep.subr.mxu0 0.0
  %134 = vmatpush1.msra.mxu0 0.0
  %135 = vmatprep.subr.mxu0 0.0
  %136 = vmatpush1.msra.mxu0 0.0
  %137 = vmatprep.subr.mxu0 0.0
  %138 = vmatpush1.msra.mxu0 0.0
  %139 = vmatprep.subr.mxu0 0.0
  %140 = vmatpush1.msra.mxu0 0.0
  %141 = vmatprep.subr.mxu0 0.0
  %142 = vmatpush1.msra.mxu0 0.0
  %143 = vmatprep.subr.mxu0 0.0
  %144 = vmatpush1.msra.mxu0 0.0
  %145 = vmatprep.subr.mxu0 0.0
  %146 = vmatpush1.msra.mxu0 0.0
  %147 = vmatprep.subr.mxu0 0.0
  %148 = vmatpush1.msra.mxu0 0.0
  %149 = vmatprep.subr.mxu0 0.0
  %150 = vmatpush1.msra.mxu0 0.0
  %151 = vmatprep.subr.mxu0 0.0
  %152 = vmatpush1.msra.mxu0 0.0
  %153 = vmatprep.subr.mxu0 0.0
  %154 = vmatpush1.msra.mxu0 0.0
  %155 = vmatprep.subr.mxu0 0.0
  %156 = vmatpush1.msra.mxu0 0.0
  %157 = vmatprep.mubr.f32.mxu0 0.0
  %158 = vmatmul.mubr.f32.gmra.mrb[0].mxu0 %v91
  %v159 = vpop.f32.mrb[0].mxu0
  %v160 = vadd.f32 0.0, %v159
  %v161 = vpop.f32.mrb[0].mxu0
  %162 = vdwg.mxu0
  %163 = vmatprep.subr.mxu0 0.0
  %164 = vmatpush1.msra.mxu0 %v57
  %165 = vmatprep.subr.mxu0 0.0
  %166 = vmatpush1.msra.mxu0 %v58
  %167 = vmatprep.subr.mxu0 0.0
  %168 = vmatpush1.msra.mxu0 0.0
  %169 = vmatprep.subr.mxu0 0.0
  %170 = vmatpush1.msra.mxu0 0.0
  %171 = vmatprep.subr.mxu0 0.0
  %172 = vmatpush1.msra.mxu0 0.0
  %173 = vmatprep.subr.mxu0 0.0
  %174 = vmatpush1.msra.mxu0 0.0
  %175 = vmatprep.subr.mxu0 0.0
  %176 = vmatpush1.msra.mxu0 0.0
  %177 = vmatprep.subr.mxu0 0.0
  %178 = vmatpush1.msra.mxu0 0.0
  %179 = vmatprep.subr.mxu0 0.0
  %180 = vmatpush1.msra.mxu0 0.0
  %181 = vmatprep.subr.mxu0 0.0
  %182 = vmatpush1.msra.mxu0 0.0
  %183 = vmatprep.subr.mxu0 0.0
  %184 = vmatpush1.msra.mxu0 0.0
  %185 = vmatprep.subr.mxu0 0.0
  %186 = vmatpush1.msra.mxu0 0.0
  %187 = vmatprep.subr.mxu0 0.0
  %188 = vmatpush1.msra.mxu0 0.0
  %189 = vmatprep.subr.mxu0 0.0
  %190 = vmatpush1.msra.mxu0 0.0
  %191 = vmatprep.subr.mxu0 0.0
  %192 = vmatpush1.msra.mxu0 0.0
  %193 = vmatprep.subr.mxu0 0.0
  %194 = vmatpush1.msra.mxu0 0.0
  %195 = vmatprep.subr.mxu0 0.0
  %196 = vmatpush1.msra.mxu0 0.0
  %197 = vmatprep.subr.mxu0 0.0
  %198 = vmatpush1.msra.mxu0 0.0
  %199 = vmatprep.subr.mxu0 0.0
  %200 = vmatpush1.msra.mxu0 0.0
  %201 = vmatprep.subr.mxu0 0.0
  %202 = vmatpush1.msra.mxu0 0.0
  %203 = vmatprep.subr.mxu0 0.0
  %204 = vmatpush1.msra.mxu0 0.0
  %205 = vmatprep.subr.mxu0 0.0
  %206 = vmatpush1.msra.mxu0 0.0
  %207 = vmatprep.subr.mxu0 0.0
  %208 = vmatpush1.msra.mxu0 0.0
  %209 = vmatprep.subr.mxu0 0.0
  %210 = vmatpush1.msra.mxu0 0.0
  %211 = vmatprep.subr.mxu0 0.0
  %212 = vmatpush1.msra.mxu0 0.0
  %213 = vmatprep.subr.mxu0 0.0
  %214 = vmatpush1.msra.mxu0 0.0
  %215 = vmatprep.subr.mxu0 0.0
  %216 = vmatpush1.msra.mxu0 0.0
  %217 = vmatprep.subr.mxu0 0.0
  %218 = vmatpush1.msra.mxu0 0.0
  %219 = vmatprep.subr.mxu0 0.0
  %220 = vmatpush1.msra.mxu0 0.0
  %221 = vmatprep.subr.mxu0 0.0
  %222 = vmatpush1.msra.mxu0 0.0
  %223 = vmatprep.subr.mxu0 0.0
  %224 = vmatpush1.msra.mxu0 0.0
  %225 = vmatprep.subr.mxu0 0.0
  %226 = vmatpush1.msra.mxu0 0.0
  %227 = vmatprep.mubr.f32.mxu0 0.0
  %228 = vmatmul.mubr.f32.gmra.mrb[0].mxu0 %v91
  %v229 = vpop.f32.mrb[0].mxu0
  %v230 = vadd.f32 0.0, %v229
  %v231 = vpop.f32.mrb[0].mxu0
  %232 = vdwg.mxu0
  %v233 = vsub.f32 %v160, %v230
  %v234 = vmul.f32 %v233, %v233
  %vm235 = vcmask 1042432
  %v236 = vsel %vm235, %v234, 0.0
  %v237 = vrot.slane %v236, 4
  %v238 = vadd.f32 %v236, %v237
  %v239 = vrot.slane %v238, 2
  %v240 = vadd.f32 %v238, %v239
  %v241 = vrot.slane %v240, 1
  %v242 = vadd.f32 %v240, %v241
  %vm243 = vcmask 23552
  %v245 = vsel %vm243, %v78, 0
  %v248 = vsel %vm243, %v79, 0
  %v251 = vsel %vm235, %v230, 0
  %253 = vmatprep.subr.mxu0 0.0
  %254 = vmatpush1.msra.mxu0 %v251
  %255 = vmatprep.subr.mxu0 0.0
  %256 = vmatpush1.msra.mxu0 0.0
  %257 = vmatprep.subr.mxu0 0.0
  %258 = vmatpush1.msra.mxu0 0.0
  %259 = vmatprep.subr.mxu0 0.0
  %260 = vmatpush1.msra.mxu0 0.0
  %261 = vmatprep.subr.mxu0 0.0
  %262 = vmatpush1.msra.mxu0 0.0
  %263 = vmatprep.subr.mxu0 0.0
  %264 = vmatpush1.msra.mxu0 0.0
  %265 = vmatprep.subr.mxu0 0.0
  %266 = vmatpush1.msra.mxu0 0.0
  %267 = vmatprep.subr.mxu0 0.0
  %268 = vmatpush1.msra.mxu0 0.0
  %269 = vmatprep.subr.mxu0 0.0
  %270 = vmatpush1.msra.mxu0 0.0
  %271 = vmatprep.subr.mxu0 0.0
  %272 = vmatpush1.msra.mxu0 0.0
  %273 = vmatprep.subr.mxu0 0.0
  %274 = vmatpush1.msra.mxu0 0.0
  %275 = vmatprep.subr.mxu0 0.0
  %276 = vmatpush1.msra.mxu0 0.0
  %277 = vmatprep.subr.mxu0 0.0
  %278 = vmatpush1.msra.mxu0 0.0
  %279 = vmatprep.subr.mxu0 0.0
  %280 = vmatpush1.msra.mxu0 0.0
  %281 = vmatprep.subr.mxu0 0.0
  %282 = vmatpush1.msra.mxu0 0.0
  %283 = vmatprep.subr.mxu0 0.0
  %284 = vmatpush1.msra.mxu0 0.0
  %285 = vmatprep.subr.mxu0 0.0
  %286 = vmatpush1.msra.mxu0 0.0
  %287 = vmatprep.subr.mxu0 0.0
  %288 = vmatpush1.msra.mxu0 0.0
  %289 = vmatprep.subr.mxu0 0.0
  %290 = vmatpush1.msra.mxu0 0.0
  %291 = vmatprep.subr.mxu0 0.0
  %292 = vmatpush1.msra.mxu0 0.0
  %293 = vmatprep.subr.mxu0 0.0
  %294 = vmatpush1.msra.mxu0 0.0
  %295 = vmatprep.subr.mxu0 0.0
  %296 = vmatpush1.msra.mxu0 0.0
  %297 = vmatprep.subr.mxu0 0.0
  %298 = vmatpush1.msra.mxu0 0.0
  %299 = vmatprep.subr.mxu0 0.0
  %300 = vmatpush1.msra.mxu0 0.0
  %301 = vmatprep.subr.mxu0 0.0
  %302 = vmatpush1.msra.mxu0 0.0
  %303 = vmatprep.subr.mxu0 0.0
  %304 = vmatpush1.msra.mxu0 0.0
  %305 = vmatprep.subr.mxu0 0.0
  %306 = vmatpush1.msra.mxu0 0.0
  %307 = vmatprep.subr.mxu0 0.0
  %308 = vmatpush1.msra.mxu0 0.0
  %309 = vmatprep.subr.mxu0 0.0
  %310 = vmatpush1.msra.mxu0 0.0
  %311 = vmatprep.subr.mxu0 0.0
  %312 = vmatpush1.msra.mxu0 0.0
  %313 = vmatprep.subr.mxu0 0.0
  %314 = vmatpush1.msra.mxu0 0.0
  %315 = vmatprep.subr.mxu0 0.0
  %316 = vmatpush1.msra.mxu0 0.0
  %317 = vmatprep.mubr.f32.mxu0 0.0
  %318 = vmatmul.mubr.f32.gmra.mrb[0].mxu0 %v245
  %v319 = vpop.f32.mrb[0].mxu0
  %v320 = vadd.f32 0.0, %v319
  %v321 = vpop.f32.mrb[0].mxu0
  %322 = vmatprep.mubr.f32.mxu0 0.0
  %323 = vmatmul.mubr.f32.gmra.mrb[0].mxu0 %v248
  %v324 = vpop.f32.mrb[0].mxu0
  %v325 = vadd.f32 0.0, %v324
  %v326 = vpop.f32.mrb[0].mxu0
  %327 = vdwg.mxu0
  %v329 = vsel %vm243, %v76, 0
  %v332 = vsel %vm243, %v77, 0
  %v335 = vsel %vm235, %v160, 0
  %337 = vmatprep.subr.mxu0 0.0
  %338 = vmatpush1.msra.mxu0 %v335
  %339 = vmatprep.subr.mxu0 0.0
  %340 = vmatpush1.msra.mxu0 0.0
  %341 = vmatprep.subr.mxu0 0.0
  %342 = vmatpush1.msra.mxu0 0.0
  %343 = vmatprep.subr.mxu0 0.0
  %344 = vmatpush1.msra.mxu0 0.0
  %345 = vmatprep.subr.mxu0 0.0
  %346 = vmatpush1.msra.mxu0 0.0
  %347 = vmatprep.subr.mxu0 0.0
  %348 = vmatpush1.msra.mxu0 0.0
  %349 = vmatprep.subr.mxu0 0.0
  %350 = vmatpush1.msra.mxu0 0.0
  %351 = vmatprep.subr.mxu0 0.0
  %352 = vmatpush1.msra.mxu0 0.0
  %353 = vmatprep.subr.mxu0 0.0
  %354 = vmatpush1.msra.mxu0 0.0
  %355 = vmatprep.subr.mxu0 0.0
  %356 = vmatpush1.msra.mxu0 0.0
  %357 = vmatprep.subr.mxu0 0.0
  %358 = vmatpush1.msra.mxu0 0.0
  %359 = vmatprep.subr.mxu0 0.0
  %360 = vmatpush1.msra.mxu0 0.0
  %361 = vmatprep.subr.mxu0 0.0
  %362 = vmatpush1.msra.mxu0 0.0
  %363 = vmatprep.subr.mxu0 0.0
  %364 = vmatpush1.msra.mxu0 0.0
  %365 = vmatprep.subr.mxu0 0.0
  %366 = vmatpush1.msra.mxu0 0.0
  %367 = vmatprep.subr.mxu0 0.0
  %368 = vmatpush1.msra.mxu0 0.0
  %369 = vmatprep.subr.mxu0 0.0
  %370 = vmatpush1.msra.mxu0 0.0
  %371 = vmatprep.subr.mxu0 0.0
  %372 = vmatpush1.msra.mxu0 0.0
  %373 = vmatprep.subr.mxu0 0.0
  %374 = vmatpush1.msra.mxu0 0.0
  %375 = vmatprep.subr.mxu0 0.0
  %376 = vmatpush1.msra.mxu0 0.0
  %377 = vmatprep.subr.mxu0 0.0
  %378 = vmatpush1.msra.mxu0 0.0
  %379 = vmatprep.subr.mxu0 0.0
  %380 = vmatpush1.msra.mxu0 0.0
  %381 = vmatprep.subr.mxu0 0.0
  %382 = vmatpush1.msra.mxu0 0.0
  %383 = vmatprep.subr.mxu0 0.0
  %384 = vmatpush1.msra.mxu0 0.0
  %385 = vmatprep.subr.mxu0 0.0
  %386 = vmatpush1.msra.mxu0 0.0
  %387 = vmatprep.subr.mxu0 0.0
  %388 = vmatpush1.msra.mxu0 0.0
  %389 = vmatprep.subr.mxu0 0.0
  %390 = vmatpush1.msra.mxu0 0.0
  %391 = vmatprep.subr.mxu0 0.0
  %392 = vmatpush1.msra.mxu0 0.0
  %393 = vmatprep.subr.mxu0 0.0
  %394 = vmatpush1.msra.mxu0 0.0
  %395 = vmatprep.subr.mxu0 0.0
  %396 = vmatpush1.msra.mxu0 0.0
  %397 = vmatprep.subr.mxu0 0.0
  %398 = vmatpush1.msra.mxu0 0.0
  %399 = vmatprep.subr.mxu0 0.0
  %400 = vmatpush1.msra.mxu0 0.0
  %401 = vmatprep.mubr.f32.mxu0 0.0
  %402 = vmatmul.mubr.f32.gmra.mrb[0].mxu0 %v329
  %v403 = vpop.f32.mrb[0].mxu0
  %v404 = vadd.f32 %v320, %v403
  %v405 = vpop.f32.mrb[0].mxu0
  %406 = vmatprep.mubr.f32.mxu0 0.0
  %407 = vmatmul.mubr.f32.gmra.mrb[0].mxu0 %v332
  %v408 = vpop.f32.mrb[0].mxu0
  %v409 = vadd.f32 %v325, %v408
  %v410 = vpop.f32.mrb[0].mxu0
  %411 = vdwg.mxu0
  %413 = vset.pattern.permute.xlu0 0
  %414 = vperm.xlu0 %413, %v80
  %v415 = vpop.permute.xlu0 %414
  %418 = vset.pattern.permute.xlu0 0
  %419 = vperm.xlu0 %418, %v81
  %v420 = vpop.permute.xlu0 %419
  %v422 = vmul.f32 %v415, %v242
  %v423 = vmul.f32 %v420, %v242
  %v424 = vadd.f32 %v404, %v422
  %v425 = vadd.f32 %v409, %v423
  %v426 = vld [vmem:[%s8] sm:$0xff]
  %v427 = vld [vmem:[%s8 + $0x8] sm:$0x3f]
  %429 = vset.pattern.permute.xlu0 0
  %430 = vperm.xlu0 %429, %v426
  %v431 = vpop.permute.xlu0 %430
  %434 = vset.pattern.permute.xlu0 0
  %435 = vperm.xlu0 %434, %v427
  %v436 = vpop.permute.xlu0 %435
  %v438 = vadd.f32 %v424, %v431
  %v439 = vadd.f32 %v425, %v436
  %v440 = vsub.f32 0.0, %v438
  %v441 = vsub.f32 0.0, %v439
  %v442 = vmul.f32 %v440, 1.442695
  %v443 = vpow.pop %v442
  %v444 = vmul.f32 %v441, 1.442695
  %v445 = vpow.pop %v444
  %v446 = vadd.f32 %v443, 1.0
  %v447 = vadd.f32 %v445, 1.0
  %v448 = vrcp.pop %v446
  %v449 = vrcp.pop %v447
  %v450 = vmul.f32 %v438, %v448
  %v451 = vmul.f32 %v439, %v449
  %v452 = vsub.f32 1.0, %v448
  %v453 = vsub.f32 1.0, %v449
  %v454 = vmul.f32 %v438, %v452
  %v455 = vmul.f32 %v439, %v453
  %v456 = vadd.f32 %v454, 1.0
  %v457 = vadd.f32 %v455, 1.0
  %v458 = vmul.f32 %v448, %v456
  %v459 = vmul.f32 %v449, %v457
  %v460 = vld [vmem:[%s10] sm:$0xff]
  %v461 = vld [vmem:[%s10 + $0x8] sm:$0xff]
  %v462 = vld [vmem:[%s10 + $0x10] sm:$0xff]
  %v463 = vld [vmem:[%s10 + $0x18] sm:$0xff]
  %465 = vset.pattern.permute.xlu0 0
  %466 = vperm.xlu0 %465, %v460
  %v467 = vpop.permute.xlu0 %466
  %470 = vset.pattern.permute.xlu0 0
  %471 = vperm.xlu0 %470, %v461
  %v472 = vpop.permute.xlu0 %471
  %475 = vset.pattern.permute.xlu0 0
  %476 = vperm.xlu0 %475, %v462
  %v477 = vpop.permute.xlu0 %476
  %480 = vset.pattern.permute.xlu0 0
  %481 = vperm.xlu0 %480, %v463
  %v482 = vpop.permute.xlu0 %481
  %vm484 = vcmask 113664
  %v486 = vsel %vm484, %v82, 0
  %v489 = vsel %vm484, %v83, 0
  %v492 = vsel %vm484, %v84, 0
  %v495 = vsel %vm484, %v85, 0
  %vm497 = vcmask 1045504
  %v499 = vsel %vm497, %v451, 0
  %501 = vmatprep.subr.mxu0 0.0
  %502 = vmatpush1.msra.mxu0 %v450
  %503 = vmatprep.subr.mxu0 0.0
  %504 = vmatpush1.msra.mxu0 %v499
  %505 = vmatprep.subr.mxu0 0.0
  %506 = vmatpush1.msra.mxu0 0.0
  %507 = vmatprep.subr.mxu0 0.0
  %508 = vmatpush1.msra.mxu0 0.0
  %509 = vmatprep.subr.mxu0 0.0
  %510 = vmatpush1.msra.mxu0 0.0
  %511 = vmatprep.subr.mxu0 0.0
  %512 = vmatpush1.msra.mxu0 0.0
  %513 = vmatprep.subr.mxu0 0.0
  %514 = vmatpush1.msra.mxu0 0.0
  %515 = vmatprep.subr.mxu0 0.0
  %516 = vmatpush1.msra.mxu0 0.0
  %517 = vmatprep.subr.mxu0 0.0
  %518 = vmatpush1.msra.mxu0 0.0
  %519 = vmatprep.subr.mxu0 0.0
  %520 = vmatpush1.msra.mxu0 0.0
  %521 = vmatprep.subr.mxu0 0.0
  %522 = vmatpush1.msra.mxu0 0.0
  %523 = vmatprep.subr.mxu0 0.0
  %524 = vmatpush1.msra.mxu0 0.0
  %525 = vmatprep.subr.mxu0 0.0
  %526 = vmatpush1.msra.mxu0 0.0
  %527 = vmatprep.subr.mxu0 0.0
  %528 = vmatpush1.msra.mxu0 0.0
  %529 = vmatprep.subr.mxu0 0.0
  %530 = vmatpush1.msra.mxu0 0.0
  %531 = vmatprep.subr.mxu0 0.0
  %532 = vmatpush1.msra.mxu0 0.0
  %533 = vmatprep.subr.mxu0 0.0
  %534 = vmatpush1.msra.mxu0 0.0
  %535 = vmatprep.subr.mxu0 0.0
  %536 = vmatpush1.msra.mxu0 0.0
  %537 = vmatprep.subr.mxu0 0.0
  %538 = vmatpush1.msra.mxu0 0.0
  %539 = vmatprep.subr.mxu0 0.0
  %540 = vmatpush1.msra.mxu0 0.0
  %541 = vmatprep.subr.mxu0 0.0
  %542 = vmatpush1.msra.mxu0 0.0
  %543 = vmatprep.subr.mxu0 0.0
  %544 = vmatpush1.msra.mxu0 0.0
  %545 = vmatprep.subr.mxu0 0.0
  %546 = vmatpush1.msra.mxu0 0.0
  %547 = vmatprep.subr.mxu0 0.0
  %548 = vmatpush1.msra.mxu0 0.0
  %549 = vmatprep.subr.mxu0 0.0
  %550 = vmatpush1.msra.mxu0 0.0
  %551 = vmatprep.subr.mxu0 0.0
  %552 = vmatpush1.msra.mxu0 0.0
  %553 = vmatprep.subr.mxu0 0.0
  %554 = vmatpush1.msra.mxu0 0.0
  %555 = vmatprep.subr.mxu0 0.0
  %556 = vmatpush1.msra.mxu0 0.0
  %557 = vmatprep.subr.mxu0 0.0
  %558 = vmatpush1.msra.mxu0 0.0
  %559 = vmatprep.subr.mxu0 0.0
  %560 = vmatpush1.msra.mxu0 0.0
  %561 = vmatprep.subr.mxu0 0.0
  %562 = vmatpush1.msra.mxu0 0.0
  %563 = vmatprep.subr.mxu0 0.0
  %564 = vmatpush1.msra.mxu0 0.0
  %565 = vmatprep.mubr.f32.mxu0 0.0
  %566 = vmatmul.mubr.f32.gmra.mrb[0].mxu0 %v486
  %v567 = vpop.f32.mrb[0].mxu0
  %v568 = vadd.f32 %v467, %v567
  %v569 = vpop.f32.mrb[0].mxu0
  %570 = vmatprep.mubr.f32.mxu0 0.0
  %571 = vmatmul.mubr.f32.gmra.mrb[0].mxu0 %v489
  %v572 = vpop.f32.mrb[0].mxu0
  %v573 = vadd.f32 %v472, %v572
  %v574 = vpop.f32.mrb[0].mxu0
  %575 = vmatprep.mubr.f32.mxu0 0.0
  %576 = vmatmul.mubr.f32.gmra.mrb[0].mxu0 %v492
  %v577 = vpop.f32.mrb[0].mxu0
  %v578 = vadd.f32 %v477, %v577
  %v579 = vpop.f32.mrb[0].mxu0
  %580 = vmatprep.mubr.f32.mxu0 0.0
  %581 = vmatmul.mubr.f32.gmra.mrb[0].mxu0 %v495
  %v582 = vpop.f32.mrb[0].mxu0
  %v583 = vadd.f32 %v482, %v582
  %v584 = vpop.f32.mrb[0].mxu0
  %585 = vdwg.mxu0
  %v586 = vsub.f32 0.0, %v568
  %v587 = vsub.f32 0.0, %v573
  %v588 = vsub.f32 0.0, %v578
  %v589 = vsub.f32 0.0, %v583
  %v590 = vmul.f32 %v586, 1.442695
  %v591 = vpow.pop %v590
  %v592 = vmul.f32 %v587, 1.442695
  %v593 = vpow.pop %v592
  %v594 = vmul.f32 %v588, 1.442695
  %v595 = vpow.pop %v594
  %v596 = vmul.f32 %v589, 1.442695
  %v597 = vpow.pop %v596
  %v598 = vadd.f32 %v591, 1.0
  %v599 = vadd.f32 %v593, 1.0
  %v600 = vadd.f32 %v595, 1.0
  %v601 = vadd.f32 %v597, 1.0
  %v602 = vrcp.pop %v598
  %v603 = vrcp.pop %v599
  %v604 = vrcp.pop %v600
  %v605 = vrcp.pop %v601
  %v606 = vmul.f32 %v568, %v602
  %v607 = vmul.f32 %v573, %v603
  %v608 = vmul.f32 %v578, %v604
  %v609 = vmul.f32 %v583, %v605
  %v610 = vsub.f32 1.0, %v602
  %v611 = vsub.f32 1.0, %v603
  %v612 = vsub.f32 1.0, %v604
  %v613 = vsub.f32 1.0, %v605
  %v614 = vmul.f32 %v568, %v610
  %v615 = vmul.f32 %v573, %v611
  %v616 = vmul.f32 %v578, %v612
  %v617 = vmul.f32 %v583, %v613
  %v618 = vadd.f32 %v614, 1.0
  %v619 = vadd.f32 %v615, 1.0
  %v620 = vadd.f32 %v616, 1.0
  %v621 = vadd.f32 %v617, 1.0
  %v622 = vmul.f32 %v602, %v618
  %v623 = vmul.f32 %v603, %v619
  %v624 = vmul.f32 %v604, %v620
  %v625 = vmul.f32 %v605, %v621
  %626 = vmatprep.subr.mxu0 0.0
  %627 = vmatpush1.msra.mxu0 %v59
  %628 = vmatprep.subr.mxu0 0.0
  %629 = vmatpush1.msra.mxu0 %v60
  %630 = vmatprep.subr.mxu0 0.0
  %631 = vmatpush1.msra.mxu0 %v61
  %632 = vmatprep.subr.mxu0 0.0
  %633 = vmatpush1.msra.mxu0 %v62
  %634 = vmatprep.subr.mxu0 0.0
  %635 = vmatpush1.msra.mxu0 %v63
  %636 = vmatprep.subr.mxu0 0.0
  %637 = vmatpush1.msra.mxu0 %v64
  %638 = vmatprep.subr.mxu0 0.0
  %639 = vmatpush1.msra.mxu0 %v65
  %640 = vmatprep.subr.mxu0 0.0
  %641 = vmatpush1.msra.mxu0 %v66
  %642 = vmatprep.subr.mxu0 0.0
  %643 = vmatpush1.msra.mxu0 %v67
  %644 = vmatprep.subr.mxu0 0.0
  %645 = vmatpush1.msra.mxu0 %v68
  %646 = vmatprep.subr.mxu0 0.0
  %647 = vmatpush1.msra.mxu0 %v69
  %648 = vmatprep.subr.mxu0 0.0
  %649 = vmatpush1.msra.mxu0 %v70
  %650 = vmatprep.subr.mxu0 0.0
  %651 = vmatpush1.msra.mxu0 %v71
  %652 = vmatprep.subr.mxu0 0.0
  %653 = vmatpush1.msra.mxu0 %v72
  %654 = vmatprep.subr.mxu0 0.0
  %655 = vmatpush1.msra.mxu0 %v73
  %656 = vmatprep.subr.mxu0 0.0
  %657 = vmatpush1.msra.mxu0 %v74
  %658 = vmatprep.subr.mxu0 0.0
  %659 = vmatpush1.msra.mxu0 0.0
  %660 = vmatprep.subr.mxu0 0.0
  %661 = vmatpush1.msra.mxu0 0.0
  %662 = vmatprep.subr.mxu0 0.0
  %663 = vmatpush1.msra.mxu0 0.0
  %664 = vmatprep.subr.mxu0 0.0
  %665 = vmatpush1.msra.mxu0 0.0
  %666 = vmatprep.subr.mxu0 0.0
  %667 = vmatpush1.msra.mxu0 0.0
  %668 = vmatprep.subr.mxu0 0.0
  %669 = vmatpush1.msra.mxu0 0.0
  %670 = vmatprep.subr.mxu0 0.0
  %671 = vmatpush1.msra.mxu0 0.0
  %672 = vmatprep.subr.mxu0 0.0
  %673 = vmatpush1.msra.mxu0 0.0
  %674 = vmatprep.subr.mxu0 0.0
  %675 = vmatpush1.msra.mxu0 0.0
  %676 = vmatprep.subr.mxu0 0.0
  %677 = vmatpush1.msra.mxu0 0.0
  %678 = vmatprep.subr.mxu0 0.0
  %679 = vmatpush1.msra.mxu0 0.0
  %680 = vmatprep.subr.mxu0 0.0
  %681 = vmatpush1.msra.mxu0 0.0
  %682 = vmatprep.subr.mxu0 0.0
  %683 = vmatpush1.msra.mxu0 0.0
  %684 = vmatprep.subr.mxu0 0.0
  %685 = vmatpush1.msra.mxu0 0.0
  %686 = vmatprep.subr.mxu0 0.0
  %687 = vmatpush1.msra.mxu0 0.0
  %688 = vmatprep.subr.mxu0 0.0
  %689 = vmatpush1.msra.mxu0 0.0
  %690 = vmatprep.mubr.f32.mxu0 0.0
  %691 = vmatmul.mubr.f32.gmra.mrb[0].mxu0 %v606
  %v692 = vpop.f32.mrb[0].mxu0
  %v693 = vadd.f32 0.0, %v692
  %v694 = vpop.f32.mrb[0].mxu0
  %695 = vmatprep.mubr.f32.mxu0 0.0
  %696 = vmatmul.mubr.f32.gmra.mrb[0].mxu0 %v607
  %v697 = vpop.f32.mrb[0].mxu0
  %v698 = vadd.f32 0.0, %v697
  %v699 = vpop.f32.mrb[0].mxu0
  %700 = vmatprep.mubr.f32.mxu0 0.0
  %701 = vmatmul.mubr.f32.gmra.mrb[0].mxu0 %v608
  %v702 = vpop.f32.mrb[0].mxu0
  %v703 = vadd.f32 0.0, %v702
  %v704 = vpop.f32.mrb[0].mxu0
  %705 = vmatprep.mubr.f32.mxu0 0.0
  %706 = vmatmul.mubr.f32.gmra.mrb[0].mxu0 %v609
  %v707 = vpop.f32.mrb[0].mxu0
  %v708 = vadd.f32 0.0, %v707
  %v709 = vpop.f32.mrb[0].mxu0
  %710 = vdwg.mxu0
  %vm711 = vcmask 261120
  %v713 = vsel %vm711, %v87, 0
  %715 = vmatprep.subr.mxu0 0.0
  %716 = vmatpush1.msra.mxu0 %v693
  %717 = vmatprep.subr.mxu0 0.0
  %718 = vmatpush1.msra.mxu0 %v698
  %719 = vmatprep.subr.mxu0 0.0
  %720 = vmatpush1.msra.mxu0 %v703
  %721 = vmatprep.subr.mxu0 0.0
  %722 = vmatpush1.msra.mxu0 %v708
  %723 = vmatprep.subr.mxu0 0.0
  %724 = vmatpush1.msra.mxu0 0.0
  %725 = vmatprep.subr.mxu0 0.0
  %726 = vmatpush1.msra.mxu0 0.0
  %727 = vmatprep.subr.mxu0 0.0
  %728 = vmatpush1.msra.mxu0 0.0
  %729 = vmatprep.subr.mxu0 0.0
  %730 = vmatpush1.msra.mxu0 0.0
  %731 = vmatprep.subr.mxu0 0.0
  %732 = vmatpush1.msra.mxu0 0.0
  %733 = vmatprep.subr.mxu0 0.0
  %734 = vmatpush1.msra.mxu0 0.0
  %735 = vmatprep.subr.mxu0 0.0
  %736 = vmatpush1.msra.mxu0 0.0
  %737 = vmatprep.subr.mxu0 0.0
  %738 = vmatpush1.msra.mxu0 0.0
  %739 = vmatprep.subr.mxu0 0.0
  %740 = vmatpush1.msra.mxu0 0.0
  %741 = vmatprep.subr.mxu0 0.0
  %742 = vmatpush1.msra.mxu0 0.0
  %743 = vmatprep.subr.mxu0 0.0
  %744 = vmatpush1.msra.mxu0 0.0
  %745 = vmatprep.subr.mxu0 0.0
  %746 = vmatpush1.msra.mxu0 0.0
  %747 = vmatprep.subr.mxu0 0.0
  %748 = vmatpush1.msra.mxu0 0.0
  %749 = vmatprep.subr.mxu0 0.0
  %750 = vmatpush1.msra.mxu0 0.0
  %751 = vmatprep.subr.mxu0 0.0
  %752 = vmatpush1.msra.mxu0 0.0
  %753 = vmatprep.subr.mxu0 0.0
  %754 = vmatpush1.msra.mxu0 0.0
  %755 = vmatprep.subr.mxu0 0.0
  %756 = vmatpush1.msra.mxu0 0.0
  %757 = vmatprep.subr.mxu0 0.0
  %758 = vmatpush1.msra.mxu0 0.0
  %759 = vmatprep.subr.mxu0 0.0
  %760 = vmatpush1.msra.mxu0 0.0
  %761 = vmatprep.subr.mxu0 0.0
  %762 = vmatpush1.msra.mxu0 0.0
  %763 = vmatprep.subr.mxu0 0.0
  %764 = vmatpush1.msra.mxu0 0.0
  %765 = vmatprep.subr.mxu0 0.0
  %766 = vmatpush1.msra.mxu0 0.0
  %767 = vmatprep.subr.mxu0 0.0
  %768 = vmatpush1.msra.mxu0 0.0
  %769 = vmatprep.subr.mxu0 0.0
  %770 = vmatpush1.msra.mxu0 0.0
  %771 = vmatprep.subr.mxu0 0.0
  %772 = vmatpush1.msra.mxu0 0.0
  %773 = vmatprep.subr.mxu0 0.0
  %774 = vmatpush1.msra.mxu0 0.0
  %775 = vmatprep.subr.mxu0 0.0
  %776 = vmatpush1.msra.mxu0 0.0
  %777 = vmatprep.subr.mxu0 0.0
  %778 = vmatpush1.msra.mxu0 0.0
  %779 = vmatprep.mubr.f32.mxu0 0.0
  %780 = vmatmul.mubr.f32.gmra.mrb[0].mxu0 %v713
  %v781 = vpop.f32.mrb[0].mxu0
  %v782 = vadd.f32 0.0, %v781
  %v783 = vpop.f32.mrb[0].mxu0
  %784 = vdwg.mxu0
  %v786 = vsel %vm243, %v86, 0
  %v788 = vsel %vm235, %v75, 0
  %790 = vmatprep.subr.mxu0 0.0
  %791 = vmatpush1.msra.mxu0 %v788
  %792 = vmatprep.subr.mxu0 0.0
  %793 = vmatpush1.msra.mxu0 0.0
  %794 = vmatprep.subr.mxu0 0.0
  %795 = vmatpush1.msra.mxu0 0.0
  %796 = vmatprep.subr.mxu0 0.0
  %797 = vmatpush1.msra.mxu0 0.0
  %798 = vmatprep.subr.mxu0 0.0
  %799 = vmatpush1.msra.mxu0 0.0
  %800 = vmatprep.subr.mxu0 0.0
  %801 = vmatpush1.msra.mxu0 0.0
  %802 = vmatprep.subr.mxu0 0.0
  %803 = vmatpush1.msra.mxu0 0.0
  %804 = vmatprep.subr.mxu0 0.0
  %805 = vmatpush1.msra.mxu0 0.0
  %806 = vmatprep.subr.mxu0 0.0
  %807 = vmatpush1.msra.mxu0 0.0
  %808 = vmatprep.subr.mxu0 0.0
  %809 = vmatpush1.msra.mxu0 0.0
  %810 = vmatprep.subr.mxu0 0.0
  %811 = vmatpush1.msra.mxu0 0.0
  %812 = vmatprep.subr.mxu0 0.0
  %813 = vmatpush1.msra.mxu0 0.0
  %814 = vmatprep.subr.mxu0 0.0
  %815 = vmatpush1.msra.mxu0 0.0
  %816 = vmatprep.subr.mxu0 0.0
  %817 = vmatpush1.msra.mxu0 0.0
  %818 = vmatprep.subr.mxu0 0.0
  %819 = vmatpush1.msra.mxu0 0.0
  %820 = vmatprep.subr.mxu0 0.0
  %821 = vmatpush1.msra.mxu0 0.0
  %822 = vmatprep.subr.mxu0 0.0
  %823 = vmatpush1.msra.mxu0 0.0
  %824 = vmatprep.subr.mxu0 0.0
  %825 = vmatpush1.msra.mxu0 0.0
  %826 = vmatprep.subr.mxu0 0.0
  %827 = vmatpush1.msra.mxu0 0.0
  %828 = vmatprep.subr.mxu0 0.0
  %829 = vmatpush1.msra.mxu0 0.0
  %830 = vmatprep.subr.mxu0 0.0
  %831 = vmatpush1.msra.mxu0 0.0
  %832 = vmatprep.subr.mxu0 0.0
  %833 = vmatpush1.msra.mxu0 0.0
  %834 = vmatprep.subr.mxu0 0.0
  %835 = vmatpush1.msra.mxu0 0.0
  %836 = vmatprep.subr.mxu0 0.0
  %837 = vmatpush1.msra.mxu0 0.0
  %838 = vmatprep.subr.mxu0 0.0
  %839 = vmatpush1.msra.mxu0 0.0
  %840 = vmatprep.subr.mxu0 0.0
  %841 = vmatpush1.msra.mxu0 0.0
  %842 = vmatprep.subr.mxu0 0.0
  %843 = vmatpush1.msra.mxu0 0.0
  %844 = vmatprep.subr.mxu0 0.0
  %845 = vmatpush1.msra.mxu0 0.0
  %846 = vmatprep.subr.mxu0 0.0
  %847 = vmatpush1.msra.mxu0 0.0
  %848 = vmatprep.subr.mxu0 0.0
  %849 = vmatpush1.msra.mxu0 0.0
  %850 = vmatprep.subr.mxu0 0.0
  %851 = vmatpush1.msra.mxu0 0.0
  %852 = vmatprep.subr.mxu0 0.0
  %853 = vmatpush1.msra.mxu0 0.0
  %854 = vmatprep.mubr.f32.mxu0 0.0
  %855 = vmatmul.mubr.f32.gmra.mrb[0].mxu0 %v786
  %v856 = vpop.f32.mrb[0].mxu0
  %v857 = vadd.f32 %v782, %v856
  %v858 = vpop.f32.mrb[0].mxu0
  %859 = vdwg.mxu0
  %v860 = vld [vmem:[%s13] sm:$0x3f]
  %862 = vset.pattern.permute.xlu0 0
  %863 = vperm.xlu0 %862, %v860
  %v864 = vpop.permute.xlu0 %863
  %v866 = vadd.f32 %v857, %v864
  %v867 = vsub.f32 0.0, %v866
  %v868 = vmul.f32 %v867, 1.442695
  %v869 = vpow.pop %v868
  %v870 = vadd.f32 %v869, 1.0
  %v871 = vrcp.pop %v870
  %v872 = vmul.f32 %v866, %v871
  %v873 = vsub.f32 1.0, %v871
  %v874 = vmul.f32 %v866, %v873
  %v875 = vadd.f32 %v874, 1.0
  %v876 = vmul.f32 %v871, %v875
  %v877 = vld [vmem:[%s15] sm:$0x7]
  %879 = vset.pattern.permute.xlu0 0
  %880 = vperm.xlu0 %879, %v877
  %v881 = vpop.permute.xlu0 %880
  %vm883 = vcmask 48128
  %v885 = vsel %vm883, %v88, 0
  %v888 = vsel %vm497, %v872, 0
  %890 = vmatprep.subr.mxu0 0.0
  %891 = vmatpush1.msra.mxu0 %v888
  %892 = vmatprep.subr.mxu0 0.0
  %893 = vmatpush1.msra.mxu0 0.0
  %894 = vmatprep.subr.mxu0 0.0
  %895 = vmatpush1.msra.mxu0 0.0
  %896 = vmatprep.subr.mxu0 0.0
  %897 = vmatpush1.msra.mxu0 0.0
  %898 = vmatprep.subr.mxu0 0.0
  %899 = vmatpush1.msra.mxu0 0.0
  %900 = vmatprep.subr.mxu0 0.0
  %901 = vmatpush1.msra.mxu0 0.0
  %902 = vmatprep.subr.mxu0 0.0
  %903 = vmatpush1.msra.mxu0 0.0
  %904 = vmatprep.subr.mxu0 0.0
  %905 = vmatpush1.msra.mxu0 0.0
  %906 = vmatprep.subr.mxu0 0.0
  %907 = vmatpush1.msra.mxu0 0.0
  %908 = vmatprep.subr.mxu0 0.0
  %909 = vmatpush1.msra.mxu0 0.0
  %910 = vmatprep.subr.mxu0 0.0
  %911 = vmatpush1.msra.mxu0 0.0
  %912 = vmatprep.subr.mxu0 0.0
  %913 = vmatpush1.msra.mxu0 0.0
  %914 = vmatprep.subr.mxu0 0.0
  %915 = vmatpush1.msra.mxu0 0.0
  %916 = vmatprep.subr.mxu0 0.0
  %917 = vmatpush1.msra.mxu0 0.0
  %918 = vmatprep.subr.mxu0 0.0
  %919 = vmatpush1.msra.mxu0 0.0
  %920 = vmatprep.subr.mxu0 0.0
  %921 = vmatpush1.msra.mxu0 0.0
  %922 = vmatprep.subr.mxu0 0.0
  %923 = vmatpush1.msra.mxu0 0.0
  %924 = vmatprep.subr.mxu0 0.0
  %925 = vmatpush1.msra.mxu0 0.0
  %926 = vmatprep.subr.mxu0 0.0
  %927 = vmatpush1.msra.mxu0 0.0
  %928 = vmatprep.subr.mxu0 0.0
  %929 = vmatpush1.msra.mxu0 0.0
  %930 = vmatprep.subr.mxu0 0.0
  %931 = vmatpush1.msra.mxu0 0.0
  %932 = vmatprep.subr.mxu0 0.0
  %933 = vmatpush1.msra.mxu0 0.0
  %934 = vmatprep.subr.mxu0 0.0
  %935 = vmatpush1.msra.mxu0 0.0
  %936 = vmatprep.subr.mxu0 0.0
  %937 = vmatpush1.msra.mxu0 0.0
  %938 = vmatprep.subr.mxu0 0.0
  %939 = vmatpush1.msra.mxu0 0.0
  %940 = vmatprep.subr.mxu0 0.0
  %941 = vmatpush1.msra.mxu0 0.0
  %942 = vmatprep.subr.mxu0 0.0
  %943 = vmatpush1.msra.mxu0 0.0
  %944 = vmatprep.subr.mxu0 0.0
  %945 = vmatpush1.msra.mxu0 0.0
  %946 = vmatprep.subr.mxu0 0.0
  %947 = vmatpush1.msra.mxu0 0.0
  %948 = vmatprep.subr.mxu0 0.0
  %949 = vmatpush1.msra.mxu0 0.0
  %950 = vmatprep.subr.mxu0 0.0
  %951 = vmatpush1.msra.mxu0 0.0
  %952 = vmatprep.subr.mxu0 0.0
  %953 = vmatpush1.msra.mxu0 0.0
  %954 = vmatprep.mubr.f32.mxu0 0.0
  %955 = vmatmul.mubr.f32.gmra.mrb[0].mxu0 %v885
  %v956 = vpop.f32.mrb[0].mxu0
  %v957 = vadd.f32 %v881, %v956
  %v958 = vpop.f32.mrb[0].mxu0
  %959 = vdwg.mxu0
  %v960 = vadd.f32 %v957, %v75
  %v961 = vld [vmem:[%s1] sm:$0x7]
  %v963 = vsel %vm89, %v961, 0
  %965 = vmatprep.subr.mxu0 0.0
  %966 = vmatpush1.msra.mxu0 %v55
  %967 = vmatprep.subr.mxu0 0.0
  %968 = vmatpush1.msra.mxu0 %v56
  %969 = vmatprep.subr.mxu0 0.0
  %970 = vmatpush1.msra.mxu0 0.0
  %971 = vmatprep.subr.mxu0 0.0
  %972 = vmatpush1.msra.mxu0 0.0
  %973 = vmatprep.subr.mxu0 0.0
  %974 = vmatpush1.msra.mxu0 0.0
  %975 = vmatprep.subr.mxu0 0.0
  %976 = vmatpush1.msra.mxu0 0.0
  %977 = vmatprep.subr.mxu0 0.0
  %978 = vmatpush1.msra.mxu0 0.0
  %979 = vmatprep.subr.mxu0 0.0
  %980 = vmatpush1.msra.mxu0 0.0
  %981 = vmatprep.subr.mxu0 0.0
  %982 = vmatpush1.msra.mxu0 0.0
  %983 = vmatprep.subr.mxu0 0.0
  %984 = vmatpush1.msra.mxu0 0.0
  %985 = vmatprep.subr.mxu0 0.0
  %986 = vmatpush1.msra.mxu0 0.0
  %987 = vmatprep.subr.mxu0 0.0
  %988 = vmatpush1.msra.mxu0 0.0
  %989 = vmatprep.subr.mxu0 0.0
  %990 = vmatpush1.msra.mxu0 0.0
  %991 = vmatprep.subr.mxu0 0.0
  %992 = vmatpush1.msra.mxu0 0.0
  %993 = vmatprep.subr.mxu0 0.0
  %994 = vmatpush1.msra.mxu0 0.0
  %995 = vmatprep.subr.mxu0 0.0
  %996 = vmatpush1.msra.mxu0 0.0
  %997 = vmatprep.subr.mxu0 0.0
  %998 = vmatpush1.msra.mxu0 0.0
  %999 = vmatprep.subr.mxu0 0.0
  %1000 = vmatpush1.msra.mxu0 0.0
  %1001 = vmatprep.subr.mxu0 0.0
  %1002 = vmatpush1.msra.mxu0 0.0
  %1003 = vmatprep.subr.mxu0 0.0
  %1004 = vmatpush1.msra.mxu0 0.0
  %1005 = vmatprep.subr.mxu0 0.0
  %1006 = vmatpush1.msra.mxu0 0.0
  %1007 = vmatprep.subr.mxu0 0.0
  %1008 = vmatpush1.msra.mxu0 0.0
  %1009 = vmatprep.subr.mxu0 0.0
  %1010 = vmatpush1.msra.mxu0 0.0
  %1011 = vmatprep.subr.mxu0 0.0
  %1012 = vmatpush1.msra.mxu0 0.0
  %1013 = vmatprep.subr.mxu0 0.0
  %1014 = vmatpush1.msra.mxu0 0.0
  %1015 = vmatprep.subr.mxu0 0.0
  %1016 = vmatpush1.msra.mxu0 0.0
  %1017 = vmatprep.subr.mxu0 0.0
  %1018 = vmatpush1.msra.mxu0 0.0
  %1019 = vmatprep.subr.mxu0 0.0
  %1020 = vmatpush1.msra.mxu0 0.0
  %1021 = vmatprep.subr.mxu0 0.0
  %1022 = vmatpush1.msra.mxu0 0.0
  %1023 = vmatprep.subr.mxu0 0.0
  %1024 = vmatpush1.msra.mxu0 0.0
  %1025 = vmatprep.subr.mxu0 0.0
  %1026 = vmatpush1.msra.mxu0 0.0
  %1027 = vmatprep.subr.mxu0 0.0
  %1028 = vmatpush1.msra.mxu0 0.0
  %1029 = vmatprep.mubr.f32.mxu0 0.0
  %1030 = vmatmul.mubr.f32.gmra.mrb[0].mxu0 %v963
  %v1031 = vpop.f32.mrb[0].mxu0
  %v1032 = vadd.f32 0.0, %v1031
  %v1033 = vpop.f32.mrb[0].mxu0
  %1034 = vdwg.mxu0
  %1035 = vmatprep.subr.mxu0 0.0
  %1036 = vmatpush1.msra.mxu0 %v57
  %1037 = vmatprep.subr.mxu0 0.0
  %1038 = vmatpush1.msra.mxu0 %v58
  %1039 = vmatprep.subr.mxu0 0.0
  %1040 = vmatpush1.msra.mxu0 0.0
  %1041 = vmatprep.subr.mxu0 0.0
  %1042 = vmatpush1.msra.mxu0 0.0
  %1043 = vmatprep.subr.mxu0 0.0
  %1044 = vmatpush1.msra.mxu0 0.0
  %1045 = vmatprep.subr.mxu0 0.0
  %1046 = vmatpush1.msra.mxu0 0.0
  %1047 = vmatprep.subr.mxu0 0.0
  %1048 = vmatpush1.msra.mxu0 0.0
  %1049 = vmatprep.subr.mxu0 0.0
  %1050 = vmatpush1.msra.mxu0 0.0
  %1051 = vmatprep.subr.mxu0 0.0
  %1052 = vmatpush1.msra.mxu0 0.0
  %1053 = vmatprep.subr.mxu0 0.0
  %1054 = vmatpush1.msra.mxu0 0.0
  %1055 = vmatprep.subr.mxu0 0.0
  %1056 = vmatpush1.msra.mxu0 0.0
  %1057 = vmatprep.subr.mxu0 0.0
  %1058 = vmatpush1.msra.mxu0 0.0
  %1059 = vmatprep.subr.mxu0 0.0
  %1060 = vmatpush1.msra.mxu0 0.0
  %1061 = vmatprep.subr.mxu0 0.0
  %1062 = vmatpush1.msra.mxu0 0.0
  %1063 = vmatprep.subr.mxu0 0.0
  %1064 = vmatpush1.msra.mxu0 0.0
  %1065 = vmatprep.subr.mxu0 0.0
  %1066 = vmatpush1.msra.mxu0 0.0
  %1067 = vmatprep.subr.mxu0 0.0
  %1068 = vmatpush1.msra.mxu0 0.0
  %1069 = vmatprep.subr.mxu0 0.0
  %1070 = vmatpush1.msra.mxu0 0.0
  %1071 = vmatprep.subr.mxu0 0.0
  %1072 = vmatpush1.msra.mxu0 0.0
  %1073 = vmatprep.subr.mxu0 0.0
  %1074 = vmatpush1.msra.mxu0 0.0
  %1075 = vmatprep.subr.mxu0 0.0
  %1076 = vmatpush1.msra.mxu0 0.0
  %1077 = vmatprep.subr.mxu0 0.0
  %1078 = vmatpush1.msra.mxu0 0.0
  %1079 = vmatprep.subr.mxu0 0.0
  %1080 = vmatpush1.msra.mxu0 0.0
  %1081 = vmatprep.subr.mxu0 0.0
  %1082 = vmatpush1.msra.mxu0 0.0
  %1083 = vmatprep.subr.mxu0 0.0
  %1084 = vmatpush1.msra.mxu0 0.0
  %1085 = vmatprep.subr.mxu0 0.0
  %1086 = vmatpush1.msra.mxu0 0.0
  %1087 = vmatprep.subr.mxu0 0.0
  %1088 = vmatpush1.msra.mxu0 0.0
  %1089 = vmatprep.subr.mxu0 0.0
  %1090 = vmatpush1.msra.mxu0 0.0
  %1091 = vmatprep.subr.mxu0 0.0
  %1092 = vmatpush1.msra.mxu0 0.0
  %1093 = vmatprep.subr.mxu0 0.0
  %1094 = vmatpush1.msra.mxu0 0.0
  %1095 = vmatprep.subr.mxu0 0.0
  %1096 = vmatpush1.msra.mxu0 0.0
  %1097 = vmatprep.subr.mxu0 0.0
  %1098 = vmatpush1.msra.mxu0 0.0
  %1099 = vmatprep.mubr.f32.mxu0 0.0
  %1100 = vmatmul.mubr.f32.gmra.mrb[0].mxu0 %v963
  %v1101 = vpop.f32.mrb[0].mxu0
  %v1102 = vadd.f32 0.0, %v1101
  %v1103 = vpop.f32.mrb[0].mxu0
  %1104 = vdwg.mxu0
  %v1105 = vsub.f32 %v1032, %v1102
  %v1106 = vmul.f32 %v233, %v1105
  %v1107 = vsel %vm235, %v1106, 0.0
  %v1108 = vrot.slane %v1107, 4
  %v1109 = vadd.f32 %v1107, %v1108
  %v1110 = vrot.slane %v1109, 2
  %v1111 = vadd.f32 %v1109, %v1110
  %v1112 = vrot.slane %v1111, 1
  %v1113 = vadd.f32 %v1111, %v1112
  %v1114 = vmul.f32 %v1113, 2.0
  %v1116 = vsel %vm235, %v1102, 0
  %1118 = vmatprep.subr.mxu0 0.0
  %1119 = vmatpush1.msra.mxu0 %v1116
  %1120 = vmatprep.subr.mxu0 0.0
  %1121 = vmatpush1.msra.mxu0 0.0
  %1122 = vmatprep.subr.mxu0 0.0
  %1123 = vmatpush1.msra.mxu0 0.0
  %1124 = vmatprep.subr.mxu0 0.0
  %1125 = vmatpush1.msra.mxu0 0.0
  %1126 = vmatprep.subr.mxu0 0.0
  %1127 = vmatpush1.msra.mxu0 0.0
  %1128 = vmatprep.subr.mxu0 0.0
  %1129 = vmatpush1.msra.mxu0 0.0
  %1130 = vmatprep.subr.mxu0 0.0
  %1131 = vmatpush1.msra.mxu0 0.0
  %1132 = vmatprep.subr.mxu0 0.0
  %1133 = vmatpush1.msra.mxu0 0.0
  %1134 = vmatprep.subr.mxu0 0.0
  %1135 = vmatpush1.msra.mxu0 0.0
  %1136 = vmatprep.subr.mxu0 0.0
  %1137 = vmatpush1.msra.mxu0 0.0
  %1138 = vmatprep.subr.mxu0 0.0
  %1139 = vmatpush1.msra.mxu0 0.0
  %1140 = vmatprep.subr.mxu0 0.0
  %1141 = vmatpush1.msra.mxu0 0.0
  %1142 = vmatprep.subr.mxu0 0.0
  %1143 = vmatpush1.msra.mxu0 0.0
  %1144 = vmatprep.subr.mxu0 0.0
  %1145 = vmatpush1.msra.mxu0 0.0
  %1146 = vmatprep.subr.mxu0 0.0
  %1147 = vmatpush1.msra.mxu0 0.0
  %1148 = vmatprep.subr.mxu0 0.0
  %1149 = vmatpush1.msra.mxu0 0.0
  %1150 = vmatprep.subr.mxu0 0.0
  %1151 = vmatpush1.msra.mxu0 0.0
  %1152 = vmatprep.subr.mxu0 0.0
  %1153 = vmatpush1.msra.mxu0 0.0
  %1154 = vmatprep.subr.mxu0 0.0
  %1155 = vmatpush1.msra.mxu0 0.0
  %1156 = vmatprep.subr.mxu0 0.0
  %1157 = vmatpush1.msra.mxu0 0.0
  %1158 = vmatprep.subr.mxu0 0.0
  %1159 = vmatpush1.msra.mxu0 0.0
  %1160 = vmatprep.subr.mxu0 0.0
  %1161 = vmatpush1.msra.mxu0 0.0
  %1162 = vmatprep.subr.mxu0 0.0
  %1163 = vmatpush1.msra.mxu0 0.0
  %1164 = vmatprep.subr.mxu0 0.0
  %1165 = vmatpush1.msra.mxu0 0.0
  %1166 = vmatprep.subr.mxu0 0.0
  %1167 = vmatpush1.msra.mxu0 0.0
  %1168 = vmatprep.subr.mxu0 0.0
  %1169 = vmatpush1.msra.mxu0 0.0
  %1170 = vmatprep.subr.mxu0 0.0
  %1171 = vmatpush1.msra.mxu0 0.0
  %1172 = vmatprep.subr.mxu0 0.0
  %1173 = vmatpush1.msra.mxu0 0.0
  %1174 = vmatprep.subr.mxu0 0.0
  %1175 = vmatpush1.msra.mxu0 0.0
  %1176 = vmatprep.subr.mxu0 0.0
  %1177 = vmatpush1.msra.mxu0 0.0
  %1178 = vmatprep.subr.mxu0 0.0
  %1179 = vmatpush1.msra.mxu0 0.0
  %1180 = vmatprep.subr.mxu0 0.0
  %1181 = vmatpush1.msra.mxu0 0.0
  %1182 = vmatprep.mubr.f32.mxu0 0.0
  %1183 = vmatmul.mubr.f32.gmra.mrb[0].mxu0 %v245
  %v1184 = vpop.f32.mrb[0].mxu0
  %v1185 = vadd.f32 0.0, %v1184
  %v1186 = vpop.f32.mrb[0].mxu0
  %1187 = vmatprep.mubr.f32.mxu0 0.0
  %1188 = vmatmul.mubr.f32.gmra.mrb[0].mxu0 %v248
  %v1189 = vpop.f32.mrb[0].mxu0
  %v1190 = vadd.f32 0.0, %v1189
  %v1191 = vpop.f32.mrb[0].mxu0
  %1192 = vdwg.mxu0
  %v1194 = vsel %vm235, %v1032, 0
  %1196 = vmatprep.subr.mxu0 0.0
  %1197 = vmatpush1.msra.mxu0 %v1194
  %1198 = vmatprep.subr.mxu0 0.0
  %1199 = vmatpush1.msra.mxu0 0.0
  %1200 = vmatprep.subr.mxu0 0.0
  %1201 = vmatpush1.msra.mxu0 0.0
  %1202 = vmatprep.subr.mxu0 0.0
  %1203 = vmatpush1.msra.mxu0 0.0
  %1204 = vmatprep.subr.mxu0 0.0
  %1205 = vmatpush1.msra.mxu0 0.0
  %1206 = vmatprep.subr.mxu0 0.0
  %1207 = vmatpush1.msra.mxu0 0.0
  %1208 = vmatprep.subr.mxu0 0.0
  %1209 = vmatpush1.msra.mxu0 0.0
  %1210 = vmatprep.subr.mxu0 0.0
  %1211 = vmatpush1.msra.mxu0 0.0
  %1212 = vmatprep.subr.mxu0 0.0
  %1213 = vmatpush1.msra.mxu0 0.0
  %1214 = vmatprep.subr.mxu0 0.0
  %1215 = vmatpush1.msra.mxu0 0.0
  %1216 = vmatprep.subr.mxu0 0.0
  %1217 = vmatpush1.msra.mxu0 0.0
  %1218 = vmatprep.subr.mxu0 0.0
  %1219 = vmatpush1.msra.mxu0 0.0
  %1220 = vmatprep.subr.mxu0 0.0
  %1221 = vmatpush1.msra.mxu0 0.0
  %1222 = vmatprep.subr.mxu0 0.0
  %1223 = vmatpush1.msra.mxu0 0.0
  %1224 = vmatprep.subr.mxu0 0.0
  %1225 = vmatpush1.msra.mxu0 0.0
  %1226 = vmatprep.subr.mxu0 0.0
  %1227 = vmatpush1.msra.mxu0 0.0
  %1228 = vmatprep.subr.mxu0 0.0
  %1229 = vmatpush1.msra.mxu0 0.0
  %1230 = vmatprep.subr.mxu0 0.0
  %1231 = vmatpush1.msra.mxu0 0.0
  %1232 = vmatprep.subr.mxu0 0.0
  %1233 = vmatpush1.msra.mxu0 0.0
  %1234 = vmatprep.subr.mxu0 0.0
  %1235 = vmatpush1.msra.mxu0 0.0
  %1236 = vmatprep.subr.mxu0 0.0
  %1237 = vmatpush1.msra.mxu0 0.0
  %1238 = vmatprep.subr.mxu0 0.0
  %1239 = vmatpush1.msra.mxu0 0.0
  %1240 = vmatprep.subr.mxu0 0.0
  %1241 = vmatpush1.msra.mxu0 0.0
  %1242 = vmatprep.subr.mxu0 0.0
  %1243 = vmatpush1.msra.mxu0 0.0
  %1244 = vmatprep.subr.mxu0 0.0
  %1245 = vmatpush1.msra.mxu0 0.0
  %1246 = vmatprep.subr.mxu0 0.0
  %1247 = vmatpush1.msra.mxu0 0.0
  %1248 = vmatprep.subr.mxu0 0.0
  %1249 = vmatpush1.msra.mxu0 0.0
  %1250 = vmatprep.subr.mxu0 0.0
  %1251 = vmatpush1.msra.mxu0 0.0
  %1252 = vmatprep.subr.mxu0 0.0
  %1253 = vmatpush1.msra.mxu0 0.0
  %1254 = vmatprep.subr.mxu0 0.0
  %1255 = vmatpush1.msra.mxu0 0.0
  %1256 = vmatprep.subr.mxu0 0.0
  %1257 = vmatpush1.msra.mxu0 0.0
  %1258 = vmatprep.subr.mxu0 0.0
  %1259 = vmatpush1.msra.mxu0 0.0
  %1260 = vmatprep.mubr.f32.mxu0 0.0
  %1261 = vmatmul.mubr.f32.gmra.mrb[0].mxu0 %v329
  %v1262 = vpop.f32.mrb[0].mxu0
  %v1263 = vadd.f32 %v1185, %v1262
  %v1264 = vpop.f32.mrb[0].mxu0
  %1265 = vmatprep.mubr.f32.mxu0 0.0
  %1266 = vmatmul.mubr.f32.gmra.mrb[0].mxu0 %v332
  %v1267 = vpop.f32.mrb[0].mxu0
  %v1268 = vadd.f32 %v1190, %v1267
  %v1269 = vpop.f32.mrb[0].mxu0
  %1270 = vdwg.mxu0
  %v1271 = vmul.f32 %v415, %v1114
  %v1272 = vmul.f32 %v420, %v1114
  %v1273 = vadd.f32 %v1263, %v1271
  %v1274 = vadd.f32 %v1268, %v1272
  %v1275 = vmul.f32 %v458, %v1273
  %v1276 = vmul.f32 %v459, %v1274
  %v1278 = vsel %vm497, %v1276, 0
  %1280 = vmatprep.subr.mxu0 0.0
  %1281 = vmatpush1.msra.mxu0 %v1275
  %1282 = vmatprep.subr.mxu0 0.0
  %1283 = vmatpush1.msra.mxu0 %v1278
  %1284 = vmatprep.subr.mxu0 0.0
  %1285 = vmatpush1.msra.mxu0 0.0
  %1286 = vmatprep.subr.mxu0 0.0
  %1287 = vmatpush1.msra.mxu0 0.0
  %1288 = vmatprep.subr.mxu0 0.0
  %1289 = vmatpush1.msra.mxu0 0.0
  %1290 = vmatprep.subr.mxu0 0.0
  %1291 = vmatpush1.msra.mxu0 0.0
  %1292 = vmatprep.subr.mxu0 0.0
  %1293 = vmatpush1.msra.mxu0 0.0
  %1294 = vmatprep.subr.mxu0 0.0
  %1295 = vmatpush1.msra.mxu0 0.0
  %1296 = vmatprep.subr.mxu0 0.0
  %1297 = vmatpush1.msra.mxu0 0.0
  %1298 = vmatprep.subr.mxu0 0.0
  %1299 = vmatpush1.msra.mxu0 0.0
  %1300 = vmatprep.subr.mxu0 0.0
  %1301 = vmatpush1.msra.mxu0 0.0
  %1302 = vmatprep.subr.mxu0 0.0
  %1303 = vmatpush1.msra.mxu0 0.0
  %1304 = vmatprep.subr.mxu0 0.0
  %1305 = vmatpush1.msra.mxu0 0.0
  %1306 = vmatprep.subr.mxu0 0.0
  %1307 = vmatpush1.msra.mxu0 0.0
  %1308 = vmatprep.subr.mxu0 0.0
  %1309 = vmatpush1.msra.mxu0 0.0
  %1310 = vmatprep.subr.mxu0 0.0
  %1311 = vmatpush1.msra.mxu0 0.0
  %1312 = vmatprep.subr.mxu0 0.0
  %1313 = vmatpush1.msra.mxu0 0.0
  %1314 = vmatprep.subr.mxu0 0.0
  %1315 = vmatpush1.msra.mxu0 0.0
  %1316 = vmatprep.subr.mxu0 0.0
  %1317 = vmatpush1.msra.mxu0 0.0
  %1318 = vmatprep.subr.mxu0 0.0
  %1319 = vmatpush1.msra.mxu0 0.0
  %1320 = vmatprep.subr.mxu0 0.0
  %1321 = vmatpush1.msra.mxu0 0.0
  %1322 = vmatprep.subr.mxu0 0.0
  %1323 = vmatpush1.msra.mxu0 0.0
  %1324 = vmatprep.subr.mxu0 0.0
  %1325 = vmatpush1.msra.mxu0 0.0
  %1326 = vmatprep.subr.mxu0 0.0
  %1327 = vmatpush1.msra.mxu0 0.0
  %1328 = vmatprep.subr.mxu0 0.0
  %1329 = vmatpush1.msra.mxu0 0.0
  %1330 = vmatprep.subr.mxu0 0.0
  %1331 = vmatpush1.msra.mxu0 0.0
  %1332 = vmatprep.subr.mxu0 0.0
  %1333 = vmatpush1.msra.mxu0 0.0
  %1334 = vmatprep.subr.mxu0 0.0
  %1335 = vmatpush1.msra.mxu0 0.0
  %1336 = vmatprep.subr.mxu0 0.0
  %1337 = vmatpush1.msra.mxu0 0.0
  %1338 = vmatprep.subr.mxu0 0.0
  %1339 = vmatpush1.msra.mxu0 0.0
  %1340 = vmatprep.subr.mxu0 0.0
  %1341 = vmatpush1.msra.mxu0 0.0
  %1342 = vmatprep.subr.mxu0 0.0
  %1343 = vmatpush1.msra.mxu0 0.0
  %1344 = vmatprep.mubr.f32.mxu0 0.0
  %1345 = vmatmul.mubr.f32.gmra.mrb[0].mxu0 %v486
  %v1346 = vpop.f32.mrb[0].mxu0
  %v1347 = vadd.f32 0.0, %v1346
  %v1348 = vpop.f32.mrb[0].mxu0
  %1349 = vmatprep.mubr.f32.mxu0 0.0
  %1350 = vmatmul.mubr.f32.gmra.mrb[0].mxu0 %v489
  %v1351 = vpop.f32.mrb[0].mxu0
  %v1352 = vadd.f32 0.0, %v1351
  %v1353 = vpop.f32.mrb[0].mxu0
  %1354 = vmatprep.mubr.f32.mxu0 0.0
  %1355 = vmatmul.mubr.f32.gmra.mrb[0].mxu0 %v492
  %v1356 = vpop.f32.mrb[0].mxu0
  %v1357 = vadd.f32 0.0, %v1356
  %v1358 = vpop.f32.mrb[0].mxu0
  %1359 = vmatprep.mubr.f32.mxu0 0.0
  %1360 = vmatmul.mubr.f32.gmra.mrb[0].mxu0 %v495
  %v1361 = vpop.f32.mrb[0].mxu0
  %v1362 = vadd.f32 0.0, %v1361
  %v1363 = vpop.f32.mrb[0].mxu0
  %1364 = vdwg.mxu0
  %v1365 = vmul.f32 %v622, %v1347
  %v1366 = vmul.f32 %v623, %v1352
  %v1367 = vmul.f32 %v624, %v1357
  %v1368 = vmul.f32 %v625, %v1362
  %1369 = vmatprep.subr.mxu0 0.0
  %1370 = vmatpush1.msra.mxu0 %v59
  %1371 = vmatprep.subr.mxu0 0.0
  %1372 = vmatpush1.msra.mxu0 %v60
  %1373 = vmatprep.subr.mxu0 0.0
  %1374 = vmatpush1.msra.mxu0 %v61
  %1375 = vmatprep.subr.mxu0 0.0
  %1376 = vmatpush1.msra.mxu0 %v62
  %1377 = vmatprep.subr.mxu0 0.0
  %1378 = vmatpush1.msra.mxu0 %v63
  %1379 = vmatprep.subr.mxu0 0.0
  %1380 = vmatpush1.msra.mxu0 %v64
  %1381 = vmatprep.subr.mxu0 0.0
  %1382 = vmatpush1.msra.mxu0 %v65
  %1383 = vmatprep.subr.mxu0 0.0
  %1384 = vmatpush1.msra.mxu0 %v66
  %1385 = vmatprep.subr.mxu0 0.0
  %1386 = vmatpush1.msra.mxu0 %v67
  %1387 = vmatprep.subr.mxu0 0.0
  %1388 = vmatpush1.msra.mxu0 %v68
  %1389 = vmatprep.subr.mxu0 0.0
  %1390 = vmatpush1.msra.mxu0 %v69
  %1391 = vmatprep.subr.mxu0 0.0
  %1392 = vmatpush1.msra.mxu0 %v70
  %1393 = vmatprep.subr.mxu0 0.0
  %1394 = vmatpush1.msra.mxu0 %v71
  %1395 = vmatprep.subr.mxu0 0.0
  %1396 = vmatpush1.msra.mxu0 %v72
  %1397 = vmatprep.subr.mxu0 0.0
  %1398 = vmatpush1.msra.mxu0 %v73
  %1399 = vmatprep.subr.mxu0 0.0
  %1400 = vmatpush1.msra.mxu0 %v74
  %1401 = vmatprep.subr.mxu0 0.0
  %1402 = vmatpush1.msra.mxu0 0.0
  %1403 = vmatprep.subr.mxu0 0.0
  %1404 = vmatpush1.msra.mxu0 0.0
  %1405 = vmatprep.subr.mxu0 0.0
  %1406 = vmatpush1.msra.mxu0 0.0
  %1407 = vmatprep.subr.mxu0 0.0
  %1408 = vmatpush1.msra.mxu0 0.0
  %1409 = vmatprep.subr.mxu0 0.0
  %1410 = vmatpush1.msra.mxu0 0.0
  %1411 = vmatprep.subr.mxu0 0.0
  %1412 = vmatpush1.msra.mxu0 0.0
  %1413 = vmatprep.subr.mxu0 0.0
  %1414 = vmatpush1.msra.mxu0 0.0
  %1415 = vmatprep.subr.mxu0 0.0
  %1416 = vmatpush1.msra.mxu0 0.0
  %1417 = vmatprep.subr.mxu0 0.0
  %1418 = vmatpush1.msra.mxu0 0.0
  %1419 = vmatprep.subr.mxu0 0.0
  %1420 = vmatpush1.msra.mxu0 0.0
  %1421 = vmatprep.subr.mxu0 0.0
  %1422 = vmatpush1.msra.mxu0 0.0
  %1423 = vmatprep.subr.mxu0 0.0
  %1424 = vmatpush1.msra.mxu0 0.0
  %1425 = vmatprep.subr.mxu0 0.0
  %1426 = vmatpush1.msra.mxu0 0.0
  %1427 = vmatprep.subr.mxu0 0.0
  %1428 = vmatpush1.msra.mxu0 0.0
  %1429 = vmatprep.subr.mxu0 0.0
  %1430 = vmatpush1.msra.mxu0 0.0
  %1431 = vmatprep.subr.mxu0 0.0
  %1432 = vmatpush1.msra.mxu0 0.0
  %1433 = vmatprep.mubr.f32.mxu0 0.0
  %1434 = vmatmul.mubr.f32.gmra.mrb[0].mxu0 %v1365
  %v1435 = vpop.f32.mrb[0].mxu0
  %v1436 = vadd.f32 0.0, %v1435
  %v1437 = vpop.f32.mrb[0].mxu0
  %1438 = vmatprep.mubr.f32.mxu0 0.0
  %1439 = vmatmul.mubr.f32.gmra.mrb[0].mxu0 %v1366
  %v1440 = vpop.f32.mrb[0].mxu0
  %v1441 = vadd.f32 0.0, %v1440
  %v1442 = vpop.f32.mrb[0].mxu0
  %1443 = vmatprep.mubr.f32.mxu0 0.0
  %1444 = vmatmul.mubr.f32.gmra.mrb[0].mxu0 %v1367
  %v1445 = vpop.f32.mrb[0].mxu0
  %v1446 = vadd.f32 0.0, %v1445
  %v1447 = vpop.f32.mrb[0].mxu0
  %1448 = vmatprep.mubr.f32.mxu0 0.0
  %1449 = vmatmul.mubr.f32.gmra.mrb[0].mxu0 %v1368
  %v1450 = vpop.f32.mrb[0].mxu0
  %v1451 = vadd.f32 0.0, %v1450
  %v1452 = vpop.f32.mrb[0].mxu0
  %1453 = vdwg.mxu0
  %1454 = vmatprep.subr.mxu0 0.0
  %1455 = vmatpush1.msra.mxu0 %v1436
  %1456 = vmatprep.subr.mxu0 0.0
  %1457 = vmatpush1.msra.mxu0 %v1441
  %1458 = vmatprep.subr.mxu0 0.0
  %1459 = vmatpush1.msra.mxu0 %v1446
  %1460 = vmatprep.subr.mxu0 0.0
  %1461 = vmatpush1.msra.mxu0 %v1451
  %1462 = vmatprep.subr.mxu0 0.0
  %1463 = vmatpush1.msra.mxu0 0.0
  %1464 = vmatprep.subr.mxu0 0.0
  %1465 = vmatpush1.msra.mxu0 0.0
  %1466 = vmatprep.subr.mxu0 0.0
  %1467 = vmatpush1.msra.mxu0 0.0
  %1468 = vmatprep.subr.mxu0 0.0
  %1469 = vmatpush1.msra.mxu0 0.0
  %1470 = vmatprep.subr.mxu0 0.0
  %1471 = vmatpush1.msra.mxu0 0.0
  %1472 = vmatprep.subr.mxu0 0.0
  %1473 = vmatpush1.msra.mxu0 0.0
  %1474 = vmatprep.subr.mxu0 0.0
  %1475 = vmatpush1.msra.mxu0 0.0
  %1476 = vmatprep.subr.mxu0 0.0
  %1477 = vmatpush1.msra.mxu0 0.0
  %1478 = vmatprep.subr.mxu0 0.0
  %1479 = vmatpush1.msra.mxu0 0.0
  %1480 = vmatprep.subr.mxu0 0.0
  %1481 = vmatpush1.msra.mxu0 0.0
  %1482 = vmatprep.subr.mxu0 0.0
  %1483 = vmatpush1.msra.mxu0 0.0
  %1484 = vmatprep.subr.mxu0 0.0
  %1485 = vmatpush1.msra.mxu0 0.0
  %1486 = vmatprep.subr.mxu0 0.0
  %1487 = vmatpush1.msra.mxu0 0.0
  %1488 = vmatprep.subr.mxu0 0.0
  %1489 = vmatpush1.msra.mxu0 0.0
  %1490 = vmatprep.subr.mxu0 0.0
  %1491 = vmatpush1.msra.mxu0 0.0
  %1492 = vmatprep.subr.mxu0 0.0
  %1493 = vmatpush1.msra.mxu0 0.0
  %1494 = vmatprep.subr.mxu0 0.0
  %1495 = vmatpush1.msra.mxu0 0.0
  %1496 = vmatprep.subr.mxu0 0.0
  %1497 = vmatpush1.msra.mxu0 0.0
  %1498 = vmatprep.subr.mxu0 0.0
  %1499 = vmatpush1.msra.mxu0 0.0
  %1500 = vmatprep.subr.mxu0 0.0
  %1501 = vmatpush1.msra.mxu0 0.0
  %1502 = vmatprep.subr.mxu0 0.0
  %1503 = vmatpush1.msra.mxu0 0.0
  %1504 = vmatprep.subr.mxu0 0.0
  %1505 = vmatpush1.msra.mxu0 0.0
  %1506 = vmatprep.subr.mxu0 0.0
  %1507 = vmatpush1.msra.mxu0 0.0
  %1508 = vmatprep.subr.mxu0 0.0
  %1509 = vmatpush1.msra.mxu0 0.0
  %1510 = vmatprep.subr.mxu0 0.0
  %1511 = vmatpush1.msra.mxu0 0.0
  %1512 = vmatprep.subr.mxu0 0.0
  %1513 = vmatpush1.msra.mxu0 0.0
  %1514 = vmatprep.subr.mxu0 0.0
  %1515 = vmatpush1.msra.mxu0 0.0
  %1516 = vmatprep.subr.mxu0 0.0
  %1517 = vmatpush1.msra.mxu0 0.0
  %1518 = vmatprep.mubr.f32.mxu0 0.0
  %1519 = vmatmul.mubr.f32.gmra.mrb[0].mxu0 %v713
  %v1520 = vpop.f32.mrb[0].mxu0
  %v1521 = vadd.f32 0.0, %v1520
  %v1522 = vpop.f32.mrb[0].mxu0
  %1523 = vdwg.mxu0
  %v1524 = vsel %vm235, %v961, 0
  %1526 = vmatprep.subr.mxu0 0.0
  %1527 = vmatpush1.msra.mxu0 %v1524
  %1528 = vmatprep.subr.mxu0 0.0
  %1529 = vmatpush1.msra.mxu0 0.0
  %1530 = vmatprep.subr.mxu0 0.0
  %1531 = vmatpush1.msra.mxu0 0.0
  %1532 = vmatprep.subr.mxu0 0.0
  %1533 = vmatpush1.msra.mxu0 0.0
  %1534 = vmatprep.subr.mxu0 0.0
  %1535 = vmatpush1.msra.mxu0 0.0
  %1536 = vmatprep.subr.mxu0 0.0
  %1537 = vmatpush1.msra.mxu0 0.0
  %1538 = vmatprep.subr.mxu0 0.0
  %1539 = vmatpush1.msra.mxu0 0.0
  %1540 = vmatprep.subr.mxu0 0.0
  %1541 = vmatpush1.msra.mxu0 0.0
  %1542 = vmatprep.subr.mxu0 0.0
  %1543 = vmatpush1.msra.mxu0 0.0
  %1544 = vmatprep.subr.mxu0 0.0
  %1545 = vmatpush1.msra.mxu0 0.0
  %1546 = vmatprep.subr.mxu0 0.0
  %1547 = vmatpush1.msra.mxu0 0.0
  %1548 = vmatprep.subr.mxu0 0.0
  %1549 = vmatpush1.msra.mxu0 0.0
  %1550 = vmatprep.subr.mxu0 0.0
  %1551 = vmatpush1.msra.mxu0 0.0
  %1552 = vmatprep.subr.mxu0 0.0
  %1553 = vmatpush1.msra.mxu0 0.0
  %1554 = vmatprep.subr.mxu0 0.0
  %1555 = vmatpush1.msra.mxu0 0.0
  %1556 = vmatprep.subr.mxu0 0.0
  %1557 = vmatpush1.msra.mxu0 0.0
  %1558 = vmatprep.subr.mxu0 0.0
  %1559 = vmatpush1.msra.mxu0 0.0
  %1560 = vmatprep.subr.mxu0 0.0
  %1561 = vmatpush1.msra.mxu0 0.0
  %1562 = vmatprep.subr.mxu0 0.0
  %1563 = vmatpush1.msra.mxu0 0.0
  %1564 = vmatprep.subr.mxu0 0.0
  %1565 = vmatpush1.msra.mxu0 0.0
  %1566 = vmatprep.subr.mxu0 0.0
  %1567 = vmatpush1.msra.mxu0 0.0
  %1568 = vmatprep.subr.mxu0 0.0
  %1569 = vmatpush1.msra.mxu0 0.0
  %1570 = vmatprep.subr.mxu0 0.0
  %1571 = vmatpush1.msra.mxu0 0.0
  %1572 = vmatprep.subr.mxu0 0.0
  %1573 = vmatpush1.msra.mxu0 0.0
  %1574 = vmatprep.subr.mxu0 0.0
  %1575 = vmatpush1.msra.mxu0 0.0
  %1576 = vmatprep.subr.mxu0 0.0
  %1577 = vmatpush1.msra.mxu0 0.0
  %1578 = vmatprep.subr.mxu0 0.0
  %1579 = vmatpush1.msra.mxu0 0.0
  %1580 = vmatprep.subr.mxu0 0.0
  %1581 = vmatpush1.msra.mxu0 0.0
  %1582 = vmatprep.subr.mxu0 0.0
  %1583 = vmatpush1.msra.mxu0 0.0
  %1584 = vmatprep.subr.mxu0 0.0
  %1585 = vmatpush1.msra.mxu0 0.0
  %1586 = vmatprep.subr.mxu0 0.0
  %1587 = vmatpush1.msra.mxu0 0.0
  %1588 = vmatprep.subr.mxu0 0.0
  %1589 = vmatpush1.msra.mxu0 0.0
  %1590 = vmatprep.mubr.f32.mxu0 0.0
  %1591 = vmatmul.mubr.f32.gmra.mrb[0].mxu0 %v786
  %v1592 = vpop.f32.mrb[0].mxu0
  %v1593 = vadd.f32 %v1521, %v1592
  %v1594 = vpop.f32.mrb[0].mxu0
  %1595 = vdwg.mxu0
  %v1596 = vmul.f32 %v876, %v1593
  %v1598 = vsel %vm497, %v1596, 0
  %1600 = vmatprep.subr.mxu0 0.0
  %1601 = vmatpush1.msra.mxu0 %v1598
  %1602 = vmatprep.subr.mxu0 0.0
  %1603 = vmatpush1.msra.mxu0 0.0
  %1604 = vmatprep.subr.mxu0 0.0
  %1605 = vmatpush1.msra.mxu0 0.0
  %1606 = vmatprep.subr.mxu0 0.0
  %1607 = vmatpush1.msra.mxu0 0.0
  %1608 = vmatprep.subr.mxu0 0.0
  %1609 = vmatpush1.msra.mxu0 0.0
  %1610 = vmatprep.subr.mxu0 0.0
  %1611 = vmatpush1.msra.mxu0 0.0
  %1612 = vmatprep.subr.mxu0 0.0
  %1613 = vmatpush1.msra.mxu0 0.0
  %1614 = vmatprep.subr.mxu0 0.0
  %1615 = vmatpush1.msra.mxu0 0.0
  %1616 = vmatprep.subr.mxu0 0.0
  %1617 = vmatpush1.msra.mxu0 0.0
  %1618 = vmatprep.subr.mxu0 0.0
  %1619 = vmatpush1.msra.mxu0 0.0
  %1620 = vmatprep.subr.mxu0 0.0
  %1621 = vmatpush1.msra.mxu0 0.0
  %1622 = vmatprep.subr.mxu0 0.0
  %1623 = vmatpush1.msra.mxu0 0.0
  %1624 = vmatprep.subr.mxu0 0.0
  %1625 = vmatpush1.msra.mxu0 0.0
  %1626 = vmatprep.subr.mxu0 0.0
  %1627 = vmatpush1.msra.mxu0 0.0
  %1628 = vmatprep.subr.mxu0 0.0
  %1629 = vmatpush1.msra.mxu0 0.0
  %1630 = vmatprep.subr.mxu0 0.0
  %1631 = vmatpush1.msra.mxu0 0.0
  %1632 = vmatprep.subr.mxu0 0.0
  %1633 = vmatpush1.msra.mxu0 0.0
  %1634 = vmatprep.subr.mxu0 0.0
  %1635 = vmatpush1.msra.mxu0 0.0
  %1636 = vmatprep.subr.mxu0 0.0
  %1637 = vmatpush1.msra.mxu0 0.0
  %1638 = vmatprep.subr.mxu0 0.0
  %1639 = vmatpush1.msra.mxu0 0.0
  %1640 = vmatprep.subr.mxu0 0.0
  %1641 = vmatpush1.msra.mxu0 0.0
  %1642 = vmatprep.subr.mxu0 0.0
  %1643 = vmatpush1.msra.mxu0 0.0
  %1644 = vmatprep.subr.mxu0 0.0
  %1645 = vmatpush1.msra.mxu0 0.0
  %1646 = vmatprep.subr.mxu0 0.0
  %1647 = vmatpush1.msra.mxu0 0.0
  %1648 = vmatprep.subr.mxu0 0.0
  %1649 = vmatpush1.msra.mxu0 0.0
  %1650 = vmatprep.subr.mxu0 0.0
  %1651 = vmatpush1.msra.mxu0 0.0
  %1652 = vmatprep.subr.mxu0 0.0
  %1653 = vmatpush1.msra.mxu0 0.0
  %1654 = vmatprep.subr.mxu0 0.0
  %1655 = vmatpush1.msra.mxu0 0.0
  %1656 = vmatprep.subr.mxu0 0.0
  %1657 = vmatpush1.msra.mxu0 0.0
  %1658 = vmatprep.subr.mxu0 0.0
  %1659 = vmatpush1.msra.mxu0 0.0
  %1660 = vmatprep.subr.mxu0 0.0
  %1661 = vmatpush1.msra.mxu0 0.0
  %1662 = vmatprep.subr.mxu0 0.0
  %1663 = vmatpush1.msra.mxu0 0.0
  %1664 = vmatprep.mubr.f32.mxu0 0.0
  %1665 = vmatmul.mubr.f32.gmra.mrb[0].mxu0 %v885
  %v1666 = vpop.f32.mrb[0].mxu0
  %v1667 = vadd.f32 %v961, %v1666
  %v1668 = vpop.f32.mrb[0].mxu0
  %1669 = vdwg.mxu0
  %v1670 = vmul.f32 %v1667, %v961
  %vm1671 = vcmask 124928
  %v1672 = vsel %vm1671, %v1670, 0.0
  %v1673 = vrot.slane %v1672, 4
  %v1674 = vadd.f32 %v1672, %v1673
  %v1675 = vrot.slane %v1674, 2
  %v1676 = vadd.f32 %v1674, %v1675
  %v1677 = vrot.slane %v1676, 1
  %v1678 = vadd.f32 %v1676, %v1677
  %v1679 = vadd.f32 %v1678, 0.0
  %v1681 = vsel %vm89, %v1667, 0
  %1683 = vmatprep.subr.mxu0 0.0
  %1684 = vmatpush1.msra.mxu0 %v55
  %1685 = vmatprep.subr.mxu0 0.0
  %1686 = vmatpush1.msra.mxu0 %v56
  %1687 = vmatprep.subr.mxu0 0.0
  %1688 = vmatpush1.msra.mxu0 0.0
  %1689 = vmatprep.subr.mxu0 0.0
  %1690 = vmatpush1.msra.mxu0 0.0
  %1691 = vmatprep.subr.mxu0 0.0
  %1692 = vmatpush1.msra.mxu0 0.0
  %1693 = vmatprep.subr.mxu0 0.0
  %1694 = vmatpush1.msra.mxu0 0.0
  %1695 = vmatprep.subr.mxu0 0.0
  %1696 = vmatpush1.msra.mxu0 0.0
  %1697 = vmatprep.subr.mxu0 0.0
  %1698 = vmatpush1.msra.mxu0 0.0
  %1699 = vmatprep.subr.mxu0 0.0
  %1700 = vmatpush1.msra.mxu0 0.0
  %1701 = vmatprep.subr.mxu0 0.0
  %1702 = vmatpush1.msra.mxu0 0.0
  %1703 = vmatprep.subr.mxu0 0.0
  %1704 = vmatpush1.msra.mxu0 0.0
  %1705 = vmatprep.subr.mxu0 0.0
  %1706 = vmatpush1.msra.mxu0 0.0
  %1707 = vmatprep.subr.mxu0 0.0
  %1708 = vmatpush1.msra.mxu0 0.0
  %1709 = vmatprep.subr.mxu0 0.0
  %1710 = vmatpush1.msra.mxu0 0.0
  %1711 = vmatprep.subr.mxu0 0.0
  %1712 = vmatpush1.msra.mxu0 0.0
  %1713 = vmatprep.subr.mxu0 0.0
  %1714 = vmatpush1.msra.mxu0 0.0
  %1715 = vmatprep.subr.mxu0 0.0
  %1716 = vmatpush1.msra.mxu0 0.0
  %1717 = vmatprep.subr.mxu0 0.0
  %1718 = vmatpush1.msra.mxu0 0.0
  %1719 = vmatprep.subr.mxu0 0.0
  %1720 = vmatpush1.msra.mxu0 0.0
  %1721 = vmatprep.subr.mxu0 0.0
  %1722 = vmatpush1.msra.mxu0 0.0
  %1723 = vmatprep.subr.mxu0 0.0
  %1724 = vmatpush1.msra.mxu0 0.0
  %1725 = vmatprep.subr.mxu0 0.0
  %1726 = vmatpush1.msra.mxu0 0.0
  %1727 = vmatprep.subr.mxu0 0.0
  %1728 = vmatpush1.msra.mxu0 0.0
  %1729 = vmatprep.subr.mxu0 0.0
  %1730 = vmatpush1.msra.mxu0 0.0
  %1731 = vmatprep.subr.mxu0 0.0
  %1732 = vmatpush1.msra.mxu0 0.0
  %1733 = vmatprep.subr.mxu0 0.0
  %1734 = vmatpush1.msra.mxu0 0.0
  %1735 = vmatprep.subr.mxu0 0.0
  %1736 = vmatpush1.msra.mxu0 0.0
  %1737 = vmatprep.subr.mxu0 0.0
  %1738 = vmatpush1.msra.mxu0 0.0
  %1739 = vmatprep.subr.mxu0 0.0
  %1740 = vmatpush1.msra.mxu0 0.0
  %1741 = vmatprep.subr.mxu0 0.0
  %1742 = vmatpush1.msra.mxu0 0.0
  %1743 = vmatprep.subr.mxu0 0.0
  %1744 = vmatpush1.msra.mxu0 0.0
  %1745 = vmatprep.subr.mxu0 0.0
  %1746 = vmatpush1.msra.mxu0 0.0
  %1747 = vmatprep.mubr.f32.mxu0 0.0
  %1748 = vmatmul.mubr.f32.gmra.mrb[0].mxu0 %v1681
  %v1749 = vpop.f32.mrb[0].mxu0
  %v1750 = vadd.f32 0.0, %v1749
  %v1751 = vpop.f32.mrb[0].mxu0
  %1752 = vdwg.mxu0
  %1753 = vmatprep.subr.mxu0 0.0
  %1754 = vmatpush1.msra.mxu0 %v57
  %1755 = vmatprep.subr.mxu0 0.0
  %1756 = vmatpush1.msra.mxu0 %v58
  %1757 = vmatprep.subr.mxu0 0.0
  %1758 = vmatpush1.msra.mxu0 0.0
  %1759 = vmatprep.subr.mxu0 0.0
  %1760 = vmatpush1.msra.mxu0 0.0
  %1761 = vmatprep.subr.mxu0 0.0
  %1762 = vmatpush1.msra.mxu0 0.0
  %1763 = vmatprep.subr.mxu0 0.0
  %1764 = vmatpush1.msra.mxu0 0.0
  %1765 = vmatprep.subr.mxu0 0.0
  %1766 = vmatpush1.msra.mxu0 0.0
  %1767 = vmatprep.subr.mxu0 0.0
  %1768 = vmatpush1.msra.mxu0 0.0
  %1769 = vmatprep.subr.mxu0 0.0
  %1770 = vmatpush1.msra.mxu0 0.0
  %1771 = vmatprep.subr.mxu0 0.0
  %1772 = vmatpush1.msra.mxu0 0.0
  %1773 = vmatprep.subr.mxu0 0.0
  %1774 = vmatpush1.msra.mxu0 0.0
  %1775 = vmatprep.subr.mxu0 0.0
  %1776 = vmatpush1.msra.mxu0 0.0
  %1777 = vmatprep.subr.mxu0 0.0
  %1778 = vmatpush1.msra.mxu0 0.0
  %1779 = vmatprep.subr.mxu0 0.0
  %1780 = vmatpush1.msra.mxu0 0.0
  %1781 = vmatprep.subr.mxu0 0.0
  %1782 = vmatpush1.msra.mxu0 0.0
  %1783 = vmatprep.subr.mxu0 0.0
  %1784 = vmatpush1.msra.mxu0 0.0
  %1785 = vmatprep.subr.mxu0 0.0
  %1786 = vmatpush1.msra.mxu0 0.0
  %1787 = vmatprep.subr.mxu0 0.0
  %1788 = vmatpush1.msra.mxu0 0.0
  %1789 = vmatprep.subr.mxu0 0.0
  %1790 = vmatpush1.msra.mxu0 0.0
  %1791 = vmatprep.subr.mxu0 0.0
  %1792 = vmatpush1.msra.mxu0 0.0
  %1793 = vmatprep.subr.mxu0 0.0
  %1794 = vmatpush1.msra.mxu0 0.0
  %1795 = vmatprep.subr.mxu0 0.0
  %1796 = vmatpush1.msra.mxu0 0.0
  %1797 = vmatprep.subr.mxu0 0.0
  %1798 = vmatpush1.msra.mxu0 0.0
  %1799 = vmatprep.subr.mxu0 0.0
  %1800 = vmatpush1.msra.mxu0 0.0
  %1801 = vmatprep.subr.mxu0 0.0
  %1802 = vmatpush1.msra.mxu0 0.0
  %1803 = vmatprep.subr.mxu0 0.0
  %1804 = vmatpush1.msra.mxu0 0.0
  %1805 = vmatprep.subr.mxu0 0.0
  %1806 = vmatpush1.msra.mxu0 0.0
  %1807 = vmatprep.subr.mxu0 0.0
  %1808 = vmatpush1.msra.mxu0 0.0
  %1809 = vmatprep.subr.mxu0 0.0
  %1810 = vmatpush1.msra.mxu0 0.0
  %1811 = vmatprep.subr.mxu0 0.0
  %1812 = vmatpush1.msra.mxu0 0.0
  %1813 = vmatprep.subr.mxu0 0.0
  %1814 = vmatpush1.msra.mxu0 0.0
  %1815 = vmatprep.subr.mxu0 0.0
  %1816 = vmatpush1.msra.mxu0 0.0
  %1817 = vmatprep.mubr.f32.mxu0 0.0
  %1818 = vmatmul.mubr.f32.gmra.mrb[0].mxu0 %v1681
  %v1819 = vpop.f32.mrb[0].mxu0
  %v1820 = vadd.f32 0.0, %v1819
  %v1821 = vpop.f32.mrb[0].mxu0
  %1822 = vdwg.mxu0
  %v1823 = vsub.f32 %v1750, %v1820
  %v1824 = vmul.f32 %v233, %v1823
  %v1825 = vsel %vm235, %v1824, 0.0
  %v1826 = vrot.slane %v1825, 4
  %v1827 = vadd.f32 %v1825, %v1826
  %v1828 = vrot.slane %v1827, 2
  %v1829 = vadd.f32 %v1827, %v1828
  %v1830 = vrot.slane %v1829, 1
  %v1831 = vadd.f32 %v1829, %v1830
  %v1832 = vmul.f32 %v1831, 2.0
  %v1834 = vsel %vm235, %v1820, 0
  %1836 = vmatprep.subr.mxu0 0.0
  %1837 = vmatpush1.msra.mxu0 %v1834
  %1838 = vmatprep.subr.mxu0 0.0
  %1839 = vmatpush1.msra.mxu0 0.0
  %1840 = vmatprep.subr.mxu0 0.0
  %1841 = vmatpush1.msra.mxu0 0.0
  %1842 = vmatprep.subr.mxu0 0.0
  %1843 = vmatpush1.msra.mxu0 0.0
  %1844 = vmatprep.subr.mxu0 0.0
  %1845 = vmatpush1.msra.mxu0 0.0
  %1846 = vmatprep.subr.mxu0 0.0
  %1847 = vmatpush1.msra.mxu0 0.0
  %1848 = vmatprep.subr.mxu0 0.0
  %1849 = vmatpush1.msra.mxu0 0.0
  %1850 = vmatprep.subr.mxu0 0.0
  %1851 = vmatpush1.msra.mxu0 0.0
  %1852 = vmatprep.subr.mxu0 0.0
  %1853 = vmatpush1.msra.mxu0 0.0
  %1854 = vmatprep.subr.mxu0 0.0
  %1855 = vmatpush1.msra.mxu0 0.0
  %1856 = vmatprep.subr.mxu0 0.0
  %1857 = vmatpush1.msra.mxu0 0.0
  %1858 = vmatprep.subr.mxu0 0.0
  %1859 = vmatpush1.msra.mxu0 0.0
  %1860 = vmatprep.subr.mxu0 0.0
  %1861 = vmatpush1.msra.mxu0 0.0
  %1862 = vmatprep.subr.mxu0 0.0
  %1863 = vmatpush1.msra.mxu0 0.0
  %1864 = vmatprep.subr.mxu0 0.0
  %1865 = vmatpush1.msra.mxu0 0.0
  %1866 = vmatprep.subr.mxu0 0.0
  %1867 = vmatpush1.msra.mxu0 0.0
  %1868 = vmatprep.subr.mxu0 0.0
  %1869 = vmatpush1.msra.mxu0 0.0
  %1870 = vmatprep.subr.mxu0 0.0
  %1871 = vmatpush1.msra.mxu0 0.0
  %1872 = vmatprep.subr.mxu0 0.0
  %1873 = vmatpush1.msra.mxu0 0.0
  %1874 = vmatprep.subr.mxu0 0.0
  %1875 = vmatpush1.msra.mxu0 0.0
  %1876 = vmatprep.subr.mxu0 0.0
  %1877 = vmatpush1.msra.mxu0 0.0
  %1878 = vmatprep.subr.mxu0 0.0
  %1879 = vmatpush1.msra.mxu0 0.0
  %1880 = vmatprep.subr.mxu0 0.0
  %1881 = vmatpush1.msra.mxu0 0.0
  %1882 = vmatprep.subr.mxu0 0.0
  %1883 = vmatpush1.msra.mxu0 0.0
  %1884 = vmatprep.subr.mxu0 0.0
  %1885 = vmatpush1.msra.mxu0 0.0
  %1886 = vmatprep.subr.mxu0 0.0
  %1887 = vmatpush1.msra.mxu0 0.0
  %1888 = vmatprep.subr.mxu0 0.0
  %1889 = vmatpush1.msra.mxu0 0.0
  %1890 = vmatprep.subr.mxu0 0.0
  %1891 = vmatpush1.msra.mxu0 0.0
  %1892 = vmatprep.subr.mxu0 0.0
  %1893 = vmatpush1.msra.mxu0 0.0
  %1894 = vmatprep.subr.mxu0 0.0
  %1895 = vmatpush1.msra.mxu0 0.0
  %1896 = vmatprep.subr.mxu0 0.0
  %1897 = vmatpush1.msra.mxu0 0.0
  %1898 = vmatprep.subr.mxu0 0.0
  %1899 = vmatpush1.msra.mxu0 0.0
  %1900 = vmatprep.mubr.f32.mxu0 0.0
  %1901 = vmatmul.mubr.f32.gmra.mrb[0].mxu0 %v245
  %v1902 = vpop.f32.mrb[0].mxu0
  %v1903 = vadd.f32 0.0, %v1902
  %v1904 = vpop.f32.mrb[0].mxu0
  %1905 = vmatprep.mubr.f32.mxu0 0.0
  %1906 = vmatmul.mubr.f32.gmra.mrb[0].mxu0 %v248
  %v1907 = vpop.f32.mrb[0].mxu0
  %v1908 = vadd.f32 0.0, %v1907
  %v1909 = vpop.f32.mrb[0].mxu0
  %1910 = vdwg.mxu0
  %v1912 = vsel %vm235, %v1750, 0
  %1914 = vmatprep.subr.mxu0 0.0
  %1915 = vmatpush1.msra.mxu0 %v1912
  %1916 = vmatprep.subr.mxu0 0.0
  %1917 = vmatpush1.msra.mxu0 0.0
  %1918 = vmatprep.subr.mxu0 0.0
  %1919 = vmatpush1.msra.mxu0 0.0
  %1920 = vmatprep.subr.mxu0 0.0
  %1921 = vmatpush1.msra.mxu0 0.0
  %1922 = vmatprep.subr.mxu0 0.0
  %1923 = vmatpush1.msra.mxu0 0.0
  %1924 = vmatprep.subr.mxu0 0.0
  %1925 = vmatpush1.msra.mxu0 0.0
  %1926 = vmatprep.subr.mxu0 0.0
  %1927 = vmatpush1.msra.mxu0 0.0
  %1928 = vmatprep.subr.mxu0 0.0
  %1929 = vmatpush1.msra.mxu0 0.0
  %1930 = vmatprep.subr.mxu0 0.0
  %1931 = vmatpush1.msra.mxu0 0.0
  %1932 = vmatprep.subr.mxu0 0.0
  %1933 = vmatpush1.msra.mxu0 0.0
  %1934 = vmatprep.subr.mxu0 0.0
  %1935 = vmatpush1.msra.mxu0 0.0
  %1936 = vmatprep.subr.mxu0 0.0
  %1937 = vmatpush1.msra.mxu0 0.0
  %1938 = vmatprep.subr.mxu0 0.0
  %1939 = vmatpush1.msra.mxu0 0.0
  %1940 = vmatprep.subr.mxu0 0.0
  %1941 = vmatpush1.msra.mxu0 0.0
  %1942 = vmatprep.subr.mxu0 0.0
  %1943 = vmatpush1.msra.mxu0 0.0
  %1944 = vmatprep.subr.mxu0 0.0
  %1945 = vmatpush1.msra.mxu0 0.0
  %1946 = vmatprep.subr.mxu0 0.0
  %1947 = vmatpush1.msra.mxu0 0.0
  %1948 = vmatprep.subr.mxu0 0.0
  %1949 = vmatpush1.msra.mxu0 0.0
  %1950 = vmatprep.subr.mxu0 0.0
  %1951 = vmatpush1.msra.mxu0 0.0
  %1952 = vmatprep.subr.mxu0 0.0
  %1953 = vmatpush1.msra.mxu0 0.0
  %1954 = vmatprep.subr.mxu0 0.0
  %1955 = vmatpush1.msra.mxu0 0.0
  %1956 = vmatprep.subr.mxu0 0.0
  %1957 = vmatpush1.msra.mxu0 0.0
  %1958 = vmatprep.subr.mxu0 0.0
  %1959 = vmatpush1.msra.mxu0 0.0
  %1960 = vmatprep.subr.mxu0 0.0
  %1961 = vmatpush1.msra.mxu0 0.0
  %1962 = vmatprep.subr.mxu0 0.0
  %1963 = vmatpush1.msra.mxu0 0.0
  %1964 = vmatprep.subr.mxu0 0.0
  %1965 = vmatpush1.msra.mxu0 0.0
  %1966 = vmatprep.subr.mxu0 0.0
  %1967 = vmatpush1.msra.mxu0 0.0
  %1968 = vmatprep.subr.mxu0 0.0
  %1969 = vmatpush1.msra.mxu0 0.0
  %1970 = vmatprep.subr.mxu0 0.0
  %1971 = vmatpush1.msra.mxu0 0.0
  %1972 = vmatprep.subr.mxu0 0.0
  %1973 = vmatpush1.msra.mxu0 0.0
  %1974 = vmatprep.subr.mxu0 0.0
  %1975 = vmatpush1.msra.mxu0 0.0
  %1976 = vmatprep.subr.mxu0 0.0
  %1977 = vmatpush1.msra.mxu0 0.0
  %1978 = vmatprep.mubr.f32.mxu0 0.0
  %1979 = vmatmul.mubr.f32.gmra.mrb[0].mxu0 %v329
  %v1980 = vpop.f32.mrb[0].mxu0
  %v1981 = vadd.f32 %v1903, %v1980
  %v1982 = vpop.f32.mrb[0].mxu0
  %1983 = vmatprep.mubr.f32.mxu0 0.0
  %1984 = vmatmul.mubr.f32.gmra.mrb[0].mxu0 %v332
  %v1985 = vpop.f32.mrb[0].mxu0
  %v1986 = vadd.f32 %v1908, %v1985
  %v1987 = vpop.f32.mrb[0].mxu0
  %1988 = vdwg.mxu0
  %v1989 = vmul.f32 %v415, %v1832
  %v1990 = vmul.f32 %v420, %v1832
  %v1991 = vadd.f32 %v1981, %v1989
  %v1992 = vadd.f32 %v1986, %v1990
  %v1993 = vmul.f32 %v458, %v1991
  %v1994 = vmul.f32 %v459, %v1992
  %v1996 = vsel %vm497, %v1994, 0
  %1998 = vmatprep.subr.mxu0 0.0
  %1999 = vmatpush1.msra.mxu0 %v1993
  %2000 = vmatprep.subr.mxu0 0.0
  %2001 = vmatpush1.msra.mxu0 %v1996
  %2002 = vmatprep.subr.mxu0 0.0
  %2003 = vmatpush1.msra.mxu0 0.0
  %2004 = vmatprep.subr.mxu0 0.0
  %2005 = vmatpush1.msra.mxu0 0.0
  %2006 = vmatprep.subr.mxu0 0.0
  %2007 = vmatpush1.msra.mxu0 0.0
  %2008 = vmatprep.subr.mxu0 0.0
  %2009 = vmatpush1.msra.mxu0 0.0
  %2010 = vmatprep.subr.mxu0 0.0
  %2011 = vmatpush1.msra.mxu0 0.0
  %2012 = vmatprep.subr.mxu0 0.0
  %2013 = vmatpush1.msra.mxu0 0.0
  %2014 = vmatprep.subr.mxu0 0.0
  %2015 = vmatpush1.msra.mxu0 0.0
  %2016 = vmatprep.subr.mxu0 0.0
  %2017 = vmatpush1.msra.mxu0 0.0
  %2018 = vmatprep.subr.mxu0 0.0
  %2019 = vmatpush1.msra.mxu0 0.0
  %2020 = vmatprep.subr.mxu0 0.0
  %2021 = vmatpush1.msra.mxu0 0.0
  %2022 = vmatprep.subr.mxu0 0.0
  %2023 = vmatpush1.msra.mxu0 0.0
  %2024 = vmatprep.subr.mxu0 0.0
  %2025 = vmatpush1.msra.mxu0 0.0
  %2026 = vmatprep.subr.mxu0 0.0
  %2027 = vmatpush1.msra.mxu0 0.0
  %2028 = vmatprep.subr.mxu0 0.0
  %2029 = vmatpush1.msra.mxu0 0.0
  %2030 = vmatprep.subr.mxu0 0.0
  %2031 = vmatpush1.msra.mxu0 0.0
  %2032 = vmatprep.subr.mxu0 0.0
  %2033 = vmatpush1.msra.mxu0 0.0
  %2034 = vmatprep.subr.mxu0 0.0
  %2035 = vmatpush1.msra.mxu0 0.0
  %2036 = vmatprep.subr.mxu0 0.0
  %2037 = vmatpush1.msra.mxu0 0.0
  %2038 = vmatprep.subr.mxu0 0.0
  %2039 = vmatpush1.msra.mxu0 0.0
  %2040 = vmatprep.subr.mxu0 0.0
  %2041 = vmatpush1.msra.mxu0 0.0
  %2042 = vmatprep.subr.mxu0 0.0
  %2043 = vmatpush1.msra.mxu0 0.0
  %2044 = vmatprep.subr.mxu0 0.0
  %2045 = vmatpush1.msra.mxu0 0.0
  %2046 = vmatprep.subr.mxu0 0.0
  %2047 = vmatpush1.msra.mxu0 0.0
  %2048 = vmatprep.subr.mxu0 0.0
  %2049 = vmatpush1.msra.mxu0 0.0
  %2050 = vmatprep.subr.mxu0 0.0
  %2051 = vmatpush1.msra.mxu0 0.0
  %2052 = vmatprep.subr.mxu0 0.0
  %2053 = vmatpush1.msra.mxu0 0.0
  %2054 = vmatprep.subr.mxu0 0.0
  %2055 = vmatpush1.msra.mxu0 0.0
  %2056 = vmatprep.subr.mxu0 0.0
  %2057 = vmatpush1.msra.mxu0 0.0
  %2058 = vmatprep.subr.mxu0 0.0
  %2059 = vmatpush1.msra.mxu0 0.0
  %2060 = vmatprep.subr.mxu0 0.0
  %2061 = vmatpush1.msra.mxu0 0.0
  %2062 = vmatprep.mubr.f32.mxu0 0.0
  %2063 = vmatmul.mubr.f32.gmra.mrb[0].mxu0 %v486
  %v2064 = vpop.f32.mrb[0].mxu0
  %v2065 = vadd.f32 0.0, %v2064
  %v2066 = vpop.f32.mrb[0].mxu0
  %2067 = vmatprep.mubr.f32.mxu0 0.0
  %2068 = vmatmul.mubr.f32.gmra.mrb[0].mxu0 %v489
  %v2069 = vpop.f32.mrb[0].mxu0
  %v2070 = vadd.f32 0.0, %v2069
  %v2071 = vpop.f32.mrb[0].mxu0
  %2072 = vmatprep.mubr.f32.mxu0 0.0
  %2073 = vmatmul.mubr.f32.gmra.mrb[0].mxu0 %v492
  %v2074 = vpop.f32.mrb[0].mxu0
  %v2075 = vadd.f32 0.0, %v2074
  %v2076 = vpop.f32.mrb[0].mxu0
  %2077 = vmatprep.mubr.f32.mxu0 0.0
  %2078 = vmatmul.mubr.f32.gmra.mrb[0].mxu0 %v495
  %v2079 = vpop.f32.mrb[0].mxu0
  %v2080 = vadd.f32 0.0, %v2079
  %v2081 = vpop.f32.mrb[0].mxu0
  %2082 = vdwg.mxu0
  %v2083 = vmul.f32 %v622, %v2065
  %v2084 = vmul.f32 %v623, %v2070
  %v2085 = vmul.f32 %v624, %v2075
  %v2086 = vmul.f32 %v625, %v2080
  %2087 = vmatprep.subr.mxu0 0.0
  %2088 = vmatpush1.msra.mxu0 %v59
  %2089 = vmatprep.subr.mxu0 0.0
  %2090 = vmatpush1.msra.mxu0 %v60
  %2091 = vmatprep.subr.mxu0 0.0
  %2092 = vmatpush1.msra.mxu0 %v61
  %2093 = vmatprep.subr.mxu0 0.0
  %2094 = vmatpush1.msra.mxu0 %v62
  %2095 = vmatprep.subr.mxu0 0.0
  %2096 = vmatpush1.msra.mxu0 %v63
  %2097 = vmatprep.subr.mxu0 0.0
  %2098 = vmatpush1.msra.mxu0 %v64
  %2099 = vmatprep.subr.mxu0 0.0
  %2100 = vmatpush1.msra.mxu0 %v65
  %2101 = vmatprep.subr.mxu0 0.0
  %2102 = vmatpush1.msra.mxu0 %v66
  %2103 = vmatprep.subr.mxu0 0.0
  %2104 = vmatpush1.msra.mxu0 %v67
  %2105 = vmatprep.subr.mxu0 0.0
  %2106 = vmatpush1.msra.mxu0 %v68
  %2107 = vmatprep.subr.mxu0 0.0
  %2108 = vmatpush1.msra.mxu0 %v69
  %2109 = vmatprep.subr.mxu0 0.0
  %2110 = vmatpush1.msra.mxu0 %v70
  %2111 = vmatprep.subr.mxu0 0.0
  %2112 = vmatpush1.msra.mxu0 %v71
  %2113 = vmatprep.subr.mxu0 0.0
  %2114 = vmatpush1.msra.mxu0 %v72
  %2115 = vmatprep.subr.mxu0 0.0
  %2116 = vmatpush1.msra.mxu0 %v73
  %2117 = vmatprep.subr.mxu0 0.0
  %2118 = vmatpush1.msra.mxu0 %v74
  %2119 = vmatprep.subr.mxu0 0.0
  %2120 = vmatpush1.msra.mxu0 0.0
  %2121 = vmatprep.subr.mxu0 0.0
  %2122 = vmatpush1.msra.mxu0 0.0
  %2123 = vmatprep.subr.mxu0 0.0
  %2124 = vmatpush1.msra.mxu0 0.0
  %2125 = vmatprep.subr.mxu0 0.0
  %2126 = vmatpush1.msra.mxu0 0.0
  %2127 = vmatprep.subr.mxu0 0.0
  %2128 = vmatpush1.msra.mxu0 0.0
  %2129 = vmatprep.subr.mxu0 0.0
  %2130 = vmatpush1.msra.mxu0 0.0
  %2131 = vmatprep.subr.mxu0 0.0
  %2132 = vmatpush1.msra.mxu0 0.0
  %2133 = vmatprep.subr.mxu0 0.0
  %2134 = vmatpush1.msra.mxu0 0.0
  %2135 = vmatprep.subr.mxu0 0.0
  %2136 = vmatpush1.msra.mxu0 0.0
  %2137 = vmatprep.subr.mxu0 0.0
  %2138 = vmatpush1.msra.mxu0 0.0
  %2139 = vmatprep.subr.mxu0 0.0
  %2140 = vmatpush1.msra.mxu0 0.0
  %2141 = vmatprep.subr.mxu0 0.0
  %2142 = vmatpush1.msra.mxu0 0.0
  %2143 = vmatprep.subr.mxu0 0.0
  %2144 = vmatpush1.msra.mxu0 0.0
  %2145 = vmatprep.subr.mxu0 0.0
  %2146 = vmatpush1.msra.mxu0 0.0
  %2147 = vmatprep.subr.mxu0 0.0
  %2148 = vmatpush1.msra.mxu0 0.0
  %2149 = vmatprep.subr.mxu0 0.0
  %2150 = vmatpush1.msra.mxu0 0.0
  %2151 = vmatprep.mubr.f32.mxu0 0.0
  %2152 = vmatmul.mubr.f32.gmra.mrb[0].mxu0 %v2083
  %v2153 = vpop.f32.mrb[0].mxu0
  %v2154 = vadd.f32 0.0, %v2153
  %v2155 = vpop.f32.mrb[0].mxu0
  %2156 = vmatprep.mubr.f32.mxu0 0.0
  %2157 = vmatmul.mubr.f32.gmra.mrb[0].mxu0 %v2084
  %v2158 = vpop.f32.mrb[0].mxu0
  %v2159 = vadd.f32 0.0, %v2158
  %v2160 = vpop.f32.mrb[0].mxu0
  %2161 = vmatprep.mubr.f32.mxu0 0.0
  %2162 = vmatmul.mubr.f32.gmra.mrb[0].mxu0 %v2085
  %v2163 = vpop.f32.mrb[0].mxu0
  %v2164 = vadd.f32 0.0, %v2163
  %v2165 = vpop.f32.mrb[0].mxu0
  %2166 = vmatprep.mubr.f32.mxu0 0.0
  %2167 = vmatmul.mubr.f32.gmra.mrb[0].mxu0 %v2086
  %v2168 = vpop.f32.mrb[0].mxu0
  %v2169 = vadd.f32 0.0, %v2168
  %v2170 = vpop.f32.mrb[0].mxu0
  %2171 = vdwg.mxu0
  %2172 = vmatprep.subr.mxu0 0.0
  %2173 = vmatpush1.msra.mxu0 %v2154
  %2174 = vmatprep.subr.mxu0 0.0
  %2175 = vmatpush1.msra.mxu0 %v2159
  %2176 = vmatprep.subr.mxu0 0.0
  %2177 = vmatpush1.msra.mxu0 %v2164
  %2178 = vmatprep.subr.mxu0 0.0
  %2179 = vmatpush1.msra.mxu0 %v2169
  %2180 = vmatprep.subr.mxu0 0.0
  %2181 = vmatpush1.msra.mxu0 0.0
  %2182 = vmatprep.subr.mxu0 0.0
  %2183 = vmatpush1.msra.mxu0 0.0
  %2184 = vmatprep.subr.mxu0 0.0
  %2185 = vmatpush1.msra.mxu0 0.0
  %2186 = vmatprep.subr.mxu0 0.0
  %2187 = vmatpush1.msra.mxu0 0.0
  %2188 = vmatprep.subr.mxu0 0.0
  %2189 = vmatpush1.msra.mxu0 0.0
  %2190 = vmatprep.subr.mxu0 0.0
  %2191 = vmatpush1.msra.mxu0 0.0
  %2192 = vmatprep.subr.mxu0 0.0
  %2193 = vmatpush1.msra.mxu0 0.0
  %2194 = vmatprep.subr.mxu0 0.0
  %2195 = vmatpush1.msra.mxu0 0.0
  %2196 = vmatprep.subr.mxu0 0.0
  %2197 = vmatpush1.msra.mxu0 0.0
  %2198 = vmatprep.subr.mxu0 0.0
  %2199 = vmatpush1.msra.mxu0 0.0
  %2200 = vmatprep.subr.mxu0 0.0
  %2201 = vmatpush1.msra.mxu0 0.0
  %2202 = vmatprep.subr.mxu0 0.0
  %2203 = vmatpush1.msra.mxu0 0.0
  %2204 = vmatprep.subr.mxu0 0.0
  %2205 = vmatpush1.msra.mxu0 0.0
  %2206 = vmatprep.subr.mxu0 0.0
  %2207 = vmatpush1.msra.mxu0 0.0
  %2208 = vmatprep.subr.mxu0 0.0
  %2209 = vmatpush1.msra.mxu0 0.0
  %2210 = vmatprep.subr.mxu0 0.0
  %2211 = vmatpush1.msra.mxu0 0.0
  %2212 = vmatprep.subr.mxu0 0.0
  %2213 = vmatpush1.msra.mxu0 0.0
  %2214 = vmatprep.subr.mxu0 0.0
  %2215 = vmatpush1.msra.mxu0 0.0
  %2216 = vmatprep.subr.mxu0 0.0
  %2217 = vmatpush1.msra.mxu0 0.0
  %2218 = vmatprep.subr.mxu0 0.0
  %2219 = vmatpush1.msra.mxu0 0.0
  %2220 = vmatprep.subr.mxu0 0.0
  %2221 = vmatpush1.msra.mxu0 0.0
  %2222 = vmatprep.subr.mxu0 0.0
  %2223 = vmatpush1.msra.mxu0 0.0
  %2224 = vmatprep.subr.mxu0 0.0
  %2225 = vmatpush1.msra.mxu0 0.0
  %2226 = vmatprep.subr.mxu0 0.0
  %2227 = vmatpush1.msra.mxu0 0.0
  %2228 = vmatprep.subr.mxu0 0.0
  %2229 = vmatpush1.msra.mxu0 0.0
  %2230 = vmatprep.subr.mxu0 0.0
  %2231 = vmatpush1.msra.mxu0 0.0
  %2232 = vmatprep.subr.mxu0 0.0
  %2233 = vmatpush1.msra.mxu0 0.0
  %2234 = vmatprep.subr.mxu0 0.0
  %2235 = vmatpush1.msra.mxu0 0.0
  %2236 = vmatprep.mubr.f32.mxu0 0.0
  %2237 = vmatmul.mubr.f32.gmra.mrb[0].mxu0 %v713
  %v2238 = vpop.f32.mrb[0].mxu0
  %v2239 = vadd.f32 0.0, %v2238
  %v2240 = vpop.f32.mrb[0].mxu0
  %2241 = vdwg.mxu0
  %v2242 = vsel %vm235, %v1667, 0
  %2244 = vmatprep.subr.mxu0 0.0
  %2245 = vmatpush1.msra.mxu0 %v2242
  %2246 = vmatprep.subr.mxu0 0.0
  %2247 = vmatpush1.msra.mxu0 0.0
  %2248 = vmatprep.subr.mxu0 0.0
  %2249 = vmatpush1.msra.mxu0 0.0
  %2250 = vmatprep.subr.mxu0 0.0
  %2251 = vmatpush1.msra.mxu0 0.0
  %2252 = vmatprep.subr.mxu0 0.0
  %2253 = vmatpush1.msra.mxu0 0.0
  %2254 = vmatprep.subr.mxu0 0.0
  %2255 = vmatpush1.msra.mxu0 0.0
  %2256 = vmatprep.subr.mxu0 0.0
  %2257 = vmatpush1.msra.mxu0 0.0
  %2258 = vmatprep.subr.mxu0 0.0
  %2259 = vmatpush1.msra.mxu0 0.0
  %2260 = vmatprep.subr.mxu0 0.0
  %2261 = vmatpush1.msra.mxu0 0.0
  %2262 = vmatprep.subr.mxu0 0.0
  %2263 = vmatpush1.msra.mxu0 0.0
  %2264 = vmatprep.subr.mxu0 0.0
  %2265 = vmatpush1.msra.mxu0 0.0
  %2266 = vmatprep.subr.mxu0 0.0
  %2267 = vmatpush1.msra.mxu0 0.0
  %2268 = vmatprep.subr.mxu0 0.0
  %2269 = vmatpush1.msra.mxu0 0.0
  %2270 = vmatprep.subr.mxu0 0.0
  %2271 = vmatpush1.msra.mxu0 0.0
  %2272 = vmatprep.subr.mxu0 0.0
  %2273 = vmatpush1.msra.mxu0 0.0
  %2274 = vmatprep.subr.mxu0 0.0
  %2275 = vmatpush1.msra.mxu0 0.0
  %2276 = vmatprep.subr.mxu0 0.0
  %2277 = vmatpush1.msra.mxu0 0.0
  %2278 = vmatprep.subr.mxu0 0.0
  %2279 = vmatpush1.msra.mxu0 0.0
  %2280 = vmatprep.subr.mxu0 0.0
  %2281 = vmatpush1.msra.mxu0 0.0
  %2282 = vmatprep.subr.mxu0 0.0
  %2283 = vmatpush1.msra.mxu0 0.0
  %2284 = vmatprep.subr.mxu0 0.0
  %2285 = vmatpush1.msra.mxu0 0.0
  %2286 = vmatprep.subr.mxu0 0.0
  %2287 = vmatpush1.msra.mxu0 0.0
  %2288 = vmatprep.subr.mxu0 0.0
  %2289 = vmatpush1.msra.mxu0 0.0
  %2290 = vmatprep.subr.mxu0 0.0
  %2291 = vmatpush1.msra.mxu0 0.0
  %2292 = vmatprep.subr.mxu0 0.0
  %2293 = vmatpush1.msra.mxu0 0.0
  %2294 = vmatprep.subr.mxu0 0.0
  %2295 = vmatpush1.msra.mxu0 0.0
  %2296 = vmatprep.subr.mxu0 0.0
  %2297 = vmatpush1.msra.mxu0 0.0
  %2298 = vmatprep.subr.mxu0 0.0
  %2299 = vmatpush1.msra.mxu0 0.0
  %2300 = vmatprep.subr.mxu0 0.0
  %2301 = vmatpush1.msra.mxu0 0.0
  %2302 = vmatprep.subr.mxu0 0.0
  %2303 = vmatpush1.msra.mxu0 0.0
  %2304 = vmatprep.subr.mxu0 0.0
  %2305 = vmatpush1.msra.mxu0 0.0
  %2306 = vmatprep.subr.mxu0 0.0
  %2307 = vmatpush1.msra.mxu0 0.0
  %2308 = vmatprep.mubr.f32.mxu0 0.0
  %2309 = vmatmul.mubr.f32.gmra.mrb[0].mxu0 %v786
  %v2310 = vpop.f32.mrb[0].mxu0
  %v2311 = vadd.f32 %v2239, %v2310
  %v2312 = vpop.f32.mrb[0].mxu0
  %2313 = vdwg.mxu0
  %v2314 = vmul.f32 %v876, %v2311
  %v2316 = vsel %vm497, %v2314, 0
  %2318 = vmatprep.subr.mxu0 0.0
  %2319 = vmatpush1.msra.mxu0 %v2316
  %2320 = vmatprep.subr.mxu0 0.0
  %2321 = vmatpush1.msra.mxu0 0.0
  %2322 = vmatprep.subr.mxu0 0.0
  %2323 = vmatpush1.msra.mxu0 0.0
  %2324 = vmatprep.subr.mxu0 0.0
  %2325 = vmatpush1.msra.mxu0 0.0
  %2326 = vmatprep.subr.mxu0 0.0
  %2327 = vmatpush1.msra.mxu0 0.0
  %2328 = vmatprep.subr.mxu0 0.0
  %2329 = vmatpush1.msra.mxu0 0.0
  %2330 = vmatprep.subr.mxu0 0.0
  %2331 = vmatpush1.msra.mxu0 0.0
  %2332 = vmatprep.subr.mxu0 0.0
  %2333 = vmatpush1.msra.mxu0 0.0
  %2334 = vmatprep.subr.mxu0 0.0
  %2335 = vmatpush1.msra.mxu0 0.0
  %2336 = vmatprep.subr.mxu0 0.0
  %2337 = vmatpush1.msra.mxu0 0.0
  %2338 = vmatprep.subr.mxu0 0.0
  %2339 = vmatpush1.msra.mxu0 0.0
  %2340 = vmatprep.subr.mxu0 0.0
  %2341 = vmatpush1.msra.mxu0 0.0
  %2342 = vmatprep.subr.mxu0 0.0
  %2343 = vmatpush1.msra.mxu0 0.0
  %2344 = vmatprep.subr.mxu0 0.0
  %2345 = vmatpush1.msra.mxu0 0.0
  %2346 = vmatprep.subr.mxu0 0.0
  %2347 = vmatpush1.msra.mxu0 0.0
  %2348 = vmatprep.subr.mxu0 0.0
  %2349 = vmatpush1.msra.mxu0 0.0
  %2350 = vmatprep.subr.mxu0 0.0
  %2351 = vmatpush1.msra.mxu0 0.0
  %2352 = vmatprep.subr.mxu0 0.0
  %2353 = vmatpush1.msra.mxu0 0.0
  %2354 = vmatprep.subr.mxu0 0.0
  %2355 = vmatpush1.msra.mxu0 0.0
  %2356 = vmatprep.subr.mxu0 0.0
  %2357 = vmatpush1.msra.mxu0 0.0
  %2358 = vmatprep.subr.mxu0 0.0
  %2359 = vmatpush1.msra.mxu0 0.0
  %2360 = vmatprep.subr.mxu0 0.0
  %2361 = vmatpush1.msra.mxu0 0.0
  %2362 = vmatprep.subr.mxu0 0.0
  %2363 = vmatpush1.msra.mxu0 0.0
  %2364 = vmatprep.subr.mxu0 0.0
  %2365 = vmatpush1.msra.mxu0 0.0
  %2366 = vmatprep.subr.mxu0 0.0
  %2367 = vmatpush1.msra.mxu0 0.0
  %2368 = vmatprep.subr.mxu0 0.0
  %2369 = vmatpush1.msra.mxu0 0.0
  %2370 = vmatprep.subr.mxu0 0.0
  %2371 = vmatpush1.msra.mxu0 0.0
  %2372 = vmatprep.subr.mxu0 0.0
  %2373 = vmatpush1.msra.mxu0 0.0
  %2374 = vmatprep.subr.mxu0 0.0
  %2375 = vmatpush1.msra.mxu0 0.0
  %2376 = vmatprep.subr.mxu0 0.0
  %2377 = vmatpush1.msra.mxu0 0.0
  %2378 = vmatprep.subr.mxu0 0.0
  %2379 = vmatpush1.msra.mxu0 0.0
  %2380 = vmatprep.subr.mxu0 0.0
  %2381 = vmatpush1.msra.mxu0 0.0
  %2382 = vmatprep.mubr.f32.mxu0 0.0
  %2383 = vmatmul.mubr.f32.gmra.mrb[0].mxu0 %v885
  %v2384 = vpop.f32.mrb[0].mxu0
  %v2385 = vadd.f32 %v1667, %v2384
  %v2386 = vpop.f32.mrb[0].mxu0
  %2387 = vdwg.mxu0
  %v2388 = vmul.f32 %v2385, %v961
  %v2389 = vsel %vm1671, %v2388, 0.0
  %v2390 = vrot.slane %v2389, 4
  %v2391 = vadd.f32 %v2389, %v2390
  %v2392 = vrot.slane %v2391, 2
  %v2393 = vadd.f32 %v2391, %v2392
  %v2394 = vrot.slane %v2393, 1
  %v2395 = vadd.f32 %v2393, %v2394
  %v2396 = vmul.f32 %v2395, -0.5
  %v2397 = vadd.f32 %v1679, %v2396
  %v2399 = vsel %vm89, %v2385, 0
  %2401 = vmatprep.subr.mxu0 0.0
  %2402 = vmatpush1.msra.mxu0 %v55
  %2403 = vmatprep.subr.mxu0 0.0
  %2404 = vmatpush1.msra.mxu0 %v56
  %2405 = vmatprep.subr.mxu0 0.0
  %2406 = vmatpush1.msra.mxu0 0.0
  %2407 = vmatprep.subr.mxu0 0.0
  %2408 = vmatpush1.msra.mxu0 0.0
  %2409 = vmatprep.subr.mxu0 0.0
  %2410 = vmatpush1.msra.mxu0 0.0
  %2411 = vmatprep.subr.mxu0 0.0
  %2412 = vmatpush1.msra.mxu0 0.0
  %2413 = vmatprep.subr.mxu0 0.0
  %2414 = vmatpush1.msra.mxu0 0.0
  %2415 = vmatprep.subr.mxu0 0.0
  %2416 = vmatpush1.msra.mxu0 0.0
  %2417 = vmatprep.subr.mxu0 0.0
  %2418 = vmatpush1.msra.mxu0 0.0
  %2419 = vmatprep.subr.mxu0 0.0
  %2420 = vmatpush1.msra.mxu0 0.0
  %2421 = vmatprep.subr.mxu0 0.0
  %2422 = vmatpush1.msra.mxu0 0.0
  %2423 = vmatprep.subr.mxu0 0.0
  %2424 = vmatpush1.msra.mxu0 0.0
  %2425 = vmatprep.subr.mxu0 0.0
  %2426 = vmatpush1.msra.mxu0 0.0
  %2427 = vmatprep.subr.mxu0 0.0
  %2428 = vmatpush1.msra.mxu0 0.0
  %2429 = vmatprep.subr.mxu0 0.0
  %2430 = vmatpush1.msra.mxu0 0.0
  %2431 = vmatprep.subr.mxu0 0.0
  %2432 = vmatpush1.msra.mxu0 0.0
  %2433 = vmatprep.subr.mxu0 0.0
  %2434 = vmatpush1.msra.mxu0 0.0
  %2435 = vmatprep.subr.mxu0 0.0
  %2436 = vmatpush1.msra.mxu0 0.0
  %2437 = vmatprep.subr.mxu0 0.0
  %2438 = vmatpush1.msra.mxu0 0.0
  %2439 = vmatprep.subr.mxu0 0.0
  %2440 = vmatpush1.msra.mxu0 0.0
  %2441 = vmatprep.subr.mxu0 0.0
  %2442 = vmatpush1.msra.mxu0 0.0
  %2443 = vmatprep.subr.mxu0 0.0
  %2444 = vmatpush1.msra.mxu0 0.0
  %2445 = vmatprep.subr.mxu0 0.0
  %2446 = vmatpush1.msra.mxu0 0.0
  %2447 = vmatprep.subr.mxu0 0.0
  %2448 = vmatpush1.msra.mxu0 0.0
  %2449 = vmatprep.subr.mxu0 0.0
  %2450 = vmatpush1.msra.mxu0 0.0
  %2451 = vmatprep.subr.mxu0 0.0
  %2452 = vmatpush1.msra.mxu0 0.0
  %2453 = vmatprep.subr.mxu0 0.0
  %2454 = vmatpush1.msra.mxu0 0.0
  %2455 = vmatprep.subr.mxu0 0.0
  %2456 = vmatpush1.msra.mxu0 0.0
  %2457 = vmatprep.subr.mxu0 0.0
  %2458 = vmatpush1.msra.mxu0 0.0
  %2459 = vmatprep.subr.mxu0 0.0
  %2460 = vmatpush1.msra.mxu0 0.0
  %2461 = vmatprep.subr.mxu0 0.0
  %2462 = vmatpush1.msra.mxu0 0.0
  %2463 = vmatprep.subr.mxu0 0.0
  %2464 = vmatpush1.msra.mxu0 0.0
  %2465 = vmatprep.mubr.f32.mxu0 0.0
  %2466 = vmatmul.mubr.f32.gmra.mrb[0].mxu0 %v2399
  %v2467 = vpop.f32.mrb[0].mxu0
  %v2468 = vadd.f32 0.0, %v2467
  %v2469 = vpop.f32.mrb[0].mxu0
  %2470 = vdwg.mxu0
  %2471 = vmatprep.subr.mxu0 0.0
  %2472 = vmatpush1.msra.mxu0 %v57
  %2473 = vmatprep.subr.mxu0 0.0
  %2474 = vmatpush1.msra.mxu0 %v58
  %2475 = vmatprep.subr.mxu0 0.0
  %2476 = vmatpush1.msra.mxu0 0.0
  %2477 = vmatprep.subr.mxu0 0.0
  %2478 = vmatpush1.msra.mxu0 0.0
  %2479 = vmatprep.subr.mxu0 0.0
  %2480 = vmatpush1.msra.mxu0 0.0
  %2481 = vmatprep.subr.mxu0 0.0
  %2482 = vmatpush1.msra.mxu0 0.0
  %2483 = vmatprep.subr.mxu0 0.0
  %2484 = vmatpush1.msra.mxu0 0.0
  %2485 = vmatprep.subr.mxu0 0.0
  %2486 = vmatpush1.msra.mxu0 0.0
  %2487 = vmatprep.subr.mxu0 0.0
  %2488 = vmatpush1.msra.mxu0 0.0
  %2489 = vmatprep.subr.mxu0 0.0
  %2490 = vmatpush1.msra.mxu0 0.0
  %2491 = vmatprep.subr.mxu0 0.0
  %2492 = vmatpush1.msra.mxu0 0.0
  %2493 = vmatprep.subr.mxu0 0.0
  %2494 = vmatpush1.msra.mxu0 0.0
  %2495 = vmatprep.subr.mxu0 0.0
  %2496 = vmatpush1.msra.mxu0 0.0
  %2497 = vmatprep.subr.mxu0 0.0
  %2498 = vmatpush1.msra.mxu0 0.0
  %2499 = vmatprep.subr.mxu0 0.0
  %2500 = vmatpush1.msra.mxu0 0.0
  %2501 = vmatprep.subr.mxu0 0.0
  %2502 = vmatpush1.msra.mxu0 0.0
  %2503 = vmatprep.subr.mxu0 0.0
  %2504 = vmatpush1.msra.mxu0 0.0
  %2505 = vmatprep.subr.mxu0 0.0
  %2506 = vmatpush1.msra.mxu0 0.0
  %2507 = vmatprep.subr.mxu0 0.0
  %2508 = vmatpush1.msra.mxu0 0.0
  %2509 = vmatprep.subr.mxu0 0.0
  %2510 = vmatpush1.msra.mxu0 0.0
  %2511 = vmatprep.subr.mxu0 0.0
  %2512 = vmatpush1.msra.mxu0 0.0
  %2513 = vmatprep.subr.mxu0 0.0
  %2514 = vmatpush1.msra.mxu0 0.0
  %2515 = vmatprep.subr.mxu0 0.0
  %2516 = vmatpush1.msra.mxu0 0.0
  %2517 = vmatprep.subr.mxu0 0.0
  %2518 = vmatpush1.msra.mxu0 0.0
  %2519 = vmatprep.subr.mxu0 0.0
  %2520 = vmatpush1.msra.mxu0 0.0
  %2521 = vmatprep.subr.mxu0 0.0
  %2522 = vmatpush1.msra.mxu0 0.0
  %2523 = vmatprep.subr.mxu0 0.0
  %2524 = vmatpush1.msra.mxu0 0.0
  %2525 = vmatprep.subr.mxu0 0.0
  %2526 = vmatpush1.msra.mxu0 0.0
  %2527 = vmatprep.subr.mxu0 0.0
  %2528 = vmatpush1.msra.mxu0 0.0
  %2529 = vmatprep.subr.mxu0 0.0
  %2530 = vmatpush1.msra.mxu0 0.0
  %2531 = vmatprep.subr.mxu0 0.0
  %2532 = vmatpush1.msra.mxu0 0.0
  %2533 = vmatprep.subr.mxu0 0.0
  %2534 = vmatpush1.msra.mxu0 0.0
  %2535 = vmatprep.mubr.f32.mxu0 0.0
  %2536 = vmatmul.mubr.f32.gmra.mrb[0].mxu0 %v2399
  %v2537 = vpop.f32.mrb[0].mxu0
  %v2538 = vadd.f32 0.0, %v2537
  %v2539 = vpop.f32.mrb[0].mxu0
  %2540 = vdwg.mxu0
  %v2541 = vsub.f32 %v2468, %v2538
  %v2542 = vmul.f32 %v233, %v2541
  %v2543 = vsel %vm235, %v2542, 0.0
  %v2544 = vrot.slane %v2543, 4
  %v2545 = vadd.f32 %v2543, %v2544
  %v2546 = vrot.slane %v2545, 2
  %v2547 = vadd.f32 %v2545, %v2546
  %v2548 = vrot.slane %v2547, 1
  %v2549 = vadd.f32 %v2547, %v2548
  %v2550 = vmul.f32 %v2549, 2.0
  %v2552 = vsel %vm235, %v2538, 0
  %2554 = vmatprep.subr.mxu0 0.0
  %2555 = vmatpush1.msra.mxu0 %v2552
  %2556 = vmatprep.subr.mxu0 0.0
  %2557 = vmatpush1.msra.mxu0 0.0
  %2558 = vmatprep.subr.mxu0 0.0
  %2559 = vmatpush1.msra.mxu0 0.0
  %2560 = vmatprep.subr.mxu0 0.0
  %2561 = vmatpush1.msra.mxu0 0.0
  %2562 = vmatprep.subr.mxu0 0.0
  %2563 = vmatpush1.msra.mxu0 0.0
  %2564 = vmatprep.subr.mxu0 0.0
  %2565 = vmatpush1.msra.mxu0 0.0
  %2566 = vmatprep.subr.mxu0 0.0
  %2567 = vmatpush1.msra.mxu0 0.0
  %2568 = vmatprep.subr.mxu0 0.0
  %2569 = vmatpush1.msra.mxu0 0.0
  %2570 = vmatprep.subr.mxu0 0.0
  %2571 = vmatpush1.msra.mxu0 0.0
  %2572 = vmatprep.subr.mxu0 0.0
  %2573 = vmatpush1.msra.mxu0 0.0
  %2574 = vmatprep.subr.mxu0 0.0
  %2575 = vmatpush1.msra.mxu0 0.0
  %2576 = vmatprep.subr.mxu0 0.0
  %2577 = vmatpush1.msra.mxu0 0.0
  %2578 = vmatprep.subr.mxu0 0.0
  %2579 = vmatpush1.msra.mxu0 0.0
  %2580 = vmatprep.subr.mxu0 0.0
  %2581 = vmatpush1.msra.mxu0 0.0
  %2582 = vmatprep.subr.mxu0 0.0
  %2583 = vmatpush1.msra.mxu0 0.0
  %2584 = vmatprep.subr.mxu0 0.0
  %2585 = vmatpush1.msra.mxu0 0.0
  %2586 = vmatprep.subr.mxu0 0.0
  %2587 = vmatpush1.msra.mxu0 0.0
  %2588 = vmatprep.subr.mxu0 0.0
  %2589 = vmatpush1.msra.mxu0 0.0
  %2590 = vmatprep.subr.mxu0 0.0
  %2591 = vmatpush1.msra.mxu0 0.0
  %2592 = vmatprep.subr.mxu0 0.0
  %2593 = vmatpush1.msra.mxu0 0.0
  %2594 = vmatprep.subr.mxu0 0.0
  %2595 = vmatpush1.msra.mxu0 0.0
  %2596 = vmatprep.subr.mxu0 0.0
  %2597 = vmatpush1.msra.mxu0 0.0
  %2598 = vmatprep.subr.mxu0 0.0
  %2599 = vmatpush1.msra.mxu0 0.0
  %2600 = vmatprep.subr.mxu0 0.0
  %2601 = vmatpush1.msra.mxu0 0.0
  %2602 = vmatprep.subr.mxu0 0.0
  %2603 = vmatpush1.msra.mxu0 0.0
  %2604 = vmatprep.subr.mxu0 0.0
  %2605 = vmatpush1.msra.mxu0 0.0
  %2606 = vmatprep.subr.mxu0 0.0
  %2607 = vmatpush1.msra.mxu0 0.0
  %2608 = vmatprep.subr.mxu0 0.0
  %2609 = vmatpush1.msra.mxu0 0.0
  %2610 = vmatprep.subr.mxu0 0.0
  %2611 = vmatpush1.msra.mxu0 0.0
  %2612 = vmatprep.subr.mxu0 0.0
  %2613 = vmatpush1.msra.mxu0 0.0
  %2614 = vmatprep.subr.mxu0 0.0
  %2615 = vmatpush1.msra.mxu0 0.0
  %2616 = vmatprep.subr.mxu0 0.0
  %2617 = vmatpush1.msra.mxu0 0.0
  %2618 = vmatprep.mubr.f32.mxu0 0.0
  %2619 = vmatmul.mubr.f32.gmra.mrb[0].mxu0 %v245
  %v2620 = vpop.f32.mrb[0].mxu0
  %v2621 = vadd.f32 0.0, %v2620
  %v2622 = vpop.f32.mrb[0].mxu0
  %2623 = vmatprep.mubr.f32.mxu0 0.0
  %2624 = vmatmul.mubr.f32.gmra.mrb[0].mxu0 %v248
  %v2625 = vpop.f32.mrb[0].mxu0
  %v2626 = vadd.f32 0.0, %v2625
  %v2627 = vpop.f32.mrb[0].mxu0
  %2628 = vdwg.mxu0
  %v2630 = vsel %vm235, %v2468, 0
  %2632 = vmatprep.subr.mxu0 0.0
  %2633 = vmatpush1.msra.mxu0 %v2630
  %2634 = vmatprep.subr.mxu0 0.0
  %2635 = vmatpush1.msra.mxu0 0.0
  %2636 = vmatprep.subr.mxu0 0.0
  %2637 = vmatpush1.msra.mxu0 0.0
  %2638 = vmatprep.subr.mxu0 0.0
  %2639 = vmatpush1.msra.mxu0 0.0
  %2640 = vmatprep.subr.mxu0 0.0
  %2641 = vmatpush1.msra.mxu0 0.0
  %2642 = vmatprep.subr.mxu0 0.0
  %2643 = vmatpush1.msra.mxu0 0.0
  %2644 = vmatprep.subr.mxu0 0.0
  %2645 = vmatpush1.msra.mxu0 0.0
  %2646 = vmatprep.subr.mxu0 0.0
  %2647 = vmatpush1.msra.mxu0 0.0
  %2648 = vmatprep.subr.mxu0 0.0
  %2649 = vmatpush1.msra.mxu0 0.0
  %2650 = vmatprep.subr.mxu0 0.0
  %2651 = vmatpush1.msra.mxu0 0.0
  %2652 = vmatprep.subr.mxu0 0.0
  %2653 = vmatpush1.msra.mxu0 0.0
  %2654 = vmatprep.subr.mxu0 0.0
  %2655 = vmatpush1.msra.mxu0 0.0
  %2656 = vmatprep.subr.mxu0 0.0
  %2657 = vmatpush1.msra.mxu0 0.0
  %2658 = vmatprep.subr.mxu0 0.0
  %2659 = vmatpush1.msra.mxu0 0.0
  %2660 = vmatprep.subr.mxu0 0.0
  %2661 = vmatpush1.msra.mxu0 0.0
  %2662 = vmatprep.subr.mxu0 0.0
  %2663 = vmatpush1.msra.mxu0 0.0
  %2664 = vmatprep.subr.mxu0 0.0
  %2665 = vmatpush1.msra.mxu0 0.0
  %2666 = vmatprep.subr.mxu0 0.0
  %2667 = vmatpush1.msra.mxu0 0.0
  %2668 = vmatprep.subr.mxu0 0.0
  %2669 = vmatpush1.msra.mxu0 0.0
  %2670 = vmatprep.subr.mxu0 0.0
  %2671 = vmatpush1.msra.mxu0 0.0
  %2672 = vmatprep.subr.mxu0 0.0
  %2673 = vmatpush1.msra.mxu0 0.0
  %2674 = vmatprep.subr.mxu0 0.0
  %2675 = vmatpush1.msra.mxu0 0.0
  %2676 = vmatprep.subr.mxu0 0.0
  %2677 = vmatpush1.msra.mxu0 0.0
  %2678 = vmatprep.subr.mxu0 0.0
  %2679 = vmatpush1.msra.mxu0 0.0
  %2680 = vmatprep.subr.mxu0 0.0
  %2681 = vmatpush1.msra.mxu0 0.0
  %2682 = vmatprep.subr.mxu0 0.0
  %2683 = vmatpush1.msra.mxu0 0.0
  %2684 = vmatprep.subr.mxu0 0.0
  %2685 = vmatpush1.msra.mxu0 0.0
  %2686 = vmatprep.subr.mxu0 0.0
  %2687 = vmatpush1.msra.mxu0 0.0
  %2688 = vmatprep.subr.mxu0 0.0
  %2689 = vmatpush1.msra.mxu0 0.0
  %2690 = vmatprep.subr.mxu0 0.0
  %2691 = vmatpush1.msra.mxu0 0.0
  %2692 = vmatprep.subr.mxu0 0.0
  %2693 = vmatpush1.msra.mxu0 0.0
  %2694 = vmatprep.subr.mxu0 0.0
  %2695 = vmatpush1.msra.mxu0 0.0
  %2696 = vmatprep.mubr.f32.mxu0 0.0
  %2697 = vmatmul.mubr.f32.gmra.mrb[0].mxu0 %v329
  %v2698 = vpop.f32.mrb[0].mxu0
  %v2699 = vadd.f32 %v2621, %v2698
  %v2700 = vpop.f32.mrb[0].mxu0
  %2701 = vmatprep.mubr.f32.mxu0 0.0
  %2702 = vmatmul.mubr.f32.gmra.mrb[0].mxu0 %v332
  %v2703 = vpop.f32.mrb[0].mxu0
  %v2704 = vadd.f32 %v2626, %v2703
  %v2705 = vpop.f32.mrb[0].mxu0
  %2706 = vdwg.mxu0
  %v2707 = vmul.f32 %v415, %v2550
  %v2708 = vmul.f32 %v420, %v2550
  %v2709 = vadd.f32 %v2699, %v2707
  %v2710 = vadd.f32 %v2704, %v2708
  %v2711 = vmul.f32 %v458, %v2709
  %v2712 = vmul.f32 %v459, %v2710
  %v2714 = vsel %vm497, %v2712, 0
  %2716 = vmatprep.subr.mxu0 0.0
  %2717 = vmatpush1.msra.mxu0 %v2711
  %2718 = vmatprep.subr.mxu0 0.0
  %2719 = vmatpush1.msra.mxu0 %v2714
  %2720 = vmatprep.subr.mxu0 0.0
  %2721 = vmatpush1.msra.mxu0 0.0
  %2722 = vmatprep.subr.mxu0 0.0
  %2723 = vmatpush1.msra.mxu0 0.0
  %2724 = vmatprep.subr.mxu0 0.0
  %2725 = vmatpush1.msra.mxu0 0.0
  %2726 = vmatprep.subr.mxu0 0.0
  %2727 = vmatpush1.msra.mxu0 0.0
  %2728 = vmatprep.subr.mxu0 0.0
  %2729 = vmatpush1.msra.mxu0 0.0
  %2730 = vmatprep.subr.mxu0 0.0
  %2731 = vmatpush1.msra.mxu0 0.0
  %2732 = vmatprep.subr.mxu0 0.0
  %2733 = vmatpush1.msra.mxu0 0.0
  %2734 = vmatprep.subr.mxu0 0.0
  %2735 = vmatpush1.msra.mxu0 0.0
  %2736 = vmatprep.subr.mxu0 0.0
  %2737 = vmatpush1.msra.mxu0 0.0
  %2738 = vmatprep.subr.mxu0 0.0
  %2739 = vmatpush1.msra.mxu0 0.0
  %2740 = vmatprep.subr.mxu0 0.0
  %2741 = vmatpush1.msra.mxu0 0.0
  %2742 = vmatprep.subr.mxu0 0.0
  %2743 = vmatpush1.msra.mxu0 0.0
  %2744 = vmatprep.subr.mxu0 0.0
  %2745 = vmatpush1.msra.mxu0 0.0
  %2746 = vmatprep.subr.mxu0 0.0
  %2747 = vmatpush1.msra.mxu0 0.0
  %2748 = vmatprep.subr.mxu0 0.0
  %2749 = vmatpush1.msra.mxu0 0.0
  %2750 = vmatprep.subr.mxu0 0.0
  %2751 = vmatpush1.msra.mxu0 0.0
  %2752 = vmatprep.subr.mxu0 0.0
  %2753 = vmatpush1.msra.mxu0 0.0
  %2754 = vmatprep.subr.mxu0 0.0
  %2755 = vmatpush1.msra.mxu0 0.0
  %2756 = vmatprep.subr.mxu0 0.0
  %2757 = vmatpush1.msra.mxu0 0.0
  %2758 = vmatprep.subr.mxu0 0.0
  %2759 = vmatpush1.msra.mxu0 0.0
  %2760 = vmatprep.subr.mxu0 0.0
  %2761 = vmatpush1.msra.mxu0 0.0
  %2762 = vmatprep.subr.mxu0 0.0
  %2763 = vmatpush1.msra.mxu0 0.0
  %2764 = vmatprep.subr.mxu0 0.0
  %2765 = vmatpush1.msra.mxu0 0.0
  %2766 = vmatprep.subr.mxu0 0.0
  %2767 = vmatpush1.msra.mxu0 0.0
  %2768 = vmatprep.subr.mxu0 0.0
  %2769 = vmatpush1.msra.mxu0 0.0
  %2770 = vmatprep.subr.mxu0 0.0
  %2771 = vmatpush1.msra.mxu0 0.0
  %2772 = vmatprep.subr.mxu0 0.0
  %2773 = vmatpush1.msra.mxu0 0.0
  %2774 = vmatprep.subr.mxu0 0.0
  %2775 = vmatpush1.msra.mxu0 0.0
  %2776 = vmatprep.subr.mxu0 0.0
  %2777 = vmatpush1.msra.mxu0 0.0
  %2778 = vmatprep.subr.mxu0 0.0
  %2779 = vmatpush1.msra.mxu0 0.0
  %2780 = vmatprep.mubr.f32.mxu0 0.0
  %2781 = vmatmul.mubr.f32.gmra.mrb[0].mxu0 %v486
  %v2782 = vpop.f32.mrb[0].mxu0
  %v2783 = vadd.f32 0.0, %v2782
  %v2784 = vpop.f32.mrb[0].mxu0
  %2785 = vmatprep.mubr.f32.mxu0 0.0
  %2786 = vmatmul.mubr.f32.gmra.mrb[0].mxu0 %v489
  %v2787 = vpop.f32.mrb[0].mxu0
  %v2788 = vadd.f32 0.0, %v2787
  %v2789 = vpop.f32.mrb[0].mxu0
  %2790 = vmatprep.mubr.f32.mxu0 0.0
  %2791 = vmatmul.mubr.f32.gmra.mrb[0].mxu0 %v492
  %v2792 = vpop.f32.mrb[0].mxu0
  %v2793 = vadd.f32 0.0, %v2792
  %v2794 = vpop.f32.mrb[0].mxu0
  %2795 = vmatprep.mubr.f32.mxu0 0.0
  %2796 = vmatmul.mubr.f32.gmra.mrb[0].mxu0 %v495
  %v2797 = vpop.f32.mrb[0].mxu0
  %v2798 = vadd.f32 0.0, %v2797
  %v2799 = vpop.f32.mrb[0].mxu0
  %2800 = vdwg.mxu0
  %v2801 = vmul.f32 %v622, %v2783
  %v2802 = vmul.f32 %v623, %v2788
  %v2803 = vmul.f32 %v624, %v2793
  %v2804 = vmul.f32 %v625, %v2798
  %2805 = vmatprep.subr.mxu0 0.0
  %2806 = vmatpush1.msra.mxu0 %v59
  %2807 = vmatprep.subr.mxu0 0.0
  %2808 = vmatpush1.msra.mxu0 %v60
  %2809 = vmatprep.subr.mxu0 0.0
  %2810 = vmatpush1.msra.mxu0 %v61
  %2811 = vmatprep.subr.mxu0 0.0
  %2812 = vmatpush1.msra.mxu0 %v62
  %2813 = vmatprep.subr.mxu0 0.0
  %2814 = vmatpush1.msra.mxu0 %v63
  %2815 = vmatprep.subr.mxu0 0.0
  %2816 = vmatpush1.msra.mxu0 %v64
  %2817 = vmatprep.subr.mxu0 0.0
  %2818 = vmatpush1.msra.mxu0 %v65
  %2819 = vmatprep.subr.mxu0 0.0
  %2820 = vmatpush1.msra.mxu0 %v66
  %2821 = vmatprep.subr.mxu0 0.0
  %2822 = vmatpush1.msra.mxu0 %v67
  %2823 = vmatprep.subr.mxu0 0.0
  %2824 = vmatpush1.msra.mxu0 %v68
  %2825 = vmatprep.subr.mxu0 0.0
  %2826 = vmatpush1.msra.mxu0 %v69
  %2827 = vmatprep.subr.mxu0 0.0
  %2828 = vmatpush1.msra.mxu0 %v70
  %2829 = vmatprep.subr.mxu0 0.0
  %2830 = vmatpush1.msra.mxu0 %v71
  %2831 = vmatprep.subr.mxu0 0.0
  %2832 = vmatpush1.msra.mxu0 %v72
  %2833 = vmatprep.subr.mxu0 0.0
  %2834 = vmatpush1.msra.mxu0 %v73
  %2835 = vmatprep.subr.mxu0 0.0
  %2836 = vmatpush1.msra.mxu0 %v74
  %2837 = vmatprep.subr.mxu0 0.0
  %2838 = vmatpush1.msra.mxu0 0.0
  %2839 = vmatprep.subr.mxu0 0.0
  %2840 = vmatpush1.msra.mxu0 0.0
  %2841 = vmatprep.subr.mxu0 0.0
  %2842 = vmatpush1.msra.mxu0 0.0
  %2843 = vmatprep.subr.mxu0 0.0
  %2844 = vmatpush1.msra.mxu0 0.0
  %2845 = vmatprep.subr.mxu0 0.0
  %2846 = vmatpush1.msra.mxu0 0.0
  %2847 = vmatprep.subr.mxu0 0.0
  %2848 = vmatpush1.msra.mxu0 0.0
  %2849 = vmatprep.subr.mxu0 0.0
  %2850 = vmatpush1.msra.mxu0 0.0
  %2851 = vmatprep.subr.mxu0 0.0
  %2852 = vmatpush1.msra.mxu0 0.0
  %2853 = vmatprep.subr.mxu0 0.0
  %2854 = vmatpush1.msra.mxu0 0.0
  %2855 = vmatprep.subr.mxu0 0.0
  %2856 = vmatpush1.msra.mxu0 0.0
  %2857 = vmatprep.subr.mxu0 0.0
  %2858 = vmatpush1.msra.mxu0 0.0
  %2859 = vmatprep.subr.mxu0 0.0
  %2860 = vmatpush1.msra.mxu0 0.0
  %2861 = vmatprep.subr.mxu0 0.0
  %2862 = vmatpush1.msra.mxu0 0.0
  %2863 = vmatprep.subr.mxu0 0.0
  %2864 = vmatpush1.msra.mxu0 0.0
  %2865 = vmatprep.subr.mxu0 0.0
  %2866 = vmatpush1.msra.mxu0 0.0
  %2867 = vmatprep.subr.mxu0 0.0
  %2868 = vmatpush1.msra.mxu0 0.0
  %2869 = vmatprep.mubr.f32.mxu0 0.0
  %2870 = vmatmul.mubr.f32.gmra.mrb[0].mxu0 %v2801
  %v2871 = vpop.f32.mrb[0].mxu0
  %v2872 = vadd.f32 0.0, %v2871
  %v2873 = vpop.f32.mrb[0].mxu0
  %2874 = vmatprep.mubr.f32.mxu0 0.0
  %2875 = vmatmul.mubr.f32.gmra.mrb[0].mxu0 %v2802
  %v2876 = vpop.f32.mrb[0].mxu0
  %v2877 = vadd.f32 0.0, %v2876
  %v2878 = vpop.f32.mrb[0].mxu0
  %2879 = vmatprep.mubr.f32.mxu0 0.0
  %2880 = vmatmul.mubr.f32.gmra.mrb[0].mxu0 %v2803
  %v2881 = vpop.f32.mrb[0].mxu0
  %v2882 = vadd.f32 0.0, %v2881
  %v2883 = vpop.f32.mrb[0].mxu0
  %2884 = vmatprep.mubr.f32.mxu0 0.0
  %2885 = vmatmul.mubr.f32.gmra.mrb[0].mxu0 %v2804
  %v2886 = vpop.f32.mrb[0].mxu0
  %v2887 = vadd.f32 0.0, %v2886
  %v2888 = vpop.f32.mrb[0].mxu0
  %2889 = vdwg.mxu0
  %2890 = vmatprep.subr.mxu0 0.0
  %2891 = vmatpush1.msra.mxu0 %v2872
  %2892 = vmatprep.subr.mxu0 0.0
  %2893 = vmatpush1.msra.mxu0 %v2877
  %2894 = vmatprep.subr.mxu0 0.0
  %2895 = vmatpush1.msra.mxu0 %v2882
  %2896 = vmatprep.subr.mxu0 0.0
  %2897 = vmatpush1.msra.mxu0 %v2887
  %2898 = vmatprep.subr.mxu0 0.0
  %2899 = vmatpush1.msra.mxu0 0.0
  %2900 = vmatprep.subr.mxu0 0.0
  %2901 = vmatpush1.msra.mxu0 0.0
  %2902 = vmatprep.subr.mxu0 0.0
  %2903 = vmatpush1.msra.mxu0 0.0
  %2904 = vmatprep.subr.mxu0 0.0
  %2905 = vmatpush1.msra.mxu0 0.0
  %2906 = vmatprep.subr.mxu0 0.0
  %2907 = vmatpush1.msra.mxu0 0.0
  %2908 = vmatprep.subr.mxu0 0.0
  %2909 = vmatpush1.msra.mxu0 0.0
  %2910 = vmatprep.subr.mxu0 0.0
  %2911 = vmatpush1.msra.mxu0 0.0
  %2912 = vmatprep.subr.mxu0 0.0
  %2913 = vmatpush1.msra.mxu0 0.0
  %2914 = vmatprep.subr.mxu0 0.0
  %2915 = vmatpush1.msra.mxu0 0.0
  %2916 = vmatprep.subr.mxu0 0.0
  %2917 = vmatpush1.msra.mxu0 0.0
  %2918 = vmatprep.subr.mxu0 0.0
  %2919 = vmatpush1.msra.mxu0 0.0
  %2920 = vmatprep.subr.mxu0 0.0
  %2921 = vmatpush1.msra.mxu0 0.0
  %2922 = vmatprep.subr.mxu0 0.0
  %2923 = vmatpush1.msra.mxu0 0.0
  %2924 = vmatprep.subr.mxu0 0.0
  %2925 = vmatpush1.msra.mxu0 0.0
  %2926 = vmatprep.subr.mxu0 0.0
  %2927 = vmatpush1.msra.mxu0 0.0
  %2928 = vmatprep.subr.mxu0 0.0
  %2929 = vmatpush1.msra.mxu0 0.0
  %2930 = vmatprep.subr.mxu0 0.0
  %2931 = vmatpush1.msra.mxu0 0.0
  %2932 = vmatprep.subr.mxu0 0.0
  %2933 = vmatpush1.msra.mxu0 0.0
  %2934 = vmatprep.subr.mxu0 0.0
  %2935 = vmatpush1.msra.mxu0 0.0
  %2936 = vmatprep.subr.mxu0 0.0
  %2937 = vmatpush1.msra.mxu0 0.0
  %2938 = vmatprep.subr.mxu0 0.0
  %2939 = vmatpush1.msra.mxu0 0.0
  %2940 = vmatprep.subr.mxu0 0.0
  %2941 = vmatpush1.msra.mxu0 0.0
  %2942 = vmatprep.subr.mxu0 0.0
  %2943 = vmatpush1.msra.mxu0 0.0
  %2944 = vmatprep.subr.mxu0 0.0
  %2945 = vmatpush1.msra.mxu0 0.0
  %2946 = vmatprep.subr.mxu0 0.0
  %2947 = vmatpush1.msra.mxu0 0.0
  %2948 = vmatprep.subr.mxu0 0.0
  %2949 = vmatpush1.msra.mxu0 0.0
  %2950 = vmatprep.subr.mxu0 0.0
  %2951 = vmatpush1.msra.mxu0 0.0
  %2952 = vmatprep.subr.mxu0 0.0
  %2953 = vmatpush1.msra.mxu0 0.0
  %2954 = vmatprep.mubr.f32.mxu0 0.0
  %2955 = vmatmul.mubr.f32.gmra.mrb[0].mxu0 %v713
  %v2956 = vpop.f32.mrb[0].mxu0
  %v2957 = vadd.f32 0.0, %v2956
  %v2958 = vpop.f32.mrb[0].mxu0
  %2959 = vdwg.mxu0
  %v2960 = vsel %vm235, %v2385, 0
  %2962 = vmatprep.subr.mxu0 0.0
  %2963 = vmatpush1.msra.mxu0 %v2960
  %2964 = vmatprep.subr.mxu0 0.0
  %2965 = vmatpush1.msra.mxu0 0.0
  %2966 = vmatprep.subr.mxu0 0.0
  %2967 = vmatpush1.msra.mxu0 0.0
  %2968 = vmatprep.subr.mxu0 0.0
  %2969 = vmatpush1.msra.mxu0 0.0
  %2970 = vmatprep.subr.mxu0 0.0
  %2971 = vmatpush1.msra.mxu0 0.0
  %2972 = vmatprep.subr.mxu0 0.0
  %2973 = vmatpush1.msra.mxu0 0.0
  %2974 = vmatprep.subr.mxu0 0.0
  %2975 = vmatpush1.msra.mxu0 0.0
  %2976 = vmatprep.subr.mxu0 0.0
  %2977 = vmatpush1.msra.mxu0 0.0
  %2978 = vmatprep.subr.mxu0 0.0
  %2979 = vmatpush1.msra.mxu0 0.0
  %2980 = vmatprep.subr.mxu0 0.0
  %2981 = vmatpush1.msra.mxu0 0.0
  %2982 = vmatprep.subr.mxu0 0.0
  %2983 = vmatpush1.msra.mxu0 0.0
  %2984 = vmatprep.subr.mxu0 0.0
  %2985 = vmatpush1.msra.mxu0 0.0
  %2986 = vmatprep.subr.mxu0 0.0
  %2987 = vmatpush1.msra.mxu0 0.0
  %2988 = vmatprep.subr.mxu0 0.0
  %2989 = vmatpush1.msra.mxu0 0.0
  %2990 = vmatprep.subr.mxu0 0.0
  %2991 = vmatpush1.msra.mxu0 0.0
  %2992 = vmatprep.subr.mxu0 0.0
  %2993 = vmatpush1.msra.mxu0 0.0
  %2994 = vmatprep.subr.mxu0 0.0
  %2995 = vmatpush1.msra.mxu0 0.0
  %2996 = vmatprep.subr.mxu0 0.0
  %2997 = vmatpush1.msra.mxu0 0.0
  %2998 = vmatprep.subr.mxu0 0.0
  %2999 = vmatpush1.msra.mxu0 0.0
  %3000 = vmatprep.subr.mxu0 0.0
  %3001 = vmatpush1.msra.mxu0 0.0
  %3002 = vmatprep.subr.mxu0 0.0
  %3003 = vmatpush1.msra.mxu0 0.0
  %3004 = vmatprep.subr.mxu0 0.0
  %3005 = vmatpush1.msra.mxu0 0.0
  %3006 = vmatprep.subr.mxu0 0.0
  %3007 = vmatpush1.msra.mxu0 0.0
  %3008 = vmatprep.subr.mxu0 0.0
  %3009 = vmatpush1.msra.mxu0 0.0
  %3010 = vmatprep.subr.mxu0 0.0
  %3011 = vmatpush1.msra.mxu0 0.0
  %3012 = vmatprep.subr.mxu0 0.0
  %3013 = vmatpush1.msra.mxu0 0.0
  %3014 = vmatprep.subr.mxu0 0.0
  %3015 = vmatpush1.msra.mxu0 0.0
  %3016 = vmatprep.subr.mxu0 0.0
  %3017 = vmatpush1.msra.mxu0 0.0
  %3018 = vmatprep.subr.mxu0 0.0
  %3019 = vmatpush1.msra.mxu0 0.0
  %3020 = vmatprep.subr.mxu0 0.0
  %3021 = vmatpush1.msra.mxu0 0.0
  %3022 = vmatprep.subr.mxu0 0.0
  %3023 = vmatpush1.msra.mxu0 0.0
  %3024 = vmatprep.subr.mxu0 0.0
  %3025 = vmatpush1.msra.mxu0 0.0
  %3026 = vmatprep.mubr.f32.mxu0 0.0
  %3027 = vmatmul.mubr.f32.gmra.mrb[0].mxu0 %v786
  %v3028 = vpop.f32.mrb[0].mxu0
  %v3029 = vadd.f32 %v2957, %v3028
  %v3030 = vpop.f32.mrb[0].mxu0
  %3031 = vdwg.mxu0
  %v3032 = vmul.f32 %v876, %v3029
  %v3034 = vsel %vm497, %v3032, 0
  %3036 = vmatprep.subr.mxu0 0.0
  %3037 = vmatpush1.msra.mxu0 %v3034
  %3038 = vmatprep.subr.mxu0 0.0
  %3039 = vmatpush1.msra.mxu0 0.0
  %3040 = vmatprep.subr.mxu0 0.0
  %3041 = vmatpush1.msra.mxu0 0.0
  %3042 = vmatprep.subr.mxu0 0.0
  %3043 = vmatpush1.msra.mxu0 0.0
  %3044 = vmatprep.subr.mxu0 0.0
  %3045 = vmatpush1.msra.mxu0 0.0
  %3046 = vmatprep.subr.mxu0 0.0
  %3047 = vmatpush1.msra.mxu0 0.0
  %3048 = vmatprep.subr.mxu0 0.0
  %3049 = vmatpush1.msra.mxu0 0.0
  %3050 = vmatprep.subr.mxu0 0.0
  %3051 = vmatpush1.msra.mxu0 0.0
  %3052 = vmatprep.subr.mxu0 0.0
  %3053 = vmatpush1.msra.mxu0 0.0
  %3054 = vmatprep.subr.mxu0 0.0
  %3055 = vmatpush1.msra.mxu0 0.0
  %3056 = vmatprep.subr.mxu0 0.0
  %3057 = vmatpush1.msra.mxu0 0.0
  %3058 = vmatprep.subr.mxu0 0.0
  %3059 = vmatpush1.msra.mxu0 0.0
  %3060 = vmatprep.subr.mxu0 0.0
  %3061 = vmatpush1.msra.mxu0 0.0
  %3062 = vmatprep.subr.mxu0 0.0
  %3063 = vmatpush1.msra.mxu0 0.0
  %3064 = vmatprep.subr.mxu0 0.0
  %3065 = vmatpush1.msra.mxu0 0.0
  %3066 = vmatprep.subr.mxu0 0.0
  %3067 = vmatpush1.msra.mxu0 0.0
  %3068 = vmatprep.subr.mxu0 0.0
  %3069 = vmatpush1.msra.mxu0 0.0
  %3070 = vmatprep.subr.mxu0 0.0
  %3071 = vmatpush1.msra.mxu0 0.0
  %3072 = vmatprep.subr.mxu0 0.0
  %3073 = vmatpush1.msra.mxu0 0.0
  %3074 = vmatprep.subr.mxu0 0.0
  %3075 = vmatpush1.msra.mxu0 0.0
  %3076 = vmatprep.subr.mxu0 0.0
  %3077 = vmatpush1.msra.mxu0 0.0
  %3078 = vmatprep.subr.mxu0 0.0
  %3079 = vmatpush1.msra.mxu0 0.0
  %3080 = vmatprep.subr.mxu0 0.0
  %3081 = vmatpush1.msra.mxu0 0.0
  %3082 = vmatprep.subr.mxu0 0.0
  %3083 = vmatpush1.msra.mxu0 0.0
  %3084 = vmatprep.subr.mxu0 0.0
  %3085 = vmatpush1.msra.mxu0 0.0
  %3086 = vmatprep.subr.mxu0 0.0
  %3087 = vmatpush1.msra.mxu0 0.0
  %3088 = vmatprep.subr.mxu0 0.0
  %3089 = vmatpush1.msra.mxu0 0.0
  %3090 = vmatprep.subr.mxu0 0.0
  %3091 = vmatpush1.msra.mxu0 0.0
  %3092 = vmatprep.subr.mxu0 0.0
  %3093 = vmatpush1.msra.mxu0 0.0
  %3094 = vmatprep.subr.mxu0 0.0
  %3095 = vmatpush1.msra.mxu0 0.0
  %3096 = vmatprep.subr.mxu0 0.0
  %3097 = vmatpush1.msra.mxu0 0.0
  %3098 = vmatprep.subr.mxu0 0.0
  %3099 = vmatpush1.msra.mxu0 0.0
  %3100 = vmatprep.mubr.f32.mxu0 0.0
  %3101 = vmatmul.mubr.f32.gmra.mrb[0].mxu0 %v885
  %v3102 = vpop.f32.mrb[0].mxu0
  %v3103 = vadd.f32 %v2385, %v3102
  %v3104 = vpop.f32.mrb[0].mxu0
  %3105 = vdwg.mxu0
  %v3106 = vmul.f32 %v3103, %v961
  %v3107 = vsel %vm1671, %v3106, 0.0
  %v3108 = vrot.slane %v3107, 4
  %v3109 = vadd.f32 %v3107, %v3108
  %v3110 = vrot.slane %v3109, 2
  %v3111 = vadd.f32 %v3109, %v3110
  %v3112 = vrot.slane %v3111, 1
  %v3113 = vadd.f32 %v3111, %v3112
  %v3114 = vmul.f32 %v3113, 0.33333334
  %v3115 = vadd.f32 %v2397, %v3114
  %v3116 = vadd.f32 %v75, %v960
  %s3117 = scalar_lea.vmem %s5, 16
  %v3118 = vld [vmem:[%s3117] sm:$0xff]
  %v3119 = vld [vmem:[%s3117 + $0x8] sm:$0x3f]
  %s3120 = scalar_lea.vmem %s6, 16
  %v3121 = vld [vmem:[%s3120] sm:$0xff]
  %v3122 = vld [vmem:[%s3120 + $0x8] sm:$0x3f]
  %s3123 = scalar_lea.vmem %s7, 16
  %v3124 = vld [vmem:[%s3123] sm:$0xff]
  %v3125 = vld [vmem:[%s3123 + $0x8] sm:$0x3f]
  %s3126 = scalar_lea.vmem %s9, 32
  %v3127 = vld [vmem:[%s3126] sm:$0xff]
  %v3128 = vld [vmem:[%s3126 + $0x8] sm:$0xff]
  %v3129 = vld [vmem:[%s3126 + $0x10] sm:$0xff]
  %v3130 = vld [vmem:[%s3126 + $0x18] sm:$0xff]
  %s3131 = scalar_lea.vmem %s11, 8
  %v3132 = vld [vmem:[%s3131] sm:$0x3f]
  %s3133 = scalar_lea.vmem %s12, 8
  %v3134 = vld [vmem:[%s3133] sm:$0x3f]
  %s3135 = scalar_lea.vmem %s14, 4
  %v3136 = vld [vmem:[%s3135] sm:$0x7]
  %v3138 = vsel %vm89, %v3116, 0
  %3140 = vmatprep.subr.mxu0 0.0
  %3141 = vmatpush1.msra.mxu0 %v55
  %3142 = vmatprep.subr.mxu0 0.0
  %3143 = vmatpush1.msra.mxu0 %v56
  %3144 = vmatprep.subr.mxu0 0.0
  %3145 = vmatpush1.msra.mxu0 0.0
  %3146 = vmatprep.subr.mxu0 0.0
  %3147 = vmatpush1.msra.mxu0 0.0
  %3148 = vmatprep.subr.mxu0 0.0
  %3149 = vmatpush1.msra.mxu0 0.0
  %3150 = vmatprep.subr.mxu0 0.0
  %3151 = vmatpush1.msra.mxu0 0.0
  %3152 = vmatprep.subr.mxu0 0.0
  %3153 = vmatpush1.msra.mxu0 0.0
  %3154 = vmatprep.subr.mxu0 0.0
  %3155 = vmatpush1.msra.mxu0 0.0
  %3156 = vmatprep.subr.mxu0 0.0
  %3157 = vmatpush1.msra.mxu0 0.0
  %3158 = vmatprep.subr.mxu0 0.0
  %3159 = vmatpush1.msra.mxu0 0.0
  %3160 = vmatprep.subr.mxu0 0.0
  %3161 = vmatpush1.msra.mxu0 0.0
  %3162 = vmatprep.subr.mxu0 0.0
  %3163 = vmatpush1.msra.mxu0 0.0
  %3164 = vmatprep.subr.mxu0 0.0
  %3165 = vmatpush1.msra.mxu0 0.0
  %3166 = vmatprep.subr.mxu0 0.0
  %3167 = vmatpush1.msra.mxu0 0.0
  %3168 = vmatprep.subr.mxu0 0.0
  %3169 = vmatpush1.msra.mxu0 0.0
  %3170 = vmatprep.subr.mxu0 0.0
  %3171 = vmatpush1.msra.mxu0 0.0
  %3172 = vmatprep.subr.mxu0 0.0
  %3173 = vmatpush1.msra.mxu0 0.0
  %3174 = vmatprep.subr.mxu0 0.0
  %3175 = vmatpush1.msra.mxu0 0.0
  %3176 = vmatprep.subr.mxu0 0.0
  %3177 = vmatpush1.msra.mxu0 0.0
  %3178 = vmatprep.subr.mxu0 0.0
  %3179 = vmatpush1.msra.mxu0 0.0
  %3180 = vmatprep.subr.mxu0 0.0
  %3181 = vmatpush1.msra.mxu0 0.0
  %3182 = vmatprep.subr.mxu0 0.0
  %3183 = vmatpush1.msra.mxu0 0.0
  %3184 = vmatprep.subr.mxu0 0.0
  %3185 = vmatpush1.msra.mxu0 0.0
  %3186 = vmatprep.subr.mxu0 0.0
  %3187 = vmatpush1.msra.mxu0 0.0
  %3188 = vmatprep.subr.mxu0 0.0
  %3189 = vmatpush1.msra.mxu0 0.0
  %3190 = vmatprep.subr.mxu0 0.0
  %3191 = vmatpush1.msra.mxu0 0.0
  %3192 = vmatprep.subr.mxu0 0.0
  %3193 = vmatpush1.msra.mxu0 0.0
  %3194 = vmatprep.subr.mxu0 0.0
  %3195 = vmatpush1.msra.mxu0 0.0
  %3196 = vmatprep.subr.mxu0 0.0
  %3197 = vmatpush1.msra.mxu0 0.0
  %3198 = vmatprep.subr.mxu0 0.0
  %3199 = vmatpush1.msra.mxu0 0.0
  %3200 = vmatprep.subr.mxu0 0.0
  %3201 = vmatpush1.msra.mxu0 0.0
  %3202 = vmatprep.subr.mxu0 0.0
  %3203 = vmatpush1.msra.mxu0 0.0
  %3204 = vmatprep.mubr.f32.mxu0 0.0
  %3205 = vmatmul.mubr.f32.gmra.mrb[0].mxu0 %v3138
  %v3206 = vpop.f32.mrb[0].mxu0
  %v3207 = vadd.f32 0.0, %v3206
  %v3208 = vpop.f32.mrb[0].mxu0
  %3209 = vdwg.mxu0
  %3210 = vmatprep.subr.mxu0 0.0
  %3211 = vmatpush1.msra.mxu0 %v57
  %3212 = vmatprep.subr.mxu0 0.0
  %3213 = vmatpush1.msra.mxu0 %v58
  %3214 = vmatprep.subr.mxu0 0.0
  %3215 = vmatpush1.msra.mxu0 0.0
  %3216 = vmatprep.subr.mxu0 0.0
  %3217 = vmatpush1.msra.mxu0 0.0
  %3218 = vmatprep.subr.mxu0 0.0
  %3219 = vmatpush1.msra.mxu0 0.0
  %3220 = vmatprep.subr.mxu0 0.0
  %3221 = vmatpush1.msra.mxu0 0.0
  %3222 = vmatprep.subr.mxu0 0.0
  %3223 = vmatpush1.msra.mxu0 0.0
  %3224 = vmatprep.subr.mxu0 0.0
  %3225 = vmatpush1.msra.mxu0 0.0
  %3226 = vmatprep.subr.mxu0 0.0
  %3227 = vmatpush1.msra.mxu0 0.0
  %3228 = vmatprep.subr.mxu0 0.0
  %3229 = vmatpush1.msra.mxu0 0.0
  %3230 = vmatprep.subr.mxu0 0.0
  %3231 = vmatpush1.msra.mxu0 0.0
  %3232 = vmatprep.subr.mxu0 0.0
  %3233 = vmatpush1.msra.mxu0 0.0
  %3234 = vmatprep.subr.mxu0 0.0
  %3235 = vmatpush1.msra.mxu0 0.0
  %3236 = vmatprep.subr.mxu0 0.0
  %3237 = vmatpush1.msra.mxu0 0.0
  %3238 = vmatprep.subr.mxu0 0.0
  %3239 = vmatpush1.msra.mxu0 0.0
  %3240 = vmatprep.subr.mxu0 0.0
  %3241 = vmatpush1.msra.mxu0 0.0
  %3242 = vmatprep.subr.mxu0 0.0
  %3243 = vmatpush1.msra.mxu0 0.0
  %3244 = vmatprep.subr.mxu0 0.0
  %3245 = vmatpush1.msra.mxu0 0.0
  %3246 = vmatprep.subr.mxu0 0.0
  %3247 = vmatpush1.msra.mxu0 0.0
  %3248 = vmatprep.subr.mxu0 0.0
  %3249 = vmatpush1.msra.mxu0 0.0
  %3250 = vmatprep.subr.mxu0 0.0
  %3251 = vmatpush1.msra.mxu0 0.0
  %3252 = vmatprep.subr.mxu0 0.0
  %3253 = vmatpush1.msra.mxu0 0.0
  %3254 = vmatprep.subr.mxu0 0.0
  %3255 = vmatpush1.msra.mxu0 0.0
  %3256 = vmatprep.subr.mxu0 0.0
  %3257 = vmatpush1.msra.mxu0 0.0
  %3258 = vmatprep.subr.mxu0 0.0
  %3259 = vmatpush1.msra.mxu0 0.0
  %3260 = vmatprep.subr.mxu0 0.0
  %3261 = vmatpush1.msra.mxu0 0.0
  %3262 = vmatprep.subr.mxu0 0.0
  %3263 = vmatpush1.msra.mxu0 0.0
  %3264 = vmatprep.subr.mxu0 0.0
  %3265 = vmatpush1.msra.mxu0 0.0
  %3266 = vmatprep.subr.mxu0 0.0
  %3267 = vmatpush1.msra.mxu0 0.0
  %3268 = vmatprep.subr.mxu0 0.0
  %3269 = vmatpush1.msra.mxu0 0.0
  %3270 = vmatprep.subr.mxu0 0.0
  %3271 = vmatpush1.msra.mxu0 0.0
  %3272 = vmatprep.subr.mxu0 0.0
  %3273 = vmatpush1.msra.mxu0 0.0
  %3274 = vmatprep.mubr.f32.mxu0 0.0
  %3275 = vmatmul.mubr.f32.gmra.mrb[0].mxu0 %v3138
  %v3276 = vpop.f32.mrb[0].mxu0
  %v3277 = vadd.f32 0.0, %v3276
  %v3278 = vpop.f32.mrb[0].mxu0
  %3279 = vdwg.mxu0
  %v3280 = vsub.f32 %v3207, %v3277
  %v3281 = vmul.f32 %v3280, %v3280
  %v3282 = vsel %vm235, %v3281, 0.0
  %v3283 = vrot.slane %v3282, 4
  %v3284 = vadd.f32 %v3282, %v3283
  %v3285 = vrot.slane %v3284, 2
  %v3286 = vadd.f32 %v3284, %v3285
  %v3287 = vrot.slane %v3286, 1
  %v3288 = vadd.f32 %v3286, %v3287
  %v3290 = vsel %vm243, %v3121, 0
  %v3293 = vsel %vm243, %v3122, 0
  %v3296 = vsel %vm235, %v3277, 0
  %3298 = vmatprep.subr.mxu0 0.0
  %3299 = vmatpush1.msra.mxu0 %v3296
  %3300 = vmatprep.subr.mxu0 0.0
  %3301 = vmatpush1.msra.mxu0 0.0
  %3302 = vmatprep.subr.mxu0 0.0
  %3303 = vmatpush1.msra.mxu0 0.0
  %3304 = vmatprep.subr.mxu0 0.0
  %3305 = vmatpush1.msra.mxu0 0.0
  %3306 = vmatprep.subr.mxu0 0.0
  %3307 = vmatpush1.msra.mxu0 0.0
  %3308 = vmatprep.subr.mxu0 0.0
  %3309 = vmatpush1.msra.mxu0 0.0
  %3310 = vmatprep.subr.mxu0 0.0
  %3311 = vmatpush1.msra.mxu0 0.0
  %3312 = vmatprep.subr.mxu0 0.0
  %3313 = vmatpush1.msra.mxu0 0.0
  %3314 = vmatprep.subr.mxu0 0.0
  %3315 = vmatpush1.msra.mxu0 0.0
  %3316 = vmatprep.subr.mxu0 0.0
  %3317 = vmatpush1.msra.mxu0 0.0
  %3318 = vmatprep.subr.mxu0 0.0
  %3319 = vmatpush1.msra.mxu0 0.0
  %3320 = vmatprep.subr.mxu0 0.0
  %3321 = vmatpush1.msra.mxu0 0.0
  %3322 = vmatprep.subr.mxu0 0.0
  %3323 = vmatpush1.msra.mxu0 0.0
  %3324 = vmatprep.subr.mxu0 0.0
  %3325 = vmatpush1.msra.mxu0 0.0
  %3326 = vmatprep.subr.mxu0 0.0
  %3327 = vmatpush1.msra.mxu0 0.0
  %3328 = vmatprep.subr.mxu0 0.0
  %3329 = vmatpush1.msra.mxu0 0.0
  %3330 = vmatprep.subr.mxu0 0.0
  %3331 = vmatpush1.msra.mxu0 0.0
  %3332 = vmatprep.subr.mxu0 0.0
  %3333 = vmatpush1.msra.mxu0 0.0
  %3334 = vmatprep.subr.mxu0 0.0
  %3335 = vmatpush1.msra.mxu0 0.0
  %3336 = vmatprep.subr.mxu0 0.0
  %3337 = vmatpush1.msra.mxu0 0.0
  %3338 = vmatprep.subr.mxu0 0.0
  %3339 = vmatpush1.msra.mxu0 0.0
  %3340 = vmatprep.subr.mxu0 0.0
  %3341 = vmatpush1.msra.mxu0 0.0
  %3342 = vmatprep.subr.mxu0 0.0
  %3343 = vmatpush1.msra.mxu0 0.0
  %3344 = vmatprep.subr.mxu0 0.0
  %3345 = vmatpush1.msra.mxu0 0.0
  %3346 = vmatprep.subr.mxu0 0.0
  %3347 = vmatpush1.msra.mxu0 0.0
  %3348 = vmatprep.subr.mxu0 0.0
  %3349 = vmatpush1.msra.mxu0 0.0
  %3350 = vmatprep.subr.mxu0 0.0
  %3351 = vmatpush1.msra.mxu0 0.0
  %3352 = vmatprep.subr.mxu0 0.0
  %3353 = vmatpush1.msra.mxu0 0.0
  %3354 = vmatprep.subr.mxu0 0.0
  %3355 = vmatpush1.msra.mxu0 0.0
  %3356 = vmatprep.subr.mxu0 0.0
  %3357 = vmatpush1.msra.mxu0 0.0
  %3358 = vmatprep.subr.mxu0 0.0
  %3359 = vmatpush1.msra.mxu0 0.0
  %3360 = vmatprep.subr.mxu0 0.0
  %3361 = vmatpush1.msra.mxu0 0.0
  %3362 = vmatprep.mubr.f32.mxu0 0.0
  %3363 = vmatmul.mubr.f32.gmra.mrb[0].mxu0 %v3290
  %v3364 = vpop.f32.mrb[0].mxu0
  %v3365 = vadd.f32 0.0, %v3364
  %v3366 = vpop.f32.mrb[0].mxu0
  %3367 = vmatprep.mubr.f32.mxu0 0.0
  %3368 = vmatmul.mubr.f32.gmra.mrb[0].mxu0 %v3293
  %v3369 = vpop.f32.mrb[0].mxu0
  %v3370 = vadd.f32 0.0, %v3369
  %v3371 = vpop.f32.mrb[0].mxu0
  %3372 = vdwg.mxu0
  %v3374 = vsel %vm243, %v3118, 0
  %v3377 = vsel %vm243, %v3119, 0
  %v3380 = vsel %vm235, %v3207, 0
  %3382 = vmatprep.subr.mxu0 0.0
  %3383 = vmatpush1.msra.mxu0 %v3380
  %3384 = vmatprep.subr.mxu0 0.0
  %3385 = vmatpush1.msra.mxu0 0.0
  %3386 = vmatprep.subr.mxu0 0.0
  %3387 = vmatpush1.msra.mxu0 0.0
  %3388 = vmatprep.subr.mxu0 0.0
  %3389 = vmatpush1.msra.mxu0 0.0
  %3390 = vmatprep.subr.mxu0 0.0
  %3391 = vmatpush1.msra.mxu0 0.0
  %3392 = vmatprep.subr.mxu0 0.0
  %3393 = vmatpush1.msra.mxu0 0.0
  %3394 = vmatprep.subr.mxu0 0.0
  %3395 = vmatpush1.msra.mxu0 0.0
  %3396 = vmatprep.subr.mxu0 0.0
  %3397 = vmatpush1.msra.mxu0 0.0
  %3398 = vmatprep.subr.mxu0 0.0
  %3399 = vmatpush1.msra.mxu0 0.0
  %3400 = vmatprep.subr.mxu0 0.0
  %3401 = vmatpush1.msra.mxu0 0.0
  %3402 = vmatprep.subr.mxu0 0.0
  %3403 = vmatpush1.msra.mxu0 0.0
  %3404 = vmatprep.subr.mxu0 0.0
  %3405 = vmatpush1.msra.mxu0 0.0
  %3406 = vmatprep.subr.mxu0 0.0
  %3407 = vmatpush1.msra.mxu0 0.0
  %3408 = vmatprep.subr.mxu0 0.0
  %3409 = vmatpush1.msra.mxu0 0.0
  %3410 = vmatprep.subr.mxu0 0.0
  %3411 = vmatpush1.msra.mxu0 0.0
  %3412 = vmatprep.subr.mxu0 0.0
  %3413 = vmatpush1.msra.mxu0 0.0
  %3414 = vmatprep.subr.mxu0 0.0
  %3415 = vmatpush1.msra.mxu0 0.0
  %3416 = vmatprep.subr.mxu0 0.0
  %3417 = vmatpush1.msra.mxu0 0.0
  %3418 = vmatprep.subr.mxu0 0.0
  %3419 = vmatpush1.msra.mxu0 0.0
  %3420 = vmatprep.subr.mxu0 0.0
  %3421 = vmatpush1.msra.mxu0 0.0
  %3422 = vmatprep.subr.mxu0 0.0
  %3423 = vmatpush1.msra.mxu0 0.0
  %3424 = vmatprep.subr.mxu0 0.0
  %3425 = vmatpush1.msra.mxu0 0.0
  %3426 = vmatprep.subr.mxu0 0.0
  %3427 = vmatpush1.msra.mxu0 0.0
  %3428 = vmatprep.subr.mxu0 0.0
  %3429 = vmatpush1.msra.mxu0 0.0
  %3430 = vmatprep.subr.mxu0 0.0
  %3431 = vmatpush1.msra.mxu0 0.0
  %3432 = vmatprep.subr.mxu0 0.0
  %3433 = vmatpush1.msra.mxu0 0.0
  %3434 = vmatprep.subr.mxu0 0.0
  %3435 = vmatpush1.msra.mxu0 0.0
  %3436 = vmatprep.subr.mxu0 0.0
  %3437 = vmatpush1.msra.mxu0 0.0
  %3438 = vmatprep.subr.mxu0 0.0
  %3439 = vmatpush1.msra.mxu0 0.0
  %3440 = vmatprep.subr.mxu0 0.0
  %3441 = vmatpush1.msra.mxu0 0.0
  %3442 = vmatprep.subr.mxu0 0.0
  %3443 = vmatpush1.msra.mxu0 0.0
  %3444 = vmatprep.subr.mxu0 0.0
  %3445 = vmatpush1.msra.mxu0 0.0
  %3446 = vmatprep.mubr.f32.mxu0 0.0
  %3447 = vmatmul.mubr.f32.gmra.mrb[0].mxu0 %v3374
  %v3448 = vpop.f32.mrb[0].mxu0
  %v3449 = vadd.f32 %v3365, %v3448
  %v3450 = vpop.f32.mrb[0].mxu0
  %3451 = vmatprep.mubr.f32.mxu0 0.0
  %3452 = vmatmul.mubr.f32.gmra.mrb[0].mxu0 %v3377
  %v3453 = vpop.f32.mrb[0].mxu0
  %v3454 = vadd.f32 %v3370, %v3453
  %v3455 = vpop.f32.mrb[0].mxu0
  %3456 = vdwg.mxu0
  %3458 = vset.pattern.permute.xlu0 0
  %3459 = vperm.xlu0 %3458, %v3124
  %v3460 = vpop.permute.xlu0 %3459
  %3463 = vset.pattern.permute.xlu0 0
  %3464 = vperm.xlu0 %3463, %v3125
  %v3465 = vpop.permute.xlu0 %3464
  %v3467 = vmul.f32 %v3460, %v3288
  %v3468 = vmul.f32 %v3465, %v3288
  %v3469 = vadd.f32 %v3449, %v3467
  %v3470 = vadd.f32 %v3454, %v3468
  %s3471 = scalar_lea.vmem %s8, 16
  %v3472 = vld [vmem:[%s3471] sm:$0xff]
  %v3473 = vld [vmem:[%s3471 + $0x8] sm:$0x3f]
  %3475 = vset.pattern.permute.xlu0 0
  %3476 = vperm.xlu0 %3475, %v3472
  %v3477 = vpop.permute.xlu0 %3476
  %3480 = vset.pattern.permute.xlu0 0
  %3481 = vperm.xlu0 %3480, %v3473
  %v3482 = vpop.permute.xlu0 %3481
  %v3484 = vadd.f32 %v3469, %v3477
  %v3485 = vadd.f32 %v3470, %v3482
  %v3486 = vsub.f32 0.0, %v3484
  %v3487 = vsub.f32 0.0, %v3485
  %v3488 = vmul.f32 %v3486, 1.442695
  %v3489 = vpow.pop %v3488
  %v3490 = vmul.f32 %v3487, 1.442695
  %v3491 = vpow.pop %v3490
  %v3492 = vadd.f32 %v3489, 1.0
  %v3493 = vadd.f32 %v3491, 1.0
  %v3494 = vrcp.pop %v3492
  %v3495 = vrcp.pop %v3493
  %v3496 = vmul.f32 %v3484, %v3494
  %v3497 = vmul.f32 %v3485, %v3495
  %v3498 = vsub.f32 1.0, %v3494
  %v3499 = vsub.f32 1.0, %v3495
  %v3500 = vmul.f32 %v3484, %v3498
  %v3501 = vmul.f32 %v3485, %v3499
  %v3502 = vadd.f32 %v3500, 1.0
  %v3503 = vadd.f32 %v3501, 1.0
  %v3504 = vmul.f32 %v3494, %v3502
  %v3505 = vmul.f32 %v3495, %v3503
  %s3506 = scalar_lea.vmem %s10, 32
  %v3507 = vld [vmem:[%s3506] sm:$0xff]
  %v3508 = vld [vmem:[%s3506 + $0x8] sm:$0xff]
  %v3509 = vld [vmem:[%s3506 + $0x10] sm:$0xff]
  %v3510 = vld [vmem:[%s3506 + $0x18] sm:$0xff]
  %3512 = vset.pattern.permute.xlu0 0
  %3513 = vperm.xlu0 %3512, %v3507
  %v3514 = vpop.permute.xlu0 %3513
  %3517 = vset.pattern.permute.xlu0 0
  %3518 = vperm.xlu0 %3517, %v3508
  %v3519 = vpop.permute.xlu0 %3518
  %3522 = vset.pattern.permute.xlu0 0
  %3523 = vperm.xlu0 %3522, %v3509
  %v3524 = vpop.permute.xlu0 %3523
  %3527 = vset.pattern.permute.xlu0 0
  %3528 = vperm.xlu0 %3527, %v3510
  %v3529 = vpop.permute.xlu0 %3528
  %v3532 = vsel %vm484, %v3127, 0
  %v3535 = vsel %vm484, %v3128, 0
  %v3538 = vsel %vm484, %v3129, 0
  %v3541 = vsel %vm484, %v3130, 0
  %v3544 = vsel %vm497, %v3497, 0
  %3546 = vmatprep.subr.mxu0 0.0
  %3547 = vmatpush1.msra.mxu0 %v3496
  %3548 = vmatprep.subr.mxu0 0.0
  %3549 = vmatpush1.msra.mxu0 %v3544
  %3550 = vmatprep.subr.mxu0 0.0
  %3551 = vmatpush1.msra.mxu0 0.0
  %3552 = vmatprep.subr.mxu0 0.0
  %3553 = vmatpush1.msra.mxu0 0.0
  %3554 = vmatprep.subr.mxu0 0.0
  %3555 = vmatpush1.msra.mxu0 0.0
  %3556 = vmatprep.subr.mxu0 0.0
  %3557 = vmatpush1.msra.mxu0 0.0
  %3558 = vmatprep.subr.mxu0 0.0
  %3559 = vmatpush1.msra.mxu0 0.0
  %3560 = vmatprep.subr.mxu0 0.0
  %3561 = vmatpush1.msra.mxu0 0.0
  %3562 = vmatprep.subr.mxu0 0.0
  %3563 = vmatpush1.msra.mxu0 0.0
  %3564 = vmatprep.subr.mxu0 0.0
  %3565 = vmatpush1.msra.mxu0 0.0
  %3566 = vmatprep.subr.mxu0 0.0
  %3567 = vmatpush1.msra.mxu0 0.0
  %3568 = vmatprep.subr.mxu0 0.0
  %3569 = vmatpush1.msra.mxu0 0.0
  %3570 = vmatprep.subr.mxu0 0.0
  %3571 = vmatpush1.msra.mxu0 0.0
  %3572 = vmatprep.subr.mxu0 0.0
  %3573 = vmatpush1.msra.mxu0 0.0
  %3574 = vmatprep.subr.mxu0 0.0
  %3575 = vmatpush1.msra.mxu0 0.0
  %3576 = vmatprep.subr.mxu0 0.0
  %3577 = vmatpush1.msra.mxu0 0.0
  %3578 = vmatprep.subr.mxu0 0.0
  %3579 = vmatpush1.msra.mxu0 0.0
  %3580 = vmatprep.subr.mxu0 0.0
  %3581 = vmatpush1.msra.mxu0 0.0
  %3582 = vmatprep.subr.mxu0 0.0
  %3583 = vmatpush1.msra.mxu0 0.0
  %3584 = vmatprep.subr.mxu0 0.0
  %3585 = vmatpush1.msra.mxu0 0.0
  %3586 = vmatprep.subr.mxu0 0.0
  %3587 = vmatpush1.msra.mxu0 0.0
  %3588 = vmatprep.subr.mxu0 0.0
  %3589 = vmatpush1.msra.mxu0 0.0
  %3590 = vmatprep.subr.mxu0 0.0
  %3591 = vmatpush1.msra.mxu0 0.0
  %3592 = vmatprep.subr.mxu0 0.0
  %3593 = vmatpush1.msra.mxu0 0.0
  %3594 = vmatprep.subr.mxu0 0.0
  %3595 = vmatpush1.msra.mxu0 0.0
  %3596 = vmatprep.subr.mxu0 0.0
  %3597 = vmatpush1.msra.mxu0 0.0
  %3598 = vmatprep.subr.mxu0 0.0
  %3599 = vmatpush1.msra.mxu0 0.0
  %3600 = vmatprep.subr.mxu0 0.0
  %3601 = vmatpush1.msra.mxu0 0.0
  %3602 = vmatprep.subr.mxu0 0.0
  %3603 = vmatpush1.msra.mxu0 0.0
  %3604 = vmatprep.subr.mxu0 0.0
  %3605 = vmatpush1.msra.mxu0 0.0
  %3606 = vmatprep.subr.mxu0 0.0
  %3607 = vmatpush1.msra.mxu0 0.0
  %3608 = vmatprep.subr.mxu0 0.0
  %3609 = vmatpush1.msra.mxu0 0.0
  %3610 = vmatprep.mubr.f32.mxu0 0.0
  %3611 = vmatmul.mubr.f32.gmra.mrb[0].mxu0 %v3532
  %v3612 = vpop.f32.mrb[0].mxu0
  %v3613 = vadd.f32 %v3514, %v3612
  %v3614 = vpop.f32.mrb[0].mxu0
  %3615 = vmatprep.mubr.f32.mxu0 0.0
  %3616 = vmatmul.mubr.f32.gmra.mrb[0].mxu0 %v3535
  %v3617 = vpop.f32.mrb[0].mxu0
  %v3618 = vadd.f32 %v3519, %v3617
  %v3619 = vpop.f32.mrb[0].mxu0
  %3620 = vmatprep.mubr.f32.mxu0 0.0
  %3621 = vmatmul.mubr.f32.gmra.mrb[0].mxu0 %v3538
  %v3622 = vpop.f32.mrb[0].mxu0
  %v3623 = vadd.f32 %v3524, %v3622
  %v3624 = vpop.f32.mrb[0].mxu0
  %3625 = vmatprep.mubr.f32.mxu0 0.0
  %3626 = vmatmul.mubr.f32.gmra.mrb[0].mxu0 %v3541
  %v3627 = vpop.f32.mrb[0].mxu0
  %v3628 = vadd.f32 %v3529, %v3627
  %v3629 = vpop.f32.mrb[0].mxu0
  %3630 = vdwg.mxu0
  %v3631 = vsub.f32 0.0, %v3613
  %v3632 = vsub.f32 0.0, %v3618
  %v3633 = vsub.f32 0.0, %v3623
  %v3634 = vsub.f32 0.0, %v3628
  %v3635 = vmul.f32 %v3631, 1.442695
  %v3636 = vpow.pop %v3635
  %v3637 = vmul.f32 %v3632, 1.442695
  %v3638 = vpow.pop %v3637
  %v3639 = vmul.f32 %v3633, 1.442695
  %v3640 = vpow.pop %v3639
  %v3641 = vmul.f32 %v3634, 1.442695
  %v3642 = vpow.pop %v3641
  %v3643 = vadd.f32 %v3636, 1.0
  %v3644 = vadd.f32 %v3638, 1.0
  %v3645 = vadd.f32 %v3640, 1.0
  %v3646 = vadd.f32 %v3642, 1.0
  %v3647 = vrcp.pop %v3643
  %v3648 = vrcp.pop %v3644
  %v3649 = vrcp.pop %v3645
  %v3650 = vrcp.pop %v3646
  %v3651 = vmul.f32 %v3613, %v3647
  %v3652 = vmul.f32 %v3618, %v3648
  %v3653 = vmul.f32 %v3623, %v3649
  %v3654 = vmul.f32 %v3628, %v3650
  %v3655 = vsub.f32 1.0, %v3647
  %v3656 = vsub.f32 1.0, %v3648
  %v3657 = vsub.f32 1.0, %v3649
  %v3658 = vsub.f32 1.0, %v3650
  %v3659 = vmul.f32 %v3613, %v3655
  %v3660 = vmul.f32 %v3618, %v3656
  %v3661 = vmul.f32 %v3623, %v3657
  %v3662 = vmul.f32 %v3628, %v3658
  %v3663 = vadd.f32 %v3659, 1.0
  %v3664 = vadd.f32 %v3660, 1.0
  %v3665 = vadd.f32 %v3661, 1.0
  %v3666 = vadd.f32 %v3662, 1.0
  %v3667 = vmul.f32 %v3647, %v3663
  %v3668 = vmul.f32 %v3648, %v3664
  %v3669 = vmul.f32 %v3649, %v3665
  %v3670 = vmul.f32 %v3650, %v3666
  %3671 = vmatprep.subr.mxu0 0.0
  %3672 = vmatpush1.msra.mxu0 %v59
  %3673 = vmatprep.subr.mxu0 0.0
  %3674 = vmatpush1.msra.mxu0 %v60
  %3675 = vmatprep.subr.mxu0 0.0
  %3676 = vmatpush1.msra.mxu0 %v61
  %3677 = vmatprep.subr.mxu0 0.0
  %3678 = vmatpush1.msra.mxu0 %v62
  %3679 = vmatprep.subr.mxu0 0.0
  %3680 = vmatpush1.msra.mxu0 %v63
  %3681 = vmatprep.subr.mxu0 0.0
  %3682 = vmatpush1.msra.mxu0 %v64
  %3683 = vmatprep.subr.mxu0 0.0
  %3684 = vmatpush1.msra.mxu0 %v65
  %3685 = vmatprep.subr.mxu0 0.0
  %3686 = vmatpush1.msra.mxu0 %v66
  %3687 = vmatprep.subr.mxu0 0.0
  %3688 = vmatpush1.msra.mxu0 %v67
  %3689 = vmatprep.subr.mxu0 0.0
  %3690 = vmatpush1.msra.mxu0 %v68
  %3691 = vmatprep.subr.mxu0 0.0
  %3692 = vmatpush1.msra.mxu0 %v69
  %3693 = vmatprep.subr.mxu0 0.0
  %3694 = vmatpush1.msra.mxu0 %v70
  %3695 = vmatprep.subr.mxu0 0.0
  %3696 = vmatpush1.msra.mxu0 %v71
  %3697 = vmatprep.subr.mxu0 0.0
  %3698 = vmatpush1.msra.mxu0 %v72
  %3699 = vmatprep.subr.mxu0 0.0
  %3700 = vmatpush1.msra.mxu0 %v73
  %3701 = vmatprep.subr.mxu0 0.0
  %3702 = vmatpush1.msra.mxu0 %v74
  %3703 = vmatprep.subr.mxu0 0.0
  %3704 = vmatpush1.msra.mxu0 0.0
  %3705 = vmatprep.subr.mxu0 0.0
  %3706 = vmatpush1.msra.mxu0 0.0
  %3707 = vmatprep.subr.mxu0 0.0
  %3708 = vmatpush1.msra.mxu0 0.0
  %3709 = vmatprep.subr.mxu0 0.0
  %3710 = vmatpush1.msra.mxu0 0.0
  %3711 = vmatprep.subr.mxu0 0.0
  %3712 = vmatpush1.msra.mxu0 0.0
  %3713 = vmatprep.subr.mxu0 0.0
  %3714 = vmatpush1.msra.mxu0 0.0
  %3715 = vmatprep.subr.mxu0 0.0
  %3716 = vmatpush1.msra.mxu0 0.0
  %3717 = vmatprep.subr.mxu0 0.0
  %3718 = vmatpush1.msra.mxu0 0.0
  %3719 = vmatprep.subr.mxu0 0.0
  %3720 = vmatpush1.msra.mxu0 0.0
  %3721 = vmatprep.subr.mxu0 0.0
  %3722 = vmatpush1.msra.mxu0 0.0
  %3723 = vmatprep.subr.mxu0 0.0
  %3724 = vmatpush1.msra.mxu0 0.0
  %3725 = vmatprep.subr.mxu0 0.0
  %3726 = vmatpush1.msra.mxu0 0.0
  %3727 = vmatprep.subr.mxu0 0.0
  %3728 = vmatpush1.msra.mxu0 0.0
  %3729 = vmatprep.subr.mxu0 0.0
  %3730 = vmatpush1.msra.mxu0 0.0
  %3731 = vmatprep.subr.mxu0 0.0
  %3732 = vmatpush1.msra.mxu0 0.0
  %3733 = vmatprep.subr.mxu0 0.0
  %3734 = vmatpush1.msra.mxu0 0.0
  %3735 = vmatprep.mubr.f32.mxu0 0.0
  %3736 = vmatmul.mubr.f32.gmra.mrb[0].mxu0 %v3651
  %v3737 = vpop.f32.mrb[0].mxu0
  %v3738 = vadd.f32 0.0, %v3737
  %v3739 = vpop.f32.mrb[0].mxu0
  %3740 = vmatprep.mubr.f32.mxu0 0.0
  %3741 = vmatmul.mubr.f32.gmra.mrb[0].mxu0 %v3652
  %v3742 = vpop.f32.mrb[0].mxu0
  %v3743 = vadd.f32 0.0, %v3742
  %v3744 = vpop.f32.mrb[0].mxu0
  %3745 = vmatprep.mubr.f32.mxu0 0.0
  %3746 = vmatmul.mubr.f32.gmra.mrb[0].mxu0 %v3653
  %v3747 = vpop.f32.mrb[0].mxu0
  %v3748 = vadd.f32 0.0, %v3747
  %v3749 = vpop.f32.mrb[0].mxu0
  %3750 = vmatprep.mubr.f32.mxu0 0.0
  %3751 = vmatmul.mubr.f32.gmra.mrb[0].mxu0 %v3654
  %v3752 = vpop.f32.mrb[0].mxu0
  %v3753 = vadd.f32 0.0, %v3752
  %v3754 = vpop.f32.mrb[0].mxu0
  %3755 = vdwg.mxu0
  %v3757 = vsel %vm711, %v3134, 0
  %3759 = vmatprep.subr.mxu0 0.0
  %3760 = vmatpush1.msra.mxu0 %v3738
  %3761 = vmatprep.subr.mxu0 0.0
  %3762 = vmatpush1.msra.mxu0 %v3743
  %3763 = vmatprep.subr.mxu0 0.0
  %3764 = vmatpush1.msra.mxu0 %v3748
  %3765 = vmatprep.subr.mxu0 0.0
  %3766 = vmatpush1.msra.mxu0 %v3753
  %3767 = vmatprep.subr.mxu0 0.0
  %3768 = vmatpush1.msra.mxu0 0.0
  %3769 = vmatprep.subr.mxu0 0.0
  %3770 = vmatpush1.msra.mxu0 0.0
  %3771 = vmatprep.subr.mxu0 0.0
  %3772 = vmatpush1.msra.mxu0 0.0
  %3773 = vmatprep.subr.mxu0 0.0
  %3774 = vmatpush1.msra.mxu0 0.0
  %3775 = vmatprep.subr.mxu0 0.0
  %3776 = vmatpush1.msra.mxu0 0.0
  %3777 = vmatprep.subr.mxu0 0.0
  %3778 = vmatpush1.msra.mxu0 0.0
  %3779 = vmatprep.subr.mxu0 0.0
  %3780 = vmatpush1.msra.mxu0 0.0
  %3781 = vmatprep.subr.mxu0 0.0
  %3782 = vmatpush1.msra.mxu0 0.0
  %3783 = vmatprep.subr.mxu0 0.0
  %3784 = vmatpush1.msra.mxu0 0.0
  %3785 = vmatprep.subr.mxu0 0.0
  %3786 = vmatpush1.msra.mxu0 0.0
  %3787 = vmatprep.subr.mxu0 0.0
  %3788 = vmatpush1.msra.mxu0 0.0
  %3789 = vmatprep.subr.mxu0 0.0
  %3790 = vmatpush1.msra.mxu0 0.0
  %3791 = vmatprep.subr.mxu0 0.0
  %3792 = vmatpush1.msra.mxu0 0.0
  %3793 = vmatprep.subr.mxu0 0.0
  %3794 = vmatpush1.msra.mxu0 0.0
  %3795 = vmatprep.subr.mxu0 0.0
  %3796 = vmatpush1.msra.mxu0 0.0
  %3797 = vmatprep.subr.mxu0 0.0
  %3798 = vmatpush1.msra.mxu0 0.0
  %3799 = vmatprep.subr.mxu0 0.0
  %3800 = vmatpush1.msra.mxu0 0.0
  %3801 = vmatprep.subr.mxu0 0.0
  %3802 = vmatpush1.msra.mxu0 0.0
  %3803 = vmatprep.subr.mxu0 0.0
  %3804 = vmatpush1.msra.mxu0 0.0
  %3805 = vmatprep.subr.mxu0 0.0
  %3806 = vmatpush1.msra.mxu0 0.0
  %3807 = vmatprep.subr.mxu0 0.0
  %3808 = vmatpush1.msra.mxu0 0.0
  %3809 = vmatprep.subr.mxu0 0.0
  %3810 = vmatpush1.msra.mxu0 0.0
  %3811 = vmatprep.subr.mxu0 0.0
  %3812 = vmatpush1.msra.mxu0 0.0
  %3813 = vmatprep.subr.mxu0 0.0
  %3814 = vmatpush1.msra.mxu0 0.0
  %3815 = vmatprep.subr.mxu0 0.0
  %3816 = vmatpush1.msra.mxu0 0.0
  %3817 = vmatprep.subr.mxu0 0.0
  %3818 = vmatpush1.msra.mxu0 0.0
  %3819 = vmatprep.subr.mxu0 0.0
  %3820 = vmatpush1.msra.mxu0 0.0
  %3821 = vmatprep.subr.mxu0 0.0
  %3822 = vmatpush1.msra.mxu0 0.0
  %3823 = vmatprep.mubr.f32.mxu0 0.0
  %3824 = vmatmul.mubr.f32.gmra.mrb[0].mxu0 %v3757
  %v3825 = vpop.f32.mrb[0].mxu0
  %v3826 = vadd.f32 0.0, %v3825
  %v3827 = vpop.f32.mrb[0].mxu0
  %3828 = vdwg.mxu0
  %v3830 = vsel %vm243, %v3132, 0
  %v3832 = vsel %vm235, %v3116, 0
  %3834 = vmatprep.subr.mxu0 0.0
  %3835 = vmatpush1.msra.mxu0 %v3832
  %3836 = vmatprep.subr.mxu0 0.0
  %3837 = vmatpush1.msra.mxu0 0.0
  %3838 = vmatprep.subr.mxu0 0.0
  %3839 = vmatpush1.msra.mxu0 0.0
  %3840 = vmatprep.subr.mxu0 0.0
  %3841 = vmatpush1.msra.mxu0 0.0
  %3842 = vmatprep.subr.mxu0 0.0
  %3843 = vmatpush1.msra.mxu0 0.0
  %3844 = vmatprep.subr.mxu0 0.0
  %3845 = vmatpush1.msra.mxu0 0.0
  %3846 = vmatprep.subr.mxu0 0.0
  %3847 = vmatpush1.msra.mxu0 0.0
  %3848 = vmatprep.subr.mxu0 0.0
  %3849 = vmatpush1.msra.mxu0 0.0
  %3850 = vmatprep.subr.mxu0 0.0
  %3851 = vmatpush1.msra.mxu0 0.0
  %3852 = vmatprep.subr.mxu0 0.0
  %3853 = vmatpush1.msra.mxu0 0.0
  %3854 = vmatprep.subr.mxu0 0.0
  %3855 = vmatpush1.msra.mxu0 0.0
  %3856 = vmatprep.subr.mxu0 0.0
  %3857 = vmatpush1.msra.mxu0 0.0
  %3858 = vmatprep.subr.mxu0 0.0
  %3859 = vmatpush1.msra.mxu0 0.0
  %3860 = vmatprep.subr.mxu0 0.0
  %3861 = vmatpush1.msra.mxu0 0.0
  %3862 = vmatprep.subr.mxu0 0.0
  %3863 = vmatpush1.msra.mxu0 0.0
  %3864 = vmatprep.subr.mxu0 0.0
  %3865 = vmatpush1.msra.mxu0 0.0
  %3866 = vmatprep.subr.mxu0 0.0
  %3867 = vmatpush1.msra.mxu0 0.0
  %3868 = vmatprep.subr.mxu0 0.0
  %3869 = vmatpush1.msra.mxu0 0.0
  %3870 = vmatprep.subr.mxu0 0.0
  %3871 = vmatpush1.msra.mxu0 0.0
  %3872 = vmatprep.subr.mxu0 0.0
  %3873 = vmatpush1.msra.mxu0 0.0
  %3874 = vmatprep.subr.mxu0 0.0
  %3875 = vmatpush1.msra.mxu0 0.0
  %3876 = vmatprep.subr.mxu0 0.0
  %3877 = vmatpush1.msra.mxu0 0.0
  %3878 = vmatprep.subr.mxu0 0.0
  %3879 = vmatpush1.msra.mxu0 0.0
  %3880 = vmatprep.subr.mxu0 0.0
  %3881 = vmatpush1.msra.mxu0 0.0
  %3882 = vmatprep.subr.mxu0 0.0
  %3883 = vmatpush1.msra.mxu0 0.0
  %3884 = vmatprep.subr.mxu0 0.0
  %3885 = vmatpush1.msra.mxu0 0.0
  %3886 = vmatprep.subr.mxu0 0.0
  %3887 = vmatpush1.msra.mxu0 0.0
  %3888 = vmatprep.subr.mxu0 0.0
  %3889 = vmatpush1.msra.mxu0 0.0
  %3890 = vmatprep.subr.mxu0 0.0
  %3891 = vmatpush1.msra.mxu0 0.0
  %3892 = vmatprep.subr.mxu0 0.0
  %3893 = vmatpush1.msra.mxu0 0.0
  %3894 = vmatprep.subr.mxu0 0.0
  %3895 = vmatpush1.msra.mxu0 0.0
  %3896 = vmatprep.subr.mxu0 0.0
  %3897 = vmatpush1.msra.mxu0 0.0
  %3898 = vmatprep.mubr.f32.mxu0 0.0
  %3899 = vmatmul.mubr.f32.gmra.mrb[0].mxu0 %v3830
  %v3900 = vpop.f32.mrb[0].mxu0
  %v3901 = vadd.f32 %v3826, %v3900
  %v3902 = vpop.f32.mrb[0].mxu0
  %3903 = vdwg.mxu0
  %s3904 = scalar_lea.vmem %s13, 8
  %v3905 = vld [vmem:[%s3904] sm:$0x3f]
  %3907 = vset.pattern.permute.xlu0 0
  %3908 = vperm.xlu0 %3907, %v3905
  %v3909 = vpop.permute.xlu0 %3908
  %v3911 = vadd.f32 %v3901, %v3909
  %v3912 = vsub.f32 0.0, %v3911
  %v3913 = vmul.f32 %v3912, 1.442695
  %v3914 = vpow.pop %v3913
  %v3915 = vadd.f32 %v3914, 1.0
  %v3916 = vrcp.pop %v3915
  %v3917 = vmul.f32 %v3911, %v3916
  %v3918 = vsub.f32 1.0, %v3916
  %v3919 = vmul.f32 %v3911, %v3918
  %v3920 = vadd.f32 %v3919, 1.0
  %v3921 = vmul.f32 %v3916, %v3920
  %s3922 = scalar_lea.vmem %s15, 4
  %v3923 = vld [vmem:[%s3922] sm:$0x7]
  %3925 = vset.pattern.permute.xlu0 0
  %3926 = vperm.xlu0 %3925, %v3923
  %v3927 = vpop.permute.xlu0 %3926
  %v3930 = vsel %vm883, %v3136, 0
  %v3933 = vsel %vm497, %v3917, 0
  %3935 = vmatprep.subr.mxu0 0.0
  %3936 = vmatpush1.msra.mxu0 %v3933
  %3937 = vmatprep.subr.mxu0 0.0
  %3938 = vmatpush1.msra.mxu0 0.0
  %3939 = vmatprep.subr.mxu0 0.0
  %3940 = vmatpush1.msra.mxu0 0.0
  %3941 = vmatprep.subr.mxu0 0.0
  %3942 = vmatpush1.msra.mxu0 0.0
  %3943 = vmatprep.subr.mxu0 0.0
  %3944 = vmatpush1.msra.mxu0 0.0
  %3945 = vmatprep.subr.mxu0 0.0
  %3946 = vmatpush1.msra.mxu0 0.0
  %3947 = vmatprep.subr.mxu0 0.0
  %3948 = vmatpush1.msra.mxu0 0.0
  %3949 = vmatprep.subr.mxu0 0.0
  %3950 = vmatpush1.msra.mxu0 0.0
  %3951 = vmatprep.subr.mxu0 0.0
  %3952 = vmatpush1.msra.mxu0 0.0
  %3953 = vmatprep.subr.mxu0 0.0
  %3954 = vmatpush1.msra.mxu0 0.0
  %3955 = vmatprep.subr.mxu0 0.0
  %3956 = vmatpush1.msra.mxu0 0.0
  %3957 = vmatprep.subr.mxu0 0.0
  %3958 = vmatpush1.msra.mxu0 0.0
  %3959 = vmatprep.subr.mxu0 0.0
  %3960 = vmatpush1.msra.mxu0 0.0
  %3961 = vmatprep.subr.mxu0 0.0
  %3962 = vmatpush1.msra.mxu0 0.0
  %3963 = vmatprep.subr.mxu0 0.0
  %3964 = vmatpush1.msra.mxu0 0.0
  %3965 = vmatprep.subr.mxu0 0.0
  %3966 = vmatpush1.msra.mxu0 0.0
  %3967 = vmatprep.subr.mxu0 0.0
  %3968 = vmatpush1.msra.mxu0 0.0
  %3969 = vmatprep.subr.mxu0 0.0
  %3970 = vmatpush1.msra.mxu0 0.0
  %3971 = vmatprep.subr.mxu0 0.0
  %3972 = vmatpush1.msra.mxu0 0.0
  %3973 = vmatprep.subr.mxu0 0.0
  %3974 = vmatpush1.msra.mxu0 0.0
  %3975 = vmatprep.subr.mxu0 0.0
  %3976 = vmatpush1.msra.mxu0 0.0
  %3977 = vmatprep.subr.mxu0 0.0
  %3978 = vmatpush1.msra.mxu0 0.0
  %3979 = vmatprep.subr.mxu0 0.0
  %3980 = vmatpush1.msra.mxu0 0.0
  %3981 = vmatprep.subr.mxu0 0.0
  %3982 = vmatpush1.msra.mxu0 0.0
  %3983 = vmatprep.subr.mxu0 0.0
  %3984 = vmatpush1.msra.mxu0 0.0
  %3985 = vmatprep.subr.mxu0 0.0
  %3986 = vmatpush1.msra.mxu0 0.0
  %3987 = vmatprep.subr.mxu0 0.0
  %3988 = vmatpush1.msra.mxu0 0.0
  %3989 = vmatprep.subr.mxu0 0.0
  %3990 = vmatpush1.msra.mxu0 0.0
  %3991 = vmatprep.subr.mxu0 0.0
  %3992 = vmatpush1.msra.mxu0 0.0
  %3993 = vmatprep.subr.mxu0 0.0
  %3994 = vmatpush1.msra.mxu0 0.0
  %3995 = vmatprep.subr.mxu0 0.0
  %3996 = vmatpush1.msra.mxu0 0.0
  %3997 = vmatprep.subr.mxu0 0.0
  %3998 = vmatpush1.msra.mxu0 0.0
  %3999 = vmatprep.mubr.f32.mxu0 0.0
  %4000 = vmatmul.mubr.f32.gmra.mrb[0].mxu0 %v3930
  %v4001 = vpop.f32.mrb[0].mxu0
  %v4002 = vadd.f32 %v3927, %v4001
  %v4003 = vpop.f32.mrb[0].mxu0
  %4004 = vdwg.mxu0
  %v4005 = vadd.f32 %v4002, %v3116
  %s4006 = scalar_lea.vmem %s1, 4
  %v4007 = vld [vmem:[%s4006] sm:$0x7]
  %v4009 = vsel %vm89, %v4007, 0
  %4011 = vmatprep.subr.mxu0 0.0
  %4012 = vmatpush1.msra.mxu0 %v55
  %4013 = vmatprep.subr.mxu0 0.0
  %4014 = vmatpush1.msra.mxu0 %v56
  %4015 = vmatprep.subr.mxu0 0.0
  %4016 = vmatpush1.msra.mxu0 0.0
  %4017 = vmatprep.subr.mxu0 0.0
  %4018 = vmatpush1.msra.mxu0 0.0
  %4019 = vmatprep.subr.mxu0 0.0
  %4020 = vmatpush1.msra.mxu0 0.0
  %4021 = vmatprep.subr.mxu0 0.0
  %4022 = vmatpush1.msra.mxu0 0.0
  %4023 = vmatprep.subr.mxu0 0.0
  %4024 = vmatpush1.msra.mxu0 0.0
  %4025 = vmatprep.subr.mxu0 0.0
  %4026 = vmatpush1.msra.mxu0 0.0
  %4027 = vmatprep.subr.mxu0 0.0
  %4028 = vmatpush1.msra.mxu0 0.0
  %4029 = vmatprep.subr.mxu0 0.0
  %4030 = vmatpush1.msra.mxu0 0.0
  %4031 = vmatprep.subr.mxu0 0.0
  %4032 = vmatpush1.msra.mxu0 0.0
  %4033 = vmatprep.subr.mxu0 0.0
  %4034 = vmatpush1.msra.mxu0 0.0
  %4035 = vmatprep.subr.mxu0 0.0
  %4036 = vmatpush1.msra.mxu0 0.0
  %4037 = vmatprep.subr.mxu0 0.0
  %4038 = vmatpush1.msra.mxu0 0.0
  %4039 = vmatprep.subr.mxu0 0.0
  %4040 = vmatpush1.msra.mxu0 0.0
  %4041 = vmatprep.subr.mxu0 0.0
  %4042 = vmatpush1.msra.mxu0 0.0
  %4043 = vmatprep.subr.mxu0 0.0
  %4044 = vmatpush1.msra.mxu0 0.0
  %4045 = vmatprep.subr.mxu0 0.0
  %4046 = vmatpush1.msra.mxu0 0.0
  %4047 = vmatprep.subr.mxu0 0.0
  %4048 = vmatpush1.msra.mxu0 0.0
  %4049 = vmatprep.subr.mxu0 0.0
  %4050 = vmatpush1.msra.mxu0 0.0
  %4051 = vmatprep.subr.mxu0 0.0
  %4052 = vmatpush1.msra.mxu0 0.0
  %4053 = vmatprep.subr.mxu0 0.0
  %4054 = vmatpush1.msra.mxu0 0.0
  %4055 = vmatprep.subr.mxu0 0.0
  %4056 = vmatpush1.msra.mxu0 0.0
  %4057 = vmatprep.subr.mxu0 0.0
  %4058 = vmatpush1.msra.mxu0 0.0
  %4059 = vmatprep.subr.mxu0 0.0
  %4060 = vmatpush1.msra.mxu0 0.0
  %4061 = vmatprep.subr.mxu0 0.0
  %4062 = vmatpush1.msra.mxu0 0.0
  %4063 = vmatprep.subr.mxu0 0.0
  %4064 = vmatpush1.msra.mxu0 0.0
  %4065 = vmatprep.subr.mxu0 0.0
  %4066 = vmatpush1.msra.mxu0 0.0
  %4067 = vmatprep.subr.mxu0 0.0
  %4068 = vmatpush1.msra.mxu0 0.0
  %4069 = vmatprep.subr.mxu0 0.0
  %4070 = vmatpush1.msra.mxu0 0.0
  %4071 = vmatprep.subr.mxu0 0.0
  %4072 = vmatpush1.msra.mxu0 0.0
  %4073 = vmatprep.subr.mxu0 0.0
  %4074 = vmatpush1.msra.mxu0 0.0
  %4075 = vmatprep.mubr.f32.mxu0 0.0
  %4076 = vmatmul.mubr.f32.gmra.mrb[0].mxu0 %v4009
  %v4077 = vpop.f32.mrb[0].mxu0
  %v4078 = vadd.f32 0.0, %v4077
  %v4079 = vpop.f32.mrb[0].mxu0
  %4080 = vdwg.mxu0
  %4081 = vmatprep.subr.mxu0 0.0
  %4082 = vmatpush1.msra.mxu0 %v57
  %4083 = vmatprep.subr.mxu0 0.0
  %4084 = vmatpush1.msra.mxu0 %v58
  %4085 = vmatprep.subr.mxu0 0.0
  %4086 = vmatpush1.msra.mxu0 0.0
  %4087 = vmatprep.subr.mxu0 0.0
  %4088 = vmatpush1.msra.mxu0 0.0
  %4089 = vmatprep.subr.mxu0 0.0
  %4090 = vmatpush1.msra.mxu0 0.0
  %4091 = vmatprep.subr.mxu0 0.0
  %4092 = vmatpush1.msra.mxu0 0.0
  %4093 = vmatprep.subr.mxu0 0.0
  %4094 = vmatpush1.msra.mxu0 0.0
  %4095 = vmatprep.subr.mxu0 0.0
  %4096 = vmatpush1.msra.mxu0 0.0
  %4097 = vmatprep.subr.mxu0 0.0
  %4098 = vmatpush1.msra.mxu0 0.0
  %4099 = vmatprep.subr.mxu0 0.0
  %4100 = vmatpush1.msra.mxu0 0.0
  %4101 = vmatprep.subr.mxu0 0.0
  %4102 = vmatpush1.msra.mxu0 0.0
  %4103 = vmatprep.subr.mxu0 0.0
  %4104 = vmatpush1.msra.mxu0 0.0
  %4105 = vmatprep.subr.mxu0 0.0
  %4106 = vmatpush1.msra.mxu0 0.0
  %4107 = vmatprep.subr.mxu0 0.0
  %4108 = vmatpush1.msra.mxu0 0.0
  %4109 = vmatprep.subr.mxu0 0.0
  %4110 = vmatpush1.msra.mxu0 0.0
  %4111 = vmatprep.subr.mxu0 0.0
  %4112 = vmatpush1.msra.mxu0 0.0
  %4113 = vmatprep.subr.mxu0 0.0
  %4114 = vmatpush1.msra.mxu0 0.0
  %4115 = vmatprep.subr.mxu0 0.0
  %4116 = vmatpush1.msra.mxu0 0.0
  %4117 = vmatprep.subr.mxu0 0.0
  %4118 = vmatpush1.msra.mxu0 0.0
  %4119 = vmatprep.subr.mxu0 0.0
  %4120 = vmatpush1.msra.mxu0 0.0
  %4121 = vmatprep.subr.mxu0 0.0
  %4122 = vmatpush1.msra.mxu0 0.0
  %4123 = vmatprep.subr.mxu0 0.0
  %4124 = vmatpush1.msra.mxu0 0.0
  %4125 = vmatprep.subr.mxu0 0.0
  %4126 = vmatpush1.msra.mxu0 0.0
  %4127 = vmatprep.subr.mxu0 0.0
  %4128 = vmatpush1.msra.mxu0 0.0
  %4129 = vmatprep.subr.mxu0 0.0
  %4130 = vmatpush1.msra.mxu0 0.0
  %4131 = vmatprep.subr.mxu0 0.0
  %4132 = vmatpush1.msra.mxu0 0.0
  %4133 = vmatprep.subr.mxu0 0.0
  %4134 = vmatpush1.msra.mxu0 0.0
  %4135 = vmatprep.subr.mxu0 0.0
  %4136 = vmatpush1.msra.mxu0 0.0
  %4137 = vmatprep.subr.mxu0 0.0
  %4138 = vmatpush1.msra.mxu0 0.0
  %4139 = vmatprep.subr.mxu0 0.0
  %4140 = vmatpush1.msra.mxu0 0.0
  %4141 = vmatprep.subr.mxu0 0.0
  %4142 = vmatpush1.msra.mxu0 0.0
  %4143 = vmatprep.subr.mxu0 0.0
  %4144 = vmatpush1.msra.mxu0 0.0
  %4145 = vmatprep.mubr.f32.mxu0 0.0
  %4146 = vmatmul.mubr.f32.gmra.mrb[0].mxu0 %v4009
  %v4147 = vpop.f32.mrb[0].mxu0
  %v4148 = vadd.f32 0.0, %v4147
  %v4149 = vpop.f32.mrb[0].mxu0
  %4150 = vdwg.mxu0
  %v4151 = vsub.f32 %v4078, %v4148
  %v4152 = vmul.f32 %v3280, %v4151
  %v4153 = vsel %vm235, %v4152, 0.0
  %v4154 = vrot.slane %v4153, 4
  %v4155 = vadd.f32 %v4153, %v4154
  %v4156 = vrot.slane %v4155, 2
  %v4157 = vadd.f32 %v4155, %v4156
  %v4158 = vrot.slane %v4157, 1
  %v4159 = vadd.f32 %v4157, %v4158
  %v4160 = vmul.f32 %v4159, 2.0
  %v4162 = vsel %vm235, %v4148, 0
  %4164 = vmatprep.subr.mxu0 0.0
  %4165 = vmatpush1.msra.mxu0 %v4162
  %4166 = vmatprep.subr.mxu0 0.0
  %4167 = vmatpush1.msra.mxu0 0.0
  %4168 = vmatprep.subr.mxu0 0.0
  %4169 = vmatpush1.msra.mxu0 0.0
  %4170 = vmatprep.subr.mxu0 0.0
  %4171 = vmatpush1.msra.mxu0 0.0
  %4172 = vmatprep.subr.mxu0 0.0
  %4173 = vmatpush1.msra.mxu0 0.0
  %4174 = vmatprep.subr.mxu0 0.0
  %4175 = vmatpush1.msra.mxu0 0.0
  %4176 = vmatprep.subr.mxu0 0.0
  %4177 = vmatpush1.msra.mxu0 0.0
  %4178 = vmatprep.subr.mxu0 0.0
  %4179 = vmatpush1.msra.mxu0 0.0
  %4180 = vmatprep.subr.mxu0 0.0
  %4181 = vmatpush1.msra.mxu0 0.0
  %4182 = vmatprep.subr.mxu0 0.0
  %4183 = vmatpush1.msra.mxu0 0.0
  %4184 = vmatprep.subr.mxu0 0.0
  %4185 = vmatpush1.msra.mxu0 0.0
  %4186 = vmatprep.subr.mxu0 0.0
  %4187 = vmatpush1.msra.mxu0 0.0
  %4188 = vmatprep.subr.mxu0 0.0
  %4189 = vmatpush1.msra.mxu0 0.0
  %4190 = vmatprep.subr.mxu0 0.0
  %4191 = vmatpush1.msra.mxu0 0.0
  %4192 = vmatprep.subr.mxu0 0.0
  %4193 = vmatpush1.msra.mxu0 0.0
  %4194 = vmatprep.subr.mxu0 0.0
  %4195 = vmatpush1.msra.mxu0 0.0
  %4196 = vmatprep.subr.mxu0 0.0
  %4197 = vmatpush1.msra.mxu0 0.0
  %4198 = vmatprep.subr.mxu0 0.0
  %4199 = vmatpush1.msra.mxu0 0.0
  %4200 = vmatprep.subr.mxu0 0.0
  %4201 = vmatpush1.msra.mxu0 0.0
  %4202 = vmatprep.subr.mxu0 0.0
  %4203 = vmatpush1.msra.mxu0 0.0
  %4204 = vmatprep.subr.mxu0 0.0
  %4205 = vmatpush1.msra.mxu0 0.0
  %4206 = vmatprep.subr.mxu0 0.0
  %4207 = vmatpush1.msra.mxu0 0.0
  %4208 = vmatprep.subr.mxu0 0.0
  %4209 = vmatpush1.msra.mxu0 0.0
  %4210 = vmatprep.subr.mxu0 0.0
  %4211 = vmatpush1.msra.mxu0 0.0
  %4212 = vmatprep.subr.mxu0 0.0
  %4213 = vmatpush1.msra.mxu0 0.0
  %4214 = vmatprep.subr.mxu0 0.0
  %4215 = vmatpush1.msra.mxu0 0.0
  %4216 = vmatprep.subr.mxu0 0.0
  %4217 = vmatpush1.msra.mxu0 0.0
  %4218 = vmatprep.subr.mxu0 0.0
  %4219 = vmatpush1.msra.mxu0 0.0
  %4220 = vmatprep.subr.mxu0 0.0
  %4221 = vmatpush1.msra.mxu0 0.0
  %4222 = vmatprep.subr.mxu0 0.0
  %4223 = vmatpush1.msra.mxu0 0.0
  %4224 = vmatprep.subr.mxu0 0.0
  %4225 = vmatpush1.msra.mxu0 0.0
  %4226 = vmatprep.subr.mxu0 0.0
  %4227 = vmatpush1.msra.mxu0 0.0
  %4228 = vmatprep.mubr.f32.mxu0 0.0
  %4229 = vmatmul.mubr.f32.gmra.mrb[0].mxu0 %v3290
  %v4230 = vpop.f32.mrb[0].mxu0
  %v4231 = vadd.f32 0.0, %v4230
  %v4232 = vpop.f32.mrb[0].mxu0
  %4233 = vmatprep.mubr.f32.mxu0 0.0
  %4234 = vmatmul.mubr.f32.gmra.mrb[0].mxu0 %v3293
  %v4235 = vpop.f32.mrb[0].mxu0
  %v4236 = vadd.f32 0.0, %v4235
  %v4237 = vpop.f32.mrb[0].mxu0
  %4238 = vdwg.mxu0
  %v4240 = vsel %vm235, %v4078, 0
  %4242 = vmatprep.subr.mxu0 0.0
  %4243 = vmatpush1.msra.mxu0 %v4240
  %4244 = vmatprep.subr.mxu0 0.0
  %4245 = vmatpush1.msra.mxu0 0.0
  %4246 = vmatprep.subr.mxu0 0.0
  %4247 = vmatpush1.msra.mxu0 0.0
  %4248 = vmatprep.subr.mxu0 0.0
  %4249 = vmatpush1.msra.mxu0 0.0
  %4250 = vmatprep.subr.mxu0 0.0
  %4251 = vmatpush1.msra.mxu0 0.0
  %4252 = vmatprep.subr.mxu0 0.0
  %4253 = vmatpush1.msra.mxu0 0.0
  %4254 = vmatprep.subr.mxu0 0.0
  %4255 = vmatpush1.msra.mxu0 0.0
  %4256 = vmatprep.subr.mxu0 0.0
  %4257 = vmatpush1.msra.mxu0 0.0
  %4258 = vmatprep.subr.mxu0 0.0
  %4259 = vmatpush1.msra.mxu0 0.0
  %4260 = vmatprep.subr.mxu0 0.0
  %4261 = vmatpush1.msra.mxu0 0.0
  %4262 = vmatprep.subr.mxu0 0.0
  %4263 = vmatpush1.msra.mxu0 0.0
  %4264 = vmatprep.subr.mxu0 0.0
  %4265 = vmatpush1.msra.mxu0 0.0
  %4266 = vmatprep.subr.mxu0 0.0
  %4267 = vmatpush1.msra.mxu0 0.0
  %4268 = vmatprep.subr.mxu0 0.0
  %4269 = vmatpush1.msra.mxu0 0.0
  %4270 = vmatprep.subr.mxu0 0.0
  %4271 = vmatpush1.msra.mxu0 0.0
  %4272 = vmatprep.subr.mxu0 0.0
  %4273 = vmatpush1.msra.mxu0 0.0
  %4274 = vmatprep.subr.mxu0 0.0
  %4275 = vmatpush1.msra.mxu0 0.0
  %4276 = vmatprep.subr.mxu0 0.0
  %4277 = vmatpush1.msra.mxu0 0.0
  %4278 = vmatprep.subr.mxu0 0.0
  %4279 = vmatpush1.msra.mxu0 0.0
  %4280 = vmatprep.subr.mxu0 0.0
  %4281 = vmatpush1.msra.mxu0 0.0
  %4282 = vmatprep.subr.mxu0 0.0
  %4283 = vmatpush1.msra.mxu0 0.0
  %4284 = vmatprep.subr.mxu0 0.0
  %4285 = vmatpush1.msra.mxu0 0.0
  %4286 = vmatprep.subr.mxu0 0.0
  %4287 = vmatpush1.msra.mxu0 0.0
  %4288 = vmatprep.subr.mxu0 0.0
  %4289 = vmatpush1.msra.mxu0 0.0
  %4290 = vmatprep.subr.mxu0 0.0
  %4291 = vmatpush1.msra.mxu0 0.0
  %4292 = vmatprep.subr.mxu0 0.0
  %4293 = vmatpush1.msra.mxu0 0.0
  %4294 = vmatprep.subr.mxu0 0.0
  %4295 = vmatpush1.msra.mxu0 0.0
  %4296 = vmatprep.subr.mxu0 0.0
  %4297 = vmatpush1.msra.mxu0 0.0
  %4298 = vmatprep.subr.mxu0 0.0
  %4299 = vmatpush1.msra.mxu0 0.0
  %4300 = vmatprep.subr.mxu0 0.0
  %4301 = vmatpush1.msra.mxu0 0.0
  %4302 = vmatprep.subr.mxu0 0.0
  %4303 = vmatpush1.msra.mxu0 0.0
  %4304 = vmatprep.subr.mxu0 0.0
  %4305 = vmatpush1.msra.mxu0 0.0
  %4306 = vmatprep.mubr.f32.mxu0 0.0
  %4307 = vmatmul.mubr.f32.gmra.mrb[0].mxu0 %v3374
  %v4308 = vpop.f32.mrb[0].mxu0
  %v4309 = vadd.f32 %v4231, %v4308
  %v4310 = vpop.f32.mrb[0].mxu0
  %4311 = vmatprep.mubr.f32.mxu0 0.0
  %4312 = vmatmul.mubr.f32.gmra.mrb[0].mxu0 %v3377
  %v4313 = vpop.f32.mrb[0].mxu0
  %v4314 = vadd.f32 %v4236, %v4313
  %v4315 = vpop.f32.mrb[0].mxu0
  %4316 = vdwg.mxu0
  %v4317 = vmul.f32 %v3460, %v4160
  %v4318 = vmul.f32 %v3465, %v4160
  %v4319 = vadd.f32 %v4309, %v4317
  %v4320 = vadd.f32 %v4314, %v4318
  %v4321 = vmul.f32 %v3504, %v4319
  %v4322 = vmul.f32 %v3505, %v4320
  %v4324 = vsel %vm497, %v4322, 0
  %4326 = vmatprep.subr.mxu0 0.0
  %4327 = vmatpush1.msra.mxu0 %v4321
  %4328 = vmatprep.subr.mxu0 0.0
  %4329 = vmatpush1.msra.mxu0 %v4324
  %4330 = vmatprep.subr.mxu0 0.0
  %4331 = vmatpush1.msra.mxu0 0.0
  %4332 = vmatprep.subr.mxu0 0.0
  %4333 = vmatpush1.msra.mxu0 0.0
  %4334 = vmatprep.subr.mxu0 0.0
  %4335 = vmatpush1.msra.mxu0 0.0
  %4336 = vmatprep.subr.mxu0 0.0
  %4337 = vmatpush1.msra.mxu0 0.0
  %4338 = vmatprep.subr.mxu0 0.0
  %4339 = vmatpush1.msra.mxu0 0.0
  %4340 = vmatprep.subr.mxu0 0.0
  %4341 = vmatpush1.msra.mxu0 0.0
  %4342 = vmatprep.subr.mxu0 0.0
  %4343 = vmatpush1.msra.mxu0 0.0
  %4344 = vmatprep.subr.mxu0 0.0
  %4345 = vmatpush1.msra.mxu0 0.0
  %4346 = vmatprep.subr.mxu0 0.0
  %4347 = vmatpush1.msra.mxu0 0.0
  %4348 = vmatprep.subr.mxu0 0.0
  %4349 = vmatpush1.msra.mxu0 0.0
  %4350 = vmatprep.subr.mxu0 0.0
  %4351 = vmatpush1.msra.mxu0 0.0
  %4352 = vmatprep.subr.mxu0 0.0
  %4353 = vmatpush1.msra.mxu0 0.0
  %4354 = vmatprep.subr.mxu0 0.0
  %4355 = vmatpush1.msra.mxu0 0.0
  %4356 = vmatprep.subr.mxu0 0.0
  %4357 = vmatpush1.msra.mxu0 0.0
  %4358 = vmatprep.subr.mxu0 0.0
  %4359 = vmatpush1.msra.mxu0 0.0
  %4360 = vmatprep.subr.mxu0 0.0
  %4361 = vmatpush1.msra.mxu0 0.0
  %4362 = vmatprep.subr.mxu0 0.0
  %4363 = vmatpush1.msra.mxu0 0.0
  %4364 = vmatprep.subr.mxu0 0.0
  %4365 = vmatpush1.msra.mxu0 0.0
  %4366 = vmatprep.subr.mxu0 0.0
  %4367 = vmatpush1.msra.mxu0 0.0
  %4368 = vmatprep.subr.mxu0 0.0
  %4369 = vmatpush1.msra.mxu0 0.0
  %4370 = vmatprep.subr.mxu0 0.0
  %4371 = vmatpush1.msra.mxu0 0.0
  %4372 = vmatprep.subr.mxu0 0.0
  %4373 = vmatpush1.msra.mxu0 0.0
  %4374 = vmatprep.subr.mxu0 0.0
  %4375 = vmatpush1.msra.mxu0 0.0
  %4376 = vmatprep.subr.mxu0 0.0
  %4377 = vmatpush1.msra.mxu0 0.0
  %4378 = vmatprep.subr.mxu0 0.0
  %4379 = vmatpush1.msra.mxu0 0.0
  %4380 = vmatprep.subr.mxu0 0.0
  %4381 = vmatpush1.msra.mxu0 0.0
  %4382 = vmatprep.subr.mxu0 0.0
  %4383 = vmatpush1.msra.mxu0 0.0
  %4384 = vmatprep.subr.mxu0 0.0
  %4385 = vmatpush1.msra.mxu0 0.0
  %4386 = vmatprep.subr.mxu0 0.0
  %4387 = vmatpush1.msra.mxu0 0.0
  %4388 = vmatprep.subr.mxu0 0.0
  %4389 = vmatpush1.msra.mxu0 0.0
  %4390 = vmatprep.mubr.f32.mxu0 0.0
  %4391 = vmatmul.mubr.f32.gmra.mrb[0].mxu0 %v3532
  %v4392 = vpop.f32.mrb[0].mxu0
  %v4393 = vadd.f32 0.0, %v4392
  %v4394 = vpop.f32.mrb[0].mxu0
  %4395 = vmatprep.mubr.f32.mxu0 0.0
  %4396 = vmatmul.mubr.f32.gmra.mrb[0].mxu0 %v3535
  %v4397 = vpop.f32.mrb[0].mxu0
  %v4398 = vadd.f32 0.0, %v4397
  %v4399 = vpop.f32.mrb[0].mxu0
  %4400 = vmatprep.mubr.f32.mxu0 0.0
  %4401 = vmatmul.mubr.f32.gmra.mrb[0].mxu0 %v3538
  %v4402 = vpop.f32.mrb[0].mxu0
  %v4403 = vadd.f32 0.0, %v4402
  %v4404 = vpop.f32.mrb[0].mxu0
  %4405 = vmatprep.mubr.f32.mxu0 0.0
  %4406 = vmatmul.mubr.f32.gmra.mrb[0].mxu0 %v3541
  %v4407 = vpop.f32.mrb[0].mxu0
  %v4408 = vadd.f32 0.0, %v4407
  %v4409 = vpop.f32.mrb[0].mxu0
  %4410 = vdwg.mxu0
  %v4411 = vmul.f32 %v3667, %v4393
  %v4412 = vmul.f32 %v3668, %v4398
  %v4413 = vmul.f32 %v3669, %v4403
  %v4414 = vmul.f32 %v3670, %v4408
  %4415 = vmatprep.subr.mxu0 0.0
  %4416 = vmatpush1.msra.mxu0 %v59
  %4417 = vmatprep.subr.mxu0 0.0
  %4418 = vmatpush1.msra.mxu0 %v60
  %4419 = vmatprep.subr.mxu0 0.0
  %4420 = vmatpush1.msra.mxu0 %v61
  %4421 = vmatprep.subr.mxu0 0.0
  %4422 = vmatpush1.msra.mxu0 %v62
  %4423 = vmatprep.subr.mxu0 0.0
  %4424 = vmatpush1.msra.mxu0 %v63
  %4425 = vmatprep.subr.mxu0 0.0
  %4426 = vmatpush1.msra.mxu0 %v64
  %4427 = vmatprep.subr.mxu0 0.0
  %4428 = vmatpush1.msra.mxu0 %v65
  %4429 = vmatprep.subr.mxu0 0.0
  %4430 = vmatpush1.msra.mxu0 %v66
  %4431 = vmatprep.subr.mxu0 0.0
  %4432 = vmatpush1.msra.mxu0 %v67
  %4433 = vmatprep.subr.mxu0 0.0
  %4434 = vmatpush1.msra.mxu0 %v68
  %4435 = vmatprep.subr.mxu0 0.0
  %4436 = vmatpush1.msra.mxu0 %v69
  %4437 = vmatprep.subr.mxu0 0.0
  %4438 = vmatpush1.msra.mxu0 %v70
  %4439 = vmatprep.subr.mxu0 0.0
  %4440 = vmatpush1.msra.mxu0 %v71
  %4441 = vmatprep.subr.mxu0 0.0
  %4442 = vmatpush1.msra.mxu0 %v72
  %4443 = vmatprep.subr.mxu0 0.0
  %4444 = vmatpush1.msra.mxu0 %v73
  %4445 = vmatprep.subr.mxu0 0.0
  %4446 = vmatpush1.msra.mxu0 %v74
  %4447 = vmatprep.subr.mxu0 0.0
  %4448 = vmatpush1.msra.mxu0 0.0
  %4449 = vmatprep.subr.mxu0 0.0
  %4450 = vmatpush1.msra.mxu0 0.0
  %4451 = vmatprep.subr.mxu0 0.0
  %4452 = vmatpush1.msra.mxu0 0.0
  %4453 = vmatprep.subr.mxu0 0.0
  %4454 = vmatpush1.msra.mxu0 0.0
  %4455 = vmatprep.subr.mxu0 0.0
  %4456 = vmatpush1.msra.mxu0 0.0
  %4457 = vmatprep.subr.mxu0 0.0
  %4458 = vmatpush1.msra.mxu0 0.0
  %4459 = vmatprep.subr.mxu0 0.0
  %4460 = vmatpush1.msra.mxu0 0.0
  %4461 = vmatprep.subr.mxu0 0.0
  %4462 = vmatpush1.msra.mxu0 0.0
  %4463 = vmatprep.subr.mxu0 0.0
  %4464 = vmatpush1.msra.mxu0 0.0
  %4465 = vmatprep.subr.mxu0 0.0
  %4466 = vmatpush1.msra.mxu0 0.0
  %4467 = vmatprep.subr.mxu0 0.0
  %4468 = vmatpush1.msra.mxu0 0.0
  %4469 = vmatprep.subr.mxu0 0.0
  %4470 = vmatpush1.msra.mxu0 0.0
  %4471 = vmatprep.subr.mxu0 0.0
  %4472 = vmatpush1.msra.mxu0 0.0
  %4473 = vmatprep.subr.mxu0 0.0
  %4474 = vmatpush1.msra.mxu0 0.0
  %4475 = vmatprep.subr.mxu0 0.0
  %4476 = vmatpush1.msra.mxu0 0.0
  %4477 = vmatprep.subr.mxu0 0.0
  %4478 = vmatpush1.msra.mxu0 0.0
  %4479 = vmatprep.mubr.f32.mxu0 0.0
  %4480 = vmatmul.mubr.f32.gmra.mrb[0].mxu0 %v4411
  %v4481 = vpop.f32.mrb[0].mxu0
  %v4482 = vadd.f32 0.0, %v4481
  %v4483 = vpop.f32.mrb[0].mxu0
  %4484 = vmatprep.mubr.f32.mxu0 0.0
  %4485 = vmatmul.mubr.f32.gmra.mrb[0].mxu0 %v4412
  %v4486 = vpop.f32.mrb[0].mxu0
  %v4487 = vadd.f32 0.0, %v4486
  %v4488 = vpop.f32.mrb[0].mxu0
  %4489 = vmatprep.mubr.f32.mxu0 0.0
  %4490 = vmatmul.mubr.f32.gmra.mrb[0].mxu0 %v4413
  %v4491 = vpop.f32.mrb[0].mxu0
  %v4492 = vadd.f32 0.0, %v4491
  %v4493 = vpop.f32.mrb[0].mxu0
  %4494 = vmatprep.mubr.f32.mxu0 0.0
  %4495 = vmatmul.mubr.f32.gmra.mrb[0].mxu0 %v4414
  %v4496 = vpop.f32.mrb[0].mxu0
  %v4497 = vadd.f32 0.0, %v4496
  %v4498 = vpop.f32.mrb[0].mxu0
  %4499 = vdwg.mxu0
  %4500 = vmatprep.subr.mxu0 0.0
  %4501 = vmatpush1.msra.mxu0 %v4482
  %4502 = vmatprep.subr.mxu0 0.0
  %4503 = vmatpush1.msra.mxu0 %v4487
  %4504 = vmatprep.subr.mxu0 0.0
  %4505 = vmatpush1.msra.mxu0 %v4492
  %4506 = vmatprep.subr.mxu0 0.0
  %4507 = vmatpush1.msra.mxu0 %v4497
  %4508 = vmatprep.subr.mxu0 0.0
  %4509 = vmatpush1.msra.mxu0 0.0
  %4510 = vmatprep.subr.mxu0 0.0
  %4511 = vmatpush1.msra.mxu0 0.0
  %4512 = vmatprep.subr.mxu0 0.0
  %4513 = vmatpush1.msra.mxu0 0.0
  %4514 = vmatprep.subr.mxu0 0.0
  %4515 = vmatpush1.msra.mxu0 0.0
  %4516 = vmatprep.subr.mxu0 0.0
  %4517 = vmatpush1.msra.mxu0 0.0
  %4518 = vmatprep.subr.mxu0 0.0
  %4519 = vmatpush1.msra.mxu0 0.0
  %4520 = vmatprep.subr.mxu0 0.0
  %4521 = vmatpush1.msra.mxu0 0.0
  %4522 = vmatprep.subr.mxu0 0.0
  %4523 = vmatpush1.msra.mxu0 0.0
  %4524 = vmatprep.subr.mxu0 0.0
  %4525 = vmatpush1.msra.mxu0 0.0
  %4526 = vmatprep.subr.mxu0 0.0
  %4527 = vmatpush1.msra.mxu0 0.0
  %4528 = vmatprep.subr.mxu0 0.0
  %4529 = vmatpush1.msra.mxu0 0.0
  %4530 = vmatprep.subr.mxu0 0.0
  %4531 = vmatpush1.msra.mxu0 0.0
  %4532 = vmatprep.subr.mxu0 0.0
  %4533 = vmatpush1.msra.mxu0 0.0
  %4534 = vmatprep.subr.mxu0 0.0
  %4535 = vmatpush1.msra.mxu0 0.0
  %4536 = vmatprep.subr.mxu0 0.0
  %4537 = vmatpush1.msra.mxu0 0.0
  %4538 = vmatprep.subr.mxu0 0.0
  %4539 = vmatpush1.msra.mxu0 0.0
  %4540 = vmatprep.subr.mxu0 0.0
  %4541 = vmatpush1.msra.mxu0 0.0
  %4542 = vmatprep.subr.mxu0 0.0
  %4543 = vmatpush1.msra.mxu0 0.0
  %4544 = vmatprep.subr.mxu0 0.0
  %4545 = vmatpush1.msra.mxu0 0.0
  %4546 = vmatprep.subr.mxu0 0.0
  %4547 = vmatpush1.msra.mxu0 0.0
  %4548 = vmatprep.subr.mxu0 0.0
  %4549 = vmatpush1.msra.mxu0 0.0
  %4550 = vmatprep.subr.mxu0 0.0
  %4551 = vmatpush1.msra.mxu0 0.0
  %4552 = vmatprep.subr.mxu0 0.0
  %4553 = vmatpush1.msra.mxu0 0.0
  %4554 = vmatprep.subr.mxu0 0.0
  %4555 = vmatpush1.msra.mxu0 0.0
  %4556 = vmatprep.subr.mxu0 0.0
  %4557 = vmatpush1.msra.mxu0 0.0
  %4558 = vmatprep.subr.mxu0 0.0
  %4559 = vmatpush1.msra.mxu0 0.0
  %4560 = vmatprep.subr.mxu0 0.0
  %4561 = vmatpush1.msra.mxu0 0.0
  %4562 = vmatprep.subr.mxu0 0.0
  %4563 = vmatpush1.msra.mxu0 0.0
  %4564 = vmatprep.mubr.f32.mxu0 0.0
  %4565 = vmatmul.mubr.f32.gmra.mrb[0].mxu0 %v3757
  %v4566 = vpop.f32.mrb[0].mxu0
  %v4567 = vadd.f32 0.0, %v4566
  %v4568 = vpop.f32.mrb[0].mxu0
  %4569 = vdwg.mxu0
  %v4570 = vsel %vm235, %v4007, 0
  %4572 = vmatprep.subr.mxu0 0.0
  %4573 = vmatpush1.msra.mxu0 %v4570
  %4574 = vmatprep.subr.mxu0 0.0
  %4575 = vmatpush1.msra.mxu0 0.0
  %4576 = vmatprep.subr.mxu0 0.0
  %4577 = vmatpush1.msra.mxu0 0.0
  %4578 = vmatprep.subr.mxu0 0.0
  %4579 = vmatpush1.msra.mxu0 0.0
  %4580 = vmatprep.subr.mxu0 0.0
  %4581 = vmatpush1.msra.mxu0 0.0
  %4582 = vmatprep.subr.mxu0 0.0
  %4583 = vmatpush1.msra.mxu0 0.0
  %4584 = vmatprep.subr.mxu0 0.0
  %4585 = vmatpush1.msra.mxu0 0.0
  %4586 = vmatprep.subr.mxu0 0.0
  %4587 = vmatpush1.msra.mxu0 0.0
  %4588 = vmatprep.subr.mxu0 0.0
  %4589 = vmatpush1.msra.mxu0 0.0
  %4590 = vmatprep.subr.mxu0 0.0
  %4591 = vmatpush1.msra.mxu0 0.0
  %4592 = vmatprep.subr.mxu0 0.0
  %4593 = vmatpush1.msra.mxu0 0.0
  %4594 = vmatprep.subr.mxu0 0.0
  %4595 = vmatpush1.msra.mxu0 0.0
  %4596 = vmatprep.subr.mxu0 0.0
  %4597 = vmatpush1.msra.mxu0 0.0
  %4598 = vmatprep.subr.mxu0 0.0
  %4599 = vmatpush1.msra.mxu0 0.0
  %4600 = vmatprep.subr.mxu0 0.0
  %4601 = vmatpush1.msra.mxu0 0.0
  %4602 = vmatprep.subr.mxu0 0.0
  %4603 = vmatpush1.msra.mxu0 0.0
  %4604 = vmatprep.subr.mxu0 0.0
  %4605 = vmatpush1.msra.mxu0 0.0
  %4606 = vmatprep.subr.mxu0 0.0
  %4607 = vmatpush1.msra.mxu0 0.0
  %4608 = vmatprep.subr.mxu0 0.0
  %4609 = vmatpush1.msra.mxu0 0.0
  %4610 = vmatprep.subr.mxu0 0.0
  %4611 = vmatpush1.msra.mxu0 0.0
  %4612 = vmatprep.subr.mxu0 0.0
  %4613 = vmatpush1.msra.mxu0 0.0
  %4614 = vmatprep.subr.mxu0 0.0
  %4615 = vmatpush1.msra.mxu0 0.0
  %4616 = vmatprep.subr.mxu0 0.0
  %4617 = vmatpush1.msra.mxu0 0.0
  %4618 = vmatprep.subr.mxu0 0.0
  %4619 = vmatpush1.msra.mxu0 0.0
  %4620 = vmatprep.subr.mxu0 0.0
  %4621 = vmatpush1.msra.mxu0 0.0
  %4622 = vmatprep.subr.mxu0 0.0
  %4623 = vmatpush1.msra.mxu0 0.0
  %4624 = vmatprep.subr.mxu0 0.0
  %4625 = vmatpush1.msra.mxu0 0.0
  %4626 = vmatprep.subr.mxu0 0.0
  %4627 = vmatpush1.msra.mxu0 0.0
  %4628 = vmatprep.subr.mxu0 0.0
  %4629 = vmatpush1.msra.mxu0 0.0
  %4630 = vmatprep.subr.mxu0 0.0
  %4631 = vmatpush1.msra.mxu0 0.0
  %4632 = vmatprep.subr.mxu0 0.0
  %4633 = vmatpush1.msra.mxu0 0.0
  %4634 = vmatprep.subr.mxu0 0.0
  %4635 = vmatpush1.msra.mxu0 0.0
  %4636 = vmatprep.mubr.f32.mxu0 0.0
  %4637 = vmatmul.mubr.f32.gmra.mrb[0].mxu0 %v3830
  %v4638 = vpop.f32.mrb[0].mxu0
  %v4639 = vadd.f32 %v4567, %v4638
  %v4640 = vpop.f32.mrb[0].mxu0
  %4641 = vdwg.mxu0
  %v4642 = vmul.f32 %v3921, %v4639
  %v4644 = vsel %vm497, %v4642, 0
  %4646 = vmatprep.subr.mxu0 0.0
  %4647 = vmatpush1.msra.mxu0 %v4644
  %4648 = vmatprep.subr.mxu0 0.0
  %4649 = vmatpush1.msra.mxu0 0.0
  %4650 = vmatprep.subr.mxu0 0.0
  %4651 = vmatpush1.msra.mxu0 0.0
  %4652 = vmatprep.subr.mxu0 0.0
  %4653 = vmatpush1.msra.mxu0 0.0
  %4654 = vmatprep.subr.mxu0 0.0
  %4655 = vmatpush1.msra.mxu0 0.0
  %4656 = vmatprep.subr.mxu0 0.0
  %4657 = vmatpush1.msra.mxu0 0.0
  %4658 = vmatprep.subr.mxu0 0.0
  %4659 = vmatpush1.msra.mxu0 0.0
  %4660 = vmatprep.subr.mxu0 0.0
  %4661 = vmatpush1.msra.mxu0 0.0
  %4662 = vmatprep.subr.mxu0 0.0
  %4663 = vmatpush1.msra.mxu0 0.0
  %4664 = vmatprep.subr.mxu0 0.0
  %4665 = vmatpush1.msra.mxu0 0.0
  %4666 = vmatprep.subr.mxu0 0.0
  %4667 = vmatpush1.msra.mxu0 0.0
  %4668 = vmatprep.subr.mxu0 0.0
  %4669 = vmatpush1.msra.mxu0 0.0
  %4670 = vmatprep.subr.mxu0 0.0
  %4671 = vmatpush1.msra.mxu0 0.0
  %4672 = vmatprep.subr.mxu0 0.0
  %4673 = vmatpush1.msra.mxu0 0.0
  %4674 = vmatprep.subr.mxu0 0.0
  %4675 = vmatpush1.msra.mxu0 0.0
  %4676 = vmatprep.subr.mxu0 0.0
  %4677 = vmatpush1.msra.mxu0 0.0
  %4678 = vmatprep.subr.mxu0 0.0
  %4679 = vmatpush1.msra.mxu0 0.0
  %4680 = vmatprep.subr.mxu0 0.0
  %4681 = vmatpush1.msra.mxu0 0.0
  %4682 = vmatprep.subr.mxu0 0.0
  %4683 = vmatpush1.msra.mxu0 0.0
  %4684 = vmatprep.subr.mxu0 0.0
  %4685 = vmatpush1.msra.mxu0 0.0
  %4686 = vmatprep.subr.mxu0 0.0
  %4687 = vmatpush1.msra.mxu0 0.0
  %4688 = vmatprep.subr.mxu0 0.0
  %4689 = vmatpush1.msra.mxu0 0.0
  %4690 = vmatprep.subr.mxu0 0.0
  %4691 = vmatpush1.msra.mxu0 0.0
  %4692 = vmatprep.subr.mxu0 0.0
  %4693 = vmatpush1.msra.mxu0 0.0
  %4694 = vmatprep.subr.mxu0 0.0
  %4695 = vmatpush1.msra.mxu0 0.0
  %4696 = vmatprep.subr.mxu0 0.0
  %4697 = vmatpush1.msra.mxu0 0.0
  %4698 = vmatprep.subr.mxu0 0.0
  %4699 = vmatpush1.msra.mxu0 0.0
  %4700 = vmatprep.subr.mxu0 0.0
  %4701 = vmatpush1.msra.mxu0 0.0
  %4702 = vmatprep.subr.mxu0 0.0
  %4703 = vmatpush1.msra.mxu0 0.0
  %4704 = vmatprep.subr.mxu0 0.0
  %4705 = vmatpush1.msra.mxu0 0.0
  %4706 = vmatprep.subr.mxu0 0.0
  %4707 = vmatpush1.msra.mxu0 0.0
  %4708 = vmatprep.subr.mxu0 0.0
  %4709 = vmatpush1.msra.mxu0 0.0
  %4710 = vmatprep.mubr.f32.mxu0 0.0
  %4711 = vmatmul.mubr.f32.gmra.mrb[0].mxu0 %v3930
  %v4712 = vpop.f32.mrb[0].mxu0
  %v4713 = vadd.f32 %v4007, %v4712
  %v4714 = vpop.f32.mrb[0].mxu0
  %4715 = vdwg.mxu0
  %v4716 = vmul.f32 %v4713, %v4007
  %v4717 = vsel %vm1671, %v4716, 0.0
  %v4718 = vrot.slane %v4717, 4
  %v4719 = vadd.f32 %v4717, %v4718
  %v4720 = vrot.slane %v4719, 2
  %v4721 = vadd.f32 %v4719, %v4720
  %v4722 = vrot.slane %v4721, 1
  %v4723 = vadd.f32 %v4721, %v4722
  %v4724 = vadd.f32 %v3115, %v4723
  %v4726 = vsel %vm89, %v4713, 0
  %4728 = vmatprep.subr.mxu0 0.0
  %4729 = vmatpush1.msra.mxu0 %v55
  %4730 = vmatprep.subr.mxu0 0.0
  %4731 = vmatpush1.msra.mxu0 %v56
  %4732 = vmatprep.subr.mxu0 0.0
  %4733 = vmatpush1.msra.mxu0 0.0
  %4734 = vmatprep.subr.mxu0 0.0
  %4735 = vmatpush1.msra.mxu0 0.0
  %4736 = vmatprep.subr.mxu0 0.0
  %4737 = vmatpush1.msra.mxu0 0.0
  %4738 = vmatprep.subr.mxu0 0.0
  %4739 = vmatpush1.msra.mxu0 0.0
  %4740 = vmatprep.subr.mxu0 0.0
  %4741 = vmatpush1.msra.mxu0 0.0
  %4742 = vmatprep.subr.mxu0 0.0
  %4743 = vmatpush1.msra.mxu0 0.0
  %4744 = vmatprep.subr.mxu0 0.0
  %4745 = vmatpush1.msra.mxu0 0.0
  %4746 = vmatprep.subr.mxu0 0.0
  %4747 = vmatpush1.msra.mxu0 0.0
  %4748 = vmatprep.subr.mxu0 0.0
  %4749 = vmatpush1.msra.mxu0 0.0
  %4750 = vmatprep.subr.mxu0 0.0
  %4751 = vmatpush1.msra.mxu0 0.0
  %4752 = vmatprep.subr.mxu0 0.0
  %4753 = vmatpush1.msra.mxu0 0.0
  %4754 = vmatprep.subr.mxu0 0.0
  %4755 = vmatpush1.msra.mxu0 0.0
  %4756 = vmatprep.subr.mxu0 0.0
  %4757 = vmatpush1.msra.mxu0 0.0
  %4758 = vmatprep.subr.mxu0 0.0
  %4759 = vmatpush1.msra.mxu0 0.0
  %4760 = vmatprep.subr.mxu0 0.0
  %4761 = vmatpush1.msra.mxu0 0.0
  %4762 = vmatprep.subr.mxu0 0.0
  %4763 = vmatpush1.msra.mxu0 0.0
  %4764 = vmatprep.subr.mxu0 0.0
  %4765 = vmatpush1.msra.mxu0 0.0
  %4766 = vmatprep.subr.mxu0 0.0
  %4767 = vmatpush1.msra.mxu0 0.0
  %4768 = vmatprep.subr.mxu0 0.0
  %4769 = vmatpush1.msra.mxu0 0.0
  %4770 = vmatprep.subr.mxu0 0.0
  %4771 = vmatpush1.msra.mxu0 0.0
  %4772 = vmatprep.subr.mxu0 0.0
  %4773 = vmatpush1.msra.mxu0 0.0
  %4774 = vmatprep.subr.mxu0 0.0
  %4775 = vmatpush1.msra.mxu0 0.0
  %4776 = vmatprep.subr.mxu0 0.0
  %4777 = vmatpush1.msra.mxu0 0.0
  %4778 = vmatprep.subr.mxu0 0.0
  %4779 = vmatpush1.msra.mxu0 0.0
  %4780 = vmatprep.subr.mxu0 0.0
  %4781 = vmatpush1.msra.mxu0 0.0
  %4782 = vmatprep.subr.mxu0 0.0
  %4783 = vmatpush1.msra.mxu0 0.0
  %4784 = vmatprep.subr.mxu0 0.0
  %4785 = vmatpush1.msra.mxu0 0.0
  %4786 = vmatprep.subr.mxu0 0.0
  %4787 = vmatpush1.msra.mxu0 0.0
  %4788 = vmatprep.subr.mxu0 0.0
  %4789 = vmatpush1.msra.mxu0 0.0
  %4790 = vmatprep.subr.mxu0 0.0
  %4791 = vmatpush1.msra.mxu0 0.0
  %4792 = vmatprep.mubr.f32.mxu0 0.0
  %4793 = vmatmul.mubr.f32.gmra.mrb[0].mxu0 %v4726
  %v4794 = vpop.f32.mrb[0].mxu0
  %v4795 = vadd.f32 0.0, %v4794
  %v4796 = vpop.f32.mrb[0].mxu0
  %4797 = vdwg.mxu0
  %4798 = vmatprep.subr.mxu0 0.0
  %4799 = vmatpush1.msra.mxu0 %v57
  %4800 = vmatprep.subr.mxu0 0.0
  %4801 = vmatpush1.msra.mxu0 %v58
  %4802 = vmatprep.subr.mxu0 0.0
  %4803 = vmatpush1.msra.mxu0 0.0
  %4804 = vmatprep.subr.mxu0 0.0
  %4805 = vmatpush1.msra.mxu0 0.0
  %4806 = vmatprep.subr.mxu0 0.0
  %4807 = vmatpush1.msra.mxu0 0.0
  %4808 = vmatprep.subr.mxu0 0.0
  %4809 = vmatpush1.msra.mxu0 0.0
  %4810 = vmatprep.subr.mxu0 0.0
  %4811 = vmatpush1.msra.mxu0 0.0
  %4812 = vmatprep.subr.mxu0 0.0
  %4813 = vmatpush1.msra.mxu0 0.0
  %4814 = vmatprep.subr.mxu0 0.0
  %4815 = vmatpush1.msra.mxu0 0.0
  %4816 = vmatprep.subr.mxu0 0.0
  %4817 = vmatpush1.msra.mxu0 0.0
  %4818 = vmatprep.subr.mxu0 0.0
  %4819 = vmatpush1.msra.mxu0 0.0
  %4820 = vmatprep.subr.mxu0 0.0
  %4821 = vmatpush1.msra.mxu0 0.0
  %4822 = vmatprep.subr.mxu0 0.0
  %4823 = vmatpush1.msra.mxu0 0.0
  %4824 = vmatprep.subr.mxu0 0.0
  %4825 = vmatpush1.msra.mxu0 0.0
  %4826 = vmatprep.subr.mxu0 0.0
  %4827 = vmatpush1.msra.mxu0 0.0
  %4828 = vmatprep.subr.mxu0 0.0
  %4829 = vmatpush1.msra.mxu0 0.0
  %4830 = vmatprep.subr.mxu0 0.0
  %4831 = vmatpush1.msra.mxu0 0.0
  %4832 = vmatprep.subr.mxu0 0.0
  %4833 = vmatpush1.msra.mxu0 0.0
  %4834 = vmatprep.subr.mxu0 0.0
  %4835 = vmatpush1.msra.mxu0 0.0
  %4836 = vmatprep.subr.mxu0 0.0
  %4837 = vmatpush1.msra.mxu0 0.0
  %4838 = vmatprep.subr.mxu0 0.0
  %4839 = vmatpush1.msra.mxu0 0.0
  %4840 = vmatprep.subr.mxu0 0.0
  %4841 = vmatpush1.msra.mxu0 0.0
  %4842 = vmatprep.subr.mxu0 0.0
  %4843 = vmatpush1.msra.mxu0 0.0
  %4844 = vmatprep.subr.mxu0 0.0
  %4845 = vmatpush1.msra.mxu0 0.0
  %4846 = vmatprep.subr.mxu0 0.0
  %4847 = vmatpush1.msra.mxu0 0.0
  %4848 = vmatprep.subr.mxu0 0.0
  %4849 = vmatpush1.msra.mxu0 0.0
  %4850 = vmatprep.subr.mxu0 0.0
  %4851 = vmatpush1.msra.mxu0 0.0
  %4852 = vmatprep.subr.mxu0 0.0
  %4853 = vmatpush1.msra.mxu0 0.0
  %4854 = vmatprep.subr.mxu0 0.0
  %4855 = vmatpush1.msra.mxu0 0.0
  %4856 = vmatprep.subr.mxu0 0.0
  %4857 = vmatpush1.msra.mxu0 0.0
  %4858 = vmatprep.subr.mxu0 0.0
  %4859 = vmatpush1.msra.mxu0 0.0
  %4860 = vmatprep.subr.mxu0 0.0
  %4861 = vmatpush1.msra.mxu0 0.0
  %4862 = vmatprep.mubr.f32.mxu0 0.0
  %4863 = vmatmul.mubr.f32.gmra.mrb[0].mxu0 %v4726
  %v4864 = vpop.f32.mrb[0].mxu0
  %v4865 = vadd.f32 0.0, %v4864
  %v4866 = vpop.f32.mrb[0].mxu0
  %4867 = vdwg.mxu0
  %v4868 = vsub.f32 %v4795, %v4865
  %v4869 = vmul.f32 %v3280, %v4868
  %v4870 = vsel %vm235, %v4869, 0.0
  %v4871 = vrot.slane %v4870, 4
  %v4872 = vadd.f32 %v4870, %v4871
  %v4873 = vrot.slane %v4872, 2
  %v4874 = vadd.f32 %v4872, %v4873
  %v4875 = vrot.slane %v4874, 1
  %v4876 = vadd.f32 %v4874, %v4875
  %v4877 = vmul.f32 %v4876, 2.0
  %v4879 = vsel %vm235, %v4865, 0
  %4881 = vmatprep.subr.mxu0 0.0
  %4882 = vmatpush1.msra.mxu0 %v4879
  %4883 = vmatprep.subr.mxu0 0.0
  %4884 = vmatpush1.msra.mxu0 0.0
  %4885 = vmatprep.subr.mxu0 0.0
  %4886 = vmatpush1.msra.mxu0 0.0
  %4887 = vmatprep.subr.mxu0 0.0
  %4888 = vmatpush1.msra.mxu0 0.0
  %4889 = vmatprep.subr.mxu0 0.0
  %4890 = vmatpush1.msra.mxu0 0.0
  %4891 = vmatprep.subr.mxu0 0.0
  %4892 = vmatpush1.msra.mxu0 0.0
  %4893 = vmatprep.subr.mxu0 0.0
  %4894 = vmatpush1.msra.mxu0 0.0
  %4895 = vmatprep.subr.mxu0 0.0
  %4896 = vmatpush1.msra.mxu0 0.0
  %4897 = vmatprep.subr.mxu0 0.0
  %4898 = vmatpush1.msra.mxu0 0.0
  %4899 = vmatprep.subr.mxu0 0.0
  %4900 = vmatpush1.msra.mxu0 0.0
  %4901 = vmatprep.subr.mxu0 0.0
  %4902 = vmatpush1.msra.mxu0 0.0
  %4903 = vmatprep.subr.mxu0 0.0
  %4904 = vmatpush1.msra.mxu0 0.0
  %4905 = vmatprep.subr.mxu0 0.0
  %4906 = vmatpush1.msra.mxu0 0.0
  %4907 = vmatprep.subr.mxu0 0.0
  %4908 = vmatpush1.msra.mxu0 0.0
  %4909 = vmatprep.subr.mxu0 0.0
  %4910 = vmatpush1.msra.mxu0 0.0
  %4911 = vmatprep.subr.mxu0 0.0
  %4912 = vmatpush1.msra.mxu0 0.0
  %4913 = vmatprep.subr.mxu0 0.0
  %4914 = vmatpush1.msra.mxu0 0.0
  %4915 = vmatprep.subr.mxu0 0.0
  %4916 = vmatpush1.msra.mxu0 0.0
  %4917 = vmatprep.subr.mxu0 0.0
  %4918 = vmatpush1.msra.mxu0 0.0
  %4919 = vmatprep.subr.mxu0 0.0
  %4920 = vmatpush1.msra.mxu0 0.0
  %4921 = vmatprep.subr.mxu0 0.0
  %4922 = vmatpush1.msra.mxu0 0.0
  %4923 = vmatprep.subr.mxu0 0.0
  %4924 = vmatpush1.msra.mxu0 0.0
  %4925 = vmatprep.subr.mxu0 0.0
  %4926 = vmatpush1.msra.mxu0 0.0
  %4927 = vmatprep.subr.mxu0 0.0
  %4928 = vmatpush1.msra.mxu0 0.0
  %4929 = vmatprep.subr.mxu0 0.0
  %4930 = vmatpush1.msra.mxu0 0.0
  %4931 = vmatprep.subr.mxu0 0.0
  %4932 = vmatpush1.msra.mxu0 0.0
  %4933 = vmatprep.subr.mxu0 0.0
  %4934 = vmatpush1.msra.mxu0 0.0
  %4935 = vmatprep.subr.mxu0 0.0
  %4936 = vmatpush1.msra.mxu0 0.0
  %4937 = vmatprep.subr.mxu0 0.0
  %4938 = vmatpush1.msra.mxu0 0.0
  %4939 = vmatprep.subr.mxu0 0.0
  %4940 = vmatpush1.msra.mxu0 0.0
  %4941 = vmatprep.subr.mxu0 0.0
  %4942 = vmatpush1.msra.mxu0 0.0
  %4943 = vmatprep.subr.mxu0 0.0
  %4944 = vmatpush1.msra.mxu0 0.0
  %4945 = vmatprep.mubr.f32.mxu0 0.0
  %4946 = vmatmul.mubr.f32.gmra.mrb[0].mxu0 %v3290
  %v4947 = vpop.f32.mrb[0].mxu0
  %v4948 = vadd.f32 0.0, %v4947
  %v4949 = vpop.f32.mrb[0].mxu0
  %4950 = vmatprep.mubr.f32.mxu0 0.0
  %4951 = vmatmul.mubr.f32.gmra.mrb[0].mxu0 %v3293
  %v4952 = vpop.f32.mrb[0].mxu0
  %v4953 = vadd.f32 0.0, %v4952
  %v4954 = vpop.f32.mrb[0].mxu0
  %4955 = vdwg.mxu0
  %v4957 = vsel %vm235, %v4795, 0
  %4959 = vmatprep.subr.mxu0 0.0
  %4960 = vmatpush1.msra.mxu0 %v4957
  %4961 = vmatprep.subr.mxu0 0.0
  %4962 = vmatpush1.msra.mxu0 0.0
  %4963 = vmatprep.subr.mxu0 0.0
  %4964 = vmatpush1.msra.mxu0 0.0
  %4965 = vmatprep.subr.mxu0 0.0
  %4966 = vmatpush1.msra.mxu0 0.0
  %4967 = vmatprep.subr.mxu0 0.0
  %4968 = vmatpush1.msra.mxu0 0.0
  %4969 = vmatprep.subr.mxu0 0.0
  %4970 = vmatpush1.msra.mxu0 0.0
  %4971 = vmatprep.subr.mxu0 0.0
  %4972 = vmatpush1.msra.mxu0 0.0
  %4973 = vmatprep.subr.mxu0 0.0
  %4974 = vmatpush1.msra.mxu0 0.0
  %4975 = vmatprep.subr.mxu0 0.0
  %4976 = vmatpush1.msra.mxu0 0.0
  %4977 = vmatprep.subr.mxu0 0.0
  %4978 = vmatpush1.msra.mxu0 0.0
  %4979 = vmatprep.subr.mxu0 0.0
  %4980 = vmatpush1.msra.mxu0 0.0
  %4981 = vmatprep.subr.mxu0 0.0
  %4982 = vmatpush1.msra.mxu0 0.0
  %4983 = vmatprep.subr.mxu0 0.0
  %4984 = vmatpush1.msra.mxu0 0.0
  %4985 = vmatprep.subr.mxu0 0.0
  %4986 = vmatpush1.msra.mxu0 0.0
  %4987 = vmatprep.subr.mxu0 0.0
  %4988 = vmatpush1.msra.mxu0 0.0
  %4989 = vmatprep.subr.mxu0 0.0
  %4990 = vmatpush1.msra.mxu0 0.0
  %4991 = vmatprep.subr.mxu0 0.0
  %4992 = vmatpush1.msra.mxu0 0.0
  %4993 = vmatprep.subr.mxu0 0.0
  %4994 = vmatpush1.msra.mxu0 0.0
  %4995 = vmatprep.subr.mxu0 0.0
  %4996 = vmatpush1.msra.mxu0 0.0
  %4997 = vmatprep.subr.mxu0 0.0
  %4998 = vmatpush1.msra.mxu0 0.0
  %4999 = vmatprep.subr.mxu0 0.0
  %5000 = vmatpush1.msra.mxu0 0.0
  %5001 = vmatprep.subr.mxu0 0.0
  %5002 = vmatpush1.msra.mxu0 0.0
  %5003 = vmatprep.subr.mxu0 0.0
  %5004 = vmatpush1.msra.mxu0 0.0
  %5005 = vmatprep.subr.mxu0 0.0
  %5006 = vmatpush1.msra.mxu0 0.0
  %5007 = vmatprep.subr.mxu0 0.0
  %5008 = vmatpush1.msra.mxu0 0.0
  %5009 = vmatprep.subr.mxu0 0.0
  %5010 = vmatpush1.msra.mxu0 0.0
  %5011 = vmatprep.subr.mxu0 0.0
  %5012 = vmatpush1.msra.mxu0 0.0
  %5013 = vmatprep.subr.mxu0 0.0
  %5014 = vmatpush1.msra.mxu0 0.0
  %5015 = vmatprep.subr.mxu0 0.0
  %5016 = vmatpush1.msra.mxu0 0.0
  %5017 = vmatprep.subr.mxu0 0.0
  %5018 = vmatpush1.msra.mxu0 0.0
  %5019 = vmatprep.subr.mxu0 0.0
  %5020 = vmatpush1.msra.mxu0 0.0
  %5021 = vmatprep.subr.mxu0 0.0
  %5022 = vmatpush1.msra.mxu0 0.0
  %5023 = vmatprep.mubr.f32.mxu0 0.0
  %5024 = vmatmul.mubr.f32.gmra.mrb[0].mxu0 %v3374
  %v5025 = vpop.f32.mrb[0].mxu0
  %v5026 = vadd.f32 %v4948, %v5025
  %v5027 = vpop.f32.mrb[0].mxu0
  %5028 = vmatprep.mubr.f32.mxu0 0.0
  %5029 = vmatmul.mubr.f32.gmra.mrb[0].mxu0 %v3377
  %v5030 = vpop.f32.mrb[0].mxu0
  %v5031 = vadd.f32 %v4953, %v5030
  %v5032 = vpop.f32.mrb[0].mxu0
  %5033 = vdwg.mxu0
  %v5034 = vmul.f32 %v3460, %v4877
  %v5035 = vmul.f32 %v3465, %v4877
  %v5036 = vadd.f32 %v5026, %v5034
  %v5037 = vadd.f32 %v5031, %v5035
  %v5038 = vmul.f32 %v3504, %v5036
  %v5039 = vmul.f32 %v3505, %v5037
  %v5041 = vsel %vm497, %v5039, 0
  %5043 = vmatprep.subr.mxu0 0.0
  %5044 = vmatpush1.msra.mxu0 %v5038
  %5045 = vmatprep.subr.mxu0 0.0
  %5046 = vmatpush1.msra.mxu0 %v5041
  %5047 = vmatprep.subr.mxu0 0.0
  %5048 = vmatpush1.msra.mxu0 0.0
  %5049 = vmatprep.subr.mxu0 0.0
  %5050 = vmatpush1.msra.mxu0 0.0
  %5051 = vmatprep.subr.mxu0 0.0
  %5052 = vmatpush1.msra.mxu0 0.0
  %5053 = vmatprep.subr.mxu0 0.0
  %5054 = vmatpush1.msra.mxu0 0.0
  %5055 = vmatprep.subr.mxu0 0.0
  %5056 = vmatpush1.msra.mxu0 0.0
  %5057 = vmatprep.subr.mxu0 0.0
  %5058 = vmatpush1.msra.mxu0 0.0
  %5059 = vmatprep.subr.mxu0 0.0
  %5060 = vmatpush1.msra.mxu0 0.0
  %5061 = vmatprep.subr.mxu0 0.0
  %5062 = vmatpush1.msra.mxu0 0.0
  %5063 = vmatprep.subr.mxu0 0.0
  %5064 = vmatpush1.msra.mxu0 0.0
  %5065 = vmatprep.subr.mxu0 0.0
  %5066 = vmatpush1.msra.mxu0 0.0
  %5067 = vmatprep.subr.mxu0 0.0
  %5068 = vmatpush1.msra.mxu0 0.0
  %5069 = vmatprep.subr.mxu0 0.0
  %5070 = vmatpush1.msra.mxu0 0.0
  %5071 = vmatprep.subr.mxu0 0.0
  %5072 = vmatpush1.msra.mxu0 0.0
  %5073 = vmatprep.subr.mxu0 0.0
  %5074 = vmatpush1.msra.mxu0 0.0
  %5075 = vmatprep.subr.mxu0 0.0
  %5076 = vmatpush1.msra.mxu0 0.0
  %5077 = vmatprep.subr.mxu0 0.0
  %5078 = vmatpush1.msra.mxu0 0.0
  %5079 = vmatprep.subr.mxu0 0.0
  %5080 = vmatpush1.msra.mxu0 0.0
  %5081 = vmatprep.subr.mxu0 0.0
  %5082 = vmatpush1.msra.mxu0 0.0
  %5083 = vmatprep.subr.mxu0 0.0
  %5084 = vmatpush1.msra.mxu0 0.0
  %5085 = vmatprep.subr.mxu0 0.0
  %5086 = vmatpush1.msra.mxu0 0.0
  %5087 = vmatprep.subr.mxu0 0.0
  %5088 = vmatpush1.msra.mxu0 0.0
  %5089 = vmatprep.subr.mxu0 0.0
  %5090 = vmatpush1.msra.mxu0 0.0
  %5091 = vmatprep.subr.mxu0 0.0
  %5092 = vmatpush1.msra.mxu0 0.0
  %5093 = vmatprep.subr.mxu0 0.0
  %5094 = vmatpush1.msra.mxu0 0.0
  %5095 = vmatprep.subr.mxu0 0.0
  %5096 = vmatpush1.msra.mxu0 0.0
  %5097 = vmatprep.subr.mxu0 0.0
  %5098 = vmatpush1.msra.mxu0 0.0
  %5099 = vmatprep.subr.mxu0 0.0
  %5100 = vmatpush1.msra.mxu0 0.0
  %5101 = vmatprep.subr.mxu0 0.0
  %5102 = vmatpush1.msra.mxu0 0.0
  %5103 = vmatprep.subr.mxu0 0.0
  %5104 = vmatpush1.msra.mxu0 0.0
  %5105 = vmatprep.subr.mxu0 0.0
  %5106 = vmatpush1.msra.mxu0 0.0
  %5107 = vmatprep.mubr.f32.mxu0 0.0
  %5108 = vmatmul.mubr.f32.gmra.mrb[0].mxu0 %v3532
  %v5109 = vpop.f32.mrb[0].mxu0
  %v5110 = vadd.f32 0.0, %v5109
  %v5111 = vpop.f32.mrb[0].mxu0
  %5112 = vmatprep.mubr.f32.mxu0 0.0
  %5113 = vmatmul.mubr.f32.gmra.mrb[0].mxu0 %v3535
  %v5114 = vpop.f32.mrb[0].mxu0
  %v5115 = vadd.f32 0.0, %v5114
  %v5116 = vpop.f32.mrb[0].mxu0
  %5117 = vmatprep.mubr.f32.mxu0 0.0
  %5118 = vmatmul.mubr.f32.gmra.mrb[0].mxu0 %v3538
  %v5119 = vpop.f32.mrb[0].mxu0
  %v5120 = vadd.f32 0.0, %v5119
  %v5121 = vpop.f32.mrb[0].mxu0
  %5122 = vmatprep.mubr.f32.mxu0 0.0
  %5123 = vmatmul.mubr.f32.gmra.mrb[0].mxu0 %v3541
  %v5124 = vpop.f32.mrb[0].mxu0
  %v5125 = vadd.f32 0.0, %v5124
  %v5126 = vpop.f32.mrb[0].mxu0
  %5127 = vdwg.mxu0
  %v5128 = vmul.f32 %v3667, %v5110
  %v5129 = vmul.f32 %v3668, %v5115
  %v5130 = vmul.f32 %v3669, %v5120
  %v5131 = vmul.f32 %v3670, %v5125
  %5132 = vmatprep.subr.mxu0 0.0
  %5133 = vmatpush1.msra.mxu0 %v59
  %5134 = vmatprep.subr.mxu0 0.0
  %5135 = vmatpush1.msra.mxu0 %v60
  %5136 = vmatprep.subr.mxu0 0.0
  %5137 = vmatpush1.msra.mxu0 %v61
  %5138 = vmatprep.subr.mxu0 0.0
  %5139 = vmatpush1.msra.mxu0 %v62
  %5140 = vmatprep.subr.mxu0 0.0
  %5141 = vmatpush1.msra.mxu0 %v63
  %5142 = vmatprep.subr.mxu0 0.0
  %5143 = vmatpush1.msra.mxu0 %v64
  %5144 = vmatprep.subr.mxu0 0.0
  %5145 = vmatpush1.msra.mxu0 %v65
  %5146 = vmatprep.subr.mxu0 0.0
  %5147 = vmatpush1.msra.mxu0 %v66
  %5148 = vmatprep.subr.mxu0 0.0
  %5149 = vmatpush1.msra.mxu0 %v67
  %5150 = vmatprep.subr.mxu0 0.0
  %5151 = vmatpush1.msra.mxu0 %v68
  %5152 = vmatprep.subr.mxu0 0.0
  %5153 = vmatpush1.msra.mxu0 %v69
  %5154 = vmatprep.subr.mxu0 0.0
  %5155 = vmatpush1.msra.mxu0 %v70
  %5156 = vmatprep.subr.mxu0 0.0
  %5157 = vmatpush1.msra.mxu0 %v71
  %5158 = vmatprep.subr.mxu0 0.0
  %5159 = vmatpush1.msra.mxu0 %v72
  %5160 = vmatprep.subr.mxu0 0.0
  %5161 = vmatpush1.msra.mxu0 %v73
  %5162 = vmatprep.subr.mxu0 0.0
  %5163 = vmatpush1.msra.mxu0 %v74
  %5164 = vmatprep.subr.mxu0 0.0
  %5165 = vmatpush1.msra.mxu0 0.0
  %5166 = vmatprep.subr.mxu0 0.0
  %5167 = vmatpush1.msra.mxu0 0.0
  %5168 = vmatprep.subr.mxu0 0.0
  %5169 = vmatpush1.msra.mxu0 0.0
  %5170 = vmatprep.subr.mxu0 0.0
  %5171 = vmatpush1.msra.mxu0 0.0
  %5172 = vmatprep.subr.mxu0 0.0
  %5173 = vmatpush1.msra.mxu0 0.0
  %5174 = vmatprep.subr.mxu0 0.0
  %5175 = vmatpush1.msra.mxu0 0.0
  %5176 = vmatprep.subr.mxu0 0.0
  %5177 = vmatpush1.msra.mxu0 0.0
  %5178 = vmatprep.subr.mxu0 0.0
  %5179 = vmatpush1.msra.mxu0 0.0
  %5180 = vmatprep.subr.mxu0 0.0
  %5181 = vmatpush1.msra.mxu0 0.0
  %5182 = vmatprep.subr.mxu0 0.0
  %5183 = vmatpush1.msra.mxu0 0.0
  %5184 = vmatprep.subr.mxu0 0.0
  %5185 = vmatpush1.msra.mxu0 0.0
  %5186 = vmatprep.subr.mxu0 0.0
  %5187 = vmatpush1.msra.mxu0 0.0
  %5188 = vmatprep.subr.mxu0 0.0
  %5189 = vmatpush1.msra.mxu0 0.0
  %5190 = vmatprep.subr.mxu0 0.0
  %5191 = vmatpush1.msra.mxu0 0.0
  %5192 = vmatprep.subr.mxu0 0.0
  %5193 = vmatpush1.msra.mxu0 0.0
  %5194 = vmatprep.subr.mxu0 0.0
  %5195 = vmatpush1.msra.mxu0 0.0
  %5196 = vmatprep.mubr.f32.mxu0 0.0
  %5197 = vmatmul.mubr.f32.gmra.mrb[0].mxu0 %v5128
  %v5198 = vpop.f32.mrb[0].mxu0
  %v5199 = vadd.f32 0.0, %v5198
  %v5200 = vpop.f32.mrb[0].mxu0
  %5201 = vmatprep.mubr.f32.mxu0 0.0
  %5202 = vmatmul.mubr.f32.gmra.mrb[0].mxu0 %v5129
  %v5203 = vpop.f32.mrb[0].mxu0
  %v5204 = vadd.f32 0.0, %v5203
  %v5205 = vpop.f32.mrb[0].mxu0
  %5206 = vmatprep.mubr.f32.mxu0 0.0
  %5207 = vmatmul.mubr.f32.gmra.mrb[0].mxu0 %v5130
  %v5208 = vpop.f32.mrb[0].mxu0
  %v5209 = vadd.f32 0.0, %v5208
  %v5210 = vpop.f32.mrb[0].mxu0
  %5211 = vmatprep.mubr.f32.mxu0 0.0
  %5212 = vmatmul.mubr.f32.gmra.mrb[0].mxu0 %v5131
  %v5213 = vpop.f32.mrb[0].mxu0
  %v5214 = vadd.f32 0.0, %v5213
  %v5215 = vpop.f32.mrb[0].mxu0
  %5216 = vdwg.mxu0
  %5217 = vmatprep.subr.mxu0 0.0
  %5218 = vmatpush1.msra.mxu0 %v5199
  %5219 = vmatprep.subr.mxu0 0.0
  %5220 = vmatpush1.msra.mxu0 %v5204
  %5221 = vmatprep.subr.mxu0 0.0
  %5222 = vmatpush1.msra.mxu0 %v5209
  %5223 = vmatprep.subr.mxu0 0.0
  %5224 = vmatpush1.msra.mxu0 %v5214
  %5225 = vmatprep.subr.mxu0 0.0
  %5226 = vmatpush1.msra.mxu0 0.0
  %5227 = vmatprep.subr.mxu0 0.0
  %5228 = vmatpush1.msra.mxu0 0.0
  %5229 = vmatprep.subr.mxu0 0.0
  %5230 = vmatpush1.msra.mxu0 0.0
  %5231 = vmatprep.subr.mxu0 0.0
  %5232 = vmatpush1.msra.mxu0 0.0
  %5233 = vmatprep.subr.mxu0 0.0
  %5234 = vmatpush1.msra.mxu0 0.0
  %5235 = vmatprep.subr.mxu0 0.0
  %5236 = vmatpush1.msra.mxu0 0.0
  %5237 = vmatprep.subr.mxu0 0.0
  %5238 = vmatpush1.msra.mxu0 0.0
  %5239 = vmatprep.subr.mxu0 0.0
  %5240 = vmatpush1.msra.mxu0 0.0
  %5241 = vmatprep.subr.mxu0 0.0
  %5242 = vmatpush1.msra.mxu0 0.0
  %5243 = vmatprep.subr.mxu0 0.0
  %5244 = vmatpush1.msra.mxu0 0.0
  %5245 = vmatprep.subr.mxu0 0.0
  %5246 = vmatpush1.msra.mxu0 0.0
  %5247 = vmatprep.subr.mxu0 0.0
  %5248 = vmatpush1.msra.mxu0 0.0
  %5249 = vmatprep.subr.mxu0 0.0
  %5250 = vmatpush1.msra.mxu0 0.0
  %5251 = vmatprep.subr.mxu0 0.0
  %5252 = vmatpush1.msra.mxu0 0.0
  %5253 = vmatprep.subr.mxu0 0.0
  %5254 = vmatpush1.msra.mxu0 0.0
  %5255 = vmatprep.subr.mxu0 0.0
  %5256 = vmatpush1.msra.mxu0 0.0
  %5257 = vmatprep.subr.mxu0 0.0
  %5258 = vmatpush1.msra.mxu0 0.0
  %5259 = vmatprep.subr.mxu0 0.0
  %5260 = vmatpush1.msra.mxu0 0.0
  %5261 = vmatprep.subr.mxu0 0.0
  %5262 = vmatpush1.msra.mxu0 0.0
  %5263 = vmatprep.subr.mxu0 0.0
  %5264 = vmatpush1.msra.mxu0 0.0
  %5265 = vmatprep.subr.mxu0 0.0
  %5266 = vmatpush1.msra.mxu0 0.0
  %5267 = vmatprep.subr.mxu0 0.0
  %5268 = vmatpush1.msra.mxu0 0.0
  %5269 = vmatprep.subr.mxu0 0.0
  %5270 = vmatpush1.msra.mxu0 0.0
  %5271 = vmatprep.subr.mxu0 0.0
  %5272 = vmatpush1.msra.mxu0 0.0
  %5273 = vmatprep.subr.mxu0 0.0
  %5274 = vmatpush1.msra.mxu0 0.0
  %5275 = vmatprep.subr.mxu0 0.0
  %5276 = vmatpush1.msra.mxu0 0.0
  %5277 = vmatprep.subr.mxu0 0.0
  %5278 = vmatpush1.msra.mxu0 0.0
  %5279 = vmatprep.subr.mxu0 0.0
  %5280 = vmatpush1.msra.mxu0 0.0
  %5281 = vmatprep.mubr.f32.mxu0 0.0
  %5282 = vmatmul.mubr.f32.gmra.mrb[0].mxu0 %v3757
  %v5283 = vpop.f32.mrb[0].mxu0
  %v5284 = vadd.f32 0.0, %v5283
  %v5285 = vpop.f32.mrb[0].mxu0
  %5286 = vdwg.mxu0
  %v5287 = vsel %vm235, %v4713, 0
  %5289 = vmatprep.subr.mxu0 0.0
  %5290 = vmatpush1.msra.mxu0 %v5287
  %5291 = vmatprep.subr.mxu0 0.0
  %5292 = vmatpush1.msra.mxu0 0.0
  %5293 = vmatprep.subr.mxu0 0.0
  %5294 = vmatpush1.msra.mxu0 0.0
  %5295 = vmatprep.subr.mxu0 0.0
  %5296 = vmatpush1.msra.mxu0 0.0
  %5297 = vmatprep.subr.mxu0 0.0
  %5298 = vmatpush1.msra.mxu0 0.0
  %5299 = vmatprep.subr.mxu0 0.0
  %5300 = vmatpush1.msra.mxu0 0.0
  %5301 = vmatprep.subr.mxu0 0.0
  %5302 = vmatpush1.msra.mxu0 0.0
  %5303 = vmatprep.subr.mxu0 0.0
  %5304 = vmatpush1.msra.mxu0 0.0
  %5305 = vmatprep.subr.mxu0 0.0
  %5306 = vmatpush1.msra.mxu0 0.0
  %5307 = vmatprep.subr.mxu0 0.0
  %5308 = vmatpush1.msra.mxu0 0.0
  %5309 = vmatprep.subr.mxu0 0.0
  %5310 = vmatpush1.msra.mxu0 0.0
  %5311 = vmatprep.subr.mxu0 0.0
  %5312 = vmatpush1.msra.mxu0 0.0
  %5313 = vmatprep.subr.mxu0 0.0
  %5314 = vmatpush1.msra.mxu0 0.0
  %5315 = vmatprep.subr.mxu0 0.0
  %5316 = vmatpush1.msra.mxu0 0.0
  %5317 = vmatprep.subr.mxu0 0.0
  %5318 = vmatpush1.msra.mxu0 0.0
  %5319 = vmatprep.subr.mxu0 0.0
  %5320 = vmatpush1.msra.mxu0 0.0
  %5321 = vmatprep.subr.mxu0 0.0
  %5322 = vmatpush1.msra.mxu0 0.0
  %5323 = vmatprep.subr.mxu0 0.0
  %5324 = vmatpush1.msra.mxu0 0.0
  %5325 = vmatprep.subr.mxu0 0.0
  %5326 = vmatpush1.msra.mxu0 0.0
  %5327 = vmatprep.subr.mxu0 0.0
  %5328 = vmatpush1.msra.mxu0 0.0
  %5329 = vmatprep.subr.mxu0 0.0
  %5330 = vmatpush1.msra.mxu0 0.0
  %5331 = vmatprep.subr.mxu0 0.0
  %5332 = vmatpush1.msra.mxu0 0.0
  %5333 = vmatprep.subr.mxu0 0.0
  %5334 = vmatpush1.msra.mxu0 0.0
  %5335 = vmatprep.subr.mxu0 0.0
  %5336 = vmatpush1.msra.mxu0 0.0
  %5337 = vmatprep.subr.mxu0 0.0
  %5338 = vmatpush1.msra.mxu0 0.0
  %5339 = vmatprep.subr.mxu0 0.0
  %5340 = vmatpush1.msra.mxu0 0.0
  %5341 = vmatprep.subr.mxu0 0.0
  %5342 = vmatpush1.msra.mxu0 0.0
  %5343 = vmatprep.subr.mxu0 0.0
  %5344 = vmatpush1.msra.mxu0 0.0
  %5345 = vmatprep.subr.mxu0 0.0
  %5346 = vmatpush1.msra.mxu0 0.0
  %5347 = vmatprep.subr.mxu0 0.0
  %5348 = vmatpush1.msra.mxu0 0.0
  %5349 = vmatprep.subr.mxu0 0.0
  %5350 = vmatpush1.msra.mxu0 0.0
  %5351 = vmatprep.subr.mxu0 0.0
  %5352 = vmatpush1.msra.mxu0 0.0
  %5353 = vmatprep.mubr.f32.mxu0 0.0
  %5354 = vmatmul.mubr.f32.gmra.mrb[0].mxu0 %v3830
  %v5355 = vpop.f32.mrb[0].mxu0
  %v5356 = vadd.f32 %v5284, %v5355
  %v5357 = vpop.f32.mrb[0].mxu0
  %5358 = vdwg.mxu0
  %v5359 = vmul.f32 %v3921, %v5356
  %v5361 = vsel %vm497, %v5359, 0
  %5363 = vmatprep.subr.mxu0 0.0
  %5364 = vmatpush1.msra.mxu0 %v5361
  %5365 = vmatprep.subr.mxu0 0.0
  %5366 = vmatpush1.msra.mxu0 0.0
  %5367 = vmatprep.subr.mxu0 0.0
  %5368 = vmatpush1.msra.mxu0 0.0
  %5369 = vmatprep.subr.mxu0 0.0
  %5370 = vmatpush1.msra.mxu0 0.0
  %5371 = vmatprep.subr.mxu0 0.0
  %5372 = vmatpush1.msra.mxu0 0.0
  %5373 = vmatprep.subr.mxu0 0.0
  %5374 = vmatpush1.msra.mxu0 0.0
  %5375 = vmatprep.subr.mxu0 0.0
  %5376 = vmatpush1.msra.mxu0 0.0
  %5377 = vmatprep.subr.mxu0 0.0
  %5378 = vmatpush1.msra.mxu0 0.0
  %5379 = vmatprep.subr.mxu0 0.0
  %5380 = vmatpush1.msra.mxu0 0.0
  %5381 = vmatprep.subr.mxu0 0.0
  %5382 = vmatpush1.msra.mxu0 0.0
  %5383 = vmatprep.subr.mxu0 0.0
  %5384 = vmatpush1.msra.mxu0 0.0
  %5385 = vmatprep.subr.mxu0 0.0
  %5386 = vmatpush1.msra.mxu0 0.0
  %5387 = vmatprep.subr.mxu0 0.0
  %5388 = vmatpush1.msra.mxu0 0.0
  %5389 = vmatprep.subr.mxu0 0.0
  %5390 = vmatpush1.msra.mxu0 0.0
  %5391 = vmatprep.subr.mxu0 0.0
  %5392 = vmatpush1.msra.mxu0 0.0
  %5393 = vmatprep.subr.mxu0 0.0
  %5394 = vmatpush1.msra.mxu0 0.0
  %5395 = vmatprep.subr.mxu0 0.0
  %5396 = vmatpush1.msra.mxu0 0.0
  %5397 = vmatprep.subr.mxu0 0.0
  %5398 = vmatpush1.msra.mxu0 0.0
  %5399 = vmatprep.subr.mxu0 0.0
  %5400 = vmatpush1.msra.mxu0 0.0
  %5401 = vmatprep.subr.mxu0 0.0
  %5402 = vmatpush1.msra.mxu0 0.0
  %5403 = vmatprep.subr.mxu0 0.0
  %5404 = vmatpush1.msra.mxu0 0.0
  %5405 = vmatprep.subr.mxu0 0.0
  %5406 = vmatpush1.msra.mxu0 0.0
  %5407 = vmatprep.subr.mxu0 0.0
  %5408 = vmatpush1.msra.mxu0 0.0
  %5409 = vmatprep.subr.mxu0 0.0
  %5410 = vmatpush1.msra.mxu0 0.0
  %5411 = vmatprep.subr.mxu0 0.0
  %5412 = vmatpush1.msra.mxu0 0.0
  %5413 = vmatprep.subr.mxu0 0.0
  %5414 = vmatpush1.msra.mxu0 0.0
  %5415 = vmatprep.subr.mxu0 0.0
  %5416 = vmatpush1.msra.mxu0 0.0
  %5417 = vmatprep.subr.mxu0 0.0
  %5418 = vmatpush1.msra.mxu0 0.0
  %5419 = vmatprep.subr.mxu0 0.0
  %5420 = vmatpush1.msra.mxu0 0.0
  %5421 = vmatprep.subr.mxu0 0.0
  %5422 = vmatpush1.msra.mxu0 0.0
  %5423 = vmatprep.subr.mxu0 0.0
  %5424 = vmatpush1.msra.mxu0 0.0
  %5425 = vmatprep.subr.mxu0 0.0
  %5426 = vmatpush1.msra.mxu0 0.0
  %5427 = vmatprep.mubr.f32.mxu0 0.0
  %5428 = vmatmul.mubr.f32.gmra.mrb[0].mxu0 %v3930
  %v5429 = vpop.f32.mrb[0].mxu0
  %v5430 = vadd.f32 %v4713, %v5429
  %v5431 = vpop.f32.mrb[0].mxu0
  %5432 = vdwg.mxu0
  %v5433 = vmul.f32 %v5430, %v4007
  %v5434 = vsel %vm1671, %v5433, 0.0
  %v5435 = vrot.slane %v5434, 4
  %v5436 = vadd.f32 %v5434, %v5435
  %v5437 = vrot.slane %v5436, 2
  %v5438 = vadd.f32 %v5436, %v5437
  %v5439 = vrot.slane %v5438, 1
  %v5440 = vadd.f32 %v5438, %v5439
  %v5441 = vmul.f32 %v5440, -0.5
  %v5442 = vadd.f32 %v4724, %v5441
  %v5444 = vsel %vm89, %v5430, 0
  %5446 = vmatprep.subr.mxu0 0.0
  %5447 = vmatpush1.msra.mxu0 %v55
  %5448 = vmatprep.subr.mxu0 0.0
  %5449 = vmatpush1.msra.mxu0 %v56
  %5450 = vmatprep.subr.mxu0 0.0
  %5451 = vmatpush1.msra.mxu0 0.0
  %5452 = vmatprep.subr.mxu0 0.0
  %5453 = vmatpush1.msra.mxu0 0.0
  %5454 = vmatprep.subr.mxu0 0.0
  %5455 = vmatpush1.msra.mxu0 0.0
  %5456 = vmatprep.subr.mxu0 0.0
  %5457 = vmatpush1.msra.mxu0 0.0
  %5458 = vmatprep.subr.mxu0 0.0
  %5459 = vmatpush1.msra.mxu0 0.0
  %5460 = vmatprep.subr.mxu0 0.0
  %5461 = vmatpush1.msra.mxu0 0.0
  %5462 = vmatprep.subr.mxu0 0.0
  %5463 = vmatpush1.msra.mxu0 0.0
  %5464 = vmatprep.subr.mxu0 0.0
  %5465 = vmatpush1.msra.mxu0 0.0
  %5466 = vmatprep.subr.mxu0 0.0
  %5467 = vmatpush1.msra.mxu0 0.0
  %5468 = vmatprep.subr.mxu0 0.0
  %5469 = vmatpush1.msra.mxu0 0.0
  %5470 = vmatprep.subr.mxu0 0.0
  %5471 = vmatpush1.msra.mxu0 0.0
  %5472 = vmatprep.subr.mxu0 0.0
  %5473 = vmatpush1.msra.mxu0 0.0
  %5474 = vmatprep.subr.mxu0 0.0
  %5475 = vmatpush1.msra.mxu0 0.0
  %5476 = vmatprep.subr.mxu0 0.0
  %5477 = vmatpush1.msra.mxu0 0.0
  %5478 = vmatprep.subr.mxu0 0.0
  %5479 = vmatpush1.msra.mxu0 0.0
  %5480 = vmatprep.subr.mxu0 0.0
  %5481 = vmatpush1.msra.mxu0 0.0
  %5482 = vmatprep.subr.mxu0 0.0
  %5483 = vmatpush1.msra.mxu0 0.0
  %5484 = vmatprep.subr.mxu0 0.0
  %5485 = vmatpush1.msra.mxu0 0.0
  %5486 = vmatprep.subr.mxu0 0.0
  %5487 = vmatpush1.msra.mxu0 0.0
  %5488 = vmatprep.subr.mxu0 0.0
  %5489 = vmatpush1.msra.mxu0 0.0
  %5490 = vmatprep.subr.mxu0 0.0
  %5491 = vmatpush1.msra.mxu0 0.0
  %5492 = vmatprep.subr.mxu0 0.0
  %5493 = vmatpush1.msra.mxu0 0.0
  %5494 = vmatprep.subr.mxu0 0.0
  %5495 = vmatpush1.msra.mxu0 0.0
  %5496 = vmatprep.subr.mxu0 0.0
  %5497 = vmatpush1.msra.mxu0 0.0
  %5498 = vmatprep.subr.mxu0 0.0
  %5499 = vmatpush1.msra.mxu0 0.0
  %5500 = vmatprep.subr.mxu0 0.0
  %5501 = vmatpush1.msra.mxu0 0.0
  %5502 = vmatprep.subr.mxu0 0.0
  %5503 = vmatpush1.msra.mxu0 0.0
  %5504 = vmatprep.subr.mxu0 0.0
  %5505 = vmatpush1.msra.mxu0 0.0
  %5506 = vmatprep.subr.mxu0 0.0
  %5507 = vmatpush1.msra.mxu0 0.0
  %5508 = vmatprep.subr.mxu0 0.0
  %5509 = vmatpush1.msra.mxu0 0.0
  %5510 = vmatprep.mubr.f32.mxu0 0.0
  %5511 = vmatmul.mubr.f32.gmra.mrb[0].mxu0 %v5444
  %v5512 = vpop.f32.mrb[0].mxu0
  %v5513 = vadd.f32 0.0, %v5512
  %v5514 = vpop.f32.mrb[0].mxu0
  %5515 = vdwg.mxu0
  %5516 = vmatprep.subr.mxu0 0.0
  %5517 = vmatpush1.msra.mxu0 %v57
  %5518 = vmatprep.subr.mxu0 0.0
  %5519 = vmatpush1.msra.mxu0 %v58
  %5520 = vmatprep.subr.mxu0 0.0
  %5521 = vmatpush1.msra.mxu0 0.0
  %5522 = vmatprep.subr.mxu0 0.0
  %5523 = vmatpush1.msra.mxu0 0.0
  %5524 = vmatprep.subr.mxu0 0.0
  %5525 = vmatpush1.msra.mxu0 0.0
  %5526 = vmatprep.subr.mxu0 0.0
  %5527 = vmatpush1.msra.mxu0 0.0
  %5528 = vmatprep.subr.mxu0 0.0
  %5529 = vmatpush1.msra.mxu0 0.0
  %5530 = vmatprep.subr.mxu0 0.0
  %5531 = vmatpush1.msra.mxu0 0.0
  %5532 = vmatprep.subr.mxu0 0.0
  %5533 = vmatpush1.msra.mxu0 0.0
  %5534 = vmatprep.subr.mxu0 0.0
  %5535 = vmatpush1.msra.mxu0 0.0
  %5536 = vmatprep.subr.mxu0 0.0
  %5537 = vmatpush1.msra.mxu0 0.0
  %5538 = vmatprep.subr.mxu0 0.0
  %5539 = vmatpush1.msra.mxu0 0.0
  %5540 = vmatprep.subr.mxu0 0.0
  %5541 = vmatpush1.msra.mxu0 0.0
  %5542 = vmatprep.subr.mxu0 0.0
  %5543 = vmatpush1.msra.mxu0 0.0
  %5544 = vmatprep.subr.mxu0 0.0
  %5545 = vmatpush1.msra.mxu0 0.0
  %5546 = vmatprep.subr.mxu0 0.0
  %5547 = vmatpush1.msra.mxu0 0.0
  %5548 = vmatprep.subr.mxu0 0.0
  %5549 = vmatpush1.msra.mxu0 0.0
  %5550 = vmatprep.subr.mxu0 0.0
  %5551 = vmatpush1.msra.mxu0 0.0
  %5552 = vmatprep.subr.mxu0 0.0
  %5553 = vmatpush1.msra.mxu0 0.0
  %5554 = vmatprep.subr.mxu0 0.0
  %5555 = vmatpush1.msra.mxu0 0.0
  %5556 = vmatprep.subr.mxu0 0.0
  %5557 = vmatpush1.msra.mxu0 0.0
  %5558 = vmatprep.subr.mxu0 0.0
  %5559 = vmatpush1.msra.mxu0 0.0
  %5560 = vmatprep.subr.mxu0 0.0
  %5561 = vmatpush1.msra.mxu0 0.0
  %5562 = vmatprep.subr.mxu0 0.0
  %5563 = vmatpush1.msra.mxu0 0.0
  %5564 = vmatprep.subr.mxu0 0.0
  %5565 = vmatpush1.msra.mxu0 0.0
  %5566 = vmatprep.subr.mxu0 0.0
  %5567 = vmatpush1.msra.mxu0 0.0
  %5568 = vmatprep.subr.mxu0 0.0
  %5569 = vmatpush1.msra.mxu0 0.0
  %5570 = vmatprep.subr.mxu0 0.0
  %5571 = vmatpush1.msra.mxu0 0.0
  %5572 = vmatprep.subr.mxu0 0.0
  %5573 = vmatpush1.msra.mxu0 0.0
  %5574 = vmatprep.subr.mxu0 0.0
  %5575 = vmatpush1.msra.mxu0 0.0
  %5576 = vmatprep.subr.mxu0 0.0
  %5577 = vmatpush1.msra.mxu0 0.0
  %5578 = vmatprep.subr.mxu0 0.0
  %5579 = vmatpush1.msra.mxu0 0.0
  %5580 = vmatprep.mubr.f32.mxu0 0.0
  %5581 = vmatmul.mubr.f32.gmra.mrb[0].mxu0 %v5444
  %v5582 = vpop.f32.mrb[0].mxu0
  %v5583 = vadd.f32 0.0, %v5582
  %v5584 = vpop.f32.mrb[0].mxu0
  %5585 = vdwg.mxu0
  %v5586 = vsub.f32 %v5513, %v5583
  %v5587 = vmul.f32 %v3280, %v5586
  %v5588 = vsel %vm235, %v5587, 0.0
  %v5589 = vrot.slane %v5588, 4
  %v5590 = vadd.f32 %v5588, %v5589
  %v5591 = vrot.slane %v5590, 2
  %v5592 = vadd.f32 %v5590, %v5591
  %v5593 = vrot.slane %v5592, 1
  %v5594 = vadd.f32 %v5592, %v5593
  %v5595 = vmul.f32 %v5594, 2.0
  %v5597 = vsel %vm235, %v5583, 0
  %5599 = vmatprep.subr.mxu0 0.0
  %5600 = vmatpush1.msra.mxu0 %v5597
  %5601 = vmatprep.subr.mxu0 0.0
  %5602 = vmatpush1.msra.mxu0 0.0
  %5603 = vmatprep.subr.mxu0 0.0
  %5604 = vmatpush1.msra.mxu0 0.0
  %5605 = vmatprep.subr.mxu0 0.0
  %5606 = vmatpush1.msra.mxu0 0.0
  %5607 = vmatprep.subr.mxu0 0.0
  %5608 = vmatpush1.msra.mxu0 0.0
  %5609 = vmatprep.subr.mxu0 0.0
  %5610 = vmatpush1.msra.mxu0 0.0
  %5611 = vmatprep.subr.mxu0 0.0
  %5612 = vmatpush1.msra.mxu0 0.0
  %5613 = vmatprep.subr.mxu0 0.0
  %5614 = vmatpush1.msra.mxu0 0.0
  %5615 = vmatprep.subr.mxu0 0.0
  %5616 = vmatpush1.msra.mxu0 0.0
  %5617 = vmatprep.subr.mxu0 0.0
  %5618 = vmatpush1.msra.mxu0 0.0
  %5619 = vmatprep.subr.mxu0 0.0
  %5620 = vmatpush1.msra.mxu0 0.0
  %5621 = vmatprep.subr.mxu0 0.0
  %5622 = vmatpush1.msra.mxu0 0.0
  %5623 = vmatprep.subr.mxu0 0.0
  %5624 = vmatpush1.msra.mxu0 0.0
  %5625 = vmatprep.subr.mxu0 0.0
  %5626 = vmatpush1.msra.mxu0 0.0
  %5627 = vmatprep.subr.mxu0 0.0
  %5628 = vmatpush1.msra.mxu0 0.0
  %5629 = vmatprep.subr.mxu0 0.0
  %5630 = vmatpush1.msra.mxu0 0.0
  %5631 = vmatprep.subr.mxu0 0.0
  %5632 = vmatpush1.msra.mxu0 0.0
  %5633 = vmatprep.subr.mxu0 0.0
  %5634 = vmatpush1.msra.mxu0 0.0
  %5635 = vmatprep.subr.mxu0 0.0
  %5636 = vmatpush1.msra.mxu0 0.0
  %5637 = vmatprep.subr.mxu0 0.0
  %5638 = vmatpush1.msra.mxu0 0.0
  %5639 = vmatprep.subr.mxu0 0.0
  %5640 = vmatpush1.msra.mxu0 0.0
  %5641 = vmatprep.subr.mxu0 0.0
  %5642 = vmatpush1.msra.mxu0 0.0
  %5643 = vmatprep.subr.mxu0 0.0
  %5644 = vmatpush1.msra.mxu0 0.0
  %5645 = vmatprep.subr.mxu0 0.0
  %5646 = vmatpush1.msra.mxu0 0.0
  %5647 = vmatprep.subr.mxu0 0.0
  %5648 = vmatpush1.msra.mxu0 0.0
  %5649 = vmatprep.subr.mxu0 0.0
  %5650 = vmatpush1.msra.mxu0 0.0
  %5651 = vmatprep.subr.mxu0 0.0
  %5652 = vmatpush1.msra.mxu0 0.0
  %5653 = vmatprep.subr.mxu0 0.0
  %5654 = vmatpush1.msra.mxu0 0.0
  %5655 = vmatprep.subr.mxu0 0.0
  %5656 = vmatpush1.msra.mxu0 0.0
  %5657 = vmatprep.subr.mxu0 0.0
  %5658 = vmatpush1.msra.mxu0 0.0
  %5659 = vmatprep.subr.mxu0 0.0
  %5660 = vmatpush1.msra.mxu0 0.0
  %5661 = vmatprep.subr.mxu0 0.0
  %5662 = vmatpush1.msra.mxu0 0.0
  %5663 = vmatprep.mubr.f32.mxu0 0.0
  %5664 = vmatmul.mubr.f32.gmra.mrb[0].mxu0 %v3290
  %v5665 = vpop.f32.mrb[0].mxu0
  %v5666 = vadd.f32 0.0, %v5665
  %v5667 = vpop.f32.mrb[0].mxu0
  %5668 = vmatprep.mubr.f32.mxu0 0.0
  %5669 = vmatmul.mubr.f32.gmra.mrb[0].mxu0 %v3293
  %v5670 = vpop.f32.mrb[0].mxu0
  %v5671 = vadd.f32 0.0, %v5670
  %v5672 = vpop.f32.mrb[0].mxu0
  %5673 = vdwg.mxu0
  %v5675 = vsel %vm235, %v5513, 0
  %5677 = vmatprep.subr.mxu0 0.0
  %5678 = vmatpush1.msra.mxu0 %v5675
  %5679 = vmatprep.subr.mxu0 0.0
  %5680 = vmatpush1.msra.mxu0 0.0
  %5681 = vmatprep.subr.mxu0 0.0
  %5682 = vmatpush1.msra.mxu0 0.0
  %5683 = vmatprep.subr.mxu0 0.0
  %5684 = vmatpush1.msra.mxu0 0.0
  %5685 = vmatprep.subr.mxu0 0.0
  %5686 = vmatpush1.msra.mxu0 0.0
  %5687 = vmatprep.subr.mxu0 0.0
  %5688 = vmatpush1.msra.mxu0 0.0
  %5689 = vmatprep.subr.mxu0 0.0
  %5690 = vmatpush1.msra.mxu0 0.0
  %5691 = vmatprep.subr.mxu0 0.0
  %5692 = vmatpush1.msra.mxu0 0.0
  %5693 = vmatprep.subr.mxu0 0.0
  %5694 = vmatpush1.msra.mxu0 0.0
  %5695 = vmatprep.subr.mxu0 0.0
  %5696 = vmatpush1.msra.mxu0 0.0
  %5697 = vmatprep.subr.mxu0 0.0
  %5698 = vmatpush1.msra.mxu0 0.0
  %5699 = vmatprep.subr.mxu0 0.0
  %5700 = vmatpush1.msra.mxu0 0.0
  %5701 = vmatprep.subr.mxu0 0.0
  %5702 = vmatpush1.msra.mxu0 0.0
  %5703 = vmatprep.subr.mxu0 0.0
  %5704 = vmatpush1.msra.mxu0 0.0
  %5705 = vmatprep.subr.mxu0 0.0
  %5706 = vmatpush1.msra.mxu0 0.0
  %5707 = vmatprep.subr.mxu0 0.0
  %5708 = vmatpush1.msra.mxu0 0.0
  %5709 = vmatprep.subr.mxu0 0.0
  %5710 = vmatpush1.msra.mxu0 0.0
  %5711 = vmatprep.subr.mxu0 0.0
  %5712 = vmatpush1.msra.mxu0 0.0
  %5713 = vmatprep.subr.mxu0 0.0
  %5714 = vmatpush1.msra.mxu0 0.0
  %5715 = vmatprep.subr.mxu0 0.0
  %5716 = vmatpush1.msra.mxu0 0.0
  %5717 = vmatprep.subr.mxu0 0.0
  %5718 = vmatpush1.msra.mxu0 0.0
  %5719 = vmatprep.subr.mxu0 0.0
  %5720 = vmatpush1.msra.mxu0 0.0
  %5721 = vmatprep.subr.mxu0 0.0
  %5722 = vmatpush1.msra.mxu0 0.0
  %5723 = vmatprep.subr.mxu0 0.0
  %5724 = vmatpush1.msra.mxu0 0.0
  %5725 = vmatprep.subr.mxu0 0.0
  %5726 = vmatpush1.msra.mxu0 0.0
  %5727 = vmatprep.subr.mxu0 0.0
  %5728 = vmatpush1.msra.mxu0 0.0
  %5729 = vmatprep.subr.mxu0 0.0
  %5730 = vmatpush1.msra.mxu0 0.0
  %5731 = vmatprep.subr.mxu0 0.0
  %5732 = vmatpush1.msra.mxu0 0.0
  %5733 = vmatprep.subr.mxu0 0.0
  %5734 = vmatpush1.msra.mxu0 0.0
  %5735 = vmatprep.subr.mxu0 0.0
  %5736 = vmatpush1.msra.mxu0 0.0
  %5737 = vmatprep.subr.mxu0 0.0
  %5738 = vmatpush1.msra.mxu0 0.0
  %5739 = vmatprep.subr.mxu0 0.0
  %5740 = vmatpush1.msra.mxu0 0.0
  %5741 = vmatprep.mubr.f32.mxu0 0.0
  %5742 = vmatmul.mubr.f32.gmra.mrb[0].mxu0 %v3374
  %v5743 = vpop.f32.mrb[0].mxu0
  %v5744 = vadd.f32 %v5666, %v5743
  %v5745 = vpop.f32.mrb[0].mxu0
  %5746 = vmatprep.mubr.f32.mxu0 0.0
  %5747 = vmatmul.mubr.f32.gmra.mrb[0].mxu0 %v3377
  %v5748 = vpop.f32.mrb[0].mxu0
  %v5749 = vadd.f32 %v5671, %v5748
  %v5750 = vpop.f32.mrb[0].mxu0
  %5751 = vdwg.mxu0
  %v5752 = vmul.f32 %v3460, %v5595
  %v5753 = vmul.f32 %v3465, %v5595
  %v5754 = vadd.f32 %v5744, %v5752
  %v5755 = vadd.f32 %v5749, %v5753
  %v5756 = vmul.f32 %v3504, %v5754
  %v5757 = vmul.f32 %v3505, %v5755
  %v5759 = vsel %vm497, %v5757, 0
  %5761 = vmatprep.subr.mxu0 0.0
  %5762 = vmatpush1.msra.mxu0 %v5756
  %5763 = vmatprep.subr.mxu0 0.0
  %5764 = vmatpush1.msra.mxu0 %v5759
  %5765 = vmatprep.subr.mxu0 0.0
  %5766 = vmatpush1.msra.mxu0 0.0
  %5767 = vmatprep.subr.mxu0 0.0
  %5768 = vmatpush1.msra.mxu0 0.0
  %5769 = vmatprep.subr.mxu0 0.0
  %5770 = vmatpush1.msra.mxu0 0.0
  %5771 = vmatprep.subr.mxu0 0.0
  %5772 = vmatpush1.msra.mxu0 0.0
  %5773 = vmatprep.subr.mxu0 0.0
  %5774 = vmatpush1.msra.mxu0 0.0
  %5775 = vmatprep.subr.mxu0 0.0
  %5776 = vmatpush1.msra.mxu0 0.0
  %5777 = vmatprep.subr.mxu0 0.0
  %5778 = vmatpush1.msra.mxu0 0.0
  %5779 = vmatprep.subr.mxu0 0.0
  %5780 = vmatpush1.msra.mxu0 0.0
  %5781 = vmatprep.subr.mxu0 0.0
  %5782 = vmatpush1.msra.mxu0 0.0
  %5783 = vmatprep.subr.mxu0 0.0
  %5784 = vmatpush1.msra.mxu0 0.0
  %5785 = vmatprep.subr.mxu0 0.0
  %5786 = vmatpush1.msra.mxu0 0.0
  %5787 = vmatprep.subr.mxu0 0.0
  %5788 = vmatpush1.msra.mxu0 0.0
  %5789 = vmatprep.subr.mxu0 0.0
  %5790 = vmatpush1.msra.mxu0 0.0
  %5791 = vmatprep.subr.mxu0 0.0
  %5792 = vmatpush1.msra.mxu0 0.0
  %5793 = vmatprep.subr.mxu0 0.0
  %5794 = vmatpush1.msra.mxu0 0.0
  %5795 = vmatprep.subr.mxu0 0.0
  %5796 = vmatpush1.msra.mxu0 0.0
  %5797 = vmatprep.subr.mxu0 0.0
  %5798 = vmatpush1.msra.mxu0 0.0
  %5799 = vmatprep.subr.mxu0 0.0
  %5800 = vmatpush1.msra.mxu0 0.0
  %5801 = vmatprep.subr.mxu0 0.0
  %5802 = vmatpush1.msra.mxu0 0.0
  %5803 = vmatprep.subr.mxu0 0.0
  %5804 = vmatpush1.msra.mxu0 0.0
  %5805 = vmatprep.subr.mxu0 0.0
  %5806 = vmatpush1.msra.mxu0 0.0
  %5807 = vmatprep.subr.mxu0 0.0
  %5808 = vmatpush1.msra.mxu0 0.0
  %5809 = vmatprep.subr.mxu0 0.0
  %5810 = vmatpush1.msra.mxu0 0.0
  %5811 = vmatprep.subr.mxu0 0.0
  %5812 = vmatpush1.msra.mxu0 0.0
  %5813 = vmatprep.subr.mxu0 0.0
  %5814 = vmatpush1.msra.mxu0 0.0
  %5815 = vmatprep.subr.mxu0 0.0
  %5816 = vmatpush1.msra.mxu0 0.0
  %5817 = vmatprep.subr.mxu0 0.0
  %5818 = vmatpush1.msra.mxu0 0.0
  %5819 = vmatprep.subr.mxu0 0.0
  %5820 = vmatpush1.msra.mxu0 0.0
  %5821 = vmatprep.subr.mxu0 0.0
  %5822 = vmatpush1.msra.mxu0 0.0
  %5823 = vmatprep.subr.mxu0 0.0
  %5824 = vmatpush1.msra.mxu0 0.0
  %5825 = vmatprep.mubr.f32.mxu0 0.0
  %5826 = vmatmul.mubr.f32.gmra.mrb[0].mxu0 %v3532
  %v5827 = vpop.f32.mrb[0].mxu0
  %v5828 = vadd.f32 0.0, %v5827
  %v5829 = vpop.f32.mrb[0].mxu0
  %5830 = vmatprep.mubr.f32.mxu0 0.0
  %5831 = vmatmul.mubr.f32.gmra.mrb[0].mxu0 %v3535
  %v5832 = vpop.f32.mrb[0].mxu0
  %v5833 = vadd.f32 0.0, %v5832
  %v5834 = vpop.f32.mrb[0].mxu0
  %5835 = vmatprep.mubr.f32.mxu0 0.0
  %5836 = vmatmul.mubr.f32.gmra.mrb[0].mxu0 %v3538
  %v5837 = vpop.f32.mrb[0].mxu0
  %v5838 = vadd.f32 0.0, %v5837
  %v5839 = vpop.f32.mrb[0].mxu0
  %5840 = vmatprep.mubr.f32.mxu0 0.0
  %5841 = vmatmul.mubr.f32.gmra.mrb[0].mxu0 %v3541
  %v5842 = vpop.f32.mrb[0].mxu0
  %v5843 = vadd.f32 0.0, %v5842
  %v5844 = vpop.f32.mrb[0].mxu0
  %5845 = vdwg.mxu0
  %v5846 = vmul.f32 %v3667, %v5828
  %v5847 = vmul.f32 %v3668, %v5833
  %v5848 = vmul.f32 %v3669, %v5838
  %v5849 = vmul.f32 %v3670, %v5843
  %5850 = vmatprep.subr.mxu0 0.0
  %5851 = vmatpush1.msra.mxu0 %v59
  %5852 = vmatprep.subr.mxu0 0.0
  %5853 = vmatpush1.msra.mxu0 %v60
  %5854 = vmatprep.subr.mxu0 0.0
  %5855 = vmatpush1.msra.mxu0 %v61
  %5856 = vmatprep.subr.mxu0 0.0
  %5857 = vmatpush1.msra.mxu0 %v62
  %5858 = vmatprep.subr.mxu0 0.0
  %5859 = vmatpush1.msra.mxu0 %v63
  %5860 = vmatprep.subr.mxu0 0.0
  %5861 = vmatpush1.msra.mxu0 %v64
  %5862 = vmatprep.subr.mxu0 0.0
  %5863 = vmatpush1.msra.mxu0 %v65
  %5864 = vmatprep.subr.mxu0 0.0
  %5865 = vmatpush1.msra.mxu0 %v66
  %5866 = vmatprep.subr.mxu0 0.0
  %5867 = vmatpush1.msra.mxu0 %v67
  %5868 = vmatprep.subr.mxu0 0.0
  %5869 = vmatpush1.msra.mxu0 %v68
  %5870 = vmatprep.subr.mxu0 0.0
  %5871 = vmatpush1.msra.mxu0 %v69
  %5872 = vmatprep.subr.mxu0 0.0
  %5873 = vmatpush1.msra.mxu0 %v70
  %5874 = vmatprep.subr.mxu0 0.0
  %5875 = vmatpush1.msra.mxu0 %v71
  %5876 = vmatprep.subr.mxu0 0.0
  %5877 = vmatpush1.msra.mxu0 %v72
  %5878 = vmatprep.subr.mxu0 0.0
  %5879 = vmatpush1.msra.mxu0 %v73
  %5880 = vmatprep.subr.mxu0 0.0
  %5881 = vmatpush1.msra.mxu0 %v74
  %5882 = vmatprep.subr.mxu0 0.0
  %5883 = vmatpush1.msra.mxu0 0.0
  %5884 = vmatprep.subr.mxu0 0.0
  %5885 = vmatpush1.msra.mxu0 0.0
  %5886 = vmatprep.subr.mxu0 0.0
  %5887 = vmatpush1.msra.mxu0 0.0
  %5888 = vmatprep.subr.mxu0 0.0
  %5889 = vmatpush1.msra.mxu0 0.0
  %5890 = vmatprep.subr.mxu0 0.0
  %5891 = vmatpush1.msra.mxu0 0.0
  %5892 = vmatprep.subr.mxu0 0.0
  %5893 = vmatpush1.msra.mxu0 0.0
  %5894 = vmatprep.subr.mxu0 0.0
  %5895 = vmatpush1.msra.mxu0 0.0
  %5896 = vmatprep.subr.mxu0 0.0
  %5897 = vmatpush1.msra.mxu0 0.0
  %5898 = vmatprep.subr.mxu0 0.0
  %5899 = vmatpush1.msra.mxu0 0.0
  %5900 = vmatprep.subr.mxu0 0.0
  %5901 = vmatpush1.msra.mxu0 0.0
  %5902 = vmatprep.subr.mxu0 0.0
  %5903 = vmatpush1.msra.mxu0 0.0
  %5904 = vmatprep.subr.mxu0 0.0
  %5905 = vmatpush1.msra.mxu0 0.0
  %5906 = vmatprep.subr.mxu0 0.0
  %5907 = vmatpush1.msra.mxu0 0.0
  %5908 = vmatprep.subr.mxu0 0.0
  %5909 = vmatpush1.msra.mxu0 0.0
  %5910 = vmatprep.subr.mxu0 0.0
  %5911 = vmatpush1.msra.mxu0 0.0
  %5912 = vmatprep.subr.mxu0 0.0
  %5913 = vmatpush1.msra.mxu0 0.0
  %5914 = vmatprep.mubr.f32.mxu0 0.0
  %5915 = vmatmul.mubr.f32.gmra.mrb[0].mxu0 %v5846
  %v5916 = vpop.f32.mrb[0].mxu0
  %v5917 = vadd.f32 0.0, %v5916
  %v5918 = vpop.f32.mrb[0].mxu0
  %5919 = vmatprep.mubr.f32.mxu0 0.0
  %5920 = vmatmul.mubr.f32.gmra.mrb[0].mxu0 %v5847
  %v5921 = vpop.f32.mrb[0].mxu0
  %v5922 = vadd.f32 0.0, %v5921
  %v5923 = vpop.f32.mrb[0].mxu0
  %5924 = vmatprep.mubr.f32.mxu0 0.0
  %5925 = vmatmul.mubr.f32.gmra.mrb[0].mxu0 %v5848
  %v5926 = vpop.f32.mrb[0].mxu0
  %v5927 = vadd.f32 0.0, %v5926
  %v5928 = vpop.f32.mrb[0].mxu0
  %5929 = vmatprep.mubr.f32.mxu0 0.0
  %5930 = vmatmul.mubr.f32.gmra.mrb[0].mxu0 %v5849
  %v5931 = vpop.f32.mrb[0].mxu0
  %v5932 = vadd.f32 0.0, %v5931
  %v5933 = vpop.f32.mrb[0].mxu0
  %5934 = vdwg.mxu0
  %5935 = vmatprep.subr.mxu0 0.0
  %5936 = vmatpush1.msra.mxu0 %v5917
  %5937 = vmatprep.subr.mxu0 0.0
  %5938 = vmatpush1.msra.mxu0 %v5922
  %5939 = vmatprep.subr.mxu0 0.0
  %5940 = vmatpush1.msra.mxu0 %v5927
  %5941 = vmatprep.subr.mxu0 0.0
  %5942 = vmatpush1.msra.mxu0 %v5932
  %5943 = vmatprep.subr.mxu0 0.0
  %5944 = vmatpush1.msra.mxu0 0.0
  %5945 = vmatprep.subr.mxu0 0.0
  %5946 = vmatpush1.msra.mxu0 0.0
  %5947 = vmatprep.subr.mxu0 0.0
  %5948 = vmatpush1.msra.mxu0 0.0
  %5949 = vmatprep.subr.mxu0 0.0
  %5950 = vmatpush1.msra.mxu0 0.0
  %5951 = vmatprep.subr.mxu0 0.0
  %5952 = vmatpush1.msra.mxu0 0.0
  %5953 = vmatprep.subr.mxu0 0.0
  %5954 = vmatpush1.msra.mxu0 0.0
  %5955 = vmatprep.subr.mxu0 0.0
  %5956 = vmatpush1.msra.mxu0 0.0
  %5957 = vmatprep.subr.mxu0 0.0
  %5958 = vmatpush1.msra.mxu0 0.0
  %5959 = vmatprep.subr.mxu0 0.0
  %5960 = vmatpush1.msra.mxu0 0.0
  %5961 = vmatprep.subr.mxu0 0.0
  %5962 = vmatpush1.msra.mxu0 0.0
  %5963 = vmatprep.subr.mxu0 0.0
  %5964 = vmatpush1.msra.mxu0 0.0
  %5965 = vmatprep.subr.mxu0 0.0
  %5966 = vmatpush1.msra.mxu0 0.0
  %5967 = vmatprep.subr.mxu0 0.0
  %5968 = vmatpush1.msra.mxu0 0.0
  %5969 = vmatprep.subr.mxu0 0.0
  %5970 = vmatpush1.msra.mxu0 0.0
  %5971 = vmatprep.subr.mxu0 0.0
  %5972 = vmatpush1.msra.mxu0 0.0
  %5973 = vmatprep.subr.mxu0 0.0
  %5974 = vmatpush1.msra.mxu0 0.0
  %5975 = vmatprep.subr.mxu0 0.0
  %5976 = vmatpush1.msra.mxu0 0.0
  %5977 = vmatprep.subr.mxu0 0.0
  %5978 = vmatpush1.msra.mxu0 0.0
  %5979 = vmatprep.subr.mxu0 0.0
  %5980 = vmatpush1.msra.mxu0 0.0
  %5981 = vmatprep.subr.mxu0 0.0
  %5982 = vmatpush1.msra.mxu0 0.0
  %5983 = vmatprep.subr.mxu0 0.0
  %5984 = vmatpush1.msra.mxu0 0.0
  %5985 = vmatprep.subr.mxu0 0.0
  %5986 = vmatpush1.msra.mxu0 0.0
  %5987 = vmatprep.subr.mxu0 0.0
  %5988 = vmatpush1.msra.mxu0 0.0
  %5989 = vmatprep.subr.mxu0 0.0
  %5990 = vmatpush1.msra.mxu0 0.0
  %5991 = vmatprep.subr.mxu0 0.0
  %5992 = vmatpush1.msra.mxu0 0.0
  %5993 = vmatprep.subr.mxu0 0.0
  %5994 = vmatpush1.msra.mxu0 0.0
  %5995 = vmatprep.subr.mxu0 0.0
  %5996 = vmatpush1.msra.mxu0 0.0
  %5997 = vmatprep.subr.mxu0 0.0
  %5998 = vmatpush1.msra.mxu0 0.0
  %5999 = vmatprep.mubr.f32.mxu0 0.0
  %6000 = vmatmul.mubr.f32.gmra.mrb[0].mxu0 %v3757
  %v6001 = vpop.f32.mrb[0].mxu0
  %v6002 = vadd.f32 0.0, %v6001
  %v6003 = vpop.f32.mrb[0].mxu0
  %6004 = vdwg.mxu0
  %v6005 = vsel %vm235, %v5430, 0
  %6007 = vmatprep.subr.mxu0 0.0
  %6008 = vmatpush1.msra.mxu0 %v6005
  %6009 = vmatprep.subr.mxu0 0.0
  %6010 = vmatpush1.msra.mxu0 0.0
  %6011 = vmatprep.subr.mxu0 0.0
  %6012 = vmatpush1.msra.mxu0 0.0
  %6013 = vmatprep.subr.mxu0 0.0
  %6014 = vmatpush1.msra.mxu0 0.0
  %6015 = vmatprep.subr.mxu0 0.0
  %6016 = vmatpush1.msra.mxu0 0.0
  %6017 = vmatprep.subr.mxu0 0.0
  %6018 = vmatpush1.msra.mxu0 0.0
  %6019 = vmatprep.subr.mxu0 0.0
  %6020 = vmatpush1.msra.mxu0 0.0
  %6021 = vmatprep.subr.mxu0 0.0
  %6022 = vmatpush1.msra.mxu0 0.0
  %6023 = vmatprep.subr.mxu0 0.0
  %6024 = vmatpush1.msra.mxu0 0.0
  %6025 = vmatprep.subr.mxu0 0.0
  %6026 = vmatpush1.msra.mxu0 0.0
  %6027 = vmatprep.subr.mxu0 0.0
  %6028 = vmatpush1.msra.mxu0 0.0
  %6029 = vmatprep.subr.mxu0 0.0
  %6030 = vmatpush1.msra.mxu0 0.0
  %6031 = vmatprep.subr.mxu0 0.0
  %6032 = vmatpush1.msra.mxu0 0.0
  %6033 = vmatprep.subr.mxu0 0.0
  %6034 = vmatpush1.msra.mxu0 0.0
  %6035 = vmatprep.subr.mxu0 0.0
  %6036 = vmatpush1.msra.mxu0 0.0
  %6037 = vmatprep.subr.mxu0 0.0
  %6038 = vmatpush1.msra.mxu0 0.0
  %6039 = vmatprep.subr.mxu0 0.0
  %6040 = vmatpush1.msra.mxu0 0.0
  %6041 = vmatprep.subr.mxu0 0.0
  %6042 = vmatpush1.msra.mxu0 0.0
  %6043 = vmatprep.subr.mxu0 0.0
  %6044 = vmatpush1.msra.mxu0 0.0
  %6045 = vmatprep.subr.mxu0 0.0
  %6046 = vmatpush1.msra.mxu0 0.0
  %6047 = vmatprep.subr.mxu0 0.0
  %6048 = vmatpush1.msra.mxu0 0.0
  %6049 = vmatprep.subr.mxu0 0.0
  %6050 = vmatpush1.msra.mxu0 0.0
  %6051 = vmatprep.subr.mxu0 0.0
  %6052 = vmatpush1.msra.mxu0 0.0
  %6053 = vmatprep.subr.mxu0 0.0
  %6054 = vmatpush1.msra.mxu0 0.0
  %6055 = vmatprep.subr.mxu0 0.0
  %6056 = vmatpush1.msra.mxu0 0.0
  %6057 = vmatprep.subr.mxu0 0.0
  %6058 = vmatpush1.msra.mxu0 0.0
  %6059 = vmatprep.subr.mxu0 0.0
  %6060 = vmatpush1.msra.mxu0 0.0
  %6061 = vmatprep.subr.mxu0 0.0
  %6062 = vmatpush1.msra.mxu0 0.0
  %6063 = vmatprep.subr.mxu0 0.0
  %6064 = vmatpush1.msra.mxu0 0.0
  %6065 = vmatprep.subr.mxu0 0.0
  %6066 = vmatpush1.msra.mxu0 0.0
  %6067 = vmatprep.subr.mxu0 0.0
  %6068 = vmatpush1.msra.mxu0 0.0
  %6069 = vmatprep.subr.mxu0 0.0
  %6070 = vmatpush1.msra.mxu0 0.0
  %6071 = vmatprep.mubr.f32.mxu0 0.0
  %6072 = vmatmul.mubr.f32.gmra.mrb[0].mxu0 %v3830
  %v6073 = vpop.f32.mrb[0].mxu0
  %v6074 = vadd.f32 %v6002, %v6073
  %v6075 = vpop.f32.mrb[0].mxu0
  %6076 = vdwg.mxu0
  %v6077 = vmul.f32 %v3921, %v6074
  %v6079 = vsel %vm497, %v6077, 0
  %6081 = vmatprep.subr.mxu0 0.0
  %6082 = vmatpush1.msra.mxu0 %v6079
  %6083 = vmatprep.subr.mxu0 0.0
  %6084 = vmatpush1.msra.mxu0 0.0
  %6085 = vmatprep.subr.mxu0 0.0
  %6086 = vmatpush1.msra.mxu0 0.0
  %6087 = vmatprep.subr.mxu0 0.0
  %6088 = vmatpush1.msra.mxu0 0.0
  %6089 = vmatprep.subr.mxu0 0.0
  %6090 = vmatpush1.msra.mxu0 0.0
  %6091 = vmatprep.subr.mxu0 0.0
  %6092 = vmatpush1.msra.mxu0 0.0
  %6093 = vmatprep.subr.mxu0 0.0
  %6094 = vmatpush1.msra.mxu0 0.0
  %6095 = vmatprep.subr.mxu0 0.0
  %6096 = vmatpush1.msra.mxu0 0.0
  %6097 = vmatprep.subr.mxu0 0.0
  %6098 = vmatpush1.msra.mxu0 0.0
  %6099 = vmatprep.subr.mxu0 0.0
  %6100 = vmatpush1.msra.mxu0 0.0
  %6101 = vmatprep.subr.mxu0 0.0
  %6102 = vmatpush1.msra.mxu0 0.0
  %6103 = vmatprep.subr.mxu0 0.0
  %6104 = vmatpush1.msra.mxu0 0.0
  %6105 = vmatprep.subr.mxu0 0.0
  %6106 = vmatpush1.msra.mxu0 0.0
  %6107 = vmatprep.subr.mxu0 0.0
  %6108 = vmatpush1.msra.mxu0 0.0
  %6109 = vmatprep.subr.mxu0 0.0
  %6110 = vmatpush1.msra.mxu0 0.0
  %6111 = vmatprep.subr.mxu0 0.0
  %6112 = vmatpush1.msra.mxu0 0.0
  %6113 = vmatprep.subr.mxu0 0.0
  %6114 = vmatpush1.msra.mxu0 0.0
  %6115 = vmatprep.subr.mxu0 0.0
  %6116 = vmatpush1.msra.mxu0 0.0
  %6117 = vmatprep.subr.mxu0 0.0
  %6118 = vmatpush1.msra.mxu0 0.0
  %6119 = vmatprep.subr.mxu0 0.0
  %6120 = vmatpush1.msra.mxu0 0.0
  %6121 = vmatprep.subr.mxu0 0.0
  %6122 = vmatpush1.msra.mxu0 0.0
  %6123 = vmatprep.subr.mxu0 0.0
  %6124 = vmatpush1.msra.mxu0 0.0
  %6125 = vmatprep.subr.mxu0 0.0
  %6126 = vmatpush1.msra.mxu0 0.0
  %6127 = vmatprep.subr.mxu0 0.0
  %6128 = vmatpush1.msra.mxu0 0.0
  %6129 = vmatprep.subr.mxu0 0.0
  %6130 = vmatpush1.msra.mxu0 0.0
  %6131 = vmatprep.subr.mxu0 0.0
  %6132 = vmatpush1.msra.mxu0 0.0
  %6133 = vmatprep.subr.mxu0 0.0
  %6134 = vmatpush1.msra.mxu0 0.0
  %6135 = vmatprep.subr.mxu0 0.0
  %6136 = vmatpush1.msra.mxu0 0.0
  %6137 = vmatprep.subr.mxu0 0.0
  %6138 = vmatpush1.msra.mxu0 0.0
  %6139 = vmatprep.subr.mxu0 0.0
  %6140 = vmatpush1.msra.mxu0 0.0
  %6141 = vmatprep.subr.mxu0 0.0
  %6142 = vmatpush1.msra.mxu0 0.0
  %6143 = vmatprep.subr.mxu0 0.0
  %6144 = vmatpush1.msra.mxu0 0.0
  %6145 = vmatprep.mubr.f32.mxu0 0.0
  %6146 = vmatmul.mubr.f32.gmra.mrb[0].mxu0 %v3930
  %v6147 = vpop.f32.mrb[0].mxu0
  %v6148 = vadd.f32 %v5430, %v6147
  %v6149 = vpop.f32.mrb[0].mxu0
  %6150 = vdwg.mxu0
  %v6151 = vmul.f32 %v6148, %v4007
  %v6152 = vsel %vm1671, %v6151, 0.0
  %v6153 = vrot.slane %v6152, 4
  %v6154 = vadd.f32 %v6152, %v6153
  %v6155 = vrot.slane %v6154, 2
  %v6156 = vadd.f32 %v6154, %v6155
  %v6157 = vrot.slane %v6156, 1
  %v6158 = vadd.f32 %v6156, %v6157
  %v6159 = vmul.f32 %v6158, 0.33333334
  %v6160 = vadd.f32 %v5442, %v6159
  %v6161 = vadd.f32 %v3116, %v4005
  %s6162 = scalar_lea.vmem %s5, 32
  %v6163 = vld [vmem:[%s6162] sm:$0xff]
  %v6164 = vld [vmem:[%s6162 + $0x8] sm:$0x3f]
  %s6165 = scalar_lea.vmem %s6, 32
  %v6166 = vld [vmem:[%s6165] sm:$0xff]
  %v6167 = vld [vmem:[%s6165 + $0x8] sm:$0x3f]
  %s6168 = scalar_lea.vmem %s7, 32
  %v6169 = vld [vmem:[%s6168] sm:$0xff]
  %v6170 = vld [vmem:[%s6168 + $0x8] sm:$0x3f]
  %s6171 = scalar_lea.vmem %s9, 64
  %v6172 = vld [vmem:[%s6171] sm:$0xff]
  %v6173 = vld [vmem:[%s6171 + $0x8] sm:$0xff]
  %v6174 = vld [vmem:[%s6171 + $0x10] sm:$0xff]
  %v6175 = vld [vmem:[%s6171 + $0x18] sm:$0xff]
  %s6176 = scalar_lea.vmem %s11, 16
  %v6177 = vld [vmem:[%s6176] sm:$0x3f]
  %s6178 = scalar_lea.vmem %s12, 16
  %v6179 = vld [vmem:[%s6178] sm:$0x3f]
  %s6180 = scalar_lea.vmem %s14, 8
  %v6181 = vld [vmem:[%s6180] sm:$0x7]
  %v6183 = vsel %vm89, %v6161, 0
  %6185 = vmatprep.subr.mxu0 0.0
  %6186 = vmatpush1.msra.mxu0 %v55
  %6187 = vmatprep.subr.mxu0 0.0
  %6188 = vmatpush1.msra.mxu0 %v56
  %6189 = vmatprep.subr.mxu0 0.0
  %6190 = vmatpush1.msra.mxu0 0.0
  %6191 = vmatprep.subr.mxu0 0.0
  %6192 = vmatpush1.msra.mxu0 0.0
  %6193 = vmatprep.subr.mxu0 0.0
  %6194 = vmatpush1.msra.mxu0 0.0
  %6195 = vmatprep.subr.mxu0 0.0
  %6196 = vmatpush1.msra.mxu0 0.0
  %6197 = vmatprep.subr.mxu0 0.0
  %6198 = vmatpush1.msra.mxu0 0.0
  %6199 = vmatprep.subr.mxu0 0.0
  %6200 = vmatpush1.msra.mxu0 0.0
  %6201 = vmatprep.subr.mxu0 0.0
  %6202 = vmatpush1.msra.mxu0 0.0
  %6203 = vmatprep.subr.mxu0 0.0
  %6204 = vmatpush1.msra.mxu0 0.0
  %6205 = vmatprep.subr.mxu0 0.0
  %6206 = vmatpush1.msra.mxu0 0.0
  %6207 = vmatprep.subr.mxu0 0.0
  %6208 = vmatpush1.msra.mxu0 0.0
  %6209 = vmatprep.subr.mxu0 0.0
  %6210 = vmatpush1.msra.mxu0 0.0
  %6211 = vmatprep.subr.mxu0 0.0
  %6212 = vmatpush1.msra.mxu0 0.0
  %6213 = vmatprep.subr.mxu0 0.0
  %6214 = vmatpush1.msra.mxu0 0.0
  %6215 = vmatprep.subr.mxu0 0.0
  %6216 = vmatpush1.msra.mxu0 0.0
  %6217 = vmatprep.subr.mxu0 0.0
  %6218 = vmatpush1.msra.mxu0 0.0
  %6219 = vmatprep.subr.mxu0 0.0
  %6220 = vmatpush1.msra.mxu0 0.0
  %6221 = vmatprep.subr.mxu0 0.0
  %6222 = vmatpush1.msra.mxu0 0.0
  %6223 = vmatprep.subr.mxu0 0.0
  %6224 = vmatpush1.msra.mxu0 0.0
  %6225 = vmatprep.subr.mxu0 0.0
  %6226 = vmatpush1.msra.mxu0 0.0
  %6227 = vmatprep.subr.mxu0 0.0
  %6228 = vmatpush1.msra.mxu0 0.0
  %6229 = vmatprep.subr.mxu0 0.0
  %6230 = vmatpush1.msra.mxu0 0.0
  %6231 = vmatprep.subr.mxu0 0.0
  %6232 = vmatpush1.msra.mxu0 0.0
  %6233 = vmatprep.subr.mxu0 0.0
  %6234 = vmatpush1.msra.mxu0 0.0
  %6235 = vmatprep.subr.mxu0 0.0
  %6236 = vmatpush1.msra.mxu0 0.0
  %6237 = vmatprep.subr.mxu0 0.0
  %6238 = vmatpush1.msra.mxu0 0.0
  %6239 = vmatprep.subr.mxu0 0.0
  %6240 = vmatpush1.msra.mxu0 0.0
  %6241 = vmatprep.subr.mxu0 0.0
  %6242 = vmatpush1.msra.mxu0 0.0
  %6243 = vmatprep.subr.mxu0 0.0
  %6244 = vmatpush1.msra.mxu0 0.0
  %6245 = vmatprep.subr.mxu0 0.0
  %6246 = vmatpush1.msra.mxu0 0.0
  %6247 = vmatprep.subr.mxu0 0.0
  %6248 = vmatpush1.msra.mxu0 0.0
  %6249 = vmatprep.mubr.f32.mxu0 0.0
  %6250 = vmatmul.mubr.f32.gmra.mrb[0].mxu0 %v6183
  %v6251 = vpop.f32.mrb[0].mxu0
  %v6252 = vadd.f32 0.0, %v6251
  %v6253 = vpop.f32.mrb[0].mxu0
  %6254 = vdwg.mxu0
  %6255 = vmatprep.subr.mxu0 0.0
  %6256 = vmatpush1.msra.mxu0 %v57
  %6257 = vmatprep.subr.mxu0 0.0
  %6258 = vmatpush1.msra.mxu0 %v58
  %6259 = vmatprep.subr.mxu0 0.0
  %6260 = vmatpush1.msra.mxu0 0.0
  %6261 = vmatprep.subr.mxu0 0.0
  %6262 = vmatpush1.msra.mxu0 0.0
  %6263 = vmatprep.subr.mxu0 0.0
  %6264 = vmatpush1.msra.mxu0 0.0
  %6265 = vmatprep.subr.mxu0 0.0
  %6266 = vmatpush1.msra.mxu0 0.0
  %6267 = vmatprep.subr.mxu0 0.0
  %6268 = vmatpush1.msra.mxu0 0.0
  %6269 = vmatprep.subr.mxu0 0.0
  %6270 = vmatpush1.msra.mxu0 0.0
  %6271 = vmatprep.subr.mxu0 0.0
  %6272 = vmatpush1.msra.mxu0 0.0
  %6273 = vmatprep.subr.mxu0 0.0
  %6274 = vmatpush1.msra.mxu0 0.0
  %6275 = vmatprep.subr.mxu0 0.0
  %6276 = vmatpush1.msra.mxu0 0.0
  %6277 = vmatprep.subr.mxu0 0.0
  %6278 = vmatpush1.msra.mxu0 0.0
  %6279 = vmatprep.subr.mxu0 0.0
  %6280 = vmatpush1.msra.mxu0 0.0
  %6281 = vmatprep.subr.mxu0 0.0
  %6282 = vmatpush1.msra.mxu0 0.0
  %6283 = vmatprep.subr.mxu0 0.0
  %6284 = vmatpush1.msra.mxu0 0.0
  %6285 = vmatprep.subr.mxu0 0.0
  %6286 = vmatpush1.msra.mxu0 0.0
  %6287 = vmatprep.subr.mxu0 0.0
  %6288 = vmatpush1.msra.mxu0 0.0
  %6289 = vmatprep.subr.mxu0 0.0
  %6290 = vmatpush1.msra.mxu0 0.0
  %6291 = vmatprep.subr.mxu0 0.0
  %6292 = vmatpush1.msra.mxu0 0.0
  %6293 = vmatprep.subr.mxu0 0.0
  %6294 = vmatpush1.msra.mxu0 0.0
  %6295 = vmatprep.subr.mxu0 0.0
  %6296 = vmatpush1.msra.mxu0 0.0
  %6297 = vmatprep.subr.mxu0 0.0
  %6298 = vmatpush1.msra.mxu0 0.0
  %6299 = vmatprep.subr.mxu0 0.0
  %6300 = vmatpush1.msra.mxu0 0.0
  %6301 = vmatprep.subr.mxu0 0.0
  %6302 = vmatpush1.msra.mxu0 0.0
  %6303 = vmatprep.subr.mxu0 0.0
  %6304 = vmatpush1.msra.mxu0 0.0
  %6305 = vmatprep.subr.mxu0 0.0
  %6306 = vmatpush1.msra.mxu0 0.0
  %6307 = vmatprep.subr.mxu0 0.0
  %6308 = vmatpush1.msra.mxu0 0.0
  %6309 = vmatprep.subr.mxu0 0.0
  %6310 = vmatpush1.msra.mxu0 0.0
  %6311 = vmatprep.subr.mxu0 0.0
  %6312 = vmatpush1.msra.mxu0 0.0
  %6313 = vmatprep.subr.mxu0 0.0
  %6314 = vmatpush1.msra.mxu0 0.0
  %6315 = vmatprep.subr.mxu0 0.0
  %6316 = vmatpush1.msra.mxu0 0.0
  %6317 = vmatprep.subr.mxu0 0.0
  %6318 = vmatpush1.msra.mxu0 0.0
  %6319 = vmatprep.mubr.f32.mxu0 0.0
  %6320 = vmatmul.mubr.f32.gmra.mrb[0].mxu0 %v6183
  %v6321 = vpop.f32.mrb[0].mxu0
  %v6322 = vadd.f32 0.0, %v6321
  %v6323 = vpop.f32.mrb[0].mxu0
  %6324 = vdwg.mxu0
  %v6325 = vsub.f32 %v6252, %v6322
  %v6326 = vmul.f32 %v6325, %v6325
  %v6327 = vsel %vm235, %v6326, 0.0
  %v6328 = vrot.slane %v6327, 4
  %v6329 = vadd.f32 %v6327, %v6328
  %v6330 = vrot.slane %v6329, 2
  %v6331 = vadd.f32 %v6329, %v6330
  %v6332 = vrot.slane %v6331, 1
  %v6333 = vadd.f32 %v6331, %v6332
  %v6335 = vsel %vm243, %v6166, 0
  %v6338 = vsel %vm243, %v6167, 0
  %v6341 = vsel %vm235, %v6322, 0
  %6343 = vmatprep.subr.mxu0 0.0
  %6344 = vmatpush1.msra.mxu0 %v6341
  %6345 = vmatprep.subr.mxu0 0.0
  %6346 = vmatpush1.msra.mxu0 0.0
  %6347 = vmatprep.subr.mxu0 0.0
  %6348 = vmatpush1.msra.mxu0 0.0
  %6349 = vmatprep.subr.mxu0 0.0
  %6350 = vmatpush1.msra.mxu0 0.0
  %6351 = vmatprep.subr.mxu0 0.0
  %6352 = vmatpush1.msra.mxu0 0.0
  %6353 = vmatprep.subr.mxu0 0.0
  %6354 = vmatpush1.msra.mxu0 0.0
  %6355 = vmatprep.subr.mxu0 0.0
  %6356 = vmatpush1.msra.mxu0 0.0
  %6357 = vmatprep.subr.mxu0 0.0
  %6358 = vmatpush1.msra.mxu0 0.0
  %6359 = vmatprep.subr.mxu0 0.0
  %6360 = vmatpush1.msra.mxu0 0.0
  %6361 = vmatprep.subr.mxu0 0.0
  %6362 = vmatpush1.msra.mxu0 0.0
  %6363 = vmatprep.subr.mxu0 0.0
  %6364 = vmatpush1.msra.mxu0 0.0
  %6365 = vmatprep.subr.mxu0 0.0
  %6366 = vmatpush1.msra.mxu0 0.0
  %6367 = vmatprep.subr.mxu0 0.0
  %6368 = vmatpush1.msra.mxu0 0.0
  %6369 = vmatprep.subr.mxu0 0.0
  %6370 = vmatpush1.msra.mxu0 0.0
  %6371 = vmatprep.subr.mxu0 0.0
  %6372 = vmatpush1.msra.mxu0 0.0
  %6373 = vmatprep.subr.mxu0 0.0
  %6374 = vmatpush1.msra.mxu0 0.0
  %6375 = vmatprep.subr.mxu0 0.0
  %6376 = vmatpush1.msra.mxu0 0.0
  %6377 = vmatprep.subr.mxu0 0.0
  %6378 = vmatpush1.msra.mxu0 0.0
  %6379 = vmatprep.subr.mxu0 0.0
  %6380 = vmatpush1.msra.mxu0 0.0
  %6381 = vmatprep.subr.mxu0 0.0
  %6382 = vmatpush1.msra.mxu0 0.0
  %6383 = vmatprep.subr.mxu0 0.0
  %6384 = vmatpush1.msra.mxu0 0.0
  %6385 = vmatprep.subr.mxu0 0.0
  %6386 = vmatpush1.msra.mxu0 0.0
  %6387 = vmatprep.subr.mxu0 0.0
  %6388 = vmatpush1.msra.mxu0 0.0
  %6389 = vmatprep.subr.mxu0 0.0
  %6390 = vmatpush1.msra.mxu0 0.0
  %6391 = vmatprep.subr.mxu0 0.0
  %6392 = vmatpush1.msra.mxu0 0.0
  %6393 = vmatprep.subr.mxu0 0.0
  %6394 = vmatpush1.msra.mxu0 0.0
  %6395 = vmatprep.subr.mxu0 0.0
  %6396 = vmatpush1.msra.mxu0 0.0
  %6397 = vmatprep.subr.mxu0 0.0
  %6398 = vmatpush1.msra.mxu0 0.0
  %6399 = vmatprep.subr.mxu0 0.0
  %6400 = vmatpush1.msra.mxu0 0.0
  %6401 = vmatprep.subr.mxu0 0.0
  %6402 = vmatpush1.msra.mxu0 0.0
  %6403 = vmatprep.subr.mxu0 0.0
  %6404 = vmatpush1.msra.mxu0 0.0
  %6405 = vmatprep.subr.mxu0 0.0
  %6406 = vmatpush1.msra.mxu0 0.0
  %6407 = vmatprep.mubr.f32.mxu0 0.0
  %6408 = vmatmul.mubr.f32.gmra.mrb[0].mxu0 %v6335
  %v6409 = vpop.f32.mrb[0].mxu0
  %v6410 = vadd.f32 0.0, %v6409
  %v6411 = vpop.f32.mrb[0].mxu0
  %6412 = vmatprep.mubr.f32.mxu0 0.0
  %6413 = vmatmul.mubr.f32.gmra.mrb[0].mxu0 %v6338
  %v6414 = vpop.f32.mrb[0].mxu0
  %v6415 = vadd.f32 0.0, %v6414
  %v6416 = vpop.f32.mrb[0].mxu0
  %6417 = vdwg.mxu0
  %v6419 = vsel %vm243, %v6163, 0
  %v6422 = vsel %vm243, %v6164, 0
  %v6425 = vsel %vm235, %v6252, 0
  %6427 = vmatprep.subr.mxu0 0.0
  %6428 = vmatpush1.msra.mxu0 %v6425
  %6429 = vmatprep.subr.mxu0 0.0
  %6430 = vmatpush1.msra.mxu0 0.0
  %6431 = vmatprep.subr.mxu0 0.0
  %6432 = vmatpush1.msra.mxu0 0.0
  %6433 = vmatprep.subr.mxu0 0.0
  %6434 = vmatpush1.msra.mxu0 0.0
  %6435 = vmatprep.subr.mxu0 0.0
  %6436 = vmatpush1.msra.mxu0 0.0
  %6437 = vmatprep.subr.mxu0 0.0
  %6438 = vmatpush1.msra.mxu0 0.0
  %6439 = vmatprep.subr.mxu0 0.0
  %6440 = vmatpush1.msra.mxu0 0.0
  %6441 = vmatprep.subr.mxu0 0.0
  %6442 = vmatpush1.msra.mxu0 0.0
  %6443 = vmatprep.subr.mxu0 0.0
  %6444 = vmatpush1.msra.mxu0 0.0
  %6445 = vmatprep.subr.mxu0 0.0
  %6446 = vmatpush1.msra.mxu0 0.0
  %6447 = vmatprep.subr.mxu0 0.0
  %6448 = vmatpush1.msra.mxu0 0.0
  %6449 = vmatprep.subr.mxu0 0.0
  %6450 = vmatpush1.msra.mxu0 0.0
  %6451 = vmatprep.subr.mxu0 0.0
  %6452 = vmatpush1.msra.mxu0 0.0
  %6453 = vmatprep.subr.mxu0 0.0
  %6454 = vmatpush1.msra.mxu0 0.0
  %6455 = vmatprep.subr.mxu0 0.0
  %6456 = vmatpush1.msra.mxu0 0.0
  %6457 = vmatprep.subr.mxu0 0.0
  %6458 = vmatpush1.msra.mxu0 0.0
  %6459 = vmatprep.subr.mxu0 0.0
  %6460 = vmatpush1.msra.mxu0 0.0
  %6461 = vmatprep.subr.mxu0 0.0
  %6462 = vmatpush1.msra.mxu0 0.0
  %6463 = vmatprep.subr.mxu0 0.0
  %6464 = vmatpush1.msra.mxu0 0.0
  %6465 = vmatprep.subr.mxu0 0.0
  %6466 = vmatpush1.msra.mxu0 0.0
  %6467 = vmatprep.subr.mxu0 0.0
  %6468 = vmatpush1.msra.mxu0 0.0
  %6469 = vmatprep.subr.mxu0 0.0
  %6470 = vmatpush1.msra.mxu0 0.0
  %6471 = vmatprep.subr.mxu0 0.0
  %6472 = vmatpush1.msra.mxu0 0.0
  %6473 = vmatprep.subr.mxu0 0.0
  %6474 = vmatpush1.msra.mxu0 0.0
  %6475 = vmatprep.subr.mxu0 0.0
  %6476 = vmatpush1.msra.mxu0 0.0
  %6477 = vmatprep.subr.mxu0 0.0
  %6478 = vmatpush1.msra.mxu0 0.0
  %6479 = vmatprep.subr.mxu0 0.0
  %6480 = vmatpush1.msra.mxu0 0.0
  %6481 = vmatprep.subr.mxu0 0.0
  %6482 = vmatpush1.msra.mxu0 0.0
  %6483 = vmatprep.subr.mxu0 0.0
  %6484 = vmatpush1.msra.mxu0 0.0
  %6485 = vmatprep.subr.mxu0 0.0
  %6486 = vmatpush1.msra.mxu0 0.0
  %6487 = vmatprep.subr.mxu0 0.0
  %6488 = vmatpush1.msra.mxu0 0.0
  %6489 = vmatprep.subr.mxu0 0.0
  %6490 = vmatpush1.msra.mxu0 0.0
  %6491 = vmatprep.mubr.f32.mxu0 0.0
  %6492 = vmatmul.mubr.f32.gmra.mrb[0].mxu0 %v6419
  %v6493 = vpop.f32.mrb[0].mxu0
  %v6494 = vadd.f32 %v6410, %v6493
  %v6495 = vpop.f32.mrb[0].mxu0
  %6496 = vmatprep.mubr.f32.mxu0 0.0
  %6497 = vmatmul.mubr.f32.gmra.mrb[0].mxu0 %v6422
  %v6498 = vpop.f32.mrb[0].mxu0
  %v6499 = vadd.f32 %v6415, %v6498
  %v6500 = vpop.f32.mrb[0].mxu0
  %6501 = vdwg.mxu0
  %6503 = vset.pattern.permute.xlu0 0
  %6504 = vperm.xlu0 %6503, %v6169
  %v6505 = vpop.permute.xlu0 %6504
  %6508 = vset.pattern.permute.xlu0 0
  %6509 = vperm.xlu0 %6508, %v6170
  %v6510 = vpop.permute.xlu0 %6509
  %v6512 = vmul.f32 %v6505, %v6333
  %v6513 = vmul.f32 %v6510, %v6333
  %v6514 = vadd.f32 %v6494, %v6512
  %v6515 = vadd.f32 %v6499, %v6513
  %s6516 = scalar_lea.vmem %s8, 32
  %v6517 = vld [vmem:[%s6516] sm:$0xff]
  %v6518 = vld [vmem:[%s6516 + $0x8] sm:$0x3f]
  %6520 = vset.pattern.permute.xlu0 0
  %6521 = vperm.xlu0 %6520, %v6517
  %v6522 = vpop.permute.xlu0 %6521
  %6525 = vset.pattern.permute.xlu0 0
  %6526 = vperm.xlu0 %6525, %v6518
  %v6527 = vpop.permute.xlu0 %6526
  %v6529 = vadd.f32 %v6514, %v6522
  %v6530 = vadd.f32 %v6515, %v6527
  %v6531 = vsub.f32 0.0, %v6529
  %v6532 = vsub.f32 0.0, %v6530
  %v6533 = vmul.f32 %v6531, 1.442695
  %v6534 = vpow.pop %v6533
  %v6535 = vmul.f32 %v6532, 1.442695
  %v6536 = vpow.pop %v6535
  %v6537 = vadd.f32 %v6534, 1.0
  %v6538 = vadd.f32 %v6536, 1.0
  %v6539 = vrcp.pop %v6537
  %v6540 = vrcp.pop %v6538
  %v6541 = vmul.f32 %v6529, %v6539
  %v6542 = vmul.f32 %v6530, %v6540
  %v6543 = vsub.f32 1.0, %v6539
  %v6544 = vsub.f32 1.0, %v6540
  %v6545 = vmul.f32 %v6529, %v6543
  %v6546 = vmul.f32 %v6530, %v6544
  %v6547 = vadd.f32 %v6545, 1.0
  %v6548 = vadd.f32 %v6546, 1.0
  %v6549 = vmul.f32 %v6539, %v6547
  %v6550 = vmul.f32 %v6540, %v6548
  %s6551 = scalar_lea.vmem %s10, 64
  %v6552 = vld [vmem:[%s6551] sm:$0xff]
  %v6553 = vld [vmem:[%s6551 + $0x8] sm:$0xff]
  %v6554 = vld [vmem:[%s6551 + $0x10] sm:$0xff]
  %v6555 = vld [vmem:[%s6551 + $0x18] sm:$0xff]
  %6557 = vset.pattern.permute.xlu0 0
  %6558 = vperm.xlu0 %6557, %v6552
  %v6559 = vpop.permute.xlu0 %6558
  %6562 = vset.pattern.permute.xlu0 0
  %6563 = vperm.xlu0 %6562, %v6553
  %v6564 = vpop.permute.xlu0 %6563
  %6567 = vset.pattern.permute.xlu0 0
  %6568 = vperm.xlu0 %6567, %v6554
  %v6569 = vpop.permute.xlu0 %6568
  %6572 = vset.pattern.permute.xlu0 0
  %6573 = vperm.xlu0 %6572, %v6555
  %v6574 = vpop.permute.xlu0 %6573
  %v6577 = vsel %vm484, %v6172, 0
  %v6580 = vsel %vm484, %v6173, 0
  %v6583 = vsel %vm484, %v6174, 0
  %v6586 = vsel %vm484, %v6175, 0
  %v6589 = vsel %vm497, %v6542, 0
  %6591 = vmatprep.subr.mxu0 0.0
  %6592 = vmatpush1.msra.mxu0 %v6541
  %6593 = vmatprep.subr.mxu0 0.0
  %6594 = vmatpush1.msra.mxu0 %v6589
  %6595 = vmatprep.subr.mxu0 0.0
  %6596 = vmatpush1.msra.mxu0 0.0
  %6597 = vmatprep.subr.mxu0 0.0
  %6598 = vmatpush1.msra.mxu0 0.0
  %6599 = vmatprep.subr.mxu0 0.0
  %6600 = vmatpush1.msra.mxu0 0.0
  %6601 = vmatprep.subr.mxu0 0.0
  %6602 = vmatpush1.msra.mxu0 0.0
  %6603 = vmatprep.subr.mxu0 0.0
  %6604 = vmatpush1.msra.mxu0 0.0
  %6605 = vmatprep.subr.mxu0 0.0
  %6606 = vmatpush1.msra.mxu0 0.0
  %6607 = vmatprep.subr.mxu0 0.0
  %6608 = vmatpush1.msra.mxu0 0.0
  %6609 = vmatprep.subr.mxu0 0.0
  %6610 = vmatpush1.msra.mxu0 0.0
  %6611 = vmatprep.subr.mxu0 0.0
  %6612 = vmatpush1.msra.mxu0 0.0
  %6613 = vmatprep.subr.mxu0 0.0
  %6614 = vmatpush1.msra.mxu0 0.0
  %6615 = vmatprep.subr.mxu0 0.0
  %6616 = vmatpush1.msra.mxu0 0.0
  %6617 = vmatprep.subr.mxu0 0.0
  %6618 = vmatpush1.msra.mxu0 0.0
  %6619 = vmatprep.subr.mxu0 0.0
  %6620 = vmatpush1.msra.mxu0 0.0
  %6621 = vmatprep.subr.mxu0 0.0
  %6622 = vmatpush1.msra.mxu0 0.0
  %6623 = vmatprep.subr.mxu0 0.0
  %6624 = vmatpush1.msra.mxu0 0.0
  %6625 = vmatprep.subr.mxu0 0.0
  %6626 = vmatpush1.msra.mxu0 0.0
  %6627 = vmatprep.subr.mxu0 0.0
  %6628 = vmatpush1.msra.mxu0 0.0
  %6629 = vmatprep.subr.mxu0 0.0
  %6630 = vmatpush1.msra.mxu0 0.0
  %6631 = vmatprep.subr.mxu0 0.0
  %6632 = vmatpush1.msra.mxu0 0.0
  %6633 = vmatprep.subr.mxu0 0.0
  %6634 = vmatpush1.msra.mxu0 0.0
  %6635 = vmatprep.subr.mxu0 0.0
  %6636 = vmatpush1.msra.mxu0 0.0
  %6637 = vmatprep.subr.mxu0 0.0
  %6638 = vmatpush1.msra.mxu0 0.0
  %6639 = vmatprep.subr.mxu0 0.0
  %6640 = vmatpush1.msra.mxu0 0.0
  %6641 = vmatprep.subr.mxu0 0.0
  %6642 = vmatpush1.msra.mxu0 0.0
  %6643 = vmatprep.subr.mxu0 0.0
  %6644 = vmatpush1.msra.mxu0 0.0
  %6645 = vmatprep.subr.mxu0 0.0
  %6646 = vmatpush1.msra.mxu0 0.0
  %6647 = vmatprep.subr.mxu0 0.0
  %6648 = vmatpush1.msra.mxu0 0.0
  %6649 = vmatprep.subr.mxu0 0.0
  %6650 = vmatpush1.msra.mxu0 0.0
  %6651 = vmatprep.subr.mxu0 0.0
  %6652 = vmatpush1.msra.mxu0 0.0
  %6653 = vmatprep.subr.mxu0 0.0
  %6654 = vmatpush1.msra.mxu0 0.0
  %6655 = vmatprep.mubr.f32.mxu0 0.0
  %6656 = vmatmul.mubr.f32.gmra.mrb[0].mxu0 %v6577
  %v6657 = vpop.f32.mrb[0].mxu0
  %v6658 = vadd.f32 %v6559, %v6657
  %v6659 = vpop.f32.mrb[0].mxu0
  %6660 = vmatprep.mubr.f32.mxu0 0.0
  %6661 = vmatmul.mubr.f32.gmra.mrb[0].mxu0 %v6580
  %v6662 = vpop.f32.mrb[0].mxu0
  %v6663 = vadd.f32 %v6564, %v6662
  %v6664 = vpop.f32.mrb[0].mxu0
  %6665 = vmatprep.mubr.f32.mxu0 0.0
  %6666 = vmatmul.mubr.f32.gmra.mrb[0].mxu0 %v6583
  %v6667 = vpop.f32.mrb[0].mxu0
  %v6668 = vadd.f32 %v6569, %v6667
  %v6669 = vpop.f32.mrb[0].mxu0
  %6670 = vmatprep.mubr.f32.mxu0 0.0
  %6671 = vmatmul.mubr.f32.gmra.mrb[0].mxu0 %v6586
  %v6672 = vpop.f32.mrb[0].mxu0
  %v6673 = vadd.f32 %v6574, %v6672
  %v6674 = vpop.f32.mrb[0].mxu0
  %6675 = vdwg.mxu0
  %v6676 = vsub.f32 0.0, %v6658
  %v6677 = vsub.f32 0.0, %v6663
  %v6678 = vsub.f32 0.0, %v6668
  %v6679 = vsub.f32 0.0, %v6673
  %v6680 = vmul.f32 %v6676, 1.442695
  %v6681 = vpow.pop %v6680
  %v6682 = vmul.f32 %v6677, 1.442695
  %v6683 = vpow.pop %v6682
  %v6684 = vmul.f32 %v6678, 1.442695
  %v6685 = vpow.pop %v6684
  %v6686 = vmul.f32 %v6679, 1.442695
  %v6687 = vpow.pop %v6686
  %v6688 = vadd.f32 %v6681, 1.0
  %v6689 = vadd.f32 %v6683, 1.0
  %v6690 = vadd.f32 %v6685, 1.0
  %v6691 = vadd.f32 %v6687, 1.0
  %v6692 = vrcp.pop %v6688
  %v6693 = vrcp.pop %v6689
  %v6694 = vrcp.pop %v6690
  %v6695 = vrcp.pop %v6691
  %v6696 = vmul.f32 %v6658, %v6692
  %v6697 = vmul.f32 %v6663, %v6693
  %v6698 = vmul.f32 %v6668, %v6694
  %v6699 = vmul.f32 %v6673, %v6695
  %v6700 = vsub.f32 1.0, %v6692
  %v6701 = vsub.f32 1.0, %v6693
  %v6702 = vsub.f32 1.0, %v6694
  %v6703 = vsub.f32 1.0, %v6695
  %v6704 = vmul.f32 %v6658, %v6700
  %v6705 = vmul.f32 %v6663, %v6701
  %v6706 = vmul.f32 %v6668, %v6702
  %v6707 = vmul.f32 %v6673, %v6703
  %v6708 = vadd.f32 %v6704, 1.0
  %v6709 = vadd.f32 %v6705, 1.0
  %v6710 = vadd.f32 %v6706, 1.0
  %v6711 = vadd.f32 %v6707, 1.0
  %v6712 = vmul.f32 %v6692, %v6708
  %v6713 = vmul.f32 %v6693, %v6709
  %v6714 = vmul.f32 %v6694, %v6710
  %v6715 = vmul.f32 %v6695, %v6711
  %6716 = vmatprep.subr.mxu0 0.0
  %6717 = vmatpush1.msra.mxu0 %v59
  %6718 = vmatprep.subr.mxu0 0.0
  %6719 = vmatpush1.msra.mxu0 %v60
  %6720 = vmatprep.subr.mxu0 0.0
  %6721 = vmatpush1.msra.mxu0 %v61
  %6722 = vmatprep.subr.mxu0 0.0
  %6723 = vmatpush1.msra.mxu0 %v62
  %6724 = vmatprep.subr.mxu0 0.0
  %6725 = vmatpush1.msra.mxu0 %v63
  %6726 = vmatprep.subr.mxu0 0.0
  %6727 = vmatpush1.msra.mxu0 %v64
  %6728 = vmatprep.subr.mxu0 0.0
  %6729 = vmatpush1.msra.mxu0 %v65
  %6730 = vmatprep.subr.mxu0 0.0
  %6731 = vmatpush1.msra.mxu0 %v66
  %6732 = vmatprep.subr.mxu0 0.0
  %6733 = vmatpush1.msra.mxu0 %v67
  %6734 = vmatprep.subr.mxu0 0.0
  %6735 = vmatpush1.msra.mxu0 %v68
  %6736 = vmatprep.subr.mxu0 0.0
  %6737 = vmatpush1.msra.mxu0 %v69
  %6738 = vmatprep.subr.mxu0 0.0
  %6739 = vmatpush1.msra.mxu0 %v70
  %6740 = vmatprep.subr.mxu0 0.0
  %6741 = vmatpush1.msra.mxu0 %v71
  %6742 = vmatprep.subr.mxu0 0.0
  %6743 = vmatpush1.msra.mxu0 %v72
  %6744 = vmatprep.subr.mxu0 0.0
  %6745 = vmatpush1.msra.mxu0 %v73
  %6746 = vmatprep.subr.mxu0 0.0
  %6747 = vmatpush1.msra.mxu0 %v74
  %6748 = vmatprep.subr.mxu0 0.0
  %6749 = vmatpush1.msra.mxu0 0.0
  %6750 = vmatprep.subr.mxu0 0.0
  %6751 = vmatpush1.msra.mxu0 0.0
  %6752 = vmatprep.subr.mxu0 0.0
  %6753 = vmatpush1.msra.mxu0 0.0
  %6754 = vmatprep.subr.mxu0 0.0
  %6755 = vmatpush1.msra.mxu0 0.0
  %6756 = vmatprep.subr.mxu0 0.0
  %6757 = vmatpush1.msra.mxu0 0.0
  %6758 = vmatprep.subr.mxu0 0.0
  %6759 = vmatpush1.msra.mxu0 0.0
  %6760 = vmatprep.subr.mxu0 0.0
  %6761 = vmatpush1.msra.mxu0 0.0
  %6762 = vmatprep.subr.mxu0 0.0
  %6763 = vmatpush1.msra.mxu0 0.0
  %6764 = vmatprep.subr.mxu0 0.0
  %6765 = vmatpush1.msra.mxu0 0.0
  %6766 = vmatprep.subr.mxu0 0.0
  %6767 = vmatpush1.msra.mxu0 0.0
  %6768 = vmatprep.subr.mxu0 0.0
  %6769 = vmatpush1.msra.mxu0 0.0
  %6770 = vmatprep.subr.mxu0 0.0
  %6771 = vmatpush1.msra.mxu0 0.0
  %6772 = vmatprep.subr.mxu0 0.0
  %6773 = vmatpush1.msra.mxu0 0.0
  %6774 = vmatprep.subr.mxu0 0.0
  %6775 = vmatpush1.msra.mxu0 0.0
  %6776 = vmatprep.subr.mxu0 0.0
  %6777 = vmatpush1.msra.mxu0 0.0
  %6778 = vmatprep.subr.mxu0 0.0
  %6779 = vmatpush1.msra.mxu0 0.0
  %6780 = vmatprep.mubr.f32.mxu0 0.0
  %6781 = vmatmul.mubr.f32.gmra.mrb[0].mxu0 %v6696
  %v6782 = vpop.f32.mrb[0].mxu0
  %v6783 = vadd.f32 0.0, %v6782
  %v6784 = vpop.f32.mrb[0].mxu0
  %6785 = vmatprep.mubr.f32.mxu0 0.0
  %6786 = vmatmul.mubr.f32.gmra.mrb[0].mxu0 %v6697
  %v6787 = vpop.f32.mrb[0].mxu0
  %v6788 = vadd.f32 0.0, %v6787
  %v6789 = vpop.f32.mrb[0].mxu0
  %6790 = vmatprep.mubr.f32.mxu0 0.0
  %6791 = vmatmul.mubr.f32.gmra.mrb[0].mxu0 %v6698
  %v6792 = vpop.f32.mrb[0].mxu0
  %v6793 = vadd.f32 0.0, %v6792
  %v6794 = vpop.f32.mrb[0].mxu0
  %6795 = vmatprep.mubr.f32.mxu0 0.0
  %6796 = vmatmul.mubr.f32.gmra.mrb[0].mxu0 %v6699
  %v6797 = vpop.f32.mrb[0].mxu0
  %v6798 = vadd.f32 0.0, %v6797
  %v6799 = vpop.f32.mrb[0].mxu0
  %6800 = vdwg.mxu0
  %v6802 = vsel %vm711, %v6179, 0
  %6804 = vmatprep.subr.mxu0 0.0
  %6805 = vmatpush1.msra.mxu0 %v6783
  %6806 = vmatprep.subr.mxu0 0.0
  %6807 = vmatpush1.msra.mxu0 %v6788
  %6808 = vmatprep.subr.mxu0 0.0
  %6809 = vmatpush1.msra.mxu0 %v6793
  %6810 = vmatprep.subr.mxu0 0.0
  %6811 = vmatpush1.msra.mxu0 %v6798
  %6812 = vmatprep.subr.mxu0 0.0
  %6813 = vmatpush1.msra.mxu0 0.0
  %6814 = vmatprep.subr.mxu0 0.0
  %6815 = vmatpush1.msra.mxu0 0.0
  %6816 = vmatprep.subr.mxu0 0.0
  %6817 = vmatpush1.msra.mxu0 0.0
  %6818 = vmatprep.subr.mxu0 0.0
  %6819 = vmatpush1.msra.mxu0 0.0
  %6820 = vmatprep.subr.mxu0 0.0
  %6821 = vmatpush1.msra.mxu0 0.0
  %6822 = vmatprep.subr.mxu0 0.0
  %6823 = vmatpush1.msra.mxu0 0.0
  %6824 = vmatprep.subr.mxu0 0.0
  %6825 = vmatpush1.msra.mxu0 0.0
  %6826 = vmatprep.subr.mxu0 0.0
  %6827 = vmatpush1.msra.mxu0 0.0
  %6828 = vmatprep.subr.mxu0 0.0
  %6829 = vmatpush1.msra.mxu0 0.0
  %6830 = vmatprep.subr.mxu0 0.0
  %6831 = vmatpush1.msra.mxu0 0.0
  %6832 = vmatprep.subr.mxu0 0.0
  %6833 = vmatpush1.msra.mxu0 0.0
  %6834 = vmatprep.subr.mxu0 0.0
  %6835 = vmatpush1.msra.mxu0 0.0
  %6836 = vmatprep.subr.mxu0 0.0
  %6837 = vmatpush1.msra.mxu0 0.0
  %6838 = vmatprep.subr.mxu0 0.0
  %6839 = vmatpush1.msra.mxu0 0.0
  %6840 = vmatprep.subr.mxu0 0.0
  %6841 = vmatpush1.msra.mxu0 0.0
  %6842 = vmatprep.subr.mxu0 0.0
  %6843 = vmatpush1.msra.mxu0 0.0
  %6844 = vmatprep.subr.mxu0 0.0
  %6845 = vmatpush1.msra.mxu0 0.0
  %6846 = vmatprep.subr.mxu0 0.0
  %6847 = vmatpush1.msra.mxu0 0.0
  %6848 = vmatprep.subr.mxu0 0.0
  %6849 = vmatpush1.msra.mxu0 0.0
  %6850 = vmatprep.subr.mxu0 0.0
  %6851 = vmatpush1.msra.mxu0 0.0
  %6852 = vmatprep.subr.mxu0 0.0
  %6853 = vmatpush1.msra.mxu0 0.0
  %6854 = vmatprep.subr.mxu0 0.0
  %6855 = vmatpush1.msra.mxu0 0.0
  %6856 = vmatprep.subr.mxu0 0.0
  %6857 = vmatpush1.msra.mxu0 0.0
  %6858 = vmatprep.subr.mxu0 0.0
  %6859 = vmatpush1.msra.mxu0 0.0
  %6860 = vmatprep.subr.mxu0 0.0
  %6861 = vmatpush1.msra.mxu0 0.0
  %6862 = vmatprep.subr.mxu0 0.0
  %6863 = vmatpush1.msra.mxu0 0.0
  %6864 = vmatprep.subr.mxu0 0.0
  %6865 = vmatpush1.msra.mxu0 0.0
  %6866 = vmatprep.subr.mxu0 0.0
  %6867 = vmatpush1.msra.mxu0 0.0
  %6868 = vmatprep.mubr.f32.mxu0 0.0
  %6869 = vmatmul.mubr.f32.gmra.mrb[0].mxu0 %v6802
  %v6870 = vpop.f32.mrb[0].mxu0
  %v6871 = vadd.f32 0.0, %v6870
  %v6872 = vpop.f32.mrb[0].mxu0
  %6873 = vdwg.mxu0
  %v6875 = vsel %vm243, %v6177, 0
  %v6877 = vsel %vm235, %v6161, 0
  %6879 = vmatprep.subr.mxu0 0.0
  %6880 = vmatpush1.msra.mxu0 %v6877
  %6881 = vmatprep.subr.mxu0 0.0
  %6882 = vmatpush1.msra.mxu0 0.0
  %6883 = vmatprep.subr.mxu0 0.0
  %6884 = vmatpush1.msra.mxu0 0.0
  %6885 = vmatprep.subr.mxu0 0.0
  %6886 = vmatpush1.msra.mxu0 0.0
  %6887 = vmatprep.subr.mxu0 0.0
  %6888 = vmatpush1.msra.mxu0 0.0
  %6889 = vmatprep.subr.mxu0 0.0
  %6890 = vmatpush1.msra.mxu0 0.0
  %6891 = vmatprep.subr.mxu0 0.0
  %6892 = vmatpush1.msra.mxu0 0.0
  %6893 = vmatprep.subr.mxu0 0.0
  %6894 = vmatpush1.msra.mxu0 0.0
  %6895 = vmatprep.subr.mxu0 0.0
  %6896 = vmatpush1.msra.mxu0 0.0
  %6897 = vmatprep.subr.mxu0 0.0
  %6898 = vmatpush1.msra.mxu0 0.0
  %6899 = vmatprep.subr.mxu0 0.0
  %6900 = vmatpush1.msra.mxu0 0.0
  %6901 = vmatprep.subr.mxu0 0.0
  %6902 = vmatpush1.msra.mxu0 0.0
  %6903 = vmatprep.subr.mxu0 0.0
  %6904 = vmatpush1.msra.mxu0 0.0
  %6905 = vmatprep.subr.mxu0 0.0
  %6906 = vmatpush1.msra.mxu0 0.0
  %6907 = vmatprep.subr.mxu0 0.0
  %6908 = vmatpush1.msra.mxu0 0.0
  %6909 = vmatprep.subr.mxu0 0.0
  %6910 = vmatpush1.msra.mxu0 0.0
  %6911 = vmatprep.subr.mxu0 0.0
  %6912 = vmatpush1.msra.mxu0 0.0
  %6913 = vmatprep.subr.mxu0 0.0
  %6914 = vmatpush1.msra.mxu0 0.0
  %6915 = vmatprep.subr.mxu0 0.0
  %6916 = vmatpush1.msra.mxu0 0.0
  %6917 = vmatprep.subr.mxu0 0.0
  %6918 = vmatpush1.msra.mxu0 0.0
  %6919 = vmatprep.subr.mxu0 0.0
  %6920 = vmatpush1.msra.mxu0 0.0
  %6921 = vmatprep.subr.mxu0 0.0
  %6922 = vmatpush1.msra.mxu0 0.0
  %6923 = vmatprep.subr.mxu0 0.0
  %6924 = vmatpush1.msra.mxu0 0.0
  %6925 = vmatprep.subr.mxu0 0.0
  %6926 = vmatpush1.msra.mxu0 0.0
  %6927 = vmatprep.subr.mxu0 0.0
  %6928 = vmatpush1.msra.mxu0 0.0
  %6929 = vmatprep.subr.mxu0 0.0
  %6930 = vmatpush1.msra.mxu0 0.0
  %6931 = vmatprep.subr.mxu0 0.0
  %6932 = vmatpush1.msra.mxu0 0.0
  %6933 = vmatprep.subr.mxu0 0.0
  %6934 = vmatpush1.msra.mxu0 0.0
  %6935 = vmatprep.subr.mxu0 0.0
  %6936 = vmatpush1.msra.mxu0 0.0
  %6937 = vmatprep.subr.mxu0 0.0
  %6938 = vmatpush1.msra.mxu0 0.0
  %6939 = vmatprep.subr.mxu0 0.0
  %6940 = vmatpush1.msra.mxu0 0.0
  %6941 = vmatprep.subr.mxu0 0.0
  %6942 = vmatpush1.msra.mxu0 0.0
  %6943 = vmatprep.mubr.f32.mxu0 0.0
  %6944 = vmatmul.mubr.f32.gmra.mrb[0].mxu0 %v6875
  %v6945 = vpop.f32.mrb[0].mxu0
  %v6946 = vadd.f32 %v6871, %v6945
  %v6947 = vpop.f32.mrb[0].mxu0
  %6948 = vdwg.mxu0
  %s6949 = scalar_lea.vmem %s13, 16
  %v6950 = vld [vmem:[%s6949] sm:$0x3f]
  %6952 = vset.pattern.permute.xlu0 0
  %6953 = vperm.xlu0 %6952, %v6950
  %v6954 = vpop.permute.xlu0 %6953
  %v6956 = vadd.f32 %v6946, %v6954
  %v6957 = vsub.f32 0.0, %v6956
  %v6958 = vmul.f32 %v6957, 1.442695
  %v6959 = vpow.pop %v6958
  %v6960 = vadd.f32 %v6959, 1.0
  %v6961 = vrcp.pop %v6960
  %v6962 = vmul.f32 %v6956, %v6961
  %v6963 = vsub.f32 1.0, %v6961
  %v6964 = vmul.f32 %v6956, %v6963
  %v6965 = vadd.f32 %v6964, 1.0
  %v6966 = vmul.f32 %v6961, %v6965
  %s6967 = scalar_lea.vmem %s15, 8
  %v6968 = vld [vmem:[%s6967] sm:$0x7]
  %6970 = vset.pattern.permute.xlu0 0
  %6971 = vperm.xlu0 %6970, %v6968
  %v6972 = vpop.permute.xlu0 %6971
  %v6975 = vsel %vm883, %v6181, 0
  %v6978 = vsel %vm497, %v6962, 0
  %6980 = vmatprep.subr.mxu0 0.0
  %6981 = vmatpush1.msra.mxu0 %v6978
  %6982 = vmatprep.subr.mxu0 0.0
  %6983 = vmatpush1.msra.mxu0 0.0
  %6984 = vmatprep.subr.mxu0 0.0
  %6985 = vmatpush1.msra.mxu0 0.0
  %6986 = vmatprep.subr.mxu0 0.0
  %6987 = vmatpush1.msra.mxu0 0.0
  %6988 = vmatprep.subr.mxu0 0.0
  %6989 = vmatpush1.msra.mxu0 0.0
  %6990 = vmatprep.subr.mxu0 0.0
  %6991 = vmatpush1.msra.mxu0 0.0
  %6992 = vmatprep.subr.mxu0 0.0
  %6993 = vmatpush1.msra.mxu0 0.0
  %6994 = vmatprep.subr.mxu0 0.0
  %6995 = vmatpush1.msra.mxu0 0.0
  %6996 = vmatprep.subr.mxu0 0.0
  %6997 = vmatpush1.msra.mxu0 0.0
  %6998 = vmatprep.subr.mxu0 0.0
  %6999 = vmatpush1.msra.mxu0 0.0
  %7000 = vmatprep.subr.mxu0 0.0
  %7001 = vmatpush1.msra.mxu0 0.0
  %7002 = vmatprep.subr.mxu0 0.0
  %7003 = vmatpush1.msra.mxu0 0.0
  %7004 = vmatprep.subr.mxu0 0.0
  %7005 = vmatpush1.msra.mxu0 0.0
  %7006 = vmatprep.subr.mxu0 0.0
  %7007 = vmatpush1.msra.mxu0 0.0
  %7008 = vmatprep.subr.mxu0 0.0
  %7009 = vmatpush1.msra.mxu0 0.0
  %7010 = vmatprep.subr.mxu0 0.0
  %7011 = vmatpush1.msra.mxu0 0.0
  %7012 = vmatprep.subr.mxu0 0.0
  %7013 = vmatpush1.msra.mxu0 0.0
  %7014 = vmatprep.subr.mxu0 0.0
  %7015 = vmatpush1.msra.mxu0 0.0
  %7016 = vmatprep.subr.mxu0 0.0
  %7017 = vmatpush1.msra.mxu0 0.0
  %7018 = vmatprep.subr.mxu0 0.0
  %7019 = vmatpush1.msra.mxu0 0.0
  %7020 = vmatprep.subr.mxu0 0.0
  %7021 = vmatpush1.msra.mxu0 0.0
  %7022 = vmatprep.subr.mxu0 0.0
  %7023 = vmatpush1.msra.mxu0 0.0
  %7024 = vmatprep.subr.mxu0 0.0
  %7025 = vmatpush1.msra.mxu0 0.0
  %7026 = vmatprep.subr.mxu0 0.0
  %7027 = vmatpush1.msra.mxu0 0.0
  %7028 = vmatprep.subr.mxu0 0.0
  %7029 = vmatpush1.msra.mxu0 0.0
  %7030 = vmatprep.subr.mxu0 0.0
  %7031 = vmatpush1.msra.mxu0 0.0
  %7032 = vmatprep.subr.mxu0 0.0
  %7033 = vmatpush1.msra.mxu0 0.0
  %7034 = vmatprep.subr.mxu0 0.0
  %7035 = vmatpush1.msra.mxu0 0.0
  %7036 = vmatprep.subr.mxu0 0.0
  %7037 = vmatpush1.msra.mxu0 0.0
  %7038 = vmatprep.subr.mxu0 0.0
  %7039 = vmatpush1.msra.mxu0 0.0
  %7040 = vmatprep.subr.mxu0 0.0
  %7041 = vmatpush1.msra.mxu0 0.0
  %7042 = vmatprep.subr.mxu0 0.0
  %7043 = vmatpush1.msra.mxu0 0.0
  %7044 = vmatprep.mubr.f32.mxu0 0.0
  %7045 = vmatmul.mubr.f32.gmra.mrb[0].mxu0 %v6975
  %v7046 = vpop.f32.mrb[0].mxu0
  %v7047 = vadd.f32 %v6972, %v7046
  %v7048 = vpop.f32.mrb[0].mxu0
  %7049 = vdwg.mxu0
  %v7050 = vadd.f32 %v7047, %v6161
  %s7051 = scalar_lea.vmem %s1, 8
  %v7052 = vld [vmem:[%s7051] sm:$0x7]
  %v7054 = vsel %vm89, %v7052, 0
  %7056 = vmatprep.subr.mxu0 0.0
  %7057 = vmatpush1.msra.mxu0 %v55
  %7058 = vmatprep.subr.mxu0 0.0
  %7059 = vmatpush1.msra.mxu0 %v56
  %7060 = vmatprep.subr.mxu0 0.0
  %7061 = vmatpush1.msra.mxu0 0.0
  %7062 = vmatprep.subr.mxu0 0.0
  %7063 = vmatpush1.msra.mxu0 0.0
  %7064 = vmatprep.subr.mxu0 0.0
  %7065 = vmatpush1.msra.mxu0 0.0
  %7066 = vmatprep.subr.mxu0 0.0
  %7067 = vmatpush1.msra.mxu0 0.0
  %7068 = vmatprep.subr.mxu0 0.0
  %7069 = vmatpush1.msra.mxu0 0.0
  %7070 = vmatprep.subr.mxu0 0.0
  %7071 = vmatpush1.msra.mxu0 0.0
  %7072 = vmatprep.subr.mxu0 0.0
  %7073 = vmatpush1.msra.mxu0 0.0
  %7074 = vmatprep.subr.mxu0 0.0
  %7075 = vmatpush1.msra.mxu0 0.0
  %7076 = vmatprep.subr.mxu0 0.0
  %7077 = vmatpush1.msra.mxu0 0.0
  %7078 = vmatprep.subr.mxu0 0.0
  %7079 = vmatpush1.msra.mxu0 0.0
  %7080 = vmatprep.subr.mxu0 0.0
  %7081 = vmatpush1.msra.mxu0 0.0
  %7082 = vmatprep.subr.mxu0 0.0
  %7083 = vmatpush1.msra.mxu0 0.0
  %7084 = vmatprep.subr.mxu0 0.0
  %7085 = vmatpush1.msra.mxu0 0.0
  %7086 = vmatprep.subr.mxu0 0.0
  %7087 = vmatpush1.msra.mxu0 0.0
  %7088 = vmatprep.subr.mxu0 0.0
  %7089 = vmatpush1.msra.mxu0 0.0
  %7090 = vmatprep.subr.mxu0 0.0
  %7091 = vmatpush1.msra.mxu0 0.0
  %7092 = vmatprep.subr.mxu0 0.0
  %7093 = vmatpush1.msra.mxu0 0.0
  %7094 = vmatprep.subr.mxu0 0.0
  %7095 = vmatpush1.msra.mxu0 0.0
  %7096 = vmatprep.subr.mxu0 0.0
  %7097 = vmatpush1.msra.mxu0 0.0
  %7098 = vmatprep.subr.mxu0 0.0
  %7099 = vmatpush1.msra.mxu0 0.0
  %7100 = vmatprep.subr.mxu0 0.0
  %7101 = vmatpush1.msra.mxu0 0.0
  %7102 = vmatprep.subr.mxu0 0.0
  %7103 = vmatpush1.msra.mxu0 0.0
  %7104 = vmatprep.subr.mxu0 0.0
  %7105 = vmatpush1.msra.mxu0 0.0
  %7106 = vmatprep.subr.mxu0 0.0
  %7107 = vmatpush1.msra.mxu0 0.0
  %7108 = vmatprep.subr.mxu0 0.0
  %7109 = vmatpush1.msra.mxu0 0.0
  %7110 = vmatprep.subr.mxu0 0.0
  %7111 = vmatpush1.msra.mxu0 0.0
  %7112 = vmatprep.subr.mxu0 0.0
  %7113 = vmatpush1.msra.mxu0 0.0
  %7114 = vmatprep.subr.mxu0 0.0
  %7115 = vmatpush1.msra.mxu0 0.0
  %7116 = vmatprep.subr.mxu0 0.0
  %7117 = vmatpush1.msra.mxu0 0.0
  %7118 = vmatprep.subr.mxu0 0.0
  %7119 = vmatpush1.msra.mxu0 0.0
  %7120 = vmatprep.mubr.f32.mxu0 0.0
  %7121 = vmatmul.mubr.f32.gmra.mrb[0].mxu0 %v7054
  %v7122 = vpop.f32.mrb[0].mxu0
  %v7123 = vadd.f32 0.0, %v7122
  %v7124 = vpop.f32.mrb[0].mxu0
  %7125 = vdwg.mxu0
  %7126 = vmatprep.subr.mxu0 0.0
  %7127 = vmatpush1.msra.mxu0 %v57
  %7128 = vmatprep.subr.mxu0 0.0
  %7129 = vmatpush1.msra.mxu0 %v58
  %7130 = vmatprep.subr.mxu0 0.0
  %7131 = vmatpush1.msra.mxu0 0.0
  %7132 = vmatprep.subr.mxu0 0.0
  %7133 = vmatpush1.msra.mxu0 0.0
  %7134 = vmatprep.subr.mxu0 0.0
  %7135 = vmatpush1.msra.mxu0 0.0
  %7136 = vmatprep.subr.mxu0 0.0
  %7137 = vmatpush1.msra.mxu0 0.0
  %7138 = vmatprep.subr.mxu0 0.0
  %7139 = vmatpush1.msra.mxu0 0.0
  %7140 = vmatprep.subr.mxu0 0.0
  %7141 = vmatpush1.msra.mxu0 0.0
  %7142 = vmatprep.subr.mxu0 0.0
  %7143 = vmatpush1.msra.mxu0 0.0
  %7144 = vmatprep.subr.mxu0 0.0
  %7145 = vmatpush1.msra.mxu0 0.0
  %7146 = vmatprep.subr.mxu0 0.0
  %7147 = vmatpush1.msra.mxu0 0.0
  %7148 = vmatprep.subr.mxu0 0.0
  %7149 = vmatpush1.msra.mxu0 0.0
  %7150 = vmatprep.subr.mxu0 0.0
  %7151 = vmatpush1.msra.mxu0 0.0
  %7152 = vmatprep.subr.mxu0 0.0
  %7153 = vmatpush1.msra.mxu0 0.0
  %7154 = vmatprep.subr.mxu0 0.0
  %7155 = vmatpush1.msra.mxu0 0.0
  %7156 = vmatprep.subr.mxu0 0.0
  %7157 = vmatpush1.msra.mxu0 0.0
  %7158 = vmatprep.subr.mxu0 0.0
  %7159 = vmatpush1.msra.mxu0 0.0
  %7160 = vmatprep.subr.mxu0 0.0
  %7161 = vmatpush1.msra.mxu0 0.0
  %7162 = vmatprep.subr.mxu0 0.0
  %7163 = vmatpush1.msra.mxu0 0.0
  %7164 = vmatprep.subr.mxu0 0.0
  %7165 = vmatpush1.msra.mxu0 0.0
  %7166 = vmatprep.subr.mxu0 0.0
  %7167 = vmatpush1.msra.mxu0 0.0
  %7168 = vmatprep.subr.mxu0 0.0
  %7169 = vmatpush1.msra.mxu0 0.0
  %7170 = vmatprep.subr.mxu0 0.0
  %7171 = vmatpush1.msra.mxu0 0.0
  %7172 = vmatprep.subr.mxu0 0.0
  %7173 = vmatpush1.msra.mxu0 0.0
  %7174 = vmatprep.subr.mxu0 0.0
  %7175 = vmatpush1.msra.mxu0 0.0
  %7176 = vmatprep.subr.mxu0 0.0
  %7177 = vmatpush1.msra.mxu0 0.0
  %7178 = vmatprep.subr.mxu0 0.0
  %7179 = vmatpush1.msra.mxu0 0.0
  %7180 = vmatprep.subr.mxu0 0.0
  %7181 = vmatpush1.msra.mxu0 0.0
  %7182 = vmatprep.subr.mxu0 0.0
  %7183 = vmatpush1.msra.mxu0 0.0
  %7184 = vmatprep.subr.mxu0 0.0
  %7185 = vmatpush1.msra.mxu0 0.0
  %7186 = vmatprep.subr.mxu0 0.0
  %7187 = vmatpush1.msra.mxu0 0.0
  %7188 = vmatprep.subr.mxu0 0.0
  %7189 = vmatpush1.msra.mxu0 0.0
  %7190 = vmatprep.mubr.f32.mxu0 0.0
  %7191 = vmatmul.mubr.f32.gmra.mrb[0].mxu0 %v7054
  %v7192 = vpop.f32.mrb[0].mxu0
  %v7193 = vadd.f32 0.0, %v7192
  %v7194 = vpop.f32.mrb[0].mxu0
  %7195 = vdwg.mxu0
  %v7196 = vsub.f32 %v7123, %v7193
  %v7197 = vmul.f32 %v6325, %v7196
  %v7198 = vsel %vm235, %v7197, 0.0
  %v7199 = vrot.slane %v7198, 4
  %v7200 = vadd.f32 %v7198, %v7199
  %v7201 = vrot.slane %v7200, 2
  %v7202 = vadd.f32 %v7200, %v7201
  %v7203 = vrot.slane %v7202, 1
  %v7204 = vadd.f32 %v7202, %v7203
  %v7205 = vmul.f32 %v7204, 2.0
  %v7207 = vsel %vm235, %v7193, 0
  %7209 = vmatprep.subr.mxu0 0.0
  %7210 = vmatpush1.msra.mxu0 %v7207
  %7211 = vmatprep.subr.mxu0 0.0
  %7212 = vmatpush1.msra.mxu0 0.0
  %7213 = vmatprep.subr.mxu0 0.0
  %7214 = vmatpush1.msra.mxu0 0.0
  %7215 = vmatprep.subr.mxu0 0.0
  %7216 = vmatpush1.msra.mxu0 0.0
  %7217 = vmatprep.subr.mxu0 0.0
  %7218 = vmatpush1.msra.mxu0 0.0
  %7219 = vmatprep.subr.mxu0 0.0
  %7220 = vmatpush1.msra.mxu0 0.0
  %7221 = vmatprep.subr.mxu0 0.0
  %7222 = vmatpush1.msra.mxu0 0.0
  %7223 = vmatprep.subr.mxu0 0.0
  %7224 = vmatpush1.msra.mxu0 0.0
  %7225 = vmatprep.subr.mxu0 0.0
  %7226 = vmatpush1.msra.mxu0 0.0
  %7227 = vmatprep.subr.mxu0 0.0
  %7228 = vmatpush1.msra.mxu0 0.0
  %7229 = vmatprep.subr.mxu0 0.0
  %7230 = vmatpush1.msra.mxu0 0.0
  %7231 = vmatprep.subr.mxu0 0.0
  %7232 = vmatpush1.msra.mxu0 0.0
  %7233 = vmatprep.subr.mxu0 0.0
  %7234 = vmatpush1.msra.mxu0 0.0
  %7235 = vmatprep.subr.mxu0 0.0
  %7236 = vmatpush1.msra.mxu0 0.0
  %7237 = vmatprep.subr.mxu0 0.0
  %7238 = vmatpush1.msra.mxu0 0.0
  %7239 = vmatprep.subr.mxu0 0.0
  %7240 = vmatpush1.msra.mxu0 0.0
  %7241 = vmatprep.subr.mxu0 0.0
  %7242 = vmatpush1.msra.mxu0 0.0
  %7243 = vmatprep.subr.mxu0 0.0
  %7244 = vmatpush1.msra.mxu0 0.0
  %7245 = vmatprep.subr.mxu0 0.0
  %7246 = vmatpush1.msra.mxu0 0.0
  %7247 = vmatprep.subr.mxu0 0.0
  %7248 = vmatpush1.msra.mxu0 0.0
  %7249 = vmatprep.subr.mxu0 0.0
  %7250 = vmatpush1.msra.mxu0 0.0
  %7251 = vmatprep.subr.mxu0 0.0
  %7252 = vmatpush1.msra.mxu0 0.0
  %7253 = vmatprep.subr.mxu0 0.0
  %7254 = vmatpush1.msra.mxu0 0.0
  %7255 = vmatprep.subr.mxu0 0.0
  %7256 = vmatpush1.msra.mxu0 0.0
  %7257 = vmatprep.subr.mxu0 0.0
  %7258 = vmatpush1.msra.mxu0 0.0
  %7259 = vmatprep.subr.mxu0 0.0
  %7260 = vmatpush1.msra.mxu0 0.0
  %7261 = vmatprep.subr.mxu0 0.0
  %7262 = vmatpush1.msra.mxu0 0.0
  %7263 = vmatprep.subr.mxu0 0.0
  %7264 = vmatpush1.msra.mxu0 0.0
  %7265 = vmatprep.subr.mxu0 0.0
  %7266 = vmatpush1.msra.mxu0 0.0
  %7267 = vmatprep.subr.mxu0 0.0
  %7268 = vmatpush1.msra.mxu0 0.0
  %7269 = vmatprep.subr.mxu0 0.0
  %7270 = vmatpush1.msra.mxu0 0.0
  %7271 = vmatprep.subr.mxu0 0.0
  %7272 = vmatpush1.msra.mxu0 0.0
  %7273 = vmatprep.mubr.f32.mxu0 0.0
  %7274 = vmatmul.mubr.f32.gmra.mrb[0].mxu0 %v6335
  %v7275 = vpop.f32.mrb[0].mxu0
  %v7276 = vadd.f32 0.0, %v7275
  %v7277 = vpop.f32.mrb[0].mxu0
  %7278 = vmatprep.mubr.f32.mxu0 0.0
  %7279 = vmatmul.mubr.f32.gmra.mrb[0].mxu0 %v6338
  %v7280 = vpop.f32.mrb[0].mxu0
  %v7281 = vadd.f32 0.0, %v7280
  %v7282 = vpop.f32.mrb[0].mxu0
  %7283 = vdwg.mxu0
  %v7285 = vsel %vm235, %v7123, 0
  %7287 = vmatprep.subr.mxu0 0.0
  %7288 = vmatpush1.msra.mxu0 %v7285
  %7289 = vmatprep.subr.mxu0 0.0
  %7290 = vmatpush1.msra.mxu0 0.0
  %7291 = vmatprep.subr.mxu0 0.0
  %7292 = vmatpush1.msra.mxu0 0.0
  %7293 = vmatprep.subr.mxu0 0.0
  %7294 = vmatpush1.msra.mxu0 0.0
  %7295 = vmatprep.subr.mxu0 0.0
  %7296 = vmatpush1.msra.mxu0 0.0
  %7297 = vmatprep.subr.mxu0 0.0
  %7298 = vmatpush1.msra.mxu0 0.0
  %7299 = vmatprep.subr.mxu0 0.0
  %7300 = vmatpush1.msra.mxu0 0.0
  %7301 = vmatprep.subr.mxu0 0.0
  %7302 = vmatpush1.msra.mxu0 0.0
  %7303 = vmatprep.subr.mxu0 0.0
  %7304 = vmatpush1.msra.mxu0 0.0
  %7305 = vmatprep.subr.mxu0 0.0
  %7306 = vmatpush1.msra.mxu0 0.0
  %7307 = vmatprep.subr.mxu0 0.0
  %7308 = vmatpush1.msra.mxu0 0.0
  %7309 = vmatprep.subr.mxu0 0.0
  %7310 = vmatpush1.msra.mxu0 0.0
  %7311 = vmatprep.subr.mxu0 0.0
  %7312 = vmatpush1.msra.mxu0 0.0
  %7313 = vmatprep.subr.mxu0 0.0
  %7314 = vmatpush1.msra.mxu0 0.0
  %7315 = vmatprep.subr.mxu0 0.0
  %7316 = vmatpush1.msra.mxu0 0.0
  %7317 = vmatprep.subr.mxu0 0.0
  %7318 = vmatpush1.msra.mxu0 0.0
  %7319 = vmatprep.subr.mxu0 0.0
  %7320 = vmatpush1.msra.mxu0 0.0
  %7321 = vmatprep.subr.mxu0 0.0
  %7322 = vmatpush1.msra.mxu0 0.0
  %7323 = vmatprep.subr.mxu0 0.0
  %7324 = vmatpush1.msra.mxu0 0.0
  %7325 = vmatprep.subr.mxu0 0.0
  %7326 = vmatpush1.msra.mxu0 0.0
  %7327 = vmatprep.subr.mxu0 0.0
  %7328 = vmatpush1.msra.mxu0 0.0
  %7329 = vmatprep.subr.mxu0 0.0
  %7330 = vmatpush1.msra.mxu0 0.0
  %7331 = vmatprep.subr.mxu0 0.0
  %7332 = vmatpush1.msra.mxu0 0.0
  %7333 = vmatprep.subr.mxu0 0.0
  %7334 = vmatpush1.msra.mxu0 0.0
  %7335 = vmatprep.subr.mxu0 0.0
  %7336 = vmatpush1.msra.mxu0 0.0
  %7337 = vmatprep.subr.mxu0 0.0
  %7338 = vmatpush1.msra.mxu0 0.0
  %7339 = vmatprep.subr.mxu0 0.0
  %7340 = vmatpush1.msra.mxu0 0.0
  %7341 = vmatprep.subr.mxu0 0.0
  %7342 = vmatpush1.msra.mxu0 0.0
  %7343 = vmatprep.subr.mxu0 0.0
  %7344 = vmatpush1.msra.mxu0 0.0
  %7345 = vmatprep.subr.mxu0 0.0
  %7346 = vmatpush1.msra.mxu0 0.0
  %7347 = vmatprep.subr.mxu0 0.0
  %7348 = vmatpush1.msra.mxu0 0.0
  %7349 = vmatprep.subr.mxu0 0.0
  %7350 = vmatpush1.msra.mxu0 0.0
  %7351 = vmatprep.mubr.f32.mxu0 0.0
  %7352 = vmatmul.mubr.f32.gmra.mrb[0].mxu0 %v6419
  %v7353 = vpop.f32.mrb[0].mxu0
  %v7354 = vadd.f32 %v7276, %v7353
  %v7355 = vpop.f32.mrb[0].mxu0
  %7356 = vmatprep.mubr.f32.mxu0 0.0
  %7357 = vmatmul.mubr.f32.gmra.mrb[0].mxu0 %v6422
  %v7358 = vpop.f32.mrb[0].mxu0
  %v7359 = vadd.f32 %v7281, %v7358
  %v7360 = vpop.f32.mrb[0].mxu0
  %7361 = vdwg.mxu0
  %v7362 = vmul.f32 %v6505, %v7205
  %v7363 = vmul.f32 %v6510, %v7205
  %v7364 = vadd.f32 %v7354, %v7362
  %v7365 = vadd.f32 %v7359, %v7363
  %v7366 = vmul.f32 %v6549, %v7364
  %v7367 = vmul.f32 %v6550, %v7365
  %v7369 = vsel %vm497, %v7367, 0
  %7371 = vmatprep.subr.mxu0 0.0
  %7372 = vmatpush1.msra.mxu0 %v7366
  %7373 = vmatprep.subr.mxu0 0.0
  %7374 = vmatpush1.msra.mxu0 %v7369
  %7375 = vmatprep.subr.mxu0 0.0
  %7376 = vmatpush1.msra.mxu0 0.0
  %7377 = vmatprep.subr.mxu0 0.0
  %7378 = vmatpush1.msra.mxu0 0.0
  %7379 = vmatprep.subr.mxu0 0.0
  %7380 = vmatpush1.msra.mxu0 0.0
  %7381 = vmatprep.subr.mxu0 0.0
  %7382 = vmatpush1.msra.mxu0 0.0
  %7383 = vmatprep.subr.mxu0 0.0
  %7384 = vmatpush1.msra.mxu0 0.0
  %7385 = vmatprep.subr.mxu0 0.0
  %7386 = vmatpush1.msra.mxu0 0.0
  %7387 = vmatprep.subr.mxu0 0.0
  %7388 = vmatpush1.msra.mxu0 0.0
  %7389 = vmatprep.subr.mxu0 0.0
  %7390 = vmatpush1.msra.mxu0 0.0
  %7391 = vmatprep.subr.mxu0 0.0
  %7392 = vmatpush1.msra.mxu0 0.0
  %7393 = vmatprep.subr.mxu0 0.0
  %7394 = vmatpush1.msra.mxu0 0.0
  %7395 = vmatprep.subr.mxu0 0.0
  %7396 = vmatpush1.msra.mxu0 0.0
  %7397 = vmatprep.subr.mxu0 0.0
  %7398 = vmatpush1.msra.mxu0 0.0
  %7399 = vmatprep.subr.mxu0 0.0
  %7400 = vmatpush1.msra.mxu0 0.0
  %7401 = vmatprep.subr.mxu0 0.0
  %7402 = vmatpush1.msra.mxu0 0.0
  %7403 = vmatprep.subr.mxu0 0.0
  %7404 = vmatpush1.msra.mxu0 0.0
  %7405 = vmatprep.subr.mxu0 0.0
  %7406 = vmatpush1.msra.mxu0 0.0
  %7407 = vmatprep.subr.mxu0 0.0
  %7408 = vmatpush1.msra.mxu0 0.0
  %7409 = vmatprep.subr.mxu0 0.0
  %7410 = vmatpush1.msra.mxu0 0.0
  %7411 = vmatprep.subr.mxu0 0.0
  %7412 = vmatpush1.msra.mxu0 0.0
  %7413 = vmatprep.subr.mxu0 0.0
  %7414 = vmatpush1.msra.mxu0 0.0
  %7415 = vmatprep.subr.mxu0 0.0
  %7416 = vmatpush1.msra.mxu0 0.0
  %7417 = vmatprep.subr.mxu0 0.0
  %7418 = vmatpush1.msra.mxu0 0.0
  %7419 = vmatprep.subr.mxu0 0.0
  %7420 = vmatpush1.msra.mxu0 0.0
  %7421 = vmatprep.subr.mxu0 0.0
  %7422 = vmatpush1.msra.mxu0 0.0
  %7423 = vmatprep.subr.mxu0 0.0
  %7424 = vmatpush1.msra.mxu0 0.0
  %7425 = vmatprep.subr.mxu0 0.0
  %7426 = vmatpush1.msra.mxu0 0.0
  %7427 = vmatprep.subr.mxu0 0.0
  %7428 = vmatpush1.msra.mxu0 0.0
  %7429 = vmatprep.subr.mxu0 0.0
  %7430 = vmatpush1.msra.mxu0 0.0
  %7431 = vmatprep.subr.mxu0 0.0
  %7432 = vmatpush1.msra.mxu0 0.0
  %7433 = vmatprep.subr.mxu0 0.0
  %7434 = vmatpush1.msra.mxu0 0.0
  %7435 = vmatprep.mubr.f32.mxu0 0.0
  %7436 = vmatmul.mubr.f32.gmra.mrb[0].mxu0 %v6577
  %v7437 = vpop.f32.mrb[0].mxu0
  %v7438 = vadd.f32 0.0, %v7437
  %v7439 = vpop.f32.mrb[0].mxu0
  %7440 = vmatprep.mubr.f32.mxu0 0.0
  %7441 = vmatmul.mubr.f32.gmra.mrb[0].mxu0 %v6580
  %v7442 = vpop.f32.mrb[0].mxu0
  %v7443 = vadd.f32 0.0, %v7442
  %v7444 = vpop.f32.mrb[0].mxu0
  %7445 = vmatprep.mubr.f32.mxu0 0.0
  %7446 = vmatmul.mubr.f32.gmra.mrb[0].mxu0 %v6583
  %v7447 = vpop.f32.mrb[0].mxu0
  %v7448 = vadd.f32 0.0, %v7447
  %v7449 = vpop.f32.mrb[0].mxu0
  %7450 = vmatprep.mubr.f32.mxu0 0.0
  %7451 = vmatmul.mubr.f32.gmra.mrb[0].mxu0 %v6586
  %v7452 = vpop.f32.mrb[0].mxu0
  %v7453 = vadd.f32 0.0, %v7452
  %v7454 = vpop.f32.mrb[0].mxu0
  %7455 = vdwg.mxu0
  %v7456 = vmul.f32 %v6712, %v7438
  %v7457 = vmul.f32 %v6713, %v7443
  %v7458 = vmul.f32 %v6714, %v7448
  %v7459 = vmul.f32 %v6715, %v7453
  %7460 = vmatprep.subr.mxu0 0.0
  %7461 = vmatpush1.msra.mxu0 %v59
  %7462 = vmatprep.subr.mxu0 0.0
  %7463 = vmatpush1.msra.mxu0 %v60
  %7464 = vmatprep.subr.mxu0 0.0
  %7465 = vmatpush1.msra.mxu0 %v61
  %7466 = vmatprep.subr.mxu0 0.0
  %7467 = vmatpush1.msra.mxu0 %v62
  %7468 = vmatprep.subr.mxu0 0.0
  %7469 = vmatpush1.msra.mxu0 %v63
  %7470 = vmatprep.subr.mxu0 0.0
  %7471 = vmatpush1.msra.mxu0 %v64
  %7472 = vmatprep.subr.mxu0 0.0
  %7473 = vmatpush1.msra.mxu0 %v65
  %7474 = vmatprep.subr.mxu0 0.0
  %7475 = vmatpush1.msra.mxu0 %v66
  %7476 = vmatprep.subr.mxu0 0.0
  %7477 = vmatpush1.msra.mxu0 %v67
  %7478 = vmatprep.subr.mxu0 0.0
  %7479 = vmatpush1.msra.mxu0 %v68
  %7480 = vmatprep.subr.mxu0 0.0
  %7481 = vmatpush1.msra.mxu0 %v69
  %7482 = vmatprep.subr.mxu0 0.0
  %7483 = vmatpush1.msra.mxu0 %v70
  %7484 = vmatprep.subr.mxu0 0.0
  %7485 = vmatpush1.msra.mxu0 %v71
  %7486 = vmatprep.subr.mxu0 0.0
  %7487 = vmatpush1.msra.mxu0 %v72
  %7488 = vmatprep.subr.mxu0 0.0
  %7489 = vmatpush1.msra.mxu0 %v73
  %7490 = vmatprep.subr.mxu0 0.0
  %7491 = vmatpush1.msra.mxu0 %v74
  %7492 = vmatprep.subr.mxu0 0.0
  %7493 = vmatpush1.msra.mxu0 0.0
  %7494 = vmatprep.subr.mxu0 0.0
  %7495 = vmatpush1.msra.mxu0 0.0
  %7496 = vmatprep.subr.mxu0 0.0
  %7497 = vmatpush1.msra.mxu0 0.0
  %7498 = vmatprep.subr.mxu0 0.0
  %7499 = vmatpush1.msra.mxu0 0.0
  %7500 = vmatprep.subr.mxu0 0.0
  %7501 = vmatpush1.msra.mxu0 0.0
  %7502 = vmatprep.subr.mxu0 0.0
  %7503 = vmatpush1.msra.mxu0 0.0
  %7504 = vmatprep.subr.mxu0 0.0
  %7505 = vmatpush1.msra.mxu0 0.0
  %7506 = vmatprep.subr.mxu0 0.0
  %7507 = vmatpush1.msra.mxu0 0.0
  %7508 = vmatprep.subr.mxu0 0.0
  %7509 = vmatpush1.msra.mxu0 0.0
  %7510 = vmatprep.subr.mxu0 0.0
  %7511 = vmatpush1.msra.mxu0 0.0
  %7512 = vmatprep.subr.mxu0 0.0
  %7513 = vmatpush1.msra.mxu0 0.0
  %7514 = vmatprep.subr.mxu0 0.0
  %7515 = vmatpush1.msra.mxu0 0.0
  %7516 = vmatprep.subr.mxu0 0.0
  %7517 = vmatpush1.msra.mxu0 0.0
  %7518 = vmatprep.subr.mxu0 0.0
  %7519 = vmatpush1.msra.mxu0 0.0
  %7520 = vmatprep.subr.mxu0 0.0
  %7521 = vmatpush1.msra.mxu0 0.0
  %7522 = vmatprep.subr.mxu0 0.0
  %7523 = vmatpush1.msra.mxu0 0.0
  %7524 = vmatprep.mubr.f32.mxu0 0.0
  %7525 = vmatmul.mubr.f32.gmra.mrb[0].mxu0 %v7456
  %v7526 = vpop.f32.mrb[0].mxu0
  %v7527 = vadd.f32 0.0, %v7526
  %v7528 = vpop.f32.mrb[0].mxu0
  %7529 = vmatprep.mubr.f32.mxu0 0.0
  %7530 = vmatmul.mubr.f32.gmra.mrb[0].mxu0 %v7457
  %v7531 = vpop.f32.mrb[0].mxu0
  %v7532 = vadd.f32 0.0, %v7531
  %v7533 = vpop.f32.mrb[0].mxu0
  %7534 = vmatprep.mubr.f32.mxu0 0.0
  %7535 = vmatmul.mubr.f32.gmra.mrb[0].mxu0 %v7458
  %v7536 = vpop.f32.mrb[0].mxu0
  %v7537 = vadd.f32 0.0, %v7536
  %v7538 = vpop.f32.mrb[0].mxu0
  %7539 = vmatprep.mubr.f32.mxu0 0.0
  %7540 = vmatmul.mubr.f32.gmra.mrb[0].mxu0 %v7459
  %v7541 = vpop.f32.mrb[0].mxu0
  %v7542 = vadd.f32 0.0, %v7541
  %v7543 = vpop.f32.mrb[0].mxu0
  %7544 = vdwg.mxu0
  %7545 = vmatprep.subr.mxu0 0.0
  %7546 = vmatpush1.msra.mxu0 %v7527
  %7547 = vmatprep.subr.mxu0 0.0
  %7548 = vmatpush1.msra.mxu0 %v7532
  %7549 = vmatprep.subr.mxu0 0.0
  %7550 = vmatpush1.msra.mxu0 %v7537
  %7551 = vmatprep.subr.mxu0 0.0
  %7552 = vmatpush1.msra.mxu0 %v7542
  %7553 = vmatprep.subr.mxu0 0.0
  %7554 = vmatpush1.msra.mxu0 0.0
  %7555 = vmatprep.subr.mxu0 0.0
  %7556 = vmatpush1.msra.mxu0 0.0
  %7557 = vmatprep.subr.mxu0 0.0
  %7558 = vmatpush1.msra.mxu0 0.0
  %7559 = vmatprep.subr.mxu0 0.0
  %7560 = vmatpush1.msra.mxu0 0.0
  %7561 = vmatprep.subr.mxu0 0.0
  %7562 = vmatpush1.msra.mxu0 0.0
  %7563 = vmatprep.subr.mxu0 0.0
  %7564 = vmatpush1.msra.mxu0 0.0
  %7565 = vmatprep.subr.mxu0 0.0
  %7566 = vmatpush1.msra.mxu0 0.0
  %7567 = vmatprep.subr.mxu0 0.0
  %7568 = vmatpush1.msra.mxu0 0.0
  %7569 = vmatprep.subr.mxu0 0.0
  %7570 = vmatpush1.msra.mxu0 0.0
  %7571 = vmatprep.subr.mxu0 0.0
  %7572 = vmatpush1.msra.mxu0 0.0
  %7573 = vmatprep.subr.mxu0 0.0
  %7574 = vmatpush1.msra.mxu0 0.0
  %7575 = vmatprep.subr.mxu0 0.0
  %7576 = vmatpush1.msra.mxu0 0.0
  %7577 = vmatprep.subr.mxu0 0.0
  %7578 = vmatpush1.msra.mxu0 0.0
  %7579 = vmatprep.subr.mxu0 0.0
  %7580 = vmatpush1.msra.mxu0 0.0
  %7581 = vmatprep.subr.mxu0 0.0
  %7582 = vmatpush1.msra.mxu0 0.0
  %7583 = vmatprep.subr.mxu0 0.0
  %7584 = vmatpush1.msra.mxu0 0.0
  %7585 = vmatprep.subr.mxu0 0.0
  %7586 = vmatpush1.msra.mxu0 0.0
  %7587 = vmatprep.subr.mxu0 0.0
  %7588 = vmatpush1.msra.mxu0 0.0
  %7589 = vmatprep.subr.mxu0 0.0
  %7590 = vmatpush1.msra.mxu0 0.0
  %7591 = vmatprep.subr.mxu0 0.0
  %7592 = vmatpush1.msra.mxu0 0.0
  %7593 = vmatprep.subr.mxu0 0.0
  %7594 = vmatpush1.msra.mxu0 0.0
  %7595 = vmatprep.subr.mxu0 0.0
  %7596 = vmatpush1.msra.mxu0 0.0
  %7597 = vmatprep.subr.mxu0 0.0
  %7598 = vmatpush1.msra.mxu0 0.0
  %7599 = vmatprep.subr.mxu0 0.0
  %7600 = vmatpush1.msra.mxu0 0.0
  %7601 = vmatprep.subr.mxu0 0.0
  %7602 = vmatpush1.msra.mxu0 0.0
  %7603 = vmatprep.subr.mxu0 0.0
  %7604 = vmatpush1.msra.mxu0 0.0
  %7605 = vmatprep.subr.mxu0 0.0
  %7606 = vmatpush1.msra.mxu0 0.0
  %7607 = vmatprep.subr.mxu0 0.0
  %7608 = vmatpush1.msra.mxu0 0.0
  %7609 = vmatprep.mubr.f32.mxu0 0.0
  %7610 = vmatmul.mubr.f32.gmra.mrb[0].mxu0 %v6802
  %v7611 = vpop.f32.mrb[0].mxu0
  %v7612 = vadd.f32 0.0, %v7611
  %v7613 = vpop.f32.mrb[0].mxu0
  %7614 = vdwg.mxu0
  %v7615 = vsel %vm235, %v7052, 0
  %7617 = vmatprep.subr.mxu0 0.0
  %7618 = vmatpush1.msra.mxu0 %v7615
  %7619 = vmatprep.subr.mxu0 0.0
  %7620 = vmatpush1.msra.mxu0 0.0
  %7621 = vmatprep.subr.mxu0 0.0
  %7622 = vmatpush1.msra.mxu0 0.0
  %7623 = vmatprep.subr.mxu0 0.0
  %7624 = vmatpush1.msra.mxu0 0.0
  %7625 = vmatprep.subr.mxu0 0.0
  %7626 = vmatpush1.msra.mxu0 0.0
  %7627 = vmatprep.subr.mxu0 0.0
  %7628 = vmatpush1.msra.mxu0 0.0
  %7629 = vmatprep.subr.mxu0 0.0
  %7630 = vmatpush1.msra.mxu0 0.0
  %7631 = vmatprep.subr.mxu0 0.0
  %7632 = vmatpush1.msra.mxu0 0.0
  %7633 = vmatprep.subr.mxu0 0.0
  %7634 = vmatpush1.msra.mxu0 0.0
  %7635 = vmatprep.subr.mxu0 0.0
  %7636 = vmatpush1.msra.mxu0 0.0
  %7637 = vmatprep.subr.mxu0 0.0
  %7638 = vmatpush1.msra.mxu0 0.0
  %7639 = vmatprep.subr.mxu0 0.0
  %7640 = vmatpush1.msra.mxu0 0.0
  %7641 = vmatprep.subr.mxu0 0.0
  %7642 = vmatpush1.msra.mxu0 0.0
  %7643 = vmatprep.subr.mxu0 0.0
  %7644 = vmatpush1.msra.mxu0 0.0
  %7645 = vmatprep.subr.mxu0 0.0
  %7646 = vmatpush1.msra.mxu0 0.0
  %7647 = vmatprep.subr.mxu0 0.0
  %7648 = vmatpush1.msra.mxu0 0.0
  %7649 = vmatprep.subr.mxu0 0.0
  %7650 = vmatpush1.msra.mxu0 0.0
  %7651 = vmatprep.subr.mxu0 0.0
  %7652 = vmatpush1.msra.mxu0 0.0
  %7653 = vmatprep.subr.mxu0 0.0
  %7654 = vmatpush1.msra.mxu0 0.0
  %7655 = vmatprep.subr.mxu0 0.0
  %7656 = vmatpush1.msra.mxu0 0.0
  %7657 = vmatprep.subr.mxu0 0.0
  %7658 = vmatpush1.msra.mxu0 0.0
  %7659 = vmatprep.subr.mxu0 0.0
  %7660 = vmatpush1.msra.mxu0 0.0
  %7661 = vmatprep.subr.mxu0 0.0
  %7662 = vmatpush1.msra.mxu0 0.0
  %7663 = vmatprep.subr.mxu0 0.0
  %7664 = vmatpush1.msra.mxu0 0.0
  %7665 = vmatprep.subr.mxu0 0.0
  %7666 = vmatpush1.msra.mxu0 0.0
  %7667 = vmatprep.subr.mxu0 0.0
  %7668 = vmatpush1.msra.mxu0 0.0
  %7669 = vmatprep.subr.mxu0 0.0
  %7670 = vmatpush1.msra.mxu0 0.0
  %7671 = vmatprep.subr.mxu0 0.0
  %7672 = vmatpush1.msra.mxu0 0.0
  %7673 = vmatprep.subr.mxu0 0.0
  %7674 = vmatpush1.msra.mxu0 0.0
  %7675 = vmatprep.subr.mxu0 0.0
  %7676 = vmatpush1.msra.mxu0 0.0
  %7677 = vmatprep.subr.mxu0 0.0
  %7678 = vmatpush1.msra.mxu0 0.0
  %7679 = vmatprep.subr.mxu0 0.0
  %7680 = vmatpush1.msra.mxu0 0.0
  %7681 = vmatprep.mubr.f32.mxu0 0.0
  %7682 = vmatmul.mubr.f32.gmra.mrb[0].mxu0 %v6875
  %v7683 = vpop.f32.mrb[0].mxu0
  %v7684 = vadd.f32 %v7612, %v7683
  %v7685 = vpop.f32.mrb[0].mxu0
  %7686 = vdwg.mxu0
  %v7687 = vmul.f32 %v6966, %v7684
  %v7689 = vsel %vm497, %v7687, 0
  %7691 = vmatprep.subr.mxu0 0.0
  %7692 = vmatpush1.msra.mxu0 %v7689
  %7693 = vmatprep.subr.mxu0 0.0
  %7694 = vmatpush1.msra.mxu0 0.0
  %7695 = vmatprep.subr.mxu0 0.0
  %7696 = vmatpush1.msra.mxu0 0.0
  %7697 = vmatprep.subr.mxu0 0.0
  %7698 = vmatpush1.msra.mxu0 0.0
  %7699 = vmatprep.subr.mxu0 0.0
  %7700 = vmatpush1.msra.mxu0 0.0
  %7701 = vmatprep.subr.mxu0 0.0
  %7702 = vmatpush1.msra.mxu0 0.0
  %7703 = vmatprep.subr.mxu0 0.0
  %7704 = vmatpush1.msra.mxu0 0.0
  %7705 = vmatprep.subr.mxu0 0.0
  %7706 = vmatpush1.msra.mxu0 0.0
  %7707 = vmatprep.subr.mxu0 0.0
  %7708 = vmatpush1.msra.mxu0 0.0
  %7709 = vmatprep.subr.mxu0 0.0
  %7710 = vmatpush1.msra.mxu0 0.0
  %7711 = vmatprep.subr.mxu0 0.0
  %7712 = vmatpush1.msra.mxu0 0.0
  %7713 = vmatprep.subr.mxu0 0.0
  %7714 = vmatpush1.msra.mxu0 0.0
  %7715 = vmatprep.subr.mxu0 0.0
  %7716 = vmatpush1.msra.mxu0 0.0
  %7717 = vmatprep.subr.mxu0 0.0
  %7718 = vmatpush1.msra.mxu0 0.0
  %7719 = vmatprep.subr.mxu0 0.0
  %7720 = vmatpush1.msra.mxu0 0.0
  %7721 = vmatprep.subr.mxu0 0.0
  %7722 = vmatpush1.msra.mxu0 0.0
  %7723 = vmatprep.subr.mxu0 0.0
  %7724 = vmatpush1.msra.mxu0 0.0
  %7725 = vmatprep.subr.mxu0 0.0
  %7726 = vmatpush1.msra.mxu0 0.0
  %7727 = vmatprep.subr.mxu0 0.0
  %7728 = vmatpush1.msra.mxu0 0.0
  %7729 = vmatprep.subr.mxu0 0.0
  %7730 = vmatpush1.msra.mxu0 0.0
  %7731 = vmatprep.subr.mxu0 0.0
  %7732 = vmatpush1.msra.mxu0 0.0
  %7733 = vmatprep.subr.mxu0 0.0
  %7734 = vmatpush1.msra.mxu0 0.0
  %7735 = vmatprep.subr.mxu0 0.0
  %7736 = vmatpush1.msra.mxu0 0.0
  %7737 = vmatprep.subr.mxu0 0.0
  %7738 = vmatpush1.msra.mxu0 0.0
  %7739 = vmatprep.subr.mxu0 0.0
  %7740 = vmatpush1.msra.mxu0 0.0
  %7741 = vmatprep.subr.mxu0 0.0
  %7742 = vmatpush1.msra.mxu0 0.0
  %7743 = vmatprep.subr.mxu0 0.0
  %7744 = vmatpush1.msra.mxu0 0.0
  %7745 = vmatprep.subr.mxu0 0.0
  %7746 = vmatpush1.msra.mxu0 0.0
  %7747 = vmatprep.subr.mxu0 0.0
  %7748 = vmatpush1.msra.mxu0 0.0
  %7749 = vmatprep.subr.mxu0 0.0
  %7750 = vmatpush1.msra.mxu0 0.0
  %7751 = vmatprep.subr.mxu0 0.0
  %7752 = vmatpush1.msra.mxu0 0.0
  %7753 = vmatprep.subr.mxu0 0.0
  %7754 = vmatpush1.msra.mxu0 0.0
  %7755 = vmatprep.mubr.f32.mxu0 0.0
  %7756 = vmatmul.mubr.f32.gmra.mrb[0].mxu0 %v6975
  %v7757 = vpop.f32.mrb[0].mxu0
  %v7758 = vadd.f32 %v7052, %v7757
  %v7759 = vpop.f32.mrb[0].mxu0
  %7760 = vdwg.mxu0
  %v7761 = vmul.f32 %v7758, %v7052
  %v7762 = vsel %vm1671, %v7761, 0.0
  %v7763 = vrot.slane %v7762, 4
  %v7764 = vadd.f32 %v7762, %v7763
  %v7765 = vrot.slane %v7764, 2
  %v7766 = vadd.f32 %v7764, %v7765
  %v7767 = vrot.slane %v7766, 1
  %v7768 = vadd.f32 %v7766, %v7767
  %v7769 = vadd.f32 %v6160, %v7768
  %v7771 = vsel %vm89, %v7758, 0
  %7773 = vmatprep.subr.mxu0 0.0
  %7774 = vmatpush1.msra.mxu0 %v55
  %7775 = vmatprep.subr.mxu0 0.0
  %7776 = vmatpush1.msra.mxu0 %v56
  %7777 = vmatprep.subr.mxu0 0.0
  %7778 = vmatpush1.msra.mxu0 0.0
  %7779 = vmatprep.subr.mxu0 0.0
  %7780 = vmatpush1.msra.mxu0 0.0
  %7781 = vmatprep.subr.mxu0 0.0
  %7782 = vmatpush1.msra.mxu0 0.0
  %7783 = vmatprep.subr.mxu0 0.0
  %7784 = vmatpush1.msra.mxu0 0.0
  %7785 = vmatprep.subr.mxu0 0.0
  %7786 = vmatpush1.msra.mxu0 0.0
  %7787 = vmatprep.subr.mxu0 0.0
  %7788 = vmatpush1.msra.mxu0 0.0
  %7789 = vmatprep.subr.mxu0 0.0
  %7790 = vmatpush1.msra.mxu0 0.0
  %7791 = vmatprep.subr.mxu0 0.0
  %7792 = vmatpush1.msra.mxu0 0.0
  %7793 = vmatprep.subr.mxu0 0.0
  %7794 = vmatpush1.msra.mxu0 0.0
  %7795 = vmatprep.subr.mxu0 0.0
  %7796 = vmatpush1.msra.mxu0 0.0
  %7797 = vmatprep.subr.mxu0 0.0
  %7798 = vmatpush1.msra.mxu0 0.0
  %7799 = vmatprep.subr.mxu0 0.0
  %7800 = vmatpush1.msra.mxu0 0.0
  %7801 = vmatprep.subr.mxu0 0.0
  %7802 = vmatpush1.msra.mxu0 0.0
  %7803 = vmatprep.subr.mxu0 0.0
  %7804 = vmatpush1.msra.mxu0 0.0
  %7805 = vmatprep.subr.mxu0 0.0
  %7806 = vmatpush1.msra.mxu0 0.0
  %7807 = vmatprep.subr.mxu0 0.0
  %7808 = vmatpush1.msra.mxu0 0.0
  %7809 = vmatprep.subr.mxu0 0.0
  %7810 = vmatpush1.msra.mxu0 0.0
  %7811 = vmatprep.subr.mxu0 0.0
  %7812 = vmatpush1.msra.mxu0 0.0
  %7813 = vmatprep.subr.mxu0 0.0
  %7814 = vmatpush1.msra.mxu0 0.0
  %7815 = vmatprep.subr.mxu0 0.0
  %7816 = vmatpush1.msra.mxu0 0.0
  %7817 = vmatprep.subr.mxu0 0.0
  %7818 = vmatpush1.msra.mxu0 0.0
  %7819 = vmatprep.subr.mxu0 0.0
  %7820 = vmatpush1.msra.mxu0 0.0
  %7821 = vmatprep.subr.mxu0 0.0
  %7822 = vmatpush1.msra.mxu0 0.0
  %7823 = vmatprep.subr.mxu0 0.0
  %7824 = vmatpush1.msra.mxu0 0.0
  %7825 = vmatprep.subr.mxu0 0.0
  %7826 = vmatpush1.msra.mxu0 0.0
  %7827 = vmatprep.subr.mxu0 0.0
  %7828 = vmatpush1.msra.mxu0 0.0
  %7829 = vmatprep.subr.mxu0 0.0
  %7830 = vmatpush1.msra.mxu0 0.0
  %7831 = vmatprep.subr.mxu0 0.0
  %7832 = vmatpush1.msra.mxu0 0.0
  %7833 = vmatprep.subr.mxu0 0.0
  %7834 = vmatpush1.msra.mxu0 0.0
  %7835 = vmatprep.subr.mxu0 0.0
  %7836 = vmatpush1.msra.mxu0 0.0
  %7837 = vmatprep.mubr.f32.mxu0 0.0
  %7838 = vmatmul.mubr.f32.gmra.mrb[0].mxu0 %v7771
  %v7839 = vpop.f32.mrb[0].mxu0
  %v7840 = vadd.f32 0.0, %v7839
  %v7841 = vpop.f32.mrb[0].mxu0
  %7842 = vdwg.mxu0
  %7843 = vmatprep.subr.mxu0 0.0
  %7844 = vmatpush1.msra.mxu0 %v57
  %7845 = vmatprep.subr.mxu0 0.0
  %7846 = vmatpush1.msra.mxu0 %v58
  %7847 = vmatprep.subr.mxu0 0.0
  %7848 = vmatpush1.msra.mxu0 0.0
  %7849 = vmatprep.subr.mxu0 0.0
  %7850 = vmatpush1.msra.mxu0 0.0
  %7851 = vmatprep.subr.mxu0 0.0
  %7852 = vmatpush1.msra.mxu0 0.0
  %7853 = vmatprep.subr.mxu0 0.0
  %7854 = vmatpush1.msra.mxu0 0.0
  %7855 = vmatprep.subr.mxu0 0.0
  %7856 = vmatpush1.msra.mxu0 0.0
  %7857 = vmatprep.subr.mxu0 0.0
  %7858 = vmatpush1.msra.mxu0 0.0
  %7859 = vmatprep.subr.mxu0 0.0
  %7860 = vmatpush1.msra.mxu0 0.0
  %7861 = vmatprep.subr.mxu0 0.0
  %7862 = vmatpush1.msra.mxu0 0.0
  %7863 = vmatprep.subr.mxu0 0.0
  %7864 = vmatpush1.msra.mxu0 0.0
  %7865 = vmatprep.subr.mxu0 0.0
  %7866 = vmatpush1.msra.mxu0 0.0
  %7867 = vmatprep.subr.mxu0 0.0
  %7868 = vmatpush1.msra.mxu0 0.0
  %7869 = vmatprep.subr.mxu0 0.0
  %7870 = vmatpush1.msra.mxu0 0.0
  %7871 = vmatprep.subr.mxu0 0.0
  %7872 = vmatpush1.msra.mxu0 0.0
  %7873 = vmatprep.subr.mxu0 0.0
  %7874 = vmatpush1.msra.mxu0 0.0
  %7875 = vmatprep.subr.mxu0 0.0
  %7876 = vmatpush1.msra.mxu0 0.0
  %7877 = vmatprep.subr.mxu0 0.0
  %7878 = vmatpush1.msra.mxu0 0.0
  %7879 = vmatprep.subr.mxu0 0.0
  %7880 = vmatpush1.msra.mxu0 0.0
  %7881 = vmatprep.subr.mxu0 0.0
  %7882 = vmatpush1.msra.mxu0 0.0
  %7883 = vmatprep.subr.mxu0 0.0
  %7884 = vmatpush1.msra.mxu0 0.0
  %7885 = vmatprep.subr.mxu0 0.0
  %7886 = vmatpush1.msra.mxu0 0.0
  %7887 = vmatprep.subr.mxu0 0.0
  %7888 = vmatpush1.msra.mxu0 0.0
  %7889 = vmatprep.subr.mxu0 0.0
  %7890 = vmatpush1.msra.mxu0 0.0
  %7891 = vmatprep.subr.mxu0 0.0
  %7892 = vmatpush1.msra.mxu0 0.0
  %7893 = vmatprep.subr.mxu0 0.0
  %7894 = vmatpush1.msra.mxu0 0.0
  %7895 = vmatprep.subr.mxu0 0.0
  %7896 = vmatpush1.msra.mxu0 0.0
  %7897 = vmatprep.subr.mxu0 0.0
  %7898 = vmatpush1.msra.mxu0 0.0
  %7899 = vmatprep.subr.mxu0 0.0
  %7900 = vmatpush1.msra.mxu0 0.0
  %7901 = vmatprep.subr.mxu0 0.0
  %7902 = vmatpush1.msra.mxu0 0.0
  %7903 = vmatprep.subr.mxu0 0.0
  %7904 = vmatpush1.msra.mxu0 0.0
  %7905 = vmatprep.subr.mxu0 0.0
  %7906 = vmatpush1.msra.mxu0 0.0
  %7907 = vmatprep.mubr.f32.mxu0 0.0
  %7908 = vmatmul.mubr.f32.gmra.mrb[0].mxu0 %v7771
  %v7909 = vpop.f32.mrb[0].mxu0
  %v7910 = vadd.f32 0.0, %v7909
  %v7911 = vpop.f32.mrb[0].mxu0
  %7912 = vdwg.mxu0
  %v7913 = vsub.f32 %v7840, %v7910
  %v7914 = vmul.f32 %v6325, %v7913
  %v7915 = vsel %vm235, %v7914, 0.0
  %v7916 = vrot.slane %v7915, 4
  %v7917 = vadd.f32 %v7915, %v7916
  %v7918 = vrot.slane %v7917, 2
  %v7919 = vadd.f32 %v7917, %v7918
  %v7920 = vrot.slane %v7919, 1
  %v7921 = vadd.f32 %v7919, %v7920
  %v7922 = vmul.f32 %v7921, 2.0
  %v7924 = vsel %vm235, %v7910, 0
  %7926 = vmatprep.subr.mxu0 0.0
  %7927 = vmatpush1.msra.mxu0 %v7924
  %7928 = vmatprep.subr.mxu0 0.0
  %7929 = vmatpush1.msra.mxu0 0.0
  %7930 = vmatprep.subr.mxu0 0.0
  %7931 = vmatpush1.msra.mxu0 0.0
  %7932 = vmatprep.subr.mxu0 0.0
  %7933 = vmatpush1.msra.mxu0 0.0
  %7934 = vmatprep.subr.mxu0 0.0
  %7935 = vmatpush1.msra.mxu0 0.0
  %7936 = vmatprep.subr.mxu0 0.0
  %7937 = vmatpush1.msra.mxu0 0.0
  %7938 = vmatprep.subr.mxu0 0.0
  %7939 = vmatpush1.msra.mxu0 0.0
  %7940 = vmatprep.subr.mxu0 0.0
  %7941 = vmatpush1.msra.mxu0 0.0
  %7942 = vmatprep.subr.mxu0 0.0
  %7943 = vmatpush1.msra.mxu0 0.0
  %7944 = vmatprep.subr.mxu0 0.0
  %7945 = vmatpush1.msra.mxu0 0.0
  %7946 = vmatprep.subr.mxu0 0.0
  %7947 = vmatpush1.msra.mxu0 0.0
  %7948 = vmatprep.subr.mxu0 0.0
  %7949 = vmatpush1.msra.mxu0 0.0
  %7950 = vmatprep.subr.mxu0 0.0
  %7951 = vmatpush1.msra.mxu0 0.0
  %7952 = vmatprep.subr.mxu0 0.0
  %7953 = vmatpush1.msra.mxu0 0.0
  %7954 = vmatprep.subr.mxu0 0.0
  %7955 = vmatpush1.msra.mxu0 0.0
  %7956 = vmatprep.subr.mxu0 0.0
  %7957 = vmatpush1.msra.mxu0 0.0
  %7958 = vmatprep.subr.mxu0 0.0
  %7959 = vmatpush1.msra.mxu0 0.0
  %7960 = vmatprep.subr.mxu0 0.0
  %7961 = vmatpush1.msra.mxu0 0.0
  %7962 = vmatprep.subr.mxu0 0.0
  %7963 = vmatpush1.msra.mxu0 0.0
  %7964 = vmatprep.subr.mxu0 0.0
  %7965 = vmatpush1.msra.mxu0 0.0
  %7966 = vmatprep.subr.mxu0 0.0
  %7967 = vmatpush1.msra.mxu0 0.0
  %7968 = vmatprep.subr.mxu0 0.0
  %7969 = vmatpush1.msra.mxu0 0.0
  %7970 = vmatprep.subr.mxu0 0.0
  %7971 = vmatpush1.msra.mxu0 0.0
  %7972 = vmatprep.subr.mxu0 0.0
  %7973 = vmatpush1.msra.mxu0 0.0
  %7974 = vmatprep.subr.mxu0 0.0
  %7975 = vmatpush1.msra.mxu0 0.0
  %7976 = vmatprep.subr.mxu0 0.0
  %7977 = vmatpush1.msra.mxu0 0.0
  %7978 = vmatprep.subr.mxu0 0.0
  %7979 = vmatpush1.msra.mxu0 0.0
  %7980 = vmatprep.subr.mxu0 0.0
  %7981 = vmatpush1.msra.mxu0 0.0
  %7982 = vmatprep.subr.mxu0 0.0
  %7983 = vmatpush1.msra.mxu0 0.0
  %7984 = vmatprep.subr.mxu0 0.0
  %7985 = vmatpush1.msra.mxu0 0.0
  %7986 = vmatprep.subr.mxu0 0.0
  %7987 = vmatpush1.msra.mxu0 0.0
  %7988 = vmatprep.subr.mxu0 0.0
  %7989 = vmatpush1.msra.mxu0 0.0
  %7990 = vmatprep.mubr.f32.mxu0 0.0
  %7991 = vmatmul.mubr.f32.gmra.mrb[0].mxu0 %v6335
  %v7992 = vpop.f32.mrb[0].mxu0
  %v7993 = vadd.f32 0.0, %v7992
  %v7994 = vpop.f32.mrb[0].mxu0
  %7995 = vmatprep.mubr.f32.mxu0 0.0
  %7996 = vmatmul.mubr.f32.gmra.mrb[0].mxu0 %v6338
  %v7997 = vpop.f32.mrb[0].mxu0
  %v7998 = vadd.f32 0.0, %v7997
  %v7999 = vpop.f32.mrb[0].mxu0
  %8000 = vdwg.mxu0
  %v8002 = vsel %vm235, %v7840, 0
  %8004 = vmatprep.subr.mxu0 0.0
  %8005 = vmatpush1.msra.mxu0 %v8002
  %8006 = vmatprep.subr.mxu0 0.0
  %8007 = vmatpush1.msra.mxu0 0.0
  %8008 = vmatprep.subr.mxu0 0.0
  %8009 = vmatpush1.msra.mxu0 0.0
  %8010 = vmatprep.subr.mxu0 0.0
  %8011 = vmatpush1.msra.mxu0 0.0
  %8012 = vmatprep.subr.mxu0 0.0
  %8013 = vmatpush1.msra.mxu0 0.0
  %8014 = vmatprep.subr.mxu0 0.0
  %8015 = vmatpush1.msra.mxu0 0.0
  %8016 = vmatprep.subr.mxu0 0.0
  %8017 = vmatpush1.msra.mxu0 0.0
  %8018 = vmatprep.subr.mxu0 0.0
  %8019 = vmatpush1.msra.mxu0 0.0
  %8020 = vmatprep.subr.mxu0 0.0
  %8021 = vmatpush1.msra.mxu0 0.0
  %8022 = vmatprep.subr.mxu0 0.0
  %8023 = vmatpush1.msra.mxu0 0.0
  %8024 = vmatprep.subr.mxu0 0.0
  %8025 = vmatpush1.msra.mxu0 0.0
  %8026 = vmatprep.subr.mxu0 0.0
  %8027 = vmatpush1.msra.mxu0 0.0
  %8028 = vmatprep.subr.mxu0 0.0
  %8029 = vmatpush1.msra.mxu0 0.0
  %8030 = vmatprep.subr.mxu0 0.0
  %8031 = vmatpush1.msra.mxu0 0.0
  %8032 = vmatprep.subr.mxu0 0.0
  %8033 = vmatpush1.msra.mxu0 0.0
  %8034 = vmatprep.subr.mxu0 0.0
  %8035 = vmatpush1.msra.mxu0 0.0
  %8036 = vmatprep.subr.mxu0 0.0
  %8037 = vmatpush1.msra.mxu0 0.0
  %8038 = vmatprep.subr.mxu0 0.0
  %8039 = vmatpush1.msra.mxu0 0.0
  %8040 = vmatprep.subr.mxu0 0.0
  %8041 = vmatpush1.msra.mxu0 0.0
  %8042 = vmatprep.subr.mxu0 0.0
  %8043 = vmatpush1.msra.mxu0 0.0
  %8044 = vmatprep.subr.mxu0 0.0
  %8045 = vmatpush1.msra.mxu0 0.0
  %8046 = vmatprep.subr.mxu0 0.0
  %8047 = vmatpush1.msra.mxu0 0.0
  %8048 = vmatprep.subr.mxu0 0.0
  %8049 = vmatpush1.msra.mxu0 0.0
  %8050 = vmatprep.subr.mxu0 0.0
  %8051 = vmatpush1.msra.mxu0 0.0
  %8052 = vmatprep.subr.mxu0 0.0
  %8053 = vmatpush1.msra.mxu0 0.0
  %8054 = vmatprep.subr.mxu0 0.0
  %8055 = vmatpush1.msra.mxu0 0.0
  %8056 = vmatprep.subr.mxu0 0.0
  %8057 = vmatpush1.msra.mxu0 0.0
  %8058 = vmatprep.subr.mxu0 0.0
  %8059 = vmatpush1.msra.mxu0 0.0
  %8060 = vmatprep.subr.mxu0 0.0
  %8061 = vmatpush1.msra.mxu0 0.0
  %8062 = vmatprep.subr.mxu0 0.0
  %8063 = vmatpush1.msra.mxu0 0.0
  %8064 = vmatprep.subr.mxu0 0.0
  %8065 = vmatpush1.msra.mxu0 0.0
  %8066 = vmatprep.subr.mxu0 0.0
  %8067 = vmatpush1.msra.mxu0 0.0
  %8068 = vmatprep.mubr.f32.mxu0 0.0
  %8069 = vmatmul.mubr.f32.gmra.mrb[0].mxu0 %v6419
  %v8070 = vpop.f32.mrb[0].mxu0
  %v8071 = vadd.f32 %v7993, %v8070
  %v8072 = vpop.f32.mrb[0].mxu0
  %8073 = vmatprep.mubr.f32.mxu0 0.0
  %8074 = vmatmul.mubr.f32.gmra.mrb[0].mxu0 %v6422
  %v8075 = vpop.f32.mrb[0].mxu0
  %v8076 = vadd.f32 %v7998, %v8075
  %v8077 = vpop.f32.mrb[0].mxu0
  %8078 = vdwg.mxu0
  %v8079 = vmul.f32 %v6505, %v7922
  %v8080 = vmul.f32 %v6510, %v7922
  %v8081 = vadd.f32 %v8071, %v8079
  %v8082 = vadd.f32 %v8076, %v8080
  %v8083 = vmul.f32 %v6549, %v8081
  %v8084 = vmul.f32 %v6550, %v8082
  %v8086 = vsel %vm497, %v8084, 0
  %8088 = vmatprep.subr.mxu0 0.0
  %8089 = vmatpush1.msra.mxu0 %v8083
  %8090 = vmatprep.subr.mxu0 0.0
  %8091 = vmatpush1.msra.mxu0 %v8086
  %8092 = vmatprep.subr.mxu0 0.0
  %8093 = vmatpush1.msra.mxu0 0.0
  %8094 = vmatprep.subr.mxu0 0.0
  %8095 = vmatpush1.msra.mxu0 0.0
  %8096 = vmatprep.subr.mxu0 0.0
  %8097 = vmatpush1.msra.mxu0 0.0
  %8098 = vmatprep.subr.mxu0 0.0
  %8099 = vmatpush1.msra.mxu0 0.0
  %8100 = vmatprep.subr.mxu0 0.0
  %8101 = vmatpush1.msra.mxu0 0.0
  %8102 = vmatprep.subr.mxu0 0.0
  %8103 = vmatpush1.msra.mxu0 0.0
  %8104 = vmatprep.subr.mxu0 0.0
  %8105 = vmatpush1.msra.mxu0 0.0
  %8106 = vmatprep.subr.mxu0 0.0
  %8107 = vmatpush1.msra.mxu0 0.0
  %8108 = vmatprep.subr.mxu0 0.0
  %8109 = vmatpush1.msra.mxu0 0.0
  %8110 = vmatprep.subr.mxu0 0.0
  %8111 = vmatpush1.msra.mxu0 0.0
  %8112 = vmatprep.subr.mxu0 0.0
  %8113 = vmatpush1.msra.mxu0 0.0
  %8114 = vmatprep.subr.mxu0 0.0
  %8115 = vmatpush1.msra.mxu0 0.0
  %8116 = vmatprep.subr.mxu0 0.0
  %8117 = vmatpush1.msra.mxu0 0.0
  %8118 = vmatprep.subr.mxu0 0.0
  %8119 = vmatpush1.msra.mxu0 0.0
  %8120 = vmatprep.subr.mxu0 0.0
  %8121 = vmatpush1.msra.mxu0 0.0
  %8122 = vmatprep.subr.mxu0 0.0
  %8123 = vmatpush1.msra.mxu0 0.0
  %8124 = vmatprep.subr.mxu0 0.0
  %8125 = vmatpush1.msra.mxu0 0.0
  %8126 = vmatprep.subr.mxu0 0.0
  %8127 = vmatpush1.msra.mxu0 0.0
  %8128 = vmatprep.subr.mxu0 0.0
  %8129 = vmatpush1.msra.mxu0 0.0
  %8130 = vmatprep.subr.mxu0 0.0
  %8131 = vmatpush1.msra.mxu0 0.0
  %8132 = vmatprep.subr.mxu0 0.0
  %8133 = vmatpush1.msra.mxu0 0.0
  %8134 = vmatprep.subr.mxu0 0.0
  %8135 = vmatpush1.msra.mxu0 0.0
  %8136 = vmatprep.subr.mxu0 0.0
  %8137 = vmatpush1.msra.mxu0 0.0
  %8138 = vmatprep.subr.mxu0 0.0
  %8139 = vmatpush1.msra.mxu0 0.0
  %8140 = vmatprep.subr.mxu0 0.0
  %8141 = vmatpush1.msra.mxu0 0.0
  %8142 = vmatprep.subr.mxu0 0.0
  %8143 = vmatpush1.msra.mxu0 0.0
  %8144 = vmatprep.subr.mxu0 0.0
  %8145 = vmatpush1.msra.mxu0 0.0
  %8146 = vmatprep.subr.mxu0 0.0
  %8147 = vmatpush1.msra.mxu0 0.0
  %8148 = vmatprep.subr.mxu0 0.0
  %8149 = vmatpush1.msra.mxu0 0.0
  %8150 = vmatprep.subr.mxu0 0.0
  %8151 = vmatpush1.msra.mxu0 0.0
  %8152 = vmatprep.mubr.f32.mxu0 0.0
  %8153 = vmatmul.mubr.f32.gmra.mrb[0].mxu0 %v6577
  %v8154 = vpop.f32.mrb[0].mxu0
  %v8155 = vadd.f32 0.0, %v8154
  %v8156 = vpop.f32.mrb[0].mxu0
  %8157 = vmatprep.mubr.f32.mxu0 0.0
  %8158 = vmatmul.mubr.f32.gmra.mrb[0].mxu0 %v6580
  %v8159 = vpop.f32.mrb[0].mxu0
  %v8160 = vadd.f32 0.0, %v8159
  %v8161 = vpop.f32.mrb[0].mxu0
  %8162 = vmatprep.mubr.f32.mxu0 0.0
  %8163 = vmatmul.mubr.f32.gmra.mrb[0].mxu0 %v6583
  %v8164 = vpop.f32.mrb[0].mxu0
  %v8165 = vadd.f32 0.0, %v8164
  %v8166 = vpop.f32.mrb[0].mxu0
  %8167 = vmatprep.mubr.f32.mxu0 0.0
  %8168 = vmatmul.mubr.f32.gmra.mrb[0].mxu0 %v6586
  %v8169 = vpop.f32.mrb[0].mxu0
  %v8170 = vadd.f32 0.0, %v8169
  %v8171 = vpop.f32.mrb[0].mxu0
  %8172 = vdwg.mxu0
  %v8173 = vmul.f32 %v6712, %v8155
  %v8174 = vmul.f32 %v6713, %v8160
  %v8175 = vmul.f32 %v6714, %v8165
  %v8176 = vmul.f32 %v6715, %v8170
  %8177 = vmatprep.subr.mxu0 0.0
  %8178 = vmatpush1.msra.mxu0 %v59
  %8179 = vmatprep.subr.mxu0 0.0
  %8180 = vmatpush1.msra.mxu0 %v60
  %8181 = vmatprep.subr.mxu0 0.0
  %8182 = vmatpush1.msra.mxu0 %v61
  %8183 = vmatprep.subr.mxu0 0.0
  %8184 = vmatpush1.msra.mxu0 %v62
  %8185 = vmatprep.subr.mxu0 0.0
  %8186 = vmatpush1.msra.mxu0 %v63
  %8187 = vmatprep.subr.mxu0 0.0
  %8188 = vmatpush1.msra.mxu0 %v64
  %8189 = vmatprep.subr.mxu0 0.0
  %8190 = vmatpush1.msra.mxu0 %v65
  %8191 = vmatprep.subr.mxu0 0.0
  %8192 = vmatpush1.msra.mxu0 %v66
  %8193 = vmatprep.subr.mxu0 0.0
  %8194 = vmatpush1.msra.mxu0 %v67
  %8195 = vmatprep.subr.mxu0 0.0
  %8196 = vmatpush1.msra.mxu0 %v68
  %8197 = vmatprep.subr.mxu0 0.0
  %8198 = vmatpush1.msra.mxu0 %v69
  %8199 = vmatprep.subr.mxu0 0.0
  %8200 = vmatpush1.msra.mxu0 %v70
  %8201 = vmatprep.subr.mxu0 0.0
  %8202 = vmatpush1.msra.mxu0 %v71
  %8203 = vmatprep.subr.mxu0 0.0
  %8204 = vmatpush1.msra.mxu0 %v72
  %8205 = vmatprep.subr.mxu0 0.0
  %8206 = vmatpush1.msra.mxu0 %v73
  %8207 = vmatprep.subr.mxu0 0.0
  %8208 = vmatpush1.msra.mxu0 %v74
  %8209 = vmatprep.subr.mxu0 0.0
  %8210 = vmatpush1.msra.mxu0 0.0
  %8211 = vmatprep.subr.mxu0 0.0
  %8212 = vmatpush1.msra.mxu0 0.0
  %8213 = vmatprep.subr.mxu0 0.0
  %8214 = vmatpush1.msra.mxu0 0.0
  %8215 = vmatprep.subr.mxu0 0.0
  %8216 = vmatpush1.msra.mxu0 0.0
  %8217 = vmatprep.subr.mxu0 0.0
  %8218 = vmatpush1.msra.mxu0 0.0
  %8219 = vmatprep.subr.mxu0 0.0
  %8220 = vmatpush1.msra.mxu0 0.0
  %8221 = vmatprep.subr.mxu0 0.0
  %8222 = vmatpush1.msra.mxu0 0.0
  %8223 = vmatprep.subr.mxu0 0.0
  %8224 = vmatpush1.msra.mxu0 0.0
  %8225 = vmatprep.subr.mxu0 0.0
  %8226 = vmatpush1.msra.mxu0 0.0
  %8227 = vmatprep.subr.mxu0 0.0
  %8228 = vmatpush1.msra.mxu0 0.0
  %8229 = vmatprep.subr.mxu0 0.0
  %8230 = vmatpush1.msra.mxu0 0.0
  %8231 = vmatprep.subr.mxu0 0.0
  %8232 = vmatpush1.msra.mxu0 0.0
  %8233 = vmatprep.subr.mxu0 0.0
  %8234 = vmatpush1.msra.mxu0 0.0
  %8235 = vmatprep.subr.mxu0 0.0
  %8236 = vmatpush1.msra.mxu0 0.0
  %8237 = vmatprep.subr.mxu0 0.0
  %8238 = vmatpush1.msra.mxu0 0.0
  %8239 = vmatprep.subr.mxu0 0.0
  %8240 = vmatpush1.msra.mxu0 0.0
  %8241 = vmatprep.mubr.f32.mxu0 0.0
  %8242 = vmatmul.mubr.f32.gmra.mrb[0].mxu0 %v8173
  %v8243 = vpop.f32.mrb[0].mxu0
  %v8244 = vadd.f32 0.0, %v8243
  %v8245 = vpop.f32.mrb[0].mxu0
  %8246 = vmatprep.mubr.f32.mxu0 0.0
  %8247 = vmatmul.mubr.f32.gmra.mrb[0].mxu0 %v8174
  %v8248 = vpop.f32.mrb[0].mxu0
  %v8249 = vadd.f32 0.0, %v8248
  %v8250 = vpop.f32.mrb[0].mxu0
  %8251 = vmatprep.mubr.f32.mxu0 0.0
  %8252 = vmatmul.mubr.f32.gmra.mrb[0].mxu0 %v8175
  %v8253 = vpop.f32.mrb[0].mxu0
  %v8254 = vadd.f32 0.0, %v8253
  %v8255 = vpop.f32.mrb[0].mxu0
  %8256 = vmatprep.mubr.f32.mxu0 0.0
  %8257 = vmatmul.mubr.f32.gmra.mrb[0].mxu0 %v8176
  %v8258 = vpop.f32.mrb[0].mxu0
  %v8259 = vadd.f32 0.0, %v8258
  %v8260 = vpop.f32.mrb[0].mxu0
  %8261 = vdwg.mxu0
  %8262 = vmatprep.subr.mxu0 0.0
  %8263 = vmatpush1.msra.mxu0 %v8244
  %8264 = vmatprep.subr.mxu0 0.0
  %8265 = vmatpush1.msra.mxu0 %v8249
  %8266 = vmatprep.subr.mxu0 0.0
  %8267 = vmatpush1.msra.mxu0 %v8254
  %8268 = vmatprep.subr.mxu0 0.0
  %8269 = vmatpush1.msra.mxu0 %v8259
  %8270 = vmatprep.subr.mxu0 0.0
  %8271 = vmatpush1.msra.mxu0 0.0
  %8272 = vmatprep.subr.mxu0 0.0
  %8273 = vmatpush1.msra.mxu0 0.0
  %8274 = vmatprep.subr.mxu0 0.0
  %8275 = vmatpush1.msra.mxu0 0.0
  %8276 = vmatprep.subr.mxu0 0.0
  %8277 = vmatpush1.msra.mxu0 0.0
  %8278 = vmatprep.subr.mxu0 0.0
  %8279 = vmatpush1.msra.mxu0 0.0
  %8280 = vmatprep.subr.mxu0 0.0
  %8281 = vmatpush1.msra.mxu0 0.0
  %8282 = vmatprep.subr.mxu0 0.0
  %8283 = vmatpush1.msra.mxu0 0.0
  %8284 = vmatprep.subr.mxu0 0.0
  %8285 = vmatpush1.msra.mxu0 0.0
  %8286 = vmatprep.subr.mxu0 0.0
  %8287 = vmatpush1.msra.mxu0 0.0
  %8288 = vmatprep.subr.mxu0 0.0
  %8289 = vmatpush1.msra.mxu0 0.0
  %8290 = vmatprep.subr.mxu0 0.0
  %8291 = vmatpush1.msra.mxu0 0.0
  %8292 = vmatprep.subr.mxu0 0.0
  %8293 = vmatpush1.msra.mxu0 0.0
  %8294 = vmatprep.subr.mxu0 0.0
  %8295 = vmatpush1.msra.mxu0 0.0
  %8296 = vmatprep.subr.mxu0 0.0
  %8297 = vmatpush1.msra.mxu0 0.0
  %8298 = vmatprep.subr.mxu0 0.0
  %8299 = vmatpush1.msra.mxu0 0.0
  %8300 = vmatprep.subr.mxu0 0.0
  %8301 = vmatpush1.msra.mxu0 0.0
  %8302 = vmatprep.subr.mxu0 0.0
  %8303 = vmatpush1.msra.mxu0 0.0
  %8304 = vmatprep.subr.mxu0 0.0
  %8305 = vmatpush1.msra.mxu0 0.0
  %8306 = vmatprep.subr.mxu0 0.0
  %8307 = vmatpush1.msra.mxu0 0.0
  %8308 = vmatprep.subr.mxu0 0.0
  %8309 = vmatpush1.msra.mxu0 0.0
  %8310 = vmatprep.subr.mxu0 0.0
  %8311 = vmatpush1.msra.mxu0 0.0
  %8312 = vmatprep.subr.mxu0 0.0
  %8313 = vmatpush1.msra.mxu0 0.0
  %8314 = vmatprep.subr.mxu0 0.0
  %8315 = vmatpush1.msra.mxu0 0.0
  %8316 = vmatprep.subr.mxu0 0.0
  %8317 = vmatpush1.msra.mxu0 0.0
  %8318 = vmatprep.subr.mxu0 0.0
  %8319 = vmatpush1.msra.mxu0 0.0
  %8320 = vmatprep.subr.mxu0 0.0
  %8321 = vmatpush1.msra.mxu0 0.0
  %8322 = vmatprep.subr.mxu0 0.0
  %8323 = vmatpush1.msra.mxu0 0.0
  %8324 = vmatprep.subr.mxu0 0.0
  %8325 = vmatpush1.msra.mxu0 0.0
  %8326 = vmatprep.mubr.f32.mxu0 0.0
  %8327 = vmatmul.mubr.f32.gmra.mrb[0].mxu0 %v6802
  %v8328 = vpop.f32.mrb[0].mxu0
  %v8329 = vadd.f32 0.0, %v8328
  %v8330 = vpop.f32.mrb[0].mxu0
  %8331 = vdwg.mxu0
  %v8332 = vsel %vm235, %v7758, 0
  %8334 = vmatprep.subr.mxu0 0.0
  %8335 = vmatpush1.msra.mxu0 %v8332
  %8336 = vmatprep.subr.mxu0 0.0
  %8337 = vmatpush1.msra.mxu0 0.0
  %8338 = vmatprep.subr.mxu0 0.0
  %8339 = vmatpush1.msra.mxu0 0.0
  %8340 = vmatprep.subr.mxu0 0.0
  %8341 = vmatpush1.msra.mxu0 0.0
  %8342 = vmatprep.subr.mxu0 0.0
  %8343 = vmatpush1.msra.mxu0 0.0
  %8344 = vmatprep.subr.mxu0 0.0
  %8345 = vmatpush1.msra.mxu0 0.0
  %8346 = vmatprep.subr.mxu0 0.0
  %8347 = vmatpush1.msra.mxu0 0.0
  %8348 = vmatprep.subr.mxu0 0.0
  %8349 = vmatpush1.msra.mxu0 0.0
  %8350 = vmatprep.subr.mxu0 0.0
  %8351 = vmatpush1.msra.mxu0 0.0
  %8352 = vmatprep.subr.mxu0 0.0
  %8353 = vmatpush1.msra.mxu0 0.0
  %8354 = vmatprep.subr.mxu0 0.0
  %8355 = vmatpush1.msra.mxu0 0.0
  %8356 = vmatprep.subr.mxu0 0.0
  %8357 = vmatpush1.msra.mxu0 0.0
  %8358 = vmatprep.subr.mxu0 0.0
  %8359 = vmatpush1.msra.mxu0 0.0
  %8360 = vmatprep.subr.mxu0 0.0
  %8361 = vmatpush1.msra.mxu0 0.0
  %8362 = vmatprep.subr.mxu0 0.0
  %8363 = vmatpush1.msra.mxu0 0.0
  %8364 = vmatprep.subr.mxu0 0.0
  %8365 = vmatpush1.msra.mxu0 0.0
  %8366 = vmatprep.subr.mxu0 0.0
  %8367 = vmatpush1.msra.mxu0 0.0
  %8368 = vmatprep.subr.mxu0 0.0
  %8369 = vmatpush1.msra.mxu0 0.0
  %8370 = vmatprep.subr.mxu0 0.0
  %8371 = vmatpush1.msra.mxu0 0.0
  %8372 = vmatprep.subr.mxu0 0.0
  %8373 = vmatpush1.msra.mxu0 0.0
  %8374 = vmatprep.subr.mxu0 0.0
  %8375 = vmatpush1.msra.mxu0 0.0
  %8376 = vmatprep.subr.mxu0 0.0
  %8377 = vmatpush1.msra.mxu0 0.0
  %8378 = vmatprep.subr.mxu0 0.0
  %8379 = vmatpush1.msra.mxu0 0.0
  %8380 = vmatprep.subr.mxu0 0.0
  %8381 = vmatpush1.msra.mxu0 0.0
  %8382 = vmatprep.subr.mxu0 0.0
  %8383 = vmatpush1.msra.mxu0 0.0
  %8384 = vmatprep.subr.mxu0 0.0
  %8385 = vmatpush1.msra.mxu0 0.0
  %8386 = vmatprep.subr.mxu0 0.0
  %8387 = vmatpush1.msra.mxu0 0.0
  %8388 = vmatprep.subr.mxu0 0.0
  %8389 = vmatpush1.msra.mxu0 0.0
  %8390 = vmatprep.subr.mxu0 0.0
  %8391 = vmatpush1.msra.mxu0 0.0
  %8392 = vmatprep.subr.mxu0 0.0
  %8393 = vmatpush1.msra.mxu0 0.0
  %8394 = vmatprep.subr.mxu0 0.0
  %8395 = vmatpush1.msra.mxu0 0.0
  %8396 = vmatprep.subr.mxu0 0.0
  %8397 = vmatpush1.msra.mxu0 0.0
  %8398 = vmatprep.mubr.f32.mxu0 0.0
  %8399 = vmatmul.mubr.f32.gmra.mrb[0].mxu0 %v6875
  %v8400 = vpop.f32.mrb[0].mxu0
  %v8401 = vadd.f32 %v8329, %v8400
  %v8402 = vpop.f32.mrb[0].mxu0
  %8403 = vdwg.mxu0
  %v8404 = vmul.f32 %v6966, %v8401
  %v8406 = vsel %vm497, %v8404, 0
  %8408 = vmatprep.subr.mxu0 0.0
  %8409 = vmatpush1.msra.mxu0 %v8406
  %8410 = vmatprep.subr.mxu0 0.0
  %8411 = vmatpush1.msra.mxu0 0.0
  %8412 = vmatprep.subr.mxu0 0.0
  %8413 = vmatpush1.msra.mxu0 0.0
  %8414 = vmatprep.subr.mxu0 0.0
  %8415 = vmatpush1.msra.mxu0 0.0
  %8416 = vmatprep.subr.mxu0 0.0
  %8417 = vmatpush1.msra.mxu0 0.0
  %8418 = vmatprep.subr.mxu0 0.0
  %8419 = vmatpush1.msra.mxu0 0.0
  %8420 = vmatprep.subr.mxu0 0.0
  %8421 = vmatpush1.msra.mxu0 0.0
  %8422 = vmatprep.subr.mxu0 0.0
  %8423 = vmatpush1.msra.mxu0 0.0
  %8424 = vmatprep.subr.mxu0 0.0
  %8425 = vmatpush1.msra.mxu0 0.0
  %8426 = vmatprep.subr.mxu0 0.0
  %8427 = vmatpush1.msra.mxu0 0.0
  %8428 = vmatprep.subr.mxu0 0.0
  %8429 = vmatpush1.msra.mxu0 0.0
  %8430 = vmatprep.subr.mxu0 0.0
  %8431 = vmatpush1.msra.mxu0 0.0
  %8432 = vmatprep.subr.mxu0 0.0
  %8433 = vmatpush1.msra.mxu0 0.0
  %8434 = vmatprep.subr.mxu0 0.0
  %8435 = vmatpush1.msra.mxu0 0.0
  %8436 = vmatprep.subr.mxu0 0.0
  %8437 = vmatpush1.msra.mxu0 0.0
  %8438 = vmatprep.subr.mxu0 0.0
  %8439 = vmatpush1.msra.mxu0 0.0
  %8440 = vmatprep.subr.mxu0 0.0
  %8441 = vmatpush1.msra.mxu0 0.0
  %8442 = vmatprep.subr.mxu0 0.0
  %8443 = vmatpush1.msra.mxu0 0.0
  %8444 = vmatprep.subr.mxu0 0.0
  %8445 = vmatpush1.msra.mxu0 0.0
  %8446 = vmatprep.subr.mxu0 0.0
  %8447 = vmatpush1.msra.mxu0 0.0
  %8448 = vmatprep.subr.mxu0 0.0
  %8449 = vmatpush1.msra.mxu0 0.0
  %8450 = vmatprep.subr.mxu0 0.0
  %8451 = vmatpush1.msra.mxu0 0.0
  %8452 = vmatprep.subr.mxu0 0.0
  %8453 = vmatpush1.msra.mxu0 0.0
  %8454 = vmatprep.subr.mxu0 0.0
  %8455 = vmatpush1.msra.mxu0 0.0
  %8456 = vmatprep.subr.mxu0 0.0
  %8457 = vmatpush1.msra.mxu0 0.0
  %8458 = vmatprep.subr.mxu0 0.0
  %8459 = vmatpush1.msra.mxu0 0.0
  %8460 = vmatprep.subr.mxu0 0.0
  %8461 = vmatpush1.msra.mxu0 0.0
  %8462 = vmatprep.subr.mxu0 0.0
  %8463 = vmatpush1.msra.mxu0 0.0
  %8464 = vmatprep.subr.mxu0 0.0
  %8465 = vmatpush1.msra.mxu0 0.0
  %8466 = vmatprep.subr.mxu0 0.0
  %8467 = vmatpush1.msra.mxu0 0.0
  %8468 = vmatprep.subr.mxu0 0.0
  %8469 = vmatpush1.msra.mxu0 0.0
  %8470 = vmatprep.subr.mxu0 0.0
  %8471 = vmatpush1.msra.mxu0 0.0
  %8472 = vmatprep.mubr.f32.mxu0 0.0
  %8473 = vmatmul.mubr.f32.gmra.mrb[0].mxu0 %v6975
  %v8474 = vpop.f32.mrb[0].mxu0
  %v8475 = vadd.f32 %v7758, %v8474
  %v8476 = vpop.f32.mrb[0].mxu0
  %8477 = vdwg.mxu0
  %v8478 = vmul.f32 %v8475, %v7052
  %v8479 = vsel %vm1671, %v8478, 0.0
  %v8480 = vrot.slane %v8479, 4
  %v8481 = vadd.f32 %v8479, %v8480
  %v8482 = vrot.slane %v8481, 2
  %v8483 = vadd.f32 %v8481, %v8482
  %v8484 = vrot.slane %v8483, 1
  %v8485 = vadd.f32 %v8483, %v8484
  %v8486 = vmul.f32 %v8485, -0.5
  %v8487 = vadd.f32 %v7769, %v8486
  %v8489 = vsel %vm89, %v8475, 0
  %8491 = vmatprep.subr.mxu0 0.0
  %8492 = vmatpush1.msra.mxu0 %v55
  %8493 = vmatprep.subr.mxu0 0.0
  %8494 = vmatpush1.msra.mxu0 %v56
  %8495 = vmatprep.subr.mxu0 0.0
  %8496 = vmatpush1.msra.mxu0 0.0
  %8497 = vmatprep.subr.mxu0 0.0
  %8498 = vmatpush1.msra.mxu0 0.0
  %8499 = vmatprep.subr.mxu0 0.0
  %8500 = vmatpush1.msra.mxu0 0.0
  %8501 = vmatprep.subr.mxu0 0.0
  %8502 = vmatpush1.msra.mxu0 0.0
  %8503 = vmatprep.subr.mxu0 0.0
  %8504 = vmatpush1.msra.mxu0 0.0
  %8505 = vmatprep.subr.mxu0 0.0
  %8506 = vmatpush1.msra.mxu0 0.0
  %8507 = vmatprep.subr.mxu0 0.0
  %8508 = vmatpush1.msra.mxu0 0.0
  %8509 = vmatprep.subr.mxu0 0.0
  %8510 = vmatpush1.msra.mxu0 0.0
  %8511 = vmatprep.subr.mxu0 0.0
  %8512 = vmatpush1.msra.mxu0 0.0
  %8513 = vmatprep.subr.mxu0 0.0
  %8514 = vmatpush1.msra.mxu0 0.0
  %8515 = vmatprep.subr.mxu0 0.0
  %8516 = vmatpush1.msra.mxu0 0.0
  %8517 = vmatprep.subr.mxu0 0.0
  %8518 = vmatpush1.msra.mxu0 0.0
  %8519 = vmatprep.subr.mxu0 0.0
  %8520 = vmatpush1.msra.mxu0 0.0
  %8521 = vmatprep.subr.mxu0 0.0
  %8522 = vmatpush1.msra.mxu0 0.0
  %8523 = vmatprep.subr.mxu0 0.0
  %8524 = vmatpush1.msra.mxu0 0.0
  %8525 = vmatprep.subr.mxu0 0.0
  %8526 = vmatpush1.msra.mxu0 0.0
  %8527 = vmatprep.subr.mxu0 0.0
  %8528 = vmatpush1.msra.mxu0 0.0
  %8529 = vmatprep.subr.mxu0 0.0
  %8530 = vmatpush1.msra.mxu0 0.0
  %8531 = vmatprep.subr.mxu0 0.0
  %8532 = vmatpush1.msra.mxu0 0.0
  %8533 = vmatprep.subr.mxu0 0.0
  %8534 = vmatpush1.msra.mxu0 0.0
  %8535 = vmatprep.subr.mxu0 0.0
  %8536 = vmatpush1.msra.mxu0 0.0
  %8537 = vmatprep.subr.mxu0 0.0
  %8538 = vmatpush1.msra.mxu0 0.0
  %8539 = vmatprep.subr.mxu0 0.0
  %8540 = vmatpush1.msra.mxu0 0.0
  %8541 = vmatprep.subr.mxu0 0.0
  %8542 = vmatpush1.msra.mxu0 0.0
  %8543 = vmatprep.subr.mxu0 0.0
  %8544 = vmatpush1.msra.mxu0 0.0
  %8545 = vmatprep.subr.mxu0 0.0
  %8546 = vmatpush1.msra.mxu0 0.0
  %8547 = vmatprep.subr.mxu0 0.0
  %8548 = vmatpush1.msra.mxu0 0.0
  %8549 = vmatprep.subr.mxu0 0.0
  %8550 = vmatpush1.msra.mxu0 0.0
  %8551 = vmatprep.subr.mxu0 0.0
  %8552 = vmatpush1.msra.mxu0 0.0
  %8553 = vmatprep.subr.mxu0 0.0
  %8554 = vmatpush1.msra.mxu0 0.0
  %8555 = vmatprep.mubr.f32.mxu0 0.0
  %8556 = vmatmul.mubr.f32.gmra.mrb[0].mxu0 %v8489
  %v8557 = vpop.f32.mrb[0].mxu0
  %v8558 = vadd.f32 0.0, %v8557
  %v8559 = vpop.f32.mrb[0].mxu0
  %8560 = vdwg.mxu0
  %8561 = vmatprep.subr.mxu0 0.0
  %8562 = vmatpush1.msra.mxu0 %v57
  %8563 = vmatprep.subr.mxu0 0.0
  %8564 = vmatpush1.msra.mxu0 %v58
  %8565 = vmatprep.subr.mxu0 0.0
  %8566 = vmatpush1.msra.mxu0 0.0
  %8567 = vmatprep.subr.mxu0 0.0
  %8568 = vmatpush1.msra.mxu0 0.0
  %8569 = vmatprep.subr.mxu0 0.0
  %8570 = vmatpush1.msra.mxu0 0.0
  %8571 = vmatprep.subr.mxu0 0.0
  %8572 = vmatpush1.msra.mxu0 0.0
  %8573 = vmatprep.subr.mxu0 0.0
  %8574 = vmatpush1.msra.mxu0 0.0
  %8575 = vmatprep.subr.mxu0 0.0
  %8576 = vmatpush1.msra.mxu0 0.0
  %8577 = vmatprep.subr.mxu0 0.0
  %8578 = vmatpush1.msra.mxu0 0.0
  %8579 = vmatprep.subr.mxu0 0.0
  %8580 = vmatpush1.msra.mxu0 0.0
  %8581 = vmatprep.subr.mxu0 0.0
  %8582 = vmatpush1.msra.mxu0 0.0
  %8583 = vmatprep.subr.mxu0 0.0
  %8584 = vmatpush1.msra.mxu0 0.0
  %8585 = vmatprep.subr.mxu0 0.0
  %8586 = vmatpush1.msra.mxu0 0.0
  %8587 = vmatprep.subr.mxu0 0.0
  %8588 = vmatpush1.msra.mxu0 0.0
  %8589 = vmatprep.subr.mxu0 0.0
  %8590 = vmatpush1.msra.mxu0 0.0
  %8591 = vmatprep.subr.mxu0 0.0
  %8592 = vmatpush1.msra.mxu0 0.0
  %8593 = vmatprep.subr.mxu0 0.0
  %8594 = vmatpush1.msra.mxu0 0.0
  %8595 = vmatprep.subr.mxu0 0.0
  %8596 = vmatpush1.msra.mxu0 0.0
  %8597 = vmatprep.subr.mxu0 0.0
  %8598 = vmatpush1.msra.mxu0 0.0
  %8599 = vmatprep.subr.mxu0 0.0
  %8600 = vmatpush1.msra.mxu0 0.0
  %8601 = vmatprep.subr.mxu0 0.0
  %8602 = vmatpush1.msra.mxu0 0.0
  %8603 = vmatprep.subr.mxu0 0.0
  %8604 = vmatpush1.msra.mxu0 0.0
  %8605 = vmatprep.subr.mxu0 0.0
  %8606 = vmatpush1.msra.mxu0 0.0
  %8607 = vmatprep.subr.mxu0 0.0
  %8608 = vmatpush1.msra.mxu0 0.0
  %8609 = vmatprep.subr.mxu0 0.0
  %8610 = vmatpush1.msra.mxu0 0.0
  %8611 = vmatprep.subr.mxu0 0.0
  %8612 = vmatpush1.msra.mxu0 0.0
  %8613 = vmatprep.subr.mxu0 0.0
  %8614 = vmatpush1.msra.mxu0 0.0
  %8615 = vmatprep.subr.mxu0 0.0
  %8616 = vmatpush1.msra.mxu0 0.0
  %8617 = vmatprep.subr.mxu0 0.0
  %8618 = vmatpush1.msra.mxu0 0.0
  %8619 = vmatprep.subr.mxu0 0.0
  %8620 = vmatpush1.msra.mxu0 0.0
  %8621 = vmatprep.subr.mxu0 0.0
  %8622 = vmatpush1.msra.mxu0 0.0
  %8623 = vmatprep.subr.mxu0 0.0
  %8624 = vmatpush1.msra.mxu0 0.0
  %8625 = vmatprep.mubr.f32.mxu0 0.0
  %8626 = vmatmul.mubr.f32.gmra.mrb[0].mxu0 %v8489
  %v8627 = vpop.f32.mrb[0].mxu0
  %v8628 = vadd.f32 0.0, %v8627
  %v8629 = vpop.f32.mrb[0].mxu0
  %8630 = vdwg.mxu0
  %v8631 = vsub.f32 %v8558, %v8628
  %v8632 = vmul.f32 %v6325, %v8631
  %v8633 = vsel %vm235, %v8632, 0.0
  %v8634 = vrot.slane %v8633, 4
  %v8635 = vadd.f32 %v8633, %v8634
  %v8636 = vrot.slane %v8635, 2
  %v8637 = vadd.f32 %v8635, %v8636
  %v8638 = vrot.slane %v8637, 1
  %v8639 = vadd.f32 %v8637, %v8638
  %v8640 = vmul.f32 %v8639, 2.0
  %v8642 = vsel %vm235, %v8628, 0
  %8644 = vmatprep.subr.mxu0 0.0
  %8645 = vmatpush1.msra.mxu0 %v8642
  %8646 = vmatprep.subr.mxu0 0.0
  %8647 = vmatpush1.msra.mxu0 0.0
  %8648 = vmatprep.subr.mxu0 0.0
  %8649 = vmatpush1.msra.mxu0 0.0
  %8650 = vmatprep.subr.mxu0 0.0
  %8651 = vmatpush1.msra.mxu0 0.0
  %8652 = vmatprep.subr.mxu0 0.0
  %8653 = vmatpush1.msra.mxu0 0.0
  %8654 = vmatprep.subr.mxu0 0.0
  %8655 = vmatpush1.msra.mxu0 0.0
  %8656 = vmatprep.subr.mxu0 0.0
  %8657 = vmatpush1.msra.mxu0 0.0
  %8658 = vmatprep.subr.mxu0 0.0
  %8659 = vmatpush1.msra.mxu0 0.0
  %8660 = vmatprep.subr.mxu0 0.0
  %8661 = vmatpush1.msra.mxu0 0.0
  %8662 = vmatprep.subr.mxu0 0.0
  %8663 = vmatpush1.msra.mxu0 0.0
  %8664 = vmatprep.subr.mxu0 0.0
  %8665 = vmatpush1.msra.mxu0 0.0
  %8666 = vmatprep.subr.mxu0 0.0
  %8667 = vmatpush1.msra.mxu0 0.0
  %8668 = vmatprep.subr.mxu0 0.0
  %8669 = vmatpush1.msra.mxu0 0.0
  %8670 = vmatprep.subr.mxu0 0.0
  %8671 = vmatpush1.msra.mxu0 0.0
  %8672 = vmatprep.subr.mxu0 0.0
  %8673 = vmatpush1.msra.mxu0 0.0
  %8674 = vmatprep.subr.mxu0 0.0
  %8675 = vmatpush1.msra.mxu0 0.0
  %8676 = vmatprep.subr.mxu0 0.0
  %8677 = vmatpush1.msra.mxu0 0.0
  %8678 = vmatprep.subr.mxu0 0.0
  %8679 = vmatpush1.msra.mxu0 0.0
  %8680 = vmatprep.subr.mxu0 0.0
  %8681 = vmatpush1.msra.mxu0 0.0
  %8682 = vmatprep.subr.mxu0 0.0
  %8683 = vmatpush1.msra.mxu0 0.0
  %8684 = vmatprep.subr.mxu0 0.0
  %8685 = vmatpush1.msra.mxu0 0.0
  %8686 = vmatprep.subr.mxu0 0.0
  %8687 = vmatpush1.msra.mxu0 0.0
  %8688 = vmatprep.subr.mxu0 0.0
  %8689 = vmatpush1.msra.mxu0 0.0
  %8690 = vmatprep.subr.mxu0 0.0
  %8691 = vmatpush1.msra.mxu0 0.0
  %8692 = vmatprep.subr.mxu0 0.0
  %8693 = vmatpush1.msra.mxu0 0.0
  %8694 = vmatprep.subr.mxu0 0.0
  %8695 = vmatpush1.msra.mxu0 0.0
  %8696 = vmatprep.subr.mxu0 0.0
  %8697 = vmatpush1.msra.mxu0 0.0
  %8698 = vmatprep.subr.mxu0 0.0
  %8699 = vmatpush1.msra.mxu0 0.0
  %8700 = vmatprep.subr.mxu0 0.0
  %8701 = vmatpush1.msra.mxu0 0.0
  %8702 = vmatprep.subr.mxu0 0.0
  %8703 = vmatpush1.msra.mxu0 0.0
  %8704 = vmatprep.subr.mxu0 0.0
  %8705 = vmatpush1.msra.mxu0 0.0
  %8706 = vmatprep.subr.mxu0 0.0
  %8707 = vmatpush1.msra.mxu0 0.0
  %8708 = vmatprep.mubr.f32.mxu0 0.0
  %8709 = vmatmul.mubr.f32.gmra.mrb[0].mxu0 %v6335
  %v8710 = vpop.f32.mrb[0].mxu0
  %v8711 = vadd.f32 0.0, %v8710
  %v8712 = vpop.f32.mrb[0].mxu0
  %8713 = vmatprep.mubr.f32.mxu0 0.0
  %8714 = vmatmul.mubr.f32.gmra.mrb[0].mxu0 %v6338
  %v8715 = vpop.f32.mrb[0].mxu0
  %v8716 = vadd.f32 0.0, %v8715
  %v8717 = vpop.f32.mrb[0].mxu0
  %8718 = vdwg.mxu0
  %v8720 = vsel %vm235, %v8558, 0
  %8722 = vmatprep.subr.mxu0 0.0
  %8723 = vmatpush1.msra.mxu0 %v8720
  %8724 = vmatprep.subr.mxu0 0.0
  %8725 = vmatpush1.msra.mxu0 0.0
  %8726 = vmatprep.subr.mxu0 0.0
  %8727 = vmatpush1.msra.mxu0 0.0
  %8728 = vmatprep.subr.mxu0 0.0
  %8729 = vmatpush1.msra.mxu0 0.0
  %8730 = vmatprep.subr.mxu0 0.0
  %8731 = vmatpush1.msra.mxu0 0.0
  %8732 = vmatprep.subr.mxu0 0.0
  %8733 = vmatpush1.msra.mxu0 0.0
  %8734 = vmatprep.subr.mxu0 0.0
  %8735 = vmatpush1.msra.mxu0 0.0
  %8736 = vmatprep.subr.mxu0 0.0
  %8737 = vmatpush1.msra.mxu0 0.0
  %8738 = vmatprep.subr.mxu0 0.0
  %8739 = vmatpush1.msra.mxu0 0.0
  %8740 = vmatprep.subr.mxu0 0.0
  %8741 = vmatpush1.msra.mxu0 0.0
  %8742 = vmatprep.subr.mxu0 0.0
  %8743 = vmatpush1.msra.mxu0 0.0
  %8744 = vmatprep.subr.mxu0 0.0
  %8745 = vmatpush1.msra.mxu0 0.0
  %8746 = vmatprep.subr.mxu0 0.0
  %8747 = vmatpush1.msra.mxu0 0.0
  %8748 = vmatprep.subr.mxu0 0.0
  %8749 = vmatpush1.msra.mxu0 0.0
  %8750 = vmatprep.subr.mxu0 0.0
  %8751 = vmatpush1.msra.mxu0 0.0
  %8752 = vmatprep.subr.mxu0 0.0
  %8753 = vmatpush1.msra.mxu0 0.0
  %8754 = vmatprep.subr.mxu0 0.0
  %8755 = vmatpush1.msra.mxu0 0.0
  %8756 = vmatprep.subr.mxu0 0.0
  %8757 = vmatpush1.msra.mxu0 0.0
  %8758 = vmatprep.subr.mxu0 0.0
  %8759 = vmatpush1.msra.mxu0 0.0
  %8760 = vmatprep.subr.mxu0 0.0
  %8761 = vmatpush1.msra.mxu0 0.0
  %8762 = vmatprep.subr.mxu0 0.0
  %8763 = vmatpush1.msra.mxu0 0.0
  %8764 = vmatprep.subr.mxu0 0.0
  %8765 = vmatpush1.msra.mxu0 0.0
  %8766 = vmatprep.subr.mxu0 0.0
  %8767 = vmatpush1.msra.mxu0 0.0
  %8768 = vmatprep.subr.mxu0 0.0
  %8769 = vmatpush1.msra.mxu0 0.0
  %8770 = vmatprep.subr.mxu0 0.0
  %8771 = vmatpush1.msra.mxu0 0.0
  %8772 = vmatprep.subr.mxu0 0.0
  %8773 = vmatpush1.msra.mxu0 0.0
  %8774 = vmatprep.subr.mxu0 0.0
  %8775 = vmatpush1.msra.mxu0 0.0
  %8776 = vmatprep.subr.mxu0 0.0
  %8777 = vmatpush1.msra.mxu0 0.0
  %8778 = vmatprep.subr.mxu0 0.0
  %8779 = vmatpush1.msra.mxu0 0.0
  %8780 = vmatprep.subr.mxu0 0.0
  %8781 = vmatpush1.msra.mxu0 0.0
  %8782 = vmatprep.subr.mxu0 0.0
  %8783 = vmatpush1.msra.mxu0 0.0
  %8784 = vmatprep.subr.mxu0 0.0
  %8785 = vmatpush1.msra.mxu0 0.0
  %8786 = vmatprep.mubr.f32.mxu0 0.0
  %8787 = vmatmul.mubr.f32.gmra.mrb[0].mxu0 %v6419
  %v8788 = vpop.f32.mrb[0].mxu0
  %v8789 = vadd.f32 %v8711, %v8788
  %v8790 = vpop.f32.mrb[0].mxu0
  %8791 = vmatprep.mubr.f32.mxu0 0.0
  %8792 = vmatmul.mubr.f32.gmra.mrb[0].mxu0 %v6422
  %v8793 = vpop.f32.mrb[0].mxu0
  %v8794 = vadd.f32 %v8716, %v8793
  %v8795 = vpop.f32.mrb[0].mxu0
  %8796 = vdwg.mxu0
  %v8797 = vmul.f32 %v6505, %v8640
  %v8798 = vmul.f32 %v6510, %v8640
  %v8799 = vadd.f32 %v8789, %v8797
  %v8800 = vadd.f32 %v8794, %v8798
  %v8801 = vmul.f32 %v6549, %v8799
  %v8802 = vmul.f32 %v6550, %v8800
  %v8804 = vsel %vm497, %v8802, 0
  %8806 = vmatprep.subr.mxu0 0.0
  %8807 = vmatpush1.msra.mxu0 %v8801
  %8808 = vmatprep.subr.mxu0 0.0
  %8809 = vmatpush1.msra.mxu0 %v8804
  %8810 = vmatprep.subr.mxu0 0.0
  %8811 = vmatpush1.msra.mxu0 0.0
  %8812 = vmatprep.subr.mxu0 0.0
  %8813 = vmatpush1.msra.mxu0 0.0
  %8814 = vmatprep.subr.mxu0 0.0
  %8815 = vmatpush1.msra.mxu0 0.0
  %8816 = vmatprep.subr.mxu0 0.0
  %8817 = vmatpush1.msra.mxu0 0.0
  %8818 = vmatprep.subr.mxu0 0.0
  %8819 = vmatpush1.msra.mxu0 0.0
  %8820 = vmatprep.subr.mxu0 0.0
  %8821 = vmatpush1.msra.mxu0 0.0
  %8822 = vmatprep.subr.mxu0 0.0
  %8823 = vmatpush1.msra.mxu0 0.0
  %8824 = vmatprep.subr.mxu0 0.0
  %8825 = vmatpush1.msra.mxu0 0.0
  %8826 = vmatprep.subr.mxu0 0.0
  %8827 = vmatpush1.msra.mxu0 0.0
  %8828 = vmatprep.subr.mxu0 0.0
  %8829 = vmatpush1.msra.mxu0 0.0
  %8830 = vmatprep.subr.mxu0 0.0
  %8831 = vmatpush1.msra.mxu0 0.0
  %8832 = vmatprep.subr.mxu0 0.0
  %8833 = vmatpush1.msra.mxu0 0.0
  %8834 = vmatprep.subr.mxu0 0.0
  %8835 = vmatpush1.msra.mxu0 0.0
  %8836 = vmatprep.subr.mxu0 0.0
  %8837 = vmatpush1.msra.mxu0 0.0
  %8838 = vmatprep.subr.mxu0 0.0
  %8839 = vmatpush1.msra.mxu0 0.0
  %8840 = vmatprep.subr.mxu0 0.0
  %8841 = vmatpush1.msra.mxu0 0.0
  %8842 = vmatprep.subr.mxu0 0.0
  %8843 = vmatpush1.msra.mxu0 0.0
  %8844 = vmatprep.subr.mxu0 0.0
  %8845 = vmatpush1.msra.mxu0 0.0
  %8846 = vmatprep.subr.mxu0 0.0
  %8847 = vmatpush1.msra.mxu0 0.0
  %8848 = vmatprep.subr.mxu0 0.0
  %8849 = vmatpush1.msra.mxu0 0.0
  %8850 = vmatprep.subr.mxu0 0.0
  %8851 = vmatpush1.msra.mxu0 0.0
  %8852 = vmatprep.subr.mxu0 0.0
  %8853 = vmatpush1.msra.mxu0 0.0
  %8854 = vmatprep.subr.mxu0 0.0
  %8855 = vmatpush1.msra.mxu0 0.0
  %8856 = vmatprep.subr.mxu0 0.0
  %8857 = vmatpush1.msra.mxu0 0.0
  %8858 = vmatprep.subr.mxu0 0.0
  %8859 = vmatpush1.msra.mxu0 0.0
  %8860 = vmatprep.subr.mxu0 0.0
  %8861 = vmatpush1.msra.mxu0 0.0
  %8862 = vmatprep.subr.mxu0 0.0
  %8863 = vmatpush1.msra.mxu0 0.0
  %8864 = vmatprep.subr.mxu0 0.0
  %8865 = vmatpush1.msra.mxu0 0.0
  %8866 = vmatprep.subr.mxu0 0.0
  %8867 = vmatpush1.msra.mxu0 0.0
  %8868 = vmatprep.subr.mxu0 0.0
  %8869 = vmatpush1.msra.mxu0 0.0
  %8870 = vmatprep.mubr.f32.mxu0 0.0
  %8871 = vmatmul.mubr.f32.gmra.mrb[0].mxu0 %v6577
  %v8872 = vpop.f32.mrb[0].mxu0
  %v8873 = vadd.f32 0.0, %v8872
  %v8874 = vpop.f32.mrb[0].mxu0
  %8875 = vmatprep.mubr.f32.mxu0 0.0
  %8876 = vmatmul.mubr.f32.gmra.mrb[0].mxu0 %v6580
  %v8877 = vpop.f32.mrb[0].mxu0
  %v8878 = vadd.f32 0.0, %v8877
  %v8879 = vpop.f32.mrb[0].mxu0
  %8880 = vmatprep.mubr.f32.mxu0 0.0
  %8881 = vmatmul.mubr.f32.gmra.mrb[0].mxu0 %v6583
  %v8882 = vpop.f32.mrb[0].mxu0
  %v8883 = vadd.f32 0.0, %v8882
  %v8884 = vpop.f32.mrb[0].mxu0
  %8885 = vmatprep.mubr.f32.mxu0 0.0
  %8886 = vmatmul.mubr.f32.gmra.mrb[0].mxu0 %v6586
  %v8887 = vpop.f32.mrb[0].mxu0
  %v8888 = vadd.f32 0.0, %v8887
  %v8889 = vpop.f32.mrb[0].mxu0
  %8890 = vdwg.mxu0
  %v8891 = vmul.f32 %v6712, %v8873
  %v8892 = vmul.f32 %v6713, %v8878
  %v8893 = vmul.f32 %v6714, %v8883
  %v8894 = vmul.f32 %v6715, %v8888
  %8895 = vmatprep.subr.mxu0 0.0
  %8896 = vmatpush1.msra.mxu0 %v59
  %8897 = vmatprep.subr.mxu0 0.0
  %8898 = vmatpush1.msra.mxu0 %v60
  %8899 = vmatprep.subr.mxu0 0.0
  %8900 = vmatpush1.msra.mxu0 %v61
  %8901 = vmatprep.subr.mxu0 0.0
  %8902 = vmatpush1.msra.mxu0 %v62
  %8903 = vmatprep.subr.mxu0 0.0
  %8904 = vmatpush1.msra.mxu0 %v63
  %8905 = vmatprep.subr.mxu0 0.0
  %8906 = vmatpush1.msra.mxu0 %v64
  %8907 = vmatprep.subr.mxu0 0.0
  %8908 = vmatpush1.msra.mxu0 %v65
  %8909 = vmatprep.subr.mxu0 0.0
  %8910 = vmatpush1.msra.mxu0 %v66
  %8911 = vmatprep.subr.mxu0 0.0
  %8912 = vmatpush1.msra.mxu0 %v67
  %8913 = vmatprep.subr.mxu0 0.0
  %8914 = vmatpush1.msra.mxu0 %v68
  %8915 = vmatprep.subr.mxu0 0.0
  %8916 = vmatpush1.msra.mxu0 %v69
  %8917 = vmatprep.subr.mxu0 0.0
  %8918 = vmatpush1.msra.mxu0 %v70
  %8919 = vmatprep.subr.mxu0 0.0
  %8920 = vmatpush1.msra.mxu0 %v71
  %8921 = vmatprep.subr.mxu0 0.0
  %8922 = vmatpush1.msra.mxu0 %v72
  %8923 = vmatprep.subr.mxu0 0.0
  %8924 = vmatpush1.msra.mxu0 %v73
  %8925 = vmatprep.subr.mxu0 0.0
  %8926 = vmatpush1.msra.mxu0 %v74
  %8927 = vmatprep.subr.mxu0 0.0
  %8928 = vmatpush1.msra.mxu0 0.0
  %8929 = vmatprep.subr.mxu0 0.0
  %8930 = vmatpush1.msra.mxu0 0.0
  %8931 = vmatprep.subr.mxu0 0.0
  %8932 = vmatpush1.msra.mxu0 0.0
  %8933 = vmatprep.subr.mxu0 0.0
  %8934 = vmatpush1.msra.mxu0 0.0
  %8935 = vmatprep.subr.mxu0 0.0
  %8936 = vmatpush1.msra.mxu0 0.0
  %8937 = vmatprep.subr.mxu0 0.0
  %8938 = vmatpush1.msra.mxu0 0.0
  %8939 = vmatprep.subr.mxu0 0.0
  %8940 = vmatpush1.msra.mxu0 0.0
  %8941 = vmatprep.subr.mxu0 0.0
  %8942 = vmatpush1.msra.mxu0 0.0
  %8943 = vmatprep.subr.mxu0 0.0
  %8944 = vmatpush1.msra.mxu0 0.0
  %8945 = vmatprep.subr.mxu0 0.0
  %8946 = vmatpush1.msra.mxu0 0.0
  %8947 = vmatprep.subr.mxu0 0.0
  %8948 = vmatpush1.msra.mxu0 0.0
  %8949 = vmatprep.subr.mxu0 0.0
  %8950 = vmatpush1.msra.mxu0 0.0
  %8951 = vmatprep.subr.mxu0 0.0
  %8952 = vmatpush1.msra.mxu0 0.0
  %8953 = vmatprep.subr.mxu0 0.0
  %8954 = vmatpush1.msra.mxu0 0.0
  %8955 = vmatprep.subr.mxu0 0.0
  %8956 = vmatpush1.msra.mxu0 0.0
  %8957 = vmatprep.subr.mxu0 0.0
  %8958 = vmatpush1.msra.mxu0 0.0
  %8959 = vmatprep.mubr.f32.mxu0 0.0
  %8960 = vmatmul.mubr.f32.gmra.mrb[0].mxu0 %v8891
  %v8961 = vpop.f32.mrb[0].mxu0
  %v8962 = vadd.f32 0.0, %v8961
  %v8963 = vpop.f32.mrb[0].mxu0
  %8964 = vmatprep.mubr.f32.mxu0 0.0
  %8965 = vmatmul.mubr.f32.gmra.mrb[0].mxu0 %v8892
  %v8966 = vpop.f32.mrb[0].mxu0
  %v8967 = vadd.f32 0.0, %v8966
  %v8968 = vpop.f32.mrb[0].mxu0
  %8969 = vmatprep.mubr.f32.mxu0 0.0
  %8970 = vmatmul.mubr.f32.gmra.mrb[0].mxu0 %v8893
  %v8971 = vpop.f32.mrb[0].mxu0
  %v8972 = vadd.f32 0.0, %v8971
  %v8973 = vpop.f32.mrb[0].mxu0
  %8974 = vmatprep.mubr.f32.mxu0 0.0
  %8975 = vmatmul.mubr.f32.gmra.mrb[0].mxu0 %v8894
  %v8976 = vpop.f32.mrb[0].mxu0
  %v8977 = vadd.f32 0.0, %v8976
  %v8978 = vpop.f32.mrb[0].mxu0
  %8979 = vdwg.mxu0
  %8980 = vmatprep.subr.mxu0 0.0
  %8981 = vmatpush1.msra.mxu0 %v8962
  %8982 = vmatprep.subr.mxu0 0.0
  %8983 = vmatpush1.msra.mxu0 %v8967
  %8984 = vmatprep.subr.mxu0 0.0
  %8985 = vmatpush1.msra.mxu0 %v8972
  %8986 = vmatprep.subr.mxu0 0.0
  %8987 = vmatpush1.msra.mxu0 %v8977
  %8988 = vmatprep.subr.mxu0 0.0
  %8989 = vmatpush1.msra.mxu0 0.0
  %8990 = vmatprep.subr.mxu0 0.0
  %8991 = vmatpush1.msra.mxu0 0.0
  %8992 = vmatprep.subr.mxu0 0.0
  %8993 = vmatpush1.msra.mxu0 0.0
  %8994 = vmatprep.subr.mxu0 0.0
  %8995 = vmatpush1.msra.mxu0 0.0
  %8996 = vmatprep.subr.mxu0 0.0
  %8997 = vmatpush1.msra.mxu0 0.0
  %8998 = vmatprep.subr.mxu0 0.0
  %8999 = vmatpush1.msra.mxu0 0.0
  %9000 = vmatprep.subr.mxu0 0.0
  %9001 = vmatpush1.msra.mxu0 0.0
  %9002 = vmatprep.subr.mxu0 0.0
  %9003 = vmatpush1.msra.mxu0 0.0
  %9004 = vmatprep.subr.mxu0 0.0
  %9005 = vmatpush1.msra.mxu0 0.0
  %9006 = vmatprep.subr.mxu0 0.0
  %9007 = vmatpush1.msra.mxu0 0.0
  %9008 = vmatprep.subr.mxu0 0.0
  %9009 = vmatpush1.msra.mxu0 0.0
  %9010 = vmatprep.subr.mxu0 0.0
  %9011 = vmatpush1.msra.mxu0 0.0
  %9012 = vmatprep.subr.mxu0 0.0
  %9013 = vmatpush1.msra.mxu0 0.0
  %9014 = vmatprep.subr.mxu0 0.0
  %9015 = vmatpush1.msra.mxu0 0.0
  %9016 = vmatprep.subr.mxu0 0.0
  %9017 = vmatpush1.msra.mxu0 0.0
  %9018 = vmatprep.subr.mxu0 0.0
  %9019 = vmatpush1.msra.mxu0 0.0
  %9020 = vmatprep.subr.mxu0 0.0
  %9021 = vmatpush1.msra.mxu0 0.0
  %9022 = vmatprep.subr.mxu0 0.0
  %9023 = vmatpush1.msra.mxu0 0.0
  %9024 = vmatprep.subr.mxu0 0.0
  %9025 = vmatpush1.msra.mxu0 0.0
  %9026 = vmatprep.subr.mxu0 0.0
  %9027 = vmatpush1.msra.mxu0 0.0
  %9028 = vmatprep.subr.mxu0 0.0
  %9029 = vmatpush1.msra.mxu0 0.0
  %9030 = vmatprep.subr.mxu0 0.0
  %9031 = vmatpush1.msra.mxu0 0.0
  %9032 = vmatprep.subr.mxu0 0.0
  %9033 = vmatpush1.msra.mxu0 0.0
  %9034 = vmatprep.subr.mxu0 0.0
  %9035 = vmatpush1.msra.mxu0 0.0
  %9036 = vmatprep.subr.mxu0 0.0
  %9037 = vmatpush1.msra.mxu0 0.0
  %9038 = vmatprep.subr.mxu0 0.0
  %9039 = vmatpush1.msra.mxu0 0.0
  %9040 = vmatprep.subr.mxu0 0.0
  %9041 = vmatpush1.msra.mxu0 0.0
  %9042 = vmatprep.subr.mxu0 0.0
  %9043 = vmatpush1.msra.mxu0 0.0
  %9044 = vmatprep.mubr.f32.mxu0 0.0
  %9045 = vmatmul.mubr.f32.gmra.mrb[0].mxu0 %v6802
  %v9046 = vpop.f32.mrb[0].mxu0
  %v9047 = vadd.f32 0.0, %v9046
  %v9048 = vpop.f32.mrb[0].mxu0
  %9049 = vdwg.mxu0
  %v9050 = vsel %vm235, %v8475, 0
  %9052 = vmatprep.subr.mxu0 0.0
  %9053 = vmatpush1.msra.mxu0 %v9050
  %9054 = vmatprep.subr.mxu0 0.0
  %9055 = vmatpush1.msra.mxu0 0.0
  %9056 = vmatprep.subr.mxu0 0.0
  %9057 = vmatpush1.msra.mxu0 0.0
  %9058 = vmatprep.subr.mxu0 0.0
  %9059 = vmatpush1.msra.mxu0 0.0
  %9060 = vmatprep.subr.mxu0 0.0
  %9061 = vmatpush1.msra.mxu0 0.0
  %9062 = vmatprep.subr.mxu0 0.0
  %9063 = vmatpush1.msra.mxu0 0.0
  %9064 = vmatprep.subr.mxu0 0.0
  %9065 = vmatpush1.msra.mxu0 0.0
  %9066 = vmatprep.subr.mxu0 0.0
  %9067 = vmatpush1.msra.mxu0 0.0
  %9068 = vmatprep.subr.mxu0 0.0
  %9069 = vmatpush1.msra.mxu0 0.0
  %9070 = vmatprep.subr.mxu0 0.0
  %9071 = vmatpush1.msra.mxu0 0.0
  %9072 = vmatprep.subr.mxu0 0.0
  %9073 = vmatpush1.msra.mxu0 0.0
  %9074 = vmatprep.subr.mxu0 0.0
  %9075 = vmatpush1.msra.mxu0 0.0
  %9076 = vmatprep.subr.mxu0 0.0
  %9077 = vmatpush1.msra.mxu0 0.0
  %9078 = vmatprep.subr.mxu0 0.0
  %9079 = vmatpush1.msra.mxu0 0.0
  %9080 = vmatprep.subr.mxu0 0.0
  %9081 = vmatpush1.msra.mxu0 0.0
  %9082 = vmatprep.subr.mxu0 0.0
  %9083 = vmatpush1.msra.mxu0 0.0
  %9084 = vmatprep.subr.mxu0 0.0
  %9085 = vmatpush1.msra.mxu0 0.0
  %9086 = vmatprep.subr.mxu0 0.0
  %9087 = vmatpush1.msra.mxu0 0.0
  %9088 = vmatprep.subr.mxu0 0.0
  %9089 = vmatpush1.msra.mxu0 0.0
  %9090 = vmatprep.subr.mxu0 0.0
  %9091 = vmatpush1.msra.mxu0 0.0
  %9092 = vmatprep.subr.mxu0 0.0
  %9093 = vmatpush1.msra.mxu0 0.0
  %9094 = vmatprep.subr.mxu0 0.0
  %9095 = vmatpush1.msra.mxu0 0.0
  %9096 = vmatprep.subr.mxu0 0.0
  %9097 = vmatpush1.msra.mxu0 0.0
  %9098 = vmatprep.subr.mxu0 0.0
  %9099 = vmatpush1.msra.mxu0 0.0
  %9100 = vmatprep.subr.mxu0 0.0
  %9101 = vmatpush1.msra.mxu0 0.0
  %9102 = vmatprep.subr.mxu0 0.0
  %9103 = vmatpush1.msra.mxu0 0.0
  %9104 = vmatprep.subr.mxu0 0.0
  %9105 = vmatpush1.msra.mxu0 0.0
  %9106 = vmatprep.subr.mxu0 0.0
  %9107 = vmatpush1.msra.mxu0 0.0
  %9108 = vmatprep.subr.mxu0 0.0
  %9109 = vmatpush1.msra.mxu0 0.0
  %9110 = vmatprep.subr.mxu0 0.0
  %9111 = vmatpush1.msra.mxu0 0.0
  %9112 = vmatprep.subr.mxu0 0.0
  %9113 = vmatpush1.msra.mxu0 0.0
  %9114 = vmatprep.subr.mxu0 0.0
  %9115 = vmatpush1.msra.mxu0 0.0
  %9116 = vmatprep.mubr.f32.mxu0 0.0
  %9117 = vmatmul.mubr.f32.gmra.mrb[0].mxu0 %v6875
  %v9118 = vpop.f32.mrb[0].mxu0
  %v9119 = vadd.f32 %v9047, %v9118
  %v9120 = vpop.f32.mrb[0].mxu0
  %9121 = vdwg.mxu0
  %v9122 = vmul.f32 %v6966, %v9119
  %v9124 = vsel %vm497, %v9122, 0
  %9126 = vmatprep.subr.mxu0 0.0
  %9127 = vmatpush1.msra.mxu0 %v9124
  %9128 = vmatprep.subr.mxu0 0.0
  %9129 = vmatpush1.msra.mxu0 0.0
  %9130 = vmatprep.subr.mxu0 0.0
  %9131 = vmatpush1.msra.mxu0 0.0
  %9132 = vmatprep.subr.mxu0 0.0
  %9133 = vmatpush1.msra.mxu0 0.0
  %9134 = vmatprep.subr.mxu0 0.0
  %9135 = vmatpush1.msra.mxu0 0.0
  %9136 = vmatprep.subr.mxu0 0.0
  %9137 = vmatpush1.msra.mxu0 0.0
  %9138 = vmatprep.subr.mxu0 0.0
  %9139 = vmatpush1.msra.mxu0 0.0
  %9140 = vmatprep.subr.mxu0 0.0
  %9141 = vmatpush1.msra.mxu0 0.0
  %9142 = vmatprep.subr.mxu0 0.0
  %9143 = vmatpush1.msra.mxu0 0.0
  %9144 = vmatprep.subr.mxu0 0.0
  %9145 = vmatpush1.msra.mxu0 0.0
  %9146 = vmatprep.subr.mxu0 0.0
  %9147 = vmatpush1.msra.mxu0 0.0
  %9148 = vmatprep.subr.mxu0 0.0
  %9149 = vmatpush1.msra.mxu0 0.0
  %9150 = vmatprep.subr.mxu0 0.0
  %9151 = vmatpush1.msra.mxu0 0.0
  %9152 = vmatprep.subr.mxu0 0.0
  %9153 = vmatpush1.msra.mxu0 0.0
  %9154 = vmatprep.subr.mxu0 0.0
  %9155 = vmatpush1.msra.mxu0 0.0
  %9156 = vmatprep.subr.mxu0 0.0
  %9157 = vmatpush1.msra.mxu0 0.0
  %9158 = vmatprep.subr.mxu0 0.0
  %9159 = vmatpush1.msra.mxu0 0.0
  %9160 = vmatprep.subr.mxu0 0.0
  %9161 = vmatpush1.msra.mxu0 0.0
  %9162 = vmatprep.subr.mxu0 0.0
  %9163 = vmatpush1.msra.mxu0 0.0
  %9164 = vmatprep.subr.mxu0 0.0
  %9165 = vmatpush1.msra.mxu0 0.0
  %9166 = vmatprep.subr.mxu0 0.0
  %9167 = vmatpush1.msra.mxu0 0.0
  %9168 = vmatprep.subr.mxu0 0.0
  %9169 = vmatpush1.msra.mxu0 0.0
  %9170 = vmatprep.subr.mxu0 0.0
  %9171 = vmatpush1.msra.mxu0 0.0
  %9172 = vmatprep.subr.mxu0 0.0
  %9173 = vmatpush1.msra.mxu0 0.0
  %9174 = vmatprep.subr.mxu0 0.0
  %9175 = vmatpush1.msra.mxu0 0.0
  %9176 = vmatprep.subr.mxu0 0.0
  %9177 = vmatpush1.msra.mxu0 0.0
  %9178 = vmatprep.subr.mxu0 0.0
  %9179 = vmatpush1.msra.mxu0 0.0
  %9180 = vmatprep.subr.mxu0 0.0
  %9181 = vmatpush1.msra.mxu0 0.0
  %9182 = vmatprep.subr.mxu0 0.0
  %9183 = vmatpush1.msra.mxu0 0.0
  %9184 = vmatprep.subr.mxu0 0.0
  %9185 = vmatpush1.msra.mxu0 0.0
  %9186 = vmatprep.subr.mxu0 0.0
  %9187 = vmatpush1.msra.mxu0 0.0
  %9188 = vmatprep.subr.mxu0 0.0
  %9189 = vmatpush1.msra.mxu0 0.0
  %9190 = vmatprep.mubr.f32.mxu0 0.0
  %9191 = vmatmul.mubr.f32.gmra.mrb[0].mxu0 %v6975
  %v9192 = vpop.f32.mrb[0].mxu0
  %v9193 = vadd.f32 %v8475, %v9192
  %v9194 = vpop.f32.mrb[0].mxu0
  %9195 = vdwg.mxu0
  %v9196 = vmul.f32 %v9193, %v7052
  %v9197 = vsel %vm1671, %v9196, 0.0
  %v9198 = vrot.slane %v9197, 4
  %v9199 = vadd.f32 %v9197, %v9198
  %v9200 = vrot.slane %v9199, 2
  %v9201 = vadd.f32 %v9199, %v9200
  %v9202 = vrot.slane %v9201, 1
  %v9203 = vadd.f32 %v9201, %v9202
  %v9204 = vmul.f32 %v9203, 0.33333334
  %v9205 = vadd.f32 %v8487, %v9204
  %v9206 = vadd.f32 %v6161, %v7050
  %9207 = vst.msk [vmem:[%s16] sm:$0x7] %vm1671, %v9206
  %vm9208 = vcmask 122880
  %9209 = vst.msk [vmem:[%s17] sm:$0x1] %vm9208, %v9205
  // Predicated region
  $region66: #{rescoorflow_forward.1} parent=0 // pred_check
    _
  $region67: #{rescoorflow_forward.1} parent=0 // pred_check_branch
    %9211 = sbr.rel (0) target = $region69
  $region68: #{rescoorflow_forward.1} parent=0 // pred_region
    _
  $region69: #{rescoorflow_forward.1} parent=0 // pred_fallthru
    _
  // Predicated region
  $region70: #{rescoorflow_forward.1} parent=0 // pred_check
    _
  $region71: #{rescoorflow_forward.1} parent=0 // pred_check_branch
    %9213 = sbr.rel (0) target = $region73
  $region72: #{rescoorflow_forward.1} parent=0 // pred_region
    _
  $region73: #{rescoorflow_forward.1} parent=0 // pred_fallthru
    _
  // Predicated region
  $region74: #{rescoorflow_forward.1} parent=0 // pred_check
    _
  $region75: #{rescoorflow_forward.1} parent=0 // pred_check_branch
    %9215 = sbr.rel (0) target = $region77
  $region76: #{rescoorflow_forward.1} parent=0 // pred_region
    _
  $region77: #{rescoorflow_forward.1} parent=0 // pred_fallthru
    _
  // Predicated region
  $region78: #{rescoorflow_forward.1} parent=0 // pred_check
    _
  $region79: #{rescoorflow_forward.1} parent=0 // pred_check_branch
    %9217 = sbr.rel (0) target = $region81
  $region80: #{rescoorflow_forward.1} parent=0 // pred_region
    _
  $region81: #{rescoorflow_forward.1} parent=0 // pred_fallthru
    _

</llo_original>
